<compile_context>
chip_gen: v5e
topology: v5e:2x2
jax: 0.10.0
libtpu: 0.0.40
codegen_flags: <defaults>
</compile_context>

<pallas_src>
import functools
import math

import numpy as np
import jax
import jax.numpy as jnp
from jax.experimental import pallas as pl
from jax.experimental.pallas import tpu as pltpu


# ----------------------------------------------------------------------------
# VMEM sizing helpers
# ----------------------------------------------------------------------------
def _vmem_capacity_bytes():
    try:
        return int(pltpu.get_tpu_info().vmem_capacity_bytes)
    except Exception:
        return 64 << 20          # conservative: v7x per-TensorCore VMEM


def _vmem_limit(need_bytes):
    # Never below the largest scoped default (32 MiB), 2x headroom over the
    # estimated footprint, capped at 3/4 of physical VMEM.
    cap = _vmem_capacity_bytes()
    return int(min(max(2 * int(need_bytes), 32 << 20), (cap * 3) // 4))


# ----------------------------------------------------------------------------
# Kernel 1: patch embedding  (TSTiEncoder.W_P linear + W_pos positional add)
# ----------------------------------------------------------------------------
def _patch_embed_kernel(x_ref, w_ref, b_ref, pos_ref, o_ref):
    TB, Q, P = x_ref.shape
    D = w_ref.shape[-1]
    u = jnp.dot(x_ref[...].reshape(TB * Q, P).astype(jnp.bfloat16), w_ref[...],
                preferred_element_type=jnp.float32) + b_ref[...]
    o_ref[...] = u.reshape(TB, Q, D) + pos_ref[...]


def patch_embed(x, w_bf16, b, pos):
    BN, Q, P = x.shape
    D = w_bf16.shape[1]
    # Row tile sized from VMEM capacity (in + out f32 blocks, double-buffered);
    # cdiv grid so awkward BN never degrades the tile to 1.
    per_row = Q * (P + D) * 4 * 2
    budget = max(_vmem_capacity_bytes() // 10, 2 << 20)
    TB = max(1, min(BN, budget // max(per_row, 1)))
    need = TB * per_row + (P * D) * 2 + (Q * D + D) * 4 + TB * Q * D * 4
    return pl.pallas_call(
        _patch_embed_kernel,
        out_shape=jax.ShapeDtypeStruct((BN, Q, D), jnp.float32),
        grid=(pl.cdiv(BN, TB),),
        in_specs=[
            pl.BlockSpec((TB, Q, P), lambda i: (i, 0, 0)),
            pl.BlockSpec((P, D), lambda i: (0, 0)),
            pl.BlockSpec((1, D), lambda i: (0, 0)),
            pl.BlockSpec((Q, D), lambda i: (0, 0)),
        ],
        out_specs=pl.BlockSpec((TB, Q, D), lambda i: (i, 0, 0)),
        compiler_params=pltpu.CompilerParams(
            dimension_semantics=("parallel",),
            vmem_limit_bytes=_vmem_limit(need)),
    )(x, w_bf16, b, pos)


# ----------------------------------------------------------------------------
# Kernel 2: fused TSTEncoder layer stack (grid axis = layer index).
#   The output block (constant index_map) is the running activation, resident
#   in VMEM across layers; "prev" residual-attention scores live in scratch;
#   per-layer weights are streamed (double-buffered) from stacked arrays.
# ----------------------------------------------------------------------------
def _encoder_stack_kernel(src_hbm, wqkv_ref, bqkv_ref, wo_ref, bo_ref,
                          g1_ref, be1_ref, w1_ref, b1_ref,
                          w2_ref, b2_ref, g2_ref, be2_ref,
                          out_ref, weights_ref,
                          prev_scr, copy_sem, *, n_heads, eps):
    l = pl.program_id(0)
    last = l == pl.num_programs(0) - 1

    @pl.when(l == 0)
    def _init():
        # one-shot DMA of the embedded patches into the resident output block
        cp = pltpu.make_async_copy(src_hbm, out_ref, copy_sem)
        cp.start()
        cp.wait()
        prev_scr[...] = jnp.zeros_like(prev_scr)

    src = out_ref[...]                       # [BN, Q, D] f32, running activation
    BN, Q, D = src.shape
    H = n_heads
    dk = D // H

    # Fused QKV projection (bf16 MXU, f32 accumulate); attn_scale is folded
    # into the Q columns of wqkv / bqkv.  Cast to bf16 right away: no f32
    # [BN*Q, 3D] transient.
    qkv = (jnp.dot(src.reshape(BN * Q, D).astype(jnp.bfloat16), wqkv_ref[0],
                   preferred_element_type=jnp.float32)
           + bqkv_ref[0]).astype(jnp.bfloat16)
    q = qkv[:, :D].reshape(BN, Q, D)
    k = qkv[:, D:2 * D].reshape(BN, Q, D)
    v = qkv[:, 2 * D:].reshape(BN, Q, D)

    wo = wo_ref[0]                           # [D, D] bf16
    o_acc = jnp.zeros((BN * Q, D), jnp.float32)
    attn_maps = []
    for h in range(H):                       # static unroll over heads
        sl = slice(h * dk, (h + 1) * dk)
        s = jnp.einsum('bqd,bkd->bqk', q[:, :, sl], k[:, :, sl],
                       preferred_element_type=jnp.float32)
        s = s + prev_scr[h]                  # residual attention (zeros at l==0)
        prev_scr[h] = s                      # feeds next layer (VMEM only)
        e = jnp.exp(s - jnp.max(s, axis=-1, keepdims=True))
        a = e / jnp.sum(e, axis=-1, keepdims=True)     # exact softmax
        attn_maps.append(a)
        ho = jnp.einsum('bqk,bkd->bqd', a.astype(jnp.bfloat16), v[:, :, sl],
                        preferred_element_type=jnp.float32)
        # fold the output projection per head -> no lane-wise concatenate
        o_acc = o_acc + jnp.dot(ho.reshape(BN * Q, dk).astype(jnp.bfloat16),
                                wo[sl, :], preferred_element_type=jnp.float32)

    @pl.when(last)
    def _store_attn():
        # single stacked store, PyTorch layout [bs=BN, n_heads, q_len, q_len]
        weights_ref[...] = jnp.stack(attn_maps, axis=1)

    x = src + (o_acc + bo_ref[0]).reshape(BN, Q, D)    # attention residual

    # BatchNorm1d(d_model): batch stats over (BN, Q) per feature, biased var.
    mean1 = jnp.mean(x, axis=(0, 1), keepdims=True)
    var1 = jnp.mean((x - mean1) ** 2, axis=(0, 1), keepdims=True)
    x = (x - mean1) * jax.lax.rsqrt(var1 + eps) * g1_ref[0] + be1_ref[0]

    # FFN
    h1 = jnp.dot(x.reshape(BN * Q, D).astype(jnp.bfloat16), w1_ref[0],
                 preferred_element_type=jnp.float32) + b1_ref[0]
    h1 = jax.nn.gelu(h1, approximate=True).astype(jnp.bfloat16)
    h2 = jnp.dot(h1, w2_ref[0], preferred_element_type=jnp.float32) + b2_ref[0]
    y = x + h2.reshape(BN, Q, D)                       # ffn residual

    mean2 = jnp.mean(y, axis=(0, 1), keepdims=True)
    var2 = jnp.mean((y - mean2) ** 2, axis=(0, 1), keepdims=True)
    y = (y - mean2) * jax.lax.rsqrt(var2 + eps) * g2_ref[0] + be2_ref[0]

    out_ref[...] = y                          # stays resident for the next layer


def encoder_stack(src, sp, n_layers, n_heads):
    BN, Q, D = src.shape
    H = n_heads
    F = sp['w1'].shape[-1]

    def per_layer(shape):
        nz = (0,) * len(shape)
        return pl.BlockSpec((1,) + tuple(shape), lambda l, nz=nz: (l,) + nz)

    in_specs = [
        pl.BlockSpec(memory_space=pl.ANY),              # src stays in HBM
        per_layer((D, 3 * D)), per_layer((1, 3 * D)),
        per_layer((D, D)), per_layer((1, D)),
        per_layer((1, D)), per_layer((1, D)),
        per_layer((D, F)), per_layer((1, F)),
        per_layer((F, D)), per_layer((1, D)),
        per_layer((1, D)), per_layer((1, D)),
    ]
    out_specs = (
        pl.BlockSpec((BN, Q, D), lambda l: (0, 0, 0)),          # resident activation
        pl.BlockSpec((BN, H, Q, Q), lambda l: (0, 0, 0, 0)),    # last-layer attn
    )

    # VMEM footprint: resident blocks + double-buffered per-layer weights +
    # largest in-kernel transients.
    resident = BN * Q * D * 4 + 2 * BN * H * Q * Q * 4
    wbytes = ((D * 3 * D + D * D + D * F + F * D) * 2
              + (3 * D + D + F + 5 * D) * 4)
    transients = (BN * Q * 3 * D * (4 + 2)        # qkv f32 acc + bf16 copy
                  + BN * Q * F * (4 + 2)          # h1 f32 + bf16
                  + BN * Q * Q * 4 * 2            # per-head scores / probs
                  + BN * Q * D * 4 * 3)           # o_acc / x / y
    need = resident + 2 * wbytes + transients

    flops_layer = 2 * BN * Q * D * (3 * D + D + 2 * F) + 4 * BN * Q * Q * D
    trans_layer = BN * Q * F + H * BN * Q * Q
    cost = pl.CostEstimate(
        flops=int(n_layers * flops_layer),
        transcendentals=int(n_layers * trans_layer),
        bytes_accessed=int(n_layers * wbytes + 2 * BN * Q * D * 4
                           + BN * H * Q * Q * 4))

    kernel = functools.partial(_encoder_stack_kernel, n_heads=n_heads, eps=1e-5)
    out, weights = pl.pallas_call(
        kernel,
        out_shape=(jax.ShapeDtypeStruct((BN, Q, D), jnp.float32),
                   jax.ShapeDtypeStruct((BN, H, Q, Q), jnp.float32)),
        grid=(n_layers,),
        in_specs=in_specs,
        out_specs=out_specs,
        scratch_shapes=[pltpu.VMEM((H, BN, Q, Q), jnp.float32),
                        pltpu.SemaphoreType.DMA(())],
        compiler_params=pltpu.CompilerParams(
            dimension_semantics=("arbitrary",),
            vmem_limit_bytes=_vmem_limit(need)),
        cost_estimate=cost,
    )(src, sp['wqkv'], sp['bqkv'], sp['wo'], sp['bo'],
      sp['g1'], sp['be1'], sp['w1'], sp['b1'],
      sp['w2'], sp['b2'], sp['g2'], sp['be2'])
    return out, weights


# ----------------------------------------------------------------------------
# Kernel 3: Flatten_Head linear (individual=False), tiled over rows AND the
# contraction dim nf with an f32 accumulator (bf16 MXU inputs).
# ----------------------------------------------------------------------------
def _head_kernel(x_ref, w_ref, b_ref, o_ref, acc_ref):
    k = pl.program_id(1)

    @pl.when(k == 0)
    def _zero():
        acc_ref[...] = jnp.zeros_like(acc_ref)

    acc_ref[...] += jnp.dot(x_ref[...].astype(jnp.bfloat16), w_ref[...],
                            preferred_element_type=jnp.float32)

    @pl.when(k == pl.num_programs(1) - 1)
    def _finalize():
        o_ref[...] = acc_ref[...] + b_ref[...]


def head_linear(x2d, w_bf16, b):
    R, nf = x2d.shape
    T = w_bf16.shape[1]
    TR = min(R, 256)
    # Contraction tile: largest multiple of 128 (<= 4096) dividing nf; small nf
    # falls back to a single K block (lane-size rule: last block dim must be a
    # multiple of 128 or the full extent).
    TK = nf
    if nf > 4096:
        for cand in range(4096, 127, -128):
            if nf % cand == 0:
                TK = cand
                break
    need = 2 * (TR * TK * 4 + TK * T * 2) + 2 * TR * T * 4 + T * 4
    return pl.pallas_call(
        _head_kernel,
        out_shape=jax.ShapeDtypeStruct((R, T), jnp.float32),
        grid=(pl.cdiv(R, TR), nf // TK),
        in_specs=[
            pl.BlockSpec((TR, TK), lambda i, k: (i, k)),
            pl.BlockSpec((TK, T), lambda i, k: (k, 0)),
            pl.BlockSpec((1, T), lambda i, k: (0, 0)),
        ],
        out_specs=pl.BlockSpec((TR, T), lambda i, k: (i, 0)),
        scratch_shapes=[pltpu.VMEM((TR, T), jnp.float32)],
        compiler_params=pltpu.CompilerParams(
            dimension_semantics=("parallel", "arbitrary"),
            vmem_limit_bytes=_vmem_limit(need)),
    )(x2d, w_bf16, b)


# ----------------------------------------------------------------------------
# Parameter initialization (deterministic, synthetic) + per-layer stacking
# ----------------------------------------------------------------------------
def _stack_layer_params(layers, attn_scale):
    cat = lambda name: jnp.stack([lp[name] for lp in layers], axis=0)
    wq = jnp.stack([lp['wq'] * attn_scale for lp in layers], axis=0)   # fold scale
    bq = jnp.stack([lp['bq'] * attn_scale for lp in layers], axis=0)
    wqkv = jnp.concatenate([wq, cat('wk'), cat('wv')], axis=-1)        # [L, D, 3D]
    bqkv = jnp.concatenate([bq, cat('bk'), cat('bv')], axis=-1)        # [L, 1, 3D]
    bf16 = jnp.bfloat16
    return dict(
        wqkv=wqkv.astype(bf16), bqkv=bqkv,
        wo=cat('wo').astype(bf16), bo=cat('bo'),
        g1=cat('g1'), be1=cat('be1'),
        w1=cat('w1').astype(bf16), b1=cat('b1'),
        w2=cat('w2').astype(bf16), b2=cat('b2'),
        g2=cat('g2'), be2=cat('be2'))


def init_model_params(key, cfg):
    D, F = cfg['d_model'], cfg['d_ff']
    keys = iter(jax.random.split(key, 1024))

    def linear(fan_in, fan_out):
        bound = 1.0 / math.sqrt(fan_in)
        w = jax.random.uniform(next(keys), (fan_in, fan_out), jnp.float32, -bound, bound)
        b = jax.random.uniform(next(keys), (1, fan_out), jnp.float32, -bound, bound)
        return w, b

    scales, total_patch = [], 0
    for i in range(cfg['scale']):
        pL = cfg['patch_len'] * (i + 1)
        st = cfg['stride'] * (i + 1)
        # patch_num = int((L - pL)/st + 1) + 1 + configs.gate  (configs.gate = 0)
        num = (cfg['context_window'] - pL) // st + 1 + 1
        total_patch += num
        w_p, b_p = linear(pL, D)
        w_pos = jax.random.uniform(next(keys), (num, D), jnp.float32, -0.02, 0.02)
        layers = []
        for _ in range(cfg['n_layers']):
            wq, bq = linear(D, D)
            wk, bk = linear(D, D)
            wv, bv = linear(D, D)
            wo, bo = linear(D, D)
            w1, b1 = linear(D, F)
            w2, b2 = linear(F, D)
            layers.append(dict(
                wq=wq, bq=bq, wk=wk, bk=bk, wv=wv, bv=bv, wo=wo, bo=bo,
                w1=w1, b1=b1, w2=w2, b2=b2,
                g1=jnp.ones((1, D), jnp.float32), be1=jnp.zeros((1, D), jnp.float32),
                g2=jnp.ones((1, D), jnp.float32), be2=jnp.zeros((1, D), jnp.float32)))
        scales.append(dict(w_p=w_p.astype(jnp.bfloat16), b_p=b_p, w_pos=w_pos,
                           stacked=_stack_layer_params(layers, cfg['attn_scale'])))

    nf = D * total_patch
    head_w, head_b = linear(nf, cfg['target_window'])
    return dict(scales=scales, head_w=head_w.astype(jnp.bfloat16), head_b=head_b)


# ----------------------------------------------------------------------------
# Full forward (glue in XLA under one jit, hot paths in the Pallas kernels)
# ----------------------------------------------------------------------------
def mgtst_forward(x, params, cfg, batch_x_mark=None, batch_y_mark=None):
    B, C, L = x.shape
    n_scales = cfg['scale']
    attn_collect = []
    attn_gate_collect = []          # gate == 0  ->  stays empty
    outs = []
    for i in range(n_scales):
        sp = params['scales'][i]
        pL = cfg['patch_len'] * (i + 1)
        st = cfg['stride'] * (i + 1)

        # ReplicationPad1d((0, stride_stage))
        z = jnp.pad(x, ((0, 0), (0, 0), (0, st)), mode='edge')
        # unfold(dim=-1, size=pL, step=st) via one constant-index gather (XLA)
        num = (z.shape[-1] - pL) // st + 1
        idx = np.arange(num)[:, None] * st + np.arange(pL)[None, :]
        patches = z[:, :, idx]                                     # [B, C, num, pL]

        BN = B * C
        xp = patches.reshape(BN, num, pL)
        # TSTiEncoder: W_P linear + W_pos, then fused n_layers TSTEncoderLayer stack
        src = patch_embed(xp, sp['w_p'], sp['b_p'], sp['w_pos'])
        src, weights = encoder_stack(src, sp['stacked'],
                                     cfg['n_layers'], cfg['n_heads'])
        attn_collect.append(weights)                               # [BN, H, Q, Q]

        z_enc = src.reshape(B, C, num, cfg['d_model'])
        z_enc = jnp.transpose(z_enc, (0, 1, 3, 2))                 # [B, C, D, num]
        outs.append(z_enc / n_scales)                              # z / self.scale

    out_cat = jnp.concatenate(outs, axis=-1)                       # [B, C, D, total_patch]
    flat = out_cat.reshape(B * C, -1)                              # Flatten(start_dim=-2)
    y = head_linear(flat, params['head_w'], params['head_b']).reshape(B, C, -1)
    return y, attn_collect, attn_gate_collect


if __name__ == "__main__":
    cfg = dict(batch=2, c_in=4, context_window=16, target_window=8,
               patch_len=4, stride=2, scale=2,
               d_model=32, n_heads=4, d_ff=64, n_layers=2)
    cfg['attn_scale'] = (cfg['d_model'] // cfg['n_heads']) ** (-0.5)

    key = jax.random.PRNGKey(0)
    kx, kp = jax.random.split(key)
    x = jax.random.normal(kx, (cfg['batch'], cfg['c_in'], cfg['context_window']),
                          jnp.float32)
    params = init_model_params(kp, cfg)

    fwd = jax.jit(functools.partial(mgtst_forward, cfg=cfg))
    out, attns, attn_gate = fwd(x, params)
    out = jax.block_until_ready(out)

    assert out.shape == (cfg['batch'], cfg['c_in'], cfg['target_window'])
    assert len(attns) == cfg['scale'] and len(attn_gate) == 0
    assert attns[0].shape == (cfg['batch'] * cfg['c_in'], cfg['n_heads'], 8, 8)
    assert attns[1].shape == (cfg['batch'] * cfg['c_in'], cfg['n_heads'], 4, 4)
    assert bool(jnp.all(jnp.isfinite(out)))
    print("KERNEL_OK")
</pallas_src>

<mosaic_0001>
module attributes {stable_mosaic.version = 11 : i64} {
  func.func @_patch_embed_kernel(%arg0: i32, %arg1: memref<8x8x4xf32, #tpu.memory_space<vmem>>, %arg2: memref<4x32xbf16, #tpu.memory_space<vmem>>, %arg3: memref<1x32xf32, #tpu.memory_space<vmem>>, %arg4: memref<8x32xf32, #tpu.memory_space<vmem>>, %arg5: memref<8x8x32xf32, #tpu.memory_space<vmem>>) attributes {dimension_semantics = [#tpu.dimension_semantics<parallel>], iteration_bounds = array<i64: 1>, scalar_prefetch = 0 : i64, scratch_operands = 0 : i64, tpu.core_type = #tpu.core_type<tc>, window_params = [{transform_indices = @transform_0, window_bounds = array<i64: 8, 8, 4>}, {pipeline_mode = #tpu.pipeline_mode<synchronous>, transform_indices = @transform_1, window_bounds = array<i64: 4, 32>}, {pipeline_mode = #tpu.pipeline_mode<synchronous>, transform_indices = @transform_2, window_bounds = array<i64: 1, 32>}, {pipeline_mode = #tpu.pipeline_mode<synchronous>, transform_indices = @transform_3, window_bounds = array<i64: 8, 32>}, {transform_indices = @transform_4, window_bounds = array<i64: 8, 8, 32>}]} {
    %c0 = arith.constant 0 : index
    %c0_0 = arith.constant 0 : index
    %c0_1 = arith.constant 0 : index
    %0 = vector.load %arg1[%c0, %c0_0, %c0_1] : memref<8x8x4xf32, #tpu.memory_space<vmem>>, vector<8x8x4xf32>
    %1 = vector.shape_cast %0 : vector<8x8x4xf32> to vector<64x4xf32>
    %2 = arith.truncf %1 : vector<64x4xf32> to vector<64x4xbf16>
    %c0_2 = arith.constant 0 : index
    %c0_3 = arith.constant 0 : index
    %3 = vector.load %arg2[%c0_2, %c0_3] : memref<4x32xbf16, #tpu.memory_space<vmem>>, vector<4x32xbf16>
    %cst = arith.constant dense<0.000000e+00> : vector<64x32xf32>
    %4 = tpu.matmul %2, %3, %cst {dimension_numbers = #tpu.dot_dimension_numbers<[1], [0], [0], [1], [0, 0, 1, 1], [], []>} : vector<64x4xbf16>, vector<4x32xbf16>, vector<64x32xf32> -> vector<64x32xf32>
    %c0_4 = arith.constant 0 : index
    %c0_5 = arith.constant 0 : index
    %5 = vector.load %arg3[%c0_4, %c0_5] : memref<1x32xf32, #tpu.memory_space<vmem>>, vector<1x32xf32>
    %6 = vector.broadcast %5 : vector<1x32xf32> to vector<64x32xf32>
    %7 = arith.addf %4, %6 : vector<64x32xf32>
    %8 = vector.shape_cast %7 : vector<64x32xf32> to vector<8x8x32xf32>
    %c0_6 = arith.constant 0 : index
    %c0_7 = arith.constant 0 : index
    %9 = vector.load %arg4[%c0_6, %c0_7] : memref<8x32xf32, #tpu.memory_space<vmem>>, vector<8x32xf32>
    %10 = vector.shape_cast %9 : vector<8x32xf32> to vector<1x8x32xf32>
    %11 = vector.broadcast %10 : vector<1x8x32xf32> to vector<8x8x32xf32>
    %12 = arith.addf %8, %11 : vector<8x8x32xf32>
    %c0_8 = arith.constant 0 : index
    %c0_9 = arith.constant 0 : index
    %c0_10 = arith.constant 0 : index
    %13 = vector.load %arg5[%c0_8, %c0_9, %c0_10] : memref<8x8x32xf32, #tpu.memory_space<vmem>>, vector<8x8x32xf32>
    tpu.vector_store %arg5[%c0_8, %c0_9, %c0_10], %12 {strides = array<i32>} : memref<8x8x32xf32, #tpu.memory_space<vmem>>, vector<8x8x32xf32>,
    return
  }
  func.func @transform_0(%arg0: i32) -> (i32, i32, i32) {
    %c0_i32 = arith.constant 0 : i32
    %c0_i32_0 = arith.constant 0 : i32
    %c0_i32_1 = arith.constant 0 : i32
    return %arg0, %c0_i32, %c0_i32_0 : i32, i32, i32
  }
  func.func @transform_1(%arg0: i32) -> (i32, i32) {
    %c0_i32 = arith.constant 0 : i32
    %c0_i32_0 = arith.constant 0 : i32
    %c0_i32_1 = arith.constant 0 : i32
    return %c0_i32, %c0_i32_0 : i32, i32
  }
  func.func @transform_2(%arg0: i32) -> (i32, i32) {
    %c0_i32 = arith.constant 0 : i32
    %c0_i32_0 = arith.constant 0 : i32
    %c0_i32_1 = arith.constant 0 : i32
    return %c0_i32, %c0_i32_0 : i32, i32
  }
  func.func @transform_3(%arg0: i32) -> (i32, i32) {
    %c0_i32 = arith.constant 0 : i32
    %c0_i32_0 = arith.constant 0 : i32
    %c0_i32_1 = arith.constant 0 : i32
    return %c0_i32, %c0_i32_0 : i32, i32
  }
  func.func @transform_4(%arg0: i32) -> (i32, i32, i32) {
    %c0_i32 = arith.constant 0 : i32
    %c0_i32_0 = arith.constant 0 : i32
    %c0_i32_1 = arith.constant 0 : i32
    return %arg0, %c0_i32, %c0_i32_0 : i32, i32, i32
  }
}

module attributes {stable_mosaic.version = 11 : i64} {
  func.func @_encoder_stack_kernel(%arg0: i32, %arg1: memref<8x8x32xf32, #tpu.memory_space<any>>, %arg2: memref<1x32x96xbf16, #tpu.memory_space<vmem>>, %arg3: memref<1x1x96xf32, #tpu.memory_space<vmem>>, %arg4: memref<1x32x32xbf16, #tpu.memory_space<vmem>>, %arg5: memref<1x1x32xf32, #tpu.memory_space<vmem>>, %arg6: memref<1x1x32xf32, #tpu.memory_space<vmem>>, %arg7: memref<1x1x32xf32, #tpu.memory_space<vmem>>, %arg8: memref<1x32x64xbf16, #tpu.memory_space<vmem>>, %arg9: memref<1x1x64xf32, #tpu.memory_space<vmem>>, %arg10: memref<1x64x32xbf16, #tpu.memory_space<vmem>>, %arg11: memref<1x1x32xf32, #tpu.memory_space<vmem>>, %arg12: memref<1x1x32xf32, #tpu.memory_space<vmem>>, %arg13: memref<1x1x32xf32, #tpu.memory_space<vmem>>, %arg14: memref<8x8x32xf32, #tpu.memory_space<vmem>>, %arg15: memref<8x4x8x8xf32, #tpu.memory_space<vmem>>, %arg16: memref<4x8x8x8xf32, #tpu.memory_space<vmem>>, %arg17: memref<!tpu.dma_semaphore, #tpu.memory_space<semaphore_mem>>) attributes {dimension_semantics = [#tpu.dimension_semantics<arbitrary>], iteration_bounds = array<i64: 2>, scalar_prefetch = 0 : i64, scratch_operands = 2 : i64, tpu.core_type = #tpu.core_type<tc>, window_params = [{}, {transform_indices = @transform_1, window_bounds = array<i64: 1, 32, 96>}, {transform_indices = @transform_2, window_bounds = array<i64: 1, 1, 96>}, {transform_indices = @transform_3, window_bounds = array<i64: 1, 32, 32>}, {transform_indices = @transform_4, window_bounds = array<i64: 1, 1, 32>}, {transform_indices = @transform_5, window_bounds = array<i64: 1, 1, 32>}, {transform_indices = @transform_6, window_bounds = array<i64: 1, 1, 32>}, {transform_indices = @transform_7, window_bounds = array<i64: 1, 32, 64>}, {transform_indices = @transform_8, window_bounds = array<i64: 1, 1, 64>}, {transform_indices = @transform_9, window_bounds = array<i64: 1, 64, 32>}, {transform_indices = @transform_10, window_bounds = array<i64: 1, 1, 32>}, {transform_indices = @transform_11, window_bounds = array<i64: 1, 1, 32>}, {transform_indices = @transform_12, window_bounds = array<i64: 1, 1, 32>}, {pipeline_mode = #tpu.pipeline_mode<synchronous>, transform_indices = @transform_13, window_bounds = array<i64: 8, 8, 32>}, {pipeline_mode = #tpu.pipeline_mode<synchronous>, transform_indices = @transform_14, window_bounds = array<i64: 8, 4, 8, 8>}]} {
    %c1_i32 = arith.constant 1 : i32
    %0 = arith.cmpi eq, %arg0, %c1_i32 : i32
    %c0_i32 = arith.constant 0 : i32
    %1 = arith.cmpi eq, %arg0, %c0_i32 : i32
    %2 = arith.extui %1 : i1 to i32
    %c0_i32_0 = arith.constant 0 : i32
    %3 = arith.cmpi ne, %2, %c0_i32_0 : i32
    scf.if %3 {
      tpu.enqueue_dma source(%arg1 : memref<8x8x32xf32, #tpu.memory_space<any>>) target(%arg14 : memref<8x8x32xf32, #tpu.memory_space<vmem>>) target_semaphore(%arg17 : memref<!tpu.dma_semaphore, #tpu.memory_space<semaphore_mem>>)
      tpu.wait_dma2 semaphore(%arg17 : memref<!tpu.dma_semaphore, #tpu.memory_space<semaphore_mem>>) src(%arg1 : memref<8x8x32xf32, #tpu.memory_space<any>>) dst(%arg14 : memref<8x8x32xf32, #tpu.memory_space<vmem>>)
      %cst_109 = arith.constant 0.000000e+00 : f32
      %225 = vector.broadcast %cst_109 : f32 to vector<4x8x8x8xf32>
      %c0_110 = arith.constant 0 : index
      %c0_111 = arith.constant 0 : index
      %c0_112 = arith.constant 0 : index
      %c0_113 = arith.constant 0 : index
      %226 = vector.load %arg16[%c0_110, %c0_111, %c0_112, %c0_113] : memref<4x8x8x8xf32, #tpu.memory_space<vmem>>, vector<4x8x8x8xf32>
      tpu.vector_store %arg16[%c0_110, %c0_111, %c0_112, %c0_113], %225 {strides = array<i32>} : memref<4x8x8x8xf32, #tpu.memory_space<vmem>>, vector<4x8x8x8xf32>,
    } else {
    }
    %c0 = arith.constant 0 : index
    %c0_1 = arith.constant 0 : index
    %c0_2 = arith.constant 0 : index
    %4 = vector.load %arg14[%c0, %c0_1, %c0_2] : memref<8x8x32xf32, #tpu.memory_space<vmem>>, vector<8x8x32xf32>
    %5 = vector.shape_cast %4 : vector<8x8x32xf32> to vector<64x32xf32>
    %6 = arith.truncf %5 : vector<64x32xf32> to vector<64x32xbf16>
    %c0_3 = arith.constant 0 : index
    %c0_4 = arith.constant 0 : index
    %c0_5 = arith.constant 0 : index
    %7 = vector.load %arg2[%c0_3, %c0_4, %c0_5] : memref<1x32x96xbf16, #tpu.memory_space<vmem>>, vector<1x32x96xbf16>
    %8 = vector.shape_cast %7 : vector<1x32x96xbf16> to vector<32x96xbf16>
    %cst = arith.constant dense<0.000000e+00> : vector<64x96xf32>
    %9 = tpu.matmul %6, %8, %cst {dimension_numbers = #tpu.dot_dimension_numbers<[1], [0], [0], [1], [0, 0, 1, 1], [], []>} : vector<64x32xbf16>, vector<32x96xbf16>, vector<64x96xf32> -> vector<64x96xf32>
    %c0_6 = arith.constant 0 : index
    %c0_7 = arith.constant 0 : index
    %c0_8 = arith.constant 0 : index
    %10 = vector.load %arg3[%c0_6, %c0_7, %c0_8] : memref<1x1x96xf32, #tpu.memory_space<vmem>>, vector<1x1x96xf32>
    %11 = vector.shape_cast %10 : vector<1x1x96xf32> to vector<1x96xf32>
    %12 = vector.broadcast %11 : vector<1x96xf32> to vector<64x96xf32>
    %13 = arith.addf %9, %12 : vector<64x96xf32>
    %14 = arith.truncf %13 : vector<64x96xf32> to vector<64x96xbf16>
    %15 = vector.extract_strided_slice %14 {offsets = [0, 0], sizes = [64, 32], strides = [1, 1]} : vector<64x96xbf16> to vector<64x32xbf16>
    %16 = vector.shape_cast %15 : vector<64x32xbf16> to vector<8x8x32xbf16>
    %17 = vector.extract_strided_slice %14 {offsets = [0, 32], sizes = [64, 32], strides = [1, 1]} : vector<64x96xbf16> to vector<64x32xbf16>
    %18 = vector.shape_cast %17 : vector<64x32xbf16> to vector<8x8x32xbf16>
    %19 = vector.extract_strided_slice %14 {offsets = [0, 64], sizes = [64, 32], strides = [1, 1]} : vector<64x96xbf16> to vector<64x32xbf16>
    %20 = vector.shape_cast %19 : vector<64x32xbf16> to vector<8x8x32xbf16>
    %c0_9 = arith.constant 0 : index
    %c0_10 = arith.constant 0 : index
    %c0_11 = arith.constant 0 : index
    %21 = vector.load %arg4[%c0_9, %c0_10, %c0_11] : memref<1x32x32xbf16, #tpu.memory_space<vmem>>, vector<1x32x32xbf16>
    %22 = vector.shape_cast %21 : vector<1x32x32xbf16> to vector<32x32xbf16>
    %cst_12 = arith.constant 0.000000e+00 : f32
    %23 = vector.broadcast %cst_12 : f32 to vector<64x32xf32>
    %24 = vector.extract_strided_slice %16 {offsets = [0, 0, 0], sizes = [8, 8, 8], strides = [1, 1, 1]} : vector<8x8x32xbf16> to vector<8x8x8xbf16>
    %25 = vector.extract_strided_slice %18 {offsets = [0, 0, 0], sizes = [8, 8, 8], strides = [1, 1, 1]} : vector<8x8x32xbf16> to vector<8x8x8xbf16>
    "tpu.trace_start"() <{level = 10 : i32, message = "bqd,bkd->bqk"}> : () -> ()
    %cst_13 = arith.constant dense<0.000000e+00> : vector<8x8x8xf32>
    %26 = tpu.matmul %24, %25, %cst_13 {dimension_numbers = #tpu.dot_dimension_numbers<[2], [2], [1], [1], [0, 0, 0, 1, 1, 1], [0], [0]>} : vector<8x8x8xbf16>, vector<8x8x8xbf16>, vector<8x8x8xf32> -> vector<8x8x8xf32>
    "tpu.trace_stop"() : () -> ()
    %c0_14 = arith.constant 0 : index
    %c0_15 = arith.constant 0 : index
    %c0_16 = arith.constant 0 : index
    %c0_17 = arith.constant 0 : index
    %27 = vector.load %arg16[%c0_14, %c0_15, %c0_16, %c0_17] : memref<4x8x8x8xf32, #tpu.memory_space<vmem>>, vector<1x8x8x8xf32>
    %28 = vector.shape_cast %27 : vector<1x8x8x8xf32> to vector<8x8x8xf32>
    %29 = arith.addf %26, %28 : vector<8x8x8xf32>
    %c0_18 = arith.constant 0 : index
    %c0_19 = arith.constant 0 : index
    %c0_20 = arith.constant 0 : index
    %c0_21 = arith.constant 0 : index
    %30 = vector.load %arg16[%c0_18, %c0_19, %c0_20, %c0_21] : memref<4x8x8x8xf32, #tpu.memory_space<vmem>>, vector<1x8x8x8xf32>
    %31 = vector.shape_cast %30 : vector<1x8x8x8xf32> to vector<8x8x8xf32>
    %32 = vector.shape_cast %29 : vector<8x8x8xf32> to vector<1x8x8x8xf32>
    tpu.vector_store %arg16[%c0_18, %c0_19, %c0_20, %c0_21], %32 {strides = array<i32>} : memref<4x8x8x8xf32, #tpu.memory_space<vmem>>, vector<1x8x8x8xf32>,
    %cst_22 = arith.constant dense<0xFF800000> : vector<8x8xf32>
    %33 = vector.multi_reduction <maximumf>, %29, %cst_22 [2] : vector<8x8x8xf32> to vector<8x8xf32>
    %34 = vector.shape_cast %33 : vector<8x8xf32> to vector<8x8x1xf32>
    %35 = vector.broadcast %34 : vector<8x8x1xf32> to vector<8x8x8xf32>
    %36 = arith.subf %29, %35 : vector<8x8x8xf32>
    %37 = math.exp %36 : vector<8x8x8xf32>
    %cst_23 = arith.constant dense<0.000000e+00> : vector<8x8xf32>
    %38 = vector.multi_reduction <add>, %37, %cst_23 [2] : vector<8x8x8xf32> to vector<8x8xf32>
    %39 = vector.shape_cast %38 : vector<8x8xf32> to vector<8x8x1xf32>
    %40 = vector.broadcast %39 : vector<8x8x1xf32> to vector<8x8x8xf32>
    %41 = arith.divf %37, %40 : vector<8x8x8xf32>
    %42 = arith.truncf %41 : vector<8x8x8xf32> to vector<8x8x8xbf16>
    %43 = vector.extract_strided_slice %20 {offsets = [0, 0, 0], sizes = [8, 8, 8], strides = [1, 1, 1]} : vector<8x8x32xbf16> to vector<8x8x8xbf16>
    "tpu.trace_start"() <{level = 10 : i32, message = "bqk,bkd->bqd"}> : () -> ()
    %cst_24 = arith.constant dense<0.000000e+00> : vector<8x8x8xf32>
    %44 = tpu.matmul %42, %43, %cst_24 {dimension_numbers = #tpu.dot_dimension_numbers<[2], [1], [1], [2], [0, 0, 0, 1, 1, 2], [0], [0]>} : vector<8x8x8xbf16>, vector<8x8x8xbf16>, vector<8x8x8xf32> -> vector<8x8x8xf32>
    "tpu.trace_stop"() : () -> ()
    %45 = vector.shape_cast %44 : vector<8x8x8xf32> to vector<64x8xf32>
    %46 = arith.truncf %45 : vector<64x8xf32> to vector<64x8xbf16>
    %47 = vector.extract_strided_slice %22 {offsets = [0, 0], sizes = [8, 32], strides = [1, 1]} : vector<32x32xbf16> to vector<8x32xbf16>
    %cst_25 = arith.constant dense<0.000000e+00> : vector<64x32xf32>
    %48 = tpu.matmul %46, %47, %cst_25 {dimension_numbers = #tpu.dot_dimension_numbers<[1], [0], [0], [1], [0, 0, 1, 1], [], []>} : vector<64x8xbf16>, vector<8x32xbf16>, vector<64x32xf32> -> vector<64x32xf32>
    %49 = arith.addf %23, %48 : vector<64x32xf32>
    %50 = vector.extract_strided_slice %16 {offsets = [0, 0, 8], sizes = [8, 8, 8], strides = [1, 1, 1]} : vector<8x8x32xbf16> to vector<8x8x8xbf16>
    %51 = vector.extract_strided_slice %18 {offsets = [0, 0, 8], sizes = [8, 8, 8], strides = [1, 1, 1]} : vector<8x8x32xbf16> to vector<8x8x8xbf16>
    "tpu.trace_start"() <{level = 10 : i32, message = "bqd,bkd->bqk"}> : () -> ()
    %cst_26 = arith.constant dense<0.000000e+00> : vector<8x8x8xf32>
    %52 = tpu.matmul %50, %51, %cst_26 {dimension_numbers = #tpu.dot_dimension_numbers<[2], [2], [1], [1], [0, 0, 0, 1, 1, 1], [0], [0]>} : vector<8x8x8xbf16>, vector<8x8x8xbf16>, vector<8x8x8xf32> -> vector<8x8x8xf32>
    "tpu.trace_stop"() : () -> ()
    %c1 = arith.constant 1 : index
    %c0_27 = arith.constant 0 : index
    %c0_28 = arith.constant 0 : index
    %c0_29 = arith.constant 0 : index
    %53 = vector.load %arg16[%c1, %c0_27, %c0_28, %c0_29] : memref<4x8x8x8xf32, #tpu.memory_space<vmem>>, vector<1x8x8x8xf32>
    %54 = vector.shape_cast %53 : vector<1x8x8x8xf32> to vector<8x8x8xf32>
    %55 = arith.addf %52, %54 : vector<8x8x8xf32>
    %c1_30 = arith.constant 1 : index
    %c0_31 = arith.constant 0 : index
    %c0_32 = arith.constant 0 : index
    %c0_33 = arith.constant 0 : index
    %56 = vector.load %arg16[%c1_30, %c0_31, %c0_32, %c0_33] : memref<4x8x8x8xf32, #tpu.memory_space<vmem>>, vector<1x8x8x8xf32>
    %57 = vector.shape_cast %56 : vector<1x8x8x8xf32> to vector<8x8x8xf32>
    %58 = vector.shape_cast %55 : vector<8x8x8xf32> to vector<1x8x8x8xf32>
    tpu.vector_store %arg16[%c1_30, %c0_31, %c0_32, %c0_33], %58 {strides = array<i32>} : memref<4x8x8x8xf32, #tpu.memory_space<vmem>>, vector<1x8x8x8xf32>,
    %cst_34 = arith.constant dense<0xFF800000> : vector<8x8xf32>
    %59 = vector.multi_reduction <maximumf>, %55, %cst_34 [2] : vector<8x8x8xf32> to vector<8x8xf32>
    %60 = vector.shape_cast %59 : vector<8x8xf32> to vector<8x8x1xf32>
    %61 = vector.broadcast %60 : vector<8x8x1xf32> to vector<8x8x8xf32>
    %62 = arith.subf %55, %61 : vector<8x8x8xf32>
    %63 = math.exp %62 : vector<8x8x8xf32>
    %cst_35 = arith.constant dense<0.000000e+00> : vector<8x8xf32>
    %64 = vector.multi_reduction <add>, %63, %cst_35 [2] : vector<8x8x8xf32> to vector<8x8xf32>
    %65 = vector.shape_cast %64 : vector<8x8xf32> to vector<8x8x1xf32>
    %66 = vector.broadcast %65 : vector<8x8x1xf32> to vector<8x8x8xf32>
    %67 = arith.divf %63, %66 : vector<8x8x8xf32>
    %68 = arith.truncf %67 : vector<8x8x8xf32> to vector<8x8x8xbf16>
    %69 = vector.extract_strided_slice %20 {offsets = [0, 0, 8], sizes = [8, 8, 8], strides = [1, 1, 1]} : vector<8x8x32xbf16> to vector<8x8x8xbf16>
    "tpu.trace_start"() <{level = 10 : i32, message = "bqk,bkd->bqd"}> : () -> ()
    %cst_36 = arith.constant dense<0.000000e+00> : vector<8x8x8xf32>
    %70 = tpu.matmul %68, %69, %cst_36 {dimension_numbers = #tpu.dot_dimension_numbers<[2], [1], [1], [2], [0, 0, 0, 1, 1, 2], [0], [0]>} : vector<8x8x8xbf16>, vector<8x8x8xbf16>, vector<8x8x8xf32> -> vector<8x8x8xf32>
    "tpu.trace_stop"() : () -> ()
    %71 = vector.shape_cast %70 : vector<8x8x8xf32> to vector<64x8xf32>
    %72 = arith.truncf %71 : vector<64x8xf32> to vector<64x8xbf16>
    %73 = vector.extract_strided_slice %22 {offsets = [8, 0], sizes = [8, 32], strides = [1, 1]} : vector<32x32xbf16> to vector<8x32xbf16>
    %cst_37 = arith.constant dense<0.000000e+00> : vector<64x32xf32>
    %74 = tpu.matmul %72, %73, %cst_37 {dimension_numbers = #tpu.dot_dimension_numbers<[1], [0], [0], [1], [0, 0, 1, 1], [], []>} : vector<64x8xbf16>, vector<8x32xbf16>, vector<64x32xf32> -> vector<64x32xf32>
    %75 = arith.addf %49, %74 : vector<64x32xf32>
    %76 = vector.extract_strided_slice %16 {offsets = [0, 0, 16], sizes = [8, 8, 8], strides = [1, 1, 1]} : vector<8x8x32xbf16> to vector<8x8x8xbf16>
    %77 = vector.extract_strided_slice %18 {offsets = [0, 0, 16], sizes = [8, 8, 8], strides = [1, 1, 1]} : vector<8x8x32xbf16> to vector<8x8x8xbf16>
    "tpu.trace_start"() <{level = 10 : i32, message = "bqd,bkd->bqk"}> : () -> ()
    %cst_38 = arith.constant dense<0.000000e+00> : vector<8x8x8xf32>
    %78 = tpu.matmul %76, %77, %cst_38 {dimension_numbers = #tpu.dot_dimension_numbers<[2], [2], [1], [1], [0, 0, 0, 1, 1, 1], [0], [0]>} : vector<8x8x8xbf16>, vector<8x8x8xbf16>, vector<8x8x8xf32> -> vector<8x8x8xf32>
    "tpu.trace_stop"() : () -> ()
    %c2 = arith.constant 2 : index
    %c0_39 = arith.constant 0 : index
    %c0_40 = arith.constant 0 : index
    %c0_41 = arith.constant 0 : index
    %79 = vector.load %arg16[%c2, %c0_39, %c0_40, %c0_41] : memref<4x8x8x8xf32, #tpu.memory_space<vmem>>, vector<1x8x8x8xf32>
    %80 = vector.shape_cast %79 : vector<1x8x8x8xf32> to vector<8x8x8xf32>
    %81 = arith.addf %78, %80 : vector<8x8x8xf32>
    %c2_42 = arith.constant 2 : index
    %c0_43 = arith.constant 0 : index
    %c0_44 = arith.constant 0 : index
    %c0_45 = arith.constant 0 : index
    %82 = vector.load %arg16[%c2_42, %c0_43, %c0_44, %c0_45] : memref<4x8x8x8xf32, #tpu.memory_space<vmem>>, vector<1x8x8x8xf32>
    %83 = vector.shape_cast %82 : vector<1x8x8x8xf32> to vector<8x8x8xf32>
    %84 = vector.shape_cast %81 : vector<8x8x8xf32> to vector<1x8x8x8xf32>
    tpu.vector_store %arg16[%c2_42, %c0_43, %c0_44, %c0_45], %84 {strides = array<i32>} : memref<4x8x8x8xf32, #tpu.memory_space<vmem>>, vector<1x8x8x8xf32>,
    %cst_46 = arith.constant dense<0xFF800000> : vector<8x8xf32>
    %85 = vector.multi_reduction <maximumf>, %81, %cst_46 [2] : vector<8x8x8xf32> to vector<8x8xf32>
    %86 = vector.shape_cast %85 : vector<8x8xf32> to vector<8x8x1xf32>
    %87 = vector.broadcast %86 : vector<8x8x1xf32> to vector<8x8x8xf32>
    %88 = arith.subf %81, %87 : vector<8x8x8xf32>
    %89 = math.exp %88 : vector<8x8x8xf32>
    %cst_47 = arith.constant dense<0.000000e+00> : vector<8x8xf32>
    %90 = vector.multi_reduction <add>, %89, %cst_47 [2] : vector<8x8x8xf32> to vector<8x8xf32>
    %91 = vector.shape_cast %90 : vector<8x8xf32> to vector<8x8x1xf32>
    %92 = vector.broadcast %91 : vector<8x8x1xf32> to vector<8x8x8xf32>
    %93 = arith.divf %89, %92 : vector<8x8x8xf32>
    %94 = arith.truncf %93 : vector<8x8x8xf32> to vector<8x8x8xbf16>
    %95 = vector.extract_strided_slice %20 {offsets = [0, 0, 16], sizes = [8, 8, 8], strides = [1, 1, 1]} : vector<8x8x32xbf16> to vector<8x8x8xbf16>
    "tpu.trace_start"() <{level = 10 : i32, message = "bqk,bkd->bqd"}> : () -> ()
    %cst_48 = arith.constant dense<0.000000e+00> : vector<8x8x8xf32>
    %96 = tpu.matmul %94, %95, %cst_48 {dimension_numbers = #tpu.dot_dimension_numbers<[2], [1], [1], [2], [0, 0, 0, 1, 1, 2], [0], [0]>} : vector<8x8x8xbf16>, vector<8x8x8xbf16>, vector<8x8x8xf32> -> vector<8x8x8xf32>
    "tpu.trace_stop"() : () -> ()
    %97 = vector.shape_cast %96 : vector<8x8x8xf32> to vector<64x8xf32>
    %98 = arith.truncf %97 : vector<64x8xf32> to vector<64x8xbf16>
    %99 = vector.extract_strided_slice %22 {offsets = [16, 0], sizes = [8, 32], strides = [1, 1]} : vector<32x32xbf16> to vector<8x32xbf16>
    %cst_49 = arith.constant dense<0.000000e+00> : vector<64x32xf32>
    %100 = tpu.matmul %98, %99, %cst_49 {dimension_numbers = #tpu.dot_dimension_numbers<[1], [0], [0], [1], [0, 0, 1, 1], [], []>} : vector<64x8xbf16>, vector<8x32xbf16>, vector<64x32xf32> -> vector<64x32xf32>
    %101 = arith.addf %75, %100 : vector<64x32xf32>
    %102 = vector.extract_strided_slice %16 {offsets = [0, 0, 24], sizes = [8, 8, 8], strides = [1, 1, 1]} : vector<8x8x32xbf16> to vector<8x8x8xbf16>
    %103 = vector.extract_strided_slice %18 {offsets = [0, 0, 24], sizes = [8, 8, 8], strides = [1, 1, 1]} : vector<8x8x32xbf16> to vector<8x8x8xbf16>
    "tpu.trace_start"() <{level = 10 : i32, message = "bqd,bkd->bqk"}> : () -> ()
    %cst_50 = arith.constant dense<0.000000e+00> : vector<8x8x8xf32>
    %104 = tpu.matmul %102, %103, %cst_50 {dimension_numbers = #tpu.dot_dimension_numbers<[2], [2], [1], [1], [0, 0, 0, 1, 1, 1], [0], [0]>} : vector<8x8x8xbf16>, vector<8x8x8xbf16>, vector<8x8x8xf32> -> vector<8x8x8xf32>
    "tpu.trace_stop"() : () -> ()
    %c3 = arith.constant 3 : index
    %c0_51 = arith.constant 0 : index
    %c0_52 = arith.constant 0 : index
    %c0_53 = arith.constant 0 : index
    %105 = vector.load %arg16[%c3, %c0_51, %c0_52, %c0_53] : memref<4x8x8x8xf32, #tpu.memory_space<vmem>>, vector<1x8x8x8xf32>
    %106 = vector.shape_cast %105 : vector<1x8x8x8xf32> to vector<8x8x8xf32>
    %107 = arith.addf %104, %106 : vector<8x8x8xf32>
    %c3_54 = arith.constant 3 : index
    %c0_55 = arith.constant 0 : index
    %c0_56 = arith.constant 0 : index
    %c0_57 = arith.constant 0 : index
    %108 = vector.load %arg16[%c3_54, %c0_55, %c0_56, %c0_57] : memref<4x8x8x8xf32, #tpu.memory_space<vmem>>, vector<1x8x8x8xf32>
    %109 = vector.shape_cast %108 : vector<1x8x8x8xf32> to vector<8x8x8xf32>
    %110 = vector.shape_cast %107 : vector<8x8x8xf32> to vector<1x8x8x8xf32>
    tpu.vector_store %arg16[%c3_54, %c0_55, %c0_56, %c0_57], %110 {strides = array<i32>} : memref<4x8x8x8xf32, #tpu.memory_space<vmem>>, vector<1x8x8x8xf32>,
    %cst_58 = arith.constant dense<0xFF800000> : vector<8x8xf32>
    %111 = vector.multi_reduction <maximumf>, %107, %cst_58 [2] : vector<8x8x8xf32> to vector<8x8xf32>
    %112 = vector.shape_cast %111 : vector<8x8xf32> to vector<8x8x1xf32>
    %113 = vector.broadcast %112 : vector<8x8x1xf32> to vector<8x8x8xf32>
    %114 = arith.subf %107, %113 : vector<8x8x8xf32>
    %115 = math.exp %114 : vector<8x8x8xf32>
    %cst_59 = arith.constant dense<0.000000e+00> : vector<8x8xf32>
    %116 = vector.multi_reduction <add>, %115, %cst_59 [2] : vector<8x8x8xf32> to vector<8x8xf32>
    %117 = vector.shape_cast %116 : vector<8x8xf32> to vector<8x8x1xf32>
    %118 = vector.broadcast %117 : vector<8x8x1xf32> to vector<8x8x8xf32>
    %119 = arith.divf %115, %118 : vector<8x8x8xf32>
    %120 = arith.truncf %119 : vector<8x8x8xf32> to vector<8x8x8xbf16>
    %121 = vector.extract_strided_slice %20 {offsets = [0, 0, 24], sizes = [8, 8, 8], strides = [1, 1, 1]} : vector<8x8x32xbf16> to vector<8x8x8xbf16>
    "tpu.trace_start"() <{level = 10 : i32, message = "bqk,bkd->bqd"}> : () -> ()
    %cst_60 = arith.constant dense<0.000000e+00> : vector<8x8x8xf32>
    %122 = tpu.matmul %120, %121, %cst_60 {dimension_numbers = #tpu.dot_dimension_numbers<[2], [1], [1], [2], [0, 0, 0, 1, 1, 2], [0], [0]>} : vector<8x8x8xbf16>, vector<8x8x8xbf16>, vector<8x8x8xf32> -> vector<8x8x8xf32>
    "tpu.trace_stop"() : () -> ()
    %123 = vector.shape_cast %122 : vector<8x8x8xf32> to vector<64x8xf32>
    %124 = arith.truncf %123 : vector<64x8xf32> to vector<64x8xbf16>
    %125 = vector.extract_strided_slice %22 {offsets = [24, 0], sizes = [8, 32], strides = [1, 1]} : vector<32x32xbf16> to vector<8x32xbf16>
    %cst_61 = arith.constant dense<0.000000e+00> : vector<64x32xf32>
    %126 = tpu.matmul %124, %125, %cst_61 {dimension_numbers = #tpu.dot_dimension_numbers<[1], [0], [0], [1], [0, 0, 1, 1], [], []>} : vector<64x8xbf16>, vector<8x32xbf16>, vector<64x32xf32> -> vector<64x32xf32>
    %127 = arith.addf %101, %126 : vector<64x32xf32>
    %128 = arith.extui %0 : i1 to i32
    %c0_i32_62 = arith.constant 0 : i32
    %129 = arith.cmpi ne, %128, %c0_i32_62 : i32
    scf.if %129 {
      %225 = vector.shape_cast %41 : vector<8x8x8xf32> to vector<8x1x8x8xf32>
      %226 = vector.shape_cast %67 : vector<8x8x8xf32> to vector<8x1x8x8xf32>
      %227 = vector.shape_cast %93 : vector<8x8x8xf32> to vector<8x1x8x8xf32>
      %228 = vector.shape_cast %119 : vector<8x8x8xf32> to vector<8x1x8x8xf32>
      %229 = tpu.concatenate %225, %226, %227, %228 in 1 : vector<8x1x8x8xf32>, vector<8x1x8x8xf32>, vector<8x1x8x8xf32>, vector<8x1x8x8xf32> -> vector<8x4x8x8xf32>
      %c0_109 = arith.constant 0 : index
      %c0_110 = arith.constant 0 : index
      %c0_111 = arith.constant 0 : index
      %c0_112 = arith.constant 0 : index
      %230 = vector.load %arg15[%c0_109, %c0_110, %c0_111, %c0_112] : memref<8x4x8x8xf32, #tpu.memory_space<vmem>>, vector<8x4x8x8xf32>
      tpu.vector_store %arg15[%c0_109, %c0_110, %c0_111, %c0_112], %229 {strides = array<i32>} : memref<8x4x8x8xf32, #tpu.memory_space<vmem>>, vector<8x4x8x8xf32>,
    } else {
    }
    %c0_63 = arith.constant 0 : index
    %c0_64 = arith.constant 0 : index
    %c0_65 = arith.constant 0 : index
    %130 = vector.load %arg5[%c0_63, %c0_64, %c0_65] : memref<1x1x32xf32, #tpu.memory_space<vmem>>, vector<1x1x32xf32>
    %131 = vector.shape_cast %130 : vector<1x1x32xf32> to vector<1x32xf32>
    %132 = vector.broadcast %131 : vector<1x32xf32> to vector<64x32xf32>
    %133 = arith.addf %127, %132 : vector<64x32xf32>
    %134 = vector.shape_cast %133 : vector<64x32xf32> to vector<8x8x32xf32>
    %135 = arith.addf %4, %134 : vector<8x8x32xf32>
    %cst_66 = arith.constant dense<0.000000e+00> : vector<32xf32>
    %136 = vector.multi_reduction <add>, %135, %cst_66 [0, 1] : vector<8x8x32xf32> to vector<32xf32>
    %137 = vector.shape_cast %136 : vector<32xf32> to vector<1x1x32xf32>
    %cst_67 = arith.constant 6.400000e+01 : f32
    %138 = vector.broadcast %cst_67 : f32 to vector<1x1x32xf32>
    %139 = arith.divf %137, %138 : vector<1x1x32xf32>
    %140 = vector.broadcast %139 : vector<1x1x32xf32> to vector<8x8x32xf32>
    %141 = arith.subf %135, %140 : vector<8x8x32xf32>
    %142 = arith.mulf %141, %141 : vector<8x8x32xf32>
    %cst_68 = arith.constant dense<0.000000e+00> : vector<32xf32>
    %143 = vector.multi_reduction <add>, %142, %cst_68 [0, 1] : vector<8x8x32xf32> to vector<32xf32>
    %144 = vector.shape_cast %143 : vector<32xf32> to vector<1x1x32xf32>
    %cst_69 = arith.constant 6.400000e+01 : f32
    %145 = vector.broadcast %cst_69 : f32 to vector<1x1x32xf32>
    %146 = arith.divf %144, %145 : vector<1x1x32xf32>
    %147 = vector.broadcast %139 : vector<1x1x32xf32> to vector<8x8x32xf32>
    %148 = arith.subf %135, %147 : vector<8x8x32xf32>
    %cst_70 = arith.constant 9.99999974E-6 : f32
    %149 = vector.broadcast %cst_70 : f32 to vector<1x1x32xf32>
    %150 = arith.addf %146, %149 : vector<1x1x32xf32>
    %151 = math.rsqrt %150 : vector<1x1x32xf32>
    %152 = vector.broadcast %151 : vector<1x1x32xf32> to vector<8x8x32xf32>
    %153 = arith.mulf %148, %152 : vector<8x8x32xf32>
    %c0_71 = arith.constant 0 : index
    %c0_72 = arith.constant 0 : index
    %c0_73 = arith.constant 0 : index
    %154 = vector.load %arg6[%c0_71, %c0_72, %c0_73] : memref<1x1x32xf32, #tpu.memory_space<vmem>>, vector<1x1x32xf32>
    %155 = vector.shape_cast %154 : vector<1x1x32xf32> to vector<1x32xf32>
    %156 = vector.shape_cast %155 : vector<1x32xf32> to vector<1x1x32xf32>
    %157 = vector.broadcast %156 : vector<1x1x32xf32> to vector<8x8x32xf32>
    %158 = arith.mulf %153, %157 : vector<8x8x32xf32>
    %c0_74 = arith.constant 0 : index
    %c0_75 = arith.constant 0 : index
    %c0_76 = arith.constant 0 : index
    %159 = vector.load %arg7[%c0_74, %c0_75, %c0_76] : memref<1x1x32xf32, #tpu.memory_space<vmem>>, vector<1x1x32xf32>
    %160 = vector.shape_cast %159 : vector<1x1x32xf32> to vector<1x32xf32>
    %161 = vector.shape_cast %160 : vector<1x32xf32> to vector<1x1x32xf32>
    %162 = vector.broadcast %161 : vector<1x1x32xf32> to vector<8x8x32xf32>
    %163 = arith.addf %158, %162 : vector<8x8x32xf32>
    %164 = vector.shape_cast %163 : vector<8x8x32xf32> to vector<64x32xf32>
    %165 = arith.truncf %164 : vector<64x32xf32> to vector<64x32xbf16>
    %c0_77 = arith.constant 0 : index
    %c0_78 = arith.constant 0 : index
    %c0_79 = arith.constant 0 : index
    %166 = vector.load %arg8[%c0_77, %c0_78, %c0_79] : memref<1x32x64xbf16, #tpu.memory_space<vmem>>, vector<1x32x64xbf16>
    %167 = vector.shape_cast %166 : vector<1x32x64xbf16> to vector<32x64xbf16>
    %cst_80 = arith.constant dense<0.000000e+00> : vector<64x64xf32>
    %168 = tpu.matmul %165, %167, %cst_80 {dimension_numbers = #tpu.dot_dimension_numbers<[1], [0], [0], [1], [0, 0, 1, 1], [], []>} : vector<64x32xbf16>, vector<32x64xbf16>, vector<64x64xf32> -> vector<64x64xf32>
    %c0_81 = arith.constant 0 : index
    %c0_82 = arith.constant 0 : index
    %c0_83 = arith.constant 0 : index
    %169 = vector.load %arg9[%c0_81, %c0_82, %c0_83] : memref<1x1x64xf32, #tpu.memory_space<vmem>>, vector<1x1x64xf32>
    %170 = vector.shape_cast %169 : vector<1x1x64xf32> to vector<1x64xf32>
    %171 = vector.broadcast %170 : vector<1x64xf32> to vector<64x64xf32>
    %172 = arith.addf %168, %171 : vector<64x64xf32>
    %173 = arith.mulf %172, %172 : vector<64x64xf32>
    %174 = arith.mulf %172, %173 : vector<64x64xf32>
    %cst_84 = arith.constant 4.471500e-02 : f32
    %175 = vector.broadcast %cst_84 : f32 to vector<64x64xf32>
    %176 = arith.mulf %175, %174 : vector<64x64xf32>
    %177 = arith.addf %172, %176 : vector<64x64xf32>
    %cst_85 = arith.constant 0.797884583 : f32
    %178 = vector.broadcast %cst_85 : f32 to vector<64x64xf32>
    %179 = arith.mulf %178, %177 : vector<64x64xf32>
    %180 = math.tanh %179 : vector<64x64xf32>
    %cst_86 = arith.constant 1.000000e+00 : f32
    %181 = vector.broadcast %cst_86 : f32 to vector<64x64xf32>
    %182 = arith.addf %181, %180 : vector<64x64xf32>
    %cst_87 = arith.constant 5.000000e-01 : f32
    %183 = vector.broadcast %cst_87 : f32 to vector<64x64xf32>
    %184 = arith.mulf %183, %182 : vector<64x64xf32>
    %185 = arith.mulf %172, %184 : vector<64x64xf32>
    %186 = arith.truncf %185 : vector<64x64xf32> to vector<64x64xbf16>
    %c0_88 = arith.constant 0 : index
    %c0_89 = arith.constant 0 : index
    %c0_90 = arith.constant 0 : index
    %187 = vector.load %arg10[%c0_88, %c0_89, %c0_90] : memref<1x64x32xbf16, #tpu.memory_space<vmem>>, vector<1x64x32xbf16>
    %188 = vector.shape_cast %187 : vector<1x64x32xbf16> to vector<64x32xbf16>
    %cst_91 = arith.constant dense<0.000000e+00> : vector<64x32xf32>
    %189 = tpu.matmul %186, %188, %cst_91 {dimension_numbers = #tpu.dot_dimension_numbers<[1], [0], [0], [1], [0, 0, 1, 1], [], []>} : vector<64x64xbf16>, vector<64x32xbf16>, vector<64x32xf32> -> vector<64x32xf32>
    %c0_92 = arith.constant 0 : index
    %c0_93 = arith.constant 0 : index
    %c0_94 = arith.constant 0 : index
    %190 = vector.load %arg11[%c0_92, %c0_93, %c0_94] : memref<1x1x32xf32, #tpu.memory_space<vmem>>, vector<1x1x32xf32>
    %191 = vector.shape_cast %190 : vector<1x1x32xf32> to vector<1x32xf32>
    %192 = vector.broadcast %191 : vector<1x32xf32> to vector<64x32xf32>
    %193 = arith.addf %189, %192 : vector<64x32xf32>
    %194 = vector.shape_cast %193 : vector<64x32xf32> to vector<8x8x32xf32>
    %195 = arith.addf %163, %194 : vector<8x8x32xf32>
    %cst_95 = arith.constant dense<0.000000e+00> : vector<32xf32>
    %196 = vector.multi_reduction <add>, %195, %cst_95 [0, 1] : vector<8x8x32xf32> to vector<32xf32>
    %197 = vector.shape_cast %196 : vector<32xf32> to vector<1x1x32xf32>
    %cst_96 = arith.constant 6.400000e+01 : f32
    %198 = vector.broadcast %cst_96 : f32 to vector<1x1x32xf32>
    %199 = arith.divf %197, %198 : vector<1x1x32xf32>
    %200 = vector.broadcast %199 : vector<1x1x32xf32> to vector<8x8x32xf32>
    %201 = arith.subf %195, %200 : vector<8x8x32xf32>
    %202 = arith.mulf %201, %201 : vector<8x8x32xf32>
    %cst_97 = arith.constant dense<0.000000e+00> : vector<32xf32>
    %203 = vector.multi_reduction <add>, %202, %cst_97 [0, 1] : vector<8x8x32xf32> to vector<32xf32>
    %204 = vector.shape_cast %203 : vector<32xf32> to vector<1x1x32xf32>
    %cst_98 = arith.constant 6.400000e+01 : f32
    %205 = vector.broadcast %cst_98 : f32 to vector<1x1x32xf32>
    %206 = arith.divf %204, %205 : vector<1x1x32xf32>
    %207 = vector.broadcast %199 : vector<1x1x32xf32> to vector<8x8x32xf32>
    %208 = arith.subf %195, %207 : vector<8x8x32xf32>
    %cst_99 = arith.constant 9.99999974E-6 : f32
    %209 = vector.broadcast %cst_99 : f32 to vector<1x1x32xf32>
    %210 = arith.addf %206, %209 : vector<1x1x32xf32>
    %211 = math.rsqrt %210 : vector<1x1x32xf32>
    %212 = vector.broadcast %211 : vector<1x1x32xf32> to vector<8x8x32xf32>
    %213 = arith.mulf %208, %212 : vector<8x8x32xf32>
    %c0_100 = arith.constant 0 : index
    %c0_101 = arith.constant 0 : index
    %c0_102 = arith.constant 0 : index
    %214 = vector.load %arg12[%c0_100, %c0_101, %c0_102] : memref<1x1x32xf32, #tpu.memory_space<vmem>>, vector<1x1x32xf32>
    %215 = vector.shape_cast %214 : vector<1x1x32xf32> to vector<1x32xf32>
    %216 = vector.shape_cast %215 : vector<1x32xf32> to vector<1x1x32xf32>
    %217 = vector.broadcast %216 : vector<1x1x32xf32> to vector<8x8x32xf32>
    %218 = arith.mulf %213, %217 : vector<8x8x32xf32>
    %c0_103 = arith.constant 0 : index
    %c0_104 = arith.constant 0 : index
    %c0_105 = arith.constant 0 : index
    %219 = vector.load %arg13[%c0_103, %c0_104, %c0_105] : memref<1x1x32xf32, #tpu.memory_space<vmem>>, vector<1x1x32xf32>
    %220 = vector.shape_cast %219 : vector<1x1x32xf32> to vector<1x32xf32>
    %221 = vector.shape_cast %220 : vector<1x32xf32> to vector<1x1x32xf32>
    %222 = vector.broadcast %221 : vector<1x1x32xf32> to vector<8x8x32xf32>
    %223 = arith.addf %218, %222 : vector<8x8x32xf32>
    %c0_106 = arith.constant 0 : index
    %c0_107 = arith.constant 0 : index
    %c0_108 = arith.constant 0 : index
    %224 = vector.load %arg14[%c0_106, %c0_107, %c0_108] : memref<8x8x32xf32, #tpu.memory_space<vmem>>, vector<8x8x32xf32>
    tpu.vector_store %arg14[%c0_106, %c0_107, %c0_108], %223 {strides = array<i32>} : memref<8x8x32xf32, #tpu.memory_space<vmem>>, vector<8x8x32xf32>,
    return
  }
  func.func @transform_1(%arg0: i32) -> (i32, i32, i32) {
    %c0_i32 = arith.constant 0 : i32
    %c0_i32_0 = arith.constant 0 : i32
    %c0_i32_1 = arith.constant 0 : i32
    return %arg0, %c0_i32, %c0_i32_0 : i32, i32, i32
  }
  func.func @transform_2(%arg0: i32) -> (i32, i32, i32) {
    %c0_i32 = arith.constant 0 : i32
    %c0_i32_0 = arith.constant 0 : i32
    %c0_i32_1 = arith.constant 0 : i32
    return %arg0, %c0_i32, %c0_i32_0 : i32, i32, i32
  }
  func.func @transform_3(%arg0: i32) -> (i32, i32, i32) {
    %c0_i32 = arith.constant 0 : i32
    %c0_i32_0 = arith.constant 0 : i32
    %c0_i32_1 = arith.constant 0 : i32
    return %arg0, %c0_i32, %c0_i32_0 : i32, i32, i32
  }
  func.func @transform_4(%arg0: i32) -> (i32, i32, i32) {
    %c0_i32 = arith.constant 0 : i32
    %c0_i32_0 = arith.constant 0 : i32
    %c0_i32_1 = arith.constant 0 : i32
    return %arg0, %c0_i32, %c0_i32_0 : i32, i32, i32
  }
  func.func @transform_5(%arg0: i32) -> (i32, i32, i32) {
    %c0_i32 = arith.constant 0 : i32
    %c0_i32_0 = arith.constant 0 : i32
    %c0_i32_1 = arith.constant 0 : i32
    return %arg0, %c0_i32, %c0_i32_0 : i32, i32, i32
  }
  func.func @transform_6(%arg0: i32) -> (i32, i32, i32) {
    %c0_i32 = arith.constant 0 : i32
    %c0_i32_0 = arith.constant 0 : i32
    %c0_i32_1 = arith.constant 0 : i32
    return %arg0, %c0_i32, %c0_i32_0 : i32, i32, i32
  }
  func.func @transform_7(%arg0: i32) -> (i32, i32, i32) {
    %c0_i32 = arith.constant 0 : i32
    %c0_i32_0 = arith.constant 0 : i32
    %c0_i32_1 = arith.constant 0 : i32
    return %arg0, %c0_i32, %c0_i32_0 : i32, i32, i32
  }
  func.func @transform_8(%arg0: i32) -> (i32, i32, i32) {
    %c0_i32 = arith.constant 0 : i32
    %c0_i32_0 = arith.constant 0 : i32
    %c0_i32_1 = arith.constant 0 : i32
    return %arg0, %c0_i32, %c0_i32_0 : i32, i32, i32
  }
  func.func @transform_9(%arg0: i32) -> (i32, i32, i32) {
    %c0_i32 = arith.constant 0 : i32
    %c0_i32_0 = arith.constant 0 : i32
    %c0_i32_1 = arith.constant 0 : i32
    return %arg0, %c0_i32, %c0_i32_0 : i32, i32, i32
  }
  func.func @transform_10(%arg0: i32) -> (i32, i32, i32) {
    %c0_i32 = arith.constant 0 : i32
    %c0_i32_0 = arith.constant 0 : i32
    %c0_i32_1 = arith.constant 0 : i32
    return %arg0, %c0_i32, %c0_i32_0 : i32, i32, i32
  }
  func.func @transform_11(%arg0: i32) -> (i32, i32, i32) {
    %c0_i32 = arith.constant 0 : i32
    %c0_i32_0 = arith.constant 0 : i32
    %c0_i32_1 = arith.constant 0 : i32
    return %arg0, %c0_i32, %c0_i32_0 : i32, i32, i32
  }
  func.func @transform_12(%arg0: i32) -> (i32, i32, i32) {
    %c0_i32 = arith.constant 0 : i32
    %c0_i32_0 = arith.constant 0 : i32
    %c0_i32_1 = arith.constant 0 : i32
    return %arg0, %c0_i32, %c0_i32_0 : i32, i32, i32
  }
  func.func @transform_13(%arg0: i32) -> (i32, i32, i32) {
    %c0_i32 = arith.constant 0 : i32
    %c0_i32_0 = arith.constant 0 : i32
    %c0_i32_1 = arith.constant 0 : i32
    %c0_i32_2 = arith.constant 0 : i32
    return %c0_i32, %c0_i32_0, %c0_i32_1 : i32, i32, i32
  }
  func.func @transform_14(%arg0: i32) -> (i32, i32, i32, i32) {
    %c0_i32 = arith.constant 0 : i32
    %c0_i32_0 = arith.constant 0 : i32
    %c0_i32_1 = arith.constant 0 : i32
    %c0_i32_2 = arith.constant 0 : i32
    %c0_i32_3 = arith.constant 0 : i32
    return %c0_i32, %c0_i32_0, %c0_i32_1, %c0_i32_2 : i32, i32, i32, i32
  }
}

module attributes {stable_mosaic.version = 11 : i64} {
  func.func @_patch_embed_kernel(%arg0: i32, %arg1: memref<8x4x8xf32, #tpu.memory_space<vmem>>, %arg2: memref<8x32xbf16, #tpu.memory_space<vmem>>, %arg3: memref<1x32xf32, #tpu.memory_space<vmem>>, %arg4: memref<4x32xf32, #tpu.memory_space<vmem>>, %arg5: memref<8x4x32xf32, #tpu.memory_space<vmem>>) attributes {dimension_semantics = [#tpu.dimension_semantics<parallel>], iteration_bounds = array<i64: 1>, scalar_prefetch = 0 : i64, scratch_operands = 0 : i64, tpu.core_type = #tpu.core_type<tc>, window_params = [{transform_indices = @transform_0, window_bounds = array<i64: 8, 4, 8>}, {pipeline_mode = #tpu.pipeline_mode<synchronous>, transform_indices = @transform_1, window_bounds = array<i64: 8, 32>}, {pipeline_mode = #tpu.pipeline_mode<synchronous>, transform_indices = @transform_2, window_bounds = array<i64: 1, 32>}, {pipeline_mode = #tpu.pipeline_mode<synchronous>, transform_indices = @transform_3, window_bounds = array<i64: 4, 32>}, {transform_indices = @transform_4, window_bounds = array<i64: 8, 4, 32>}]} {
    %c0 = arith.constant 0 : index
    %c0_0 = arith.constant 0 : index
    %c0_1 = arith.constant 0 : index
    %0 = vector.load %arg1[%c0, %c0_0, %c0_1] : memref<8x4x8xf32, #tpu.memory_space<vmem>>, vector<8x4x8xf32>
    %1 = vector.shape_cast %0 : vector<8x4x8xf32> to vector<32x8xf32>
    %2 = arith.truncf %1 : vector<32x8xf32> to vector<32x8xbf16>
    %c0_2 = arith.constant 0 : index
    %c0_3 = arith.constant 0 : index
    %3 = vector.load %arg2[%c0_2, %c0_3] : memref<8x32xbf16, #tpu.memory_space<vmem>>, vector<8x32xbf16>
    %cst = arith.constant dense<0.000000e+00> : vector<32x32xf32>
    %4 = tpu.matmul %2, %3, %cst {dimension_numbers = #tpu.dot_dimension_numbers<[1], [0], [0], [1], [0, 0, 1, 1], [], []>} : vector<32x8xbf16>, vector<8x32xbf16>, vector<32x32xf32> -> vector<32x32xf32>
    %c0_4 = arith.constant 0 : index
    %c0_5 = arith.constant 0 : index
    %5 = vector.load %arg3[%c0_4, %c0_5] : memref<1x32xf32, #tpu.memory_space<vmem>>, vector<1x32xf32>
    %6 = vector.broadcast %5 : vector<1x32xf32> to vector<32x32xf32>
    %7 = arith.addf %4, %6 : vector<32x32xf32>
    %8 = vector.shape_cast %7 : vector<32x32xf32> to vector<8x4x32xf32>
    %c0_6 = arith.constant 0 : index
    %c0_7 = arith.constant 0 : index
    %9 = vector.load %arg4[%c0_6, %c0_7] : memref<4x32xf32, #tpu.memory_space<vmem>>, vector<4x32xf32>
    %10 = vector.shape_cast %9 : vector<4x32xf32> to vector<1x4x32xf32>
    %11 = vector.broadcast %10 : vector<1x4x32xf32> to vector<8x4x32xf32>
    %12 = arith.addf %8, %11 : vector<8x4x32xf32>
    %c0_8 = arith.constant 0 : index
    %c0_9 = arith.constant 0 : index
    %c0_10 = arith.constant 0 : index
    %13 = vector.load %arg5[%c0_8, %c0_9, %c0_10] : memref<8x4x32xf32, #tpu.memory_space<vmem>>, vector<8x4x32xf32>
    tpu.vector_store %arg5[%c0_8, %c0_9, %c0_10], %12 {strides = array<i32>} : memref<8x4x32xf32, #tpu.memory_space<vmem>>, vector<8x4x32xf32>,
    return
  }
  func.func @transform_0(%arg0: i32) -> (i32, i32, i32) {
    %c0_i32 = arith.constant 0 : i32
    %c0_i32_0 = arith.constant 0 : i32
    %c0_i32_1 = arith.constant 0 : i32
    return %arg0, %c0_i32, %c0_i32_0 : i32, i32, i32
  }
  func.func @transform_1(%arg0: i32) -> (i32, i32) {
    %c0_i32 = arith.constant 0 : i32
    %c0_i32_0 = arith.constant 0 : i32
    %c0_i32_1 = arith.constant 0 : i32
    return %c0_i32, %c0_i32_0 : i32, i32
  }
  func.func @transform_2(%arg0: i32) -> (i32, i32) {
    %c0_i32 = arith.constant 0 : i32
    %c0_i32_0 = arith.constant 0 : i32
    %c0_i32_1 = arith.constant 0 : i32
    return %c0_i32, %c0_i32_0 : i32, i32
  }
  func.func @transform_3(%arg0: i32) -> (i32, i32) {
    %c0_i32 = arith.constant 0 : i32
    %c0_i32_0 = arith.constant 0 : i32
    %c0_i32_1 = arith.constant 0 : i32
    return %c0_i32, %c0_i32_0 : i32, i32
  }
  func.func @transform_4(%arg0: i32) -> (i32, i32, i32) {
    %c0_i32 = arith.constant 0 : i32
    %c0_i32_0 = arith.constant 0 : i32
    %c0_i32_1 = arith.constant 0 : i32
    return %arg0, %c0_i32, %c0_i32_0 : i32, i32, i32
  }
}

module attributes {stable_mosaic.version = 11 : i64} {
  func.func @_encoder_stack_kernel(%arg0: i32, %arg1: memref<8x4x32xf32, #tpu.memory_space<any>>, %arg2: memref<1x32x96xbf16, #tpu.memory_space<vmem>>, %arg3: memref<1x1x96xf32, #tpu.memory_space<vmem>>, %arg4: memref<1x32x32xbf16, #tpu.memory_space<vmem>>, %arg5: memref<1x1x32xf32, #tpu.memory_space<vmem>>, %arg6: memref<1x1x32xf32, #tpu.memory_space<vmem>>, %arg7: memref<1x1x32xf32, #tpu.memory_space<vmem>>, %arg8: memref<1x32x64xbf16, #tpu.memory_space<vmem>>, %arg9: memref<1x1x64xf32, #tpu.memory_space<vmem>>, %arg10: memref<1x64x32xbf16, #tpu.memory_space<vmem>>, %arg11: memref<1x1x32xf32, #tpu.memory_space<vmem>>, %arg12: memref<1x1x32xf32, #tpu.memory_space<vmem>>, %arg13: memref<1x1x32xf32, #tpu.memory_space<vmem>>, %arg14: memref<8x4x32xf32, #tpu.memory_space<vmem>>, %arg15: memref<8x4x4x4xf32, #tpu.memory_space<vmem>>, %arg16: memref<4x8x4x4xf32, #tpu.memory_space<vmem>>, %arg17: memref<!tpu.dma_semaphore, #tpu.memory_space<semaphore_mem>>) attributes {dimension_semantics = [#tpu.dimension_semantics<arbitrary>], iteration_bounds = array<i64: 2>, scalar_prefetch = 0 : i64, scratch_operands = 2 : i64, tpu.core_type = #tpu.core_type<tc>, window_params = [{}, {transform_indices = @transform_1, window_bounds = array<i64: 1, 32, 96>}, {transform_indices = @transform_2, window_bounds = array<i64: 1, 1, 96>}, {transform_indices = @transform_3, window_bounds = array<i64: 1, 32, 32>}, {transform_indices = @transform_4, window_bounds = array<i64: 1, 1, 32>}, {transform_indices = @transform_5, window_bounds = array<i64: 1, 1, 32>}, {transform_indices = @transform_6, window_bounds = array<i64: 1, 1, 32>}, {transform_indices = @transform_7, window_bounds = array<i64: 1, 32, 64>}, {transform_indices = @transform_8, window_bounds = array<i64: 1, 1, 64>}, {transform_indices = @transform_9, window_bounds = array<i64: 1, 64, 32>}, {transform_indices = @transform_10, window_bounds = array<i64: 1, 1, 32>}, {transform_indices = @transform_11, window_bounds = array<i64: 1, 1, 32>}, {transform_indices = @transform_12, window_bounds = array<i64: 1, 1, 32>}, {pipeline_mode = #tpu.pipeline_mode<synchronous>, transform_indices = @transform_13, window_bounds = array<i64: 8, 4, 32>}, {pipeline_mode = #tpu.pipeline_mode<synchronous>, transform_indices = @transform_14, window_bounds = array<i64: 8, 4, 4, 4>}]} {
    %c1_i32 = arith.constant 1 : i32
    %0 = arith.cmpi eq, %arg0, %c1_i32 : i32
    %c0_i32 = arith.constant 0 : i32
    %1 = arith.cmpi eq, %arg0, %c0_i32 : i32
    %2 = arith.extui %1 : i1 to i32
    %c0_i32_0 = arith.constant 0 : i32
    %3 = arith.cmpi ne, %2, %c0_i32_0 : i32
    scf.if %3 {
      tpu.enqueue_dma source(%arg1 : memref<8x4x32xf32, #tpu.memory_space<any>>) target(%arg14 : memref<8x4x32xf32, #tpu.memory_space<vmem>>) target_semaphore(%arg17 : memref<!tpu.dma_semaphore, #tpu.memory_space<semaphore_mem>>)
      tpu.wait_dma2 semaphore(%arg17 : memref<!tpu.dma_semaphore, #tpu.memory_space<semaphore_mem>>) src(%arg1 : memref<8x4x32xf32, #tpu.memory_space<any>>) dst(%arg14 : memref<8x4x32xf32, #tpu.memory_space<vmem>>)
      %cst_109 = arith.constant 0.000000e+00 : f32
      %225 = vector.broadcast %cst_109 : f32 to vector<4x8x4x4xf32>
      %c0_110 = arith.constant 0 : index
      %c0_111 = arith.constant 0 : index
      %c0_112 = arith.constant 0 : index
      %c0_113 = arith.constant 0 : index
      %226 = vector.load %arg16[%c0_110, %c0_111, %c0_112, %c0_113] : memref<4x8x4x4xf32, #tpu.memory_space<vmem>>, vector<4x8x4x4xf32>
      tpu.vector_store %arg16[%c0_110, %c0_111, %c0_112, %c0_113], %225 {strides = array<i32>} : memref<4x8x4x4xf32, #tpu.memory_space<vmem>>, vector<4x8x4x4xf32>,
    } else {
    }
    %c0 = arith.constant 0 : index
    %c0_1 = arith.constant 0 : index
    %c0_2 = arith.constant 0 : index
    %4 = vector.load %arg14[%c0, %c0_1, %c0_2] : memref<8x4x32xf32, #tpu.memory_space<vmem>>, vector<8x4x32xf32>
    %5 = vector.shape_cast %4 : vector<8x4x32xf32> to vector<32x32xf32>
    %6 = arith.truncf %5 : vector<32x32xf32> to vector<32x32xbf16>
    %c0_3 = arith.constant 0 : index
    %c0_4 = arith.constant 0 : index
    %c0_5 = arith.constant 0 : index
    %7 = vector.load %arg2[%c0_3, %c0_4, %c0_5] : memref<1x32x96xbf16, #tpu.memory_space<vmem>>, vector<1x32x96xbf16>
    %8 = vector.shape_cast %7 : vector<1x32x96xbf16> to vector<32x96xbf16>
    %cst = arith.constant dense<0.000000e+00> : vector<32x96xf32>
    %9 = tpu.matmul %6, %8, %cst {dimension_numbers = #tpu.dot_dimension_numbers<[1], [0], [0], [1], [0, 0, 1, 1], [], []>} : vector<32x32xbf16>, vector<32x96xbf16>, vector<32x96xf32> -> vector<32x96xf32>
    %c0_6 = arith.constant 0 : index
    %c0_7 = arith.constant 0 : index
    %c0_8 = arith.constant 0 : index
    %10 = vector.load %arg3[%c0_6, %c0_7, %c0_8] : memref<1x1x96xf32, #tpu.memory_space<vmem>>, vector<1x1x96xf32>
    %11 = vector.shape_cast %10 : vector<1x1x96xf32> to vector<1x96xf32>
    %12 = vector.broadcast %11 : vector<1x96xf32> to vector<32x96xf32>
    %13 = arith.addf %9, %12 : vector<32x96xf32>
    %14 = arith.truncf %13 : vector<32x96xf32> to vector<32x96xbf16>
    %15 = vector.extract_strided_slice %14 {offsets = [0, 0], sizes = [32, 32], strides = [1, 1]} : vector<32x96xbf16> to vector<32x32xbf16>
    %16 = vector.shape_cast %15 : vector<32x32xbf16> to vector<8x4x32xbf16>
    %17 = vector.extract_strided_slice %14 {offsets = [0, 32], sizes = [32, 32], strides = [1, 1]} : vector<32x96xbf16> to vector<32x32xbf16>
    %18 = vector.shape_cast %17 : vector<32x32xbf16> to vector<8x4x32xbf16>
    %19 = vector.extract_strided_slice %14 {offsets = [0, 64], sizes = [32, 32], strides = [1, 1]} : vector<32x96xbf16> to vector<32x32xbf16>
    %20 = vector.shape_cast %19 : vector<32x32xbf16> to vector<8x4x32xbf16>
    %c0_9 = arith.constant 0 : index
    %c0_10 = arith.constant 0 : index
    %c0_11 = arith.constant 0 : index
    %21 = vector.load %arg4[%c0_9, %c0_10, %c0_11] : memref<1x32x32xbf16, #tpu.memory_space<vmem>>, vector<1x32x32xbf16>
    %22 = vector.shape_cast %21 : vector<1x32x32xbf16> to vector<32x32xbf16>
    %cst_12 = arith.constant 0.000000e+00 : f32
    %23 = vector.broadcast %cst_12 : f32 to vector<32x32xf32>
    %24 = vector.extract_strided_slice %16 {offsets = [0, 0, 0], sizes = [8, 4, 8], strides = [1, 1, 1]} : vector<8x4x32xbf16> to vector<8x4x8xbf16>
    %25 = vector.extract_strided_slice %18 {offsets = [0, 0, 0], sizes = [8, 4, 8], strides = [1, 1, 1]} : vector<8x4x32xbf16> to vector<8x4x8xbf16>
    "tpu.trace_start"() <{level = 10 : i32, message = "bqd,bkd->bqk"}> : () -> ()
    %cst_13 = arith.constant dense<0.000000e+00> : vector<8x4x4xf32>
    %26 = tpu.matmul %24, %25, %cst_13 {dimension_numbers = #tpu.dot_dimension_numbers<[2], [2], [1], [1], [0, 0, 0, 1, 1, 1], [0], [0]>} : vector<8x4x8xbf16>, vector<8x4x8xbf16>, vector<8x4x4xf32> -> vector<8x4x4xf32>
    "tpu.trace_stop"() : () -> ()
    %c0_14 = arith.constant 0 : index
    %c0_15 = arith.constant 0 : index
    %c0_16 = arith.constant 0 : index
    %c0_17 = arith.constant 0 : index
    %27 = vector.load %arg16[%c0_14, %c0_15, %c0_16, %c0_17] : memref<4x8x4x4xf32, #tpu.memory_space<vmem>>, vector<1x8x4x4xf32>
    %28 = vector.shape_cast %27 : vector<1x8x4x4xf32> to vector<8x4x4xf32>
    %29 = arith.addf %26, %28 : vector<8x4x4xf32>
    %c0_18 = arith.constant 0 : index
    %c0_19 = arith.constant 0 : index
    %c0_20 = arith.constant 0 : index
    %c0_21 = arith.constant 0 : index
    %30 = vector.load %arg16[%c0_18, %c0_19, %c0_20, %c0_21] : memref<4x8x4x4xf32, #tpu.memory_space<vmem>>, vector<1x8x4x4xf32>
    %31 = vector.shape_cast %30 : vector<1x8x4x4xf32> to vector<8x4x4xf32>
    %32 = vector.shape_cast %29 : vector<8x4x4xf32> to vector<1x8x4x4xf32>
    tpu.vector_store %arg16[%c0_18, %c0_19, %c0_20, %c0_21], %32 {strides = array<i32>} : memref<4x8x4x4xf32, #tpu.memory_space<vmem>>, vector<1x8x4x4xf32>,
    %cst_22 = arith.constant dense<0xFF800000> : vector<8x4xf32>
    %33 = vector.multi_reduction <maximumf>, %29, %cst_22 [2] : vector<8x4x4xf32> to vector<8x4xf32>
    %34 = vector.shape_cast %33 : vector<8x4xf32> to vector<8x4x1xf32>
    %35 = vector.broadcast %34 : vector<8x4x1xf32> to vector<8x4x4xf32>
    %36 = arith.subf %29, %35 : vector<8x4x4xf32>
    %37 = math.exp %36 : vector<8x4x4xf32>
    %cst_23 = arith.constant dense<0.000000e+00> : vector<8x4xf32>
    %38 = vector.multi_reduction <add>, %37, %cst_23 [2] : vector<8x4x4xf32> to vector<8x4xf32>
    %39 = vector.shape_cast %38 : vector<8x4xf32> to vector<8x4x1xf32>
    %40 = vector.broadcast %39 : vector<8x4x1xf32> to vector<8x4x4xf32>
    %41 = arith.divf %37, %40 : vector<8x4x4xf32>
    %42 = arith.truncf %41 : vector<8x4x4xf32> to vector<8x4x4xbf16>
    %43 = vector.extract_strided_slice %20 {offsets = [0, 0, 0], sizes = [8, 4, 8], strides = [1, 1, 1]} : vector<8x4x32xbf16> to vector<8x4x8xbf16>
    "tpu.trace_start"() <{level = 10 : i32, message = "bqk,bkd->bqd"}> : () -> ()
    %cst_24 = arith.constant dense<0.000000e+00> : vector<8x4x8xf32>
    %44 = tpu.matmul %42, %43, %cst_24 {dimension_numbers = #tpu.dot_dimension_numbers<[2], [1], [1], [2], [0, 0, 0, 1, 1, 2], [0], [0]>} : vector<8x4x4xbf16>, vector<8x4x8xbf16>, vector<8x4x8xf32> -> vector<8x4x8xf32>
    "tpu.trace_stop"() : () -> ()
    %45 = vector.shape_cast %44 : vector<8x4x8xf32> to vector<32x8xf32>
    %46 = arith.truncf %45 : vector<32x8xf32> to vector<32x8xbf16>
    %47 = vector.extract_strided_slice %22 {offsets = [0, 0], sizes = [8, 32], strides = [1, 1]} : vector<32x32xbf16> to vector<8x32xbf16>
    %cst_25 = arith.constant dense<0.000000e+00> : vector<32x32xf32>
    %48 = tpu.matmul %46, %47, %cst_25 {dimension_numbers = #tpu.dot_dimension_numbers<[1], [0], [0], [1], [0, 0, 1, 1], [], []>} : vector<32x8xbf16>, vector<8x32xbf16>, vector<32x32xf32> -> vector<32x32xf32>
    %49 = arith.addf %23, %48 : vector<32x32xf32>
    %50 = vector.extract_strided_slice %16 {offsets = [0, 0, 8], sizes = [8, 4, 8], strides = [1, 1, 1]} : vector<8x4x32xbf16> to vector<8x4x8xbf16>
    %51 = vector.extract_strided_slice %18 {offsets = [0, 0, 8], sizes = [8, 4, 8], strides = [1, 1, 1]} : vector<8x4x32xbf16> to vector<8x4x8xbf16>
    "tpu.trace_start"() <{level = 10 : i32, message = "bqd,bkd->bqk"}> : () -> ()
    %cst_26 = arith.constant dense<0.000000e+00> : vector<8x4x4xf32>
    %52 = tpu.matmul %50, %51, %cst_26 {dimension_numbers = #tpu.dot_dimension_numbers<[2], [2], [1], [1], [0, 0, 0, 1, 1, 1], [0], [0]>} : vector<8x4x8xbf16>, vector<8x4x8xbf16>, vector<8x4x4xf32> -> vector<8x4x4xf32>
    "tpu.trace_stop"() : () -> ()
    %c1 = arith.constant 1 : index
    %c0_27 = arith.constant 0 : index
    %c0_28 = arith.constant 0 : index
    %c0_29 = arith.constant 0 : index
    %53 = vector.load %arg16[%c1, %c0_27, %c0_28, %c0_29] : memref<4x8x4x4xf32, #tpu.memory_space<vmem>>, vector<1x8x4x4xf32>
    %54 = vector.shape_cast %53 : vector<1x8x4x4xf32> to vector<8x4x4xf32>
    %55 = arith.addf %52, %54 : vector<8x4x4xf32>
    %c1_30 = arith.constant 1 : index
    %c0_31 = arith.constant 0 : index
    %c0_32 = arith.constant 0 : index
    %c0_33 = arith.constant 0 : index
    %56 = vector.load %arg16[%c1_30, %c0_31, %c0_32, %c0_33] : memref<4x8x4x4xf32, #tpu.memory_space<vmem>>, vector<1x8x4x4xf32>
    %57 = vector.shape_cast %56 : vector<1x8x4x4xf32> to vector<8x4x4xf32>
    %58 = vector.shape_cast %55 : vector<8x4x4xf32> to vector<1x8x4x4xf32>
    tpu.vector_store %arg16[%c1_30, %c0_31, %c0_32, %c0_33], %58 {strides = array<i32>} : memref<4x8x4x4xf32, #tpu.memory_space<vmem>>, vector<1x8x4x4xf32>,
    %cst_34 = arith.constant dense<0xFF800000> : vector<8x4xf32>
    %59 = vector.multi_reduction <maximumf>, %55, %cst_34 [2] : vector<8x4x4xf32> to vector<8x4xf32>
    %60 = vector.shape_cast %59 : vector<8x4xf32> to vector<8x4x1xf32>
    %61 = vector.broadcast %60 : vector<8x4x1xf32> to vector<8x4x4xf32>
    %62 = arith.subf %55, %61 : vector<8x4x4xf32>
    %63 = math.exp %62 : vector<8x4x4xf32>
    %cst_35 = arith.constant dense<0.000000e+00> : vector<8x4xf32>
    %64 = vector.multi_reduction <add>, %63, %cst_35 [2] : vector<8x4x4xf32> to vector<8x4xf32>
    %65 = vector.shape_cast %64 : vector<8x4xf32> to vector<8x4x1xf32>
    %66 = vector.broadcast %65 : vector<8x4x1xf32> to vector<8x4x4xf32>
    %67 = arith.divf %63, %66 : vector<8x4x4xf32>
    %68 = arith.truncf %67 : vector<8x4x4xf32> to vector<8x4x4xbf16>
    %69 = vector.extract_strided_slice %20 {offsets = [0, 0, 8], sizes = [8, 4, 8], strides = [1, 1, 1]} : vector<8x4x32xbf16> to vector<8x4x8xbf16>
    "tpu.trace_start"() <{level = 10 : i32, message = "bqk,bkd->bqd"}> : () -> ()
    %cst_36 = arith.constant dense<0.000000e+00> : vector<8x4x8xf32>
    %70 = tpu.matmul %68, %69, %cst_36 {dimension_numbers = #tpu.dot_dimension_numbers<[2], [1], [1], [2], [0, 0, 0, 1, 1, 2], [0], [0]>} : vector<8x4x4xbf16>, vector<8x4x8xbf16>, vector<8x4x8xf32> -> vector<8x4x8xf32>
    "tpu.trace_stop"() : () -> ()
    %71 = vector.shape_cast %70 : vector<8x4x8xf32> to vector<32x8xf32>
    %72 = arith.truncf %71 : vector<32x8xf32> to vector<32x8xbf16>
    %73 = vector.extract_strided_slice %22 {offsets = [8, 0], sizes = [8, 32], strides = [1, 1]} : vector<32x32xbf16> to vector<8x32xbf16>
    %cst_37 = arith.constant dense<0.000000e+00> : vector<32x32xf32>
    %74 = tpu.matmul %72, %73, %cst_37 {dimension_numbers = #tpu.dot_dimension_numbers<[1], [0], [0], [1], [0, 0, 1, 1], [], []>} : vector<32x8xbf16>, vector<8x32xbf16>, vector<32x32xf32> -> vector<32x32xf32>
    %75 = arith.addf %49, %74 : vector<32x32xf32>
    %76 = vector.extract_strided_slice %16 {offsets = [0, 0, 16], sizes = [8, 4, 8], strides = [1, 1, 1]} : vector<8x4x32xbf16> to vector<8x4x8xbf16>
    %77 = vector.extract_strided_slice %18 {offsets = [0, 0, 16], sizes = [8, 4, 8], strides = [1, 1, 1]} : vector<8x4x32xbf16> to vector<8x4x8xbf16>
    "tpu.trace_start"() <{level = 10 : i32, message = "bqd,bkd->bqk"}> : () -> ()
    %cst_38 = arith.constant dense<0.000000e+00> : vector<8x4x4xf32>
    %78 = tpu.matmul %76, %77, %cst_38 {dimension_numbers = #tpu.dot_dimension_numbers<[2], [2], [1], [1], [0, 0, 0, 1, 1, 1], [0], [0]>} : vector<8x4x8xbf16>, vector<8x4x8xbf16>, vector<8x4x4xf32> -> vector<8x4x4xf32>
    "tpu.trace_stop"() : () -> ()
    %c2 = arith.constant 2 : index
    %c0_39 = arith.constant 0 : index
    %c0_40 = arith.constant 0 : index
    %c0_41 = arith.constant 0 : index
    %79 = vector.load %arg16[%c2, %c0_39, %c0_40, %c0_41] : memref<4x8x4x4xf32, #tpu.memory_space<vmem>>, vector<1x8x4x4xf32>
    %80 = vector.shape_cast %79 : vector<1x8x4x4xf32> to vector<8x4x4xf32>
    %81 = arith.addf %78, %80 : vector<8x4x4xf32>
    %c2_42 = arith.constant 2 : index
    %c0_43 = arith.constant 0 : index
    %c0_44 = arith.constant 0 : index
    %c0_45 = arith.constant 0 : index
    %82 = vector.load %arg16[%c2_42, %c0_43, %c0_44, %c0_45] : memref<4x8x4x4xf32, #tpu.memory_space<vmem>>, vector<1x8x4x4xf32>
    %83 = vector.shape_cast %82 : vector<1x8x4x4xf32> to vector<8x4x4xf32>
    %84 = vector.shape_cast %81 : vector<8x4x4xf32> to vector<1x8x4x4xf32>
    tpu.vector_store %arg16[%c2_42, %c0_43, %c0_44, %c0_45], %84 {strides = array<i32>} : memref<4x8x4x4xf32, #tpu.memory_space<vmem>>, vector<1x8x4x4xf32>,
    %cst_46 = arith.constant dense<0xFF800000> : vector<8x4xf32>
    %85 = vector.multi_reduction <maximumf>, %81, %cst_46 [2] : vector<8x4x4xf32> to vector<8x4xf32>
    %86 = vector.shape_cast %85 : vector<8x4xf32> to vector<8x4x1xf32>
    %87 = vector.broadcast %86 : vector<8x4x1xf32> to vector<8x4x4xf32>
    %88 = arith.subf %81, %87 : vector<8x4x4xf32>
    %89 = math.exp %88 : vector<8x4x4xf32>
    %cst_47 = arith.constant dense<0.000000e+00> : vector<8x4xf32>
    %90 = vector.multi_reduction <add>, %89, %cst_47 [2] : vector<8x4x4xf32> to vector<8x4xf32>
    %91 = vector.shape_cast %90 : vector<8x4xf32> to vector<8x4x1xf32>
    %92 = vector.broadcast %91 : vector<8x4x1xf32> to vector<8x4x4xf32>
    %93 = arith.divf %89, %92 : vector<8x4x4xf32>
    %94 = arith.truncf %93 : vector<8x4x4xf32> to vector<8x4x4xbf16>
    %95 = vector.extract_strided_slice %20 {offsets = [0, 0, 16], sizes = [8, 4, 8], strides = [1, 1, 1]} : vector<8x4x32xbf16> to vector<8x4x8xbf16>
    "tpu.trace_start"() <{level = 10 : i32, message = "bqk,bkd->bqd"}> : () -> ()
    %cst_48 = arith.constant dense<0.000000e+00> : vector<8x4x8xf32>
    %96 = tpu.matmul %94, %95, %cst_48 {dimension_numbers = #tpu.dot_dimension_numbers<[2], [1], [1], [2], [0, 0, 0, 1, 1, 2], [0], [0]>} : vector<8x4x4xbf16>, vector<8x4x8xbf16>, vector<8x4x8xf32> -> vector<8x4x8xf32>
    "tpu.trace_stop"() : () -> ()
    %97 = vector.shape_cast %96 : vector<8x4x8xf32> to vector<32x8xf32>
    %98 = arith.truncf %97 : vector<32x8xf32> to vector<32x8xbf16>
    %99 = vector.extract_strided_slice %22 {offsets = [16, 0], sizes = [8, 32], strides = [1, 1]} : vector<32x32xbf16> to vector<8x32xbf16>
    %cst_49 = arith.constant dense<0.000000e+00> : vector<32x32xf32>
    %100 = tpu.matmul %98, %99, %cst_49 {dimension_numbers = #tpu.dot_dimension_numbers<[1], [0], [0], [1], [0, 0, 1, 1], [], []>} : vector<32x8xbf16>, vector<8x32xbf16>, vector<32x32xf32> -> vector<32x32xf32>
    %101 = arith.addf %75, %100 : vector<32x32xf32>
    %102 = vector.extract_strided_slice %16 {offsets = [0, 0, 24], sizes = [8, 4, 8], strides = [1, 1, 1]} : vector<8x4x32xbf16> to vector<8x4x8xbf16>
    %103 = vector.extract_strided_slice %18 {offsets = [0, 0, 24], sizes = [8, 4, 8], strides = [1, 1, 1]} : vector<8x4x32xbf16> to vector<8x4x8xbf16>
    "tpu.trace_start"() <{level = 10 : i32, message = "bqd,bkd->bqk"}> : () -> ()
    %cst_50 = arith.constant dense<0.000000e+00> : vector<8x4x4xf32>
    %104 = tpu.matmul %102, %103, %cst_50 {dimension_numbers = #tpu.dot_dimension_numbers<[2], [2], [1], [1], [0, 0, 0, 1, 1, 1], [0], [0]>} : vector<8x4x8xbf16>, vector<8x4x8xbf16>, vector<8x4x4xf32> -> vector<8x4x4xf32>
    "tpu.trace_stop"() : () -> ()
    %c3 = arith.constant 3 : index
    %c0_51 = arith.constant 0 : index
    %c0_52 = arith.constant 0 : index
    %c0_53 = arith.constant 0 : index
    %105 = vector.load %arg16[%c3, %c0_51, %c0_52, %c0_53] : memref<4x8x4x4xf32, #tpu.memory_space<vmem>>, vector<1x8x4x4xf32>
    %106 = vector.shape_cast %105 : vector<1x8x4x4xf32> to vector<8x4x4xf32>
    %107 = arith.addf %104, %106 : vector<8x4x4xf32>
    %c3_54 = arith.constant 3 : index
    %c0_55 = arith.constant 0 : index
    %c0_56 = arith.constant 0 : index
    %c0_57 = arith.constant 0 : index
    %108 = vector.load %arg16[%c3_54, %c0_55, %c0_56, %c0_57] : memref<4x8x4x4xf32, #tpu.memory_space<vmem>>, vector<1x8x4x4xf32>
    %109 = vector.shape_cast %108 : vector<1x8x4x4xf32> to vector<8x4x4xf32>
    %110 = vector.shape_cast %107 : vector<8x4x4xf32> to vector<1x8x4x4xf32>
    tpu.vector_store %arg16[%c3_54, %c0_55, %c0_56, %c0_57], %110 {strides = array<i32>} : memref<4x8x4x4xf32, #tpu.memory_space<vmem>>, vector<1x8x4x4xf32>,
    %cst_58 = arith.constant dense<0xFF800000> : vector<8x4xf32>
    %111 = vector.multi_reduction <maximumf>, %107, %cst_58 [2] : vector<8x4x4xf32> to vector<8x4xf32>
    %112 = vector.shape_cast %111 : vector<8x4xf32> to vector<8x4x1xf32>
    %113 = vector.broadcast %112 : vector<8x4x1xf32> to vector<8x4x4xf32>
    %114 = arith.subf %107, %113 : vector<8x4x4xf32>
    %115 = math.exp %114 : vector<8x4x4xf32>
    %cst_59 = arith.constant dense<0.000000e+00> : vector<8x4xf32>
    %116 = vector.multi_reduction <add>, %115, %cst_59 [2] : vector<8x4x4xf32> to vector<8x4xf32>
    %117 = vector.shape_cast %116 : vector<8x4xf32> to vector<8x4x1xf32>
    %118 = vector.broadcast %117 : vector<8x4x1xf32> to vector<8x4x4xf32>
    %119 = arith.divf %115, %118 : vector<8x4x4xf32>
    %120 = arith.truncf %119 : vector<8x4x4xf32> to vector<8x4x4xbf16>
    %121 = vector.extract_strided_slice %20 {offsets = [0, 0, 24], sizes = [8, 4, 8], strides = [1, 1, 1]} : vector<8x4x32xbf16> to vector<8x4x8xbf16>
    "tpu.trace_start"() <{level = 10 : i32, message = "bqk,bkd->bqd"}> : () -> ()
    %cst_60 = arith.constant dense<0.000000e+00> : vector<8x4x8xf32>
    %122 = tpu.matmul %120, %121, %cst_60 {dimension_numbers = #tpu.dot_dimension_numbers<[2], [1], [1], [2], [0, 0, 0, 1, 1, 2], [0], [0]>} : vector<8x4x4xbf16>, vector<8x4x8xbf16>, vector<8x4x8xf32> -> vector<8x4x8xf32>
    "tpu.trace_stop"() : () -> ()
    %123 = vector.shape_cast %122 : vector<8x4x8xf32> to vector<32x8xf32>
    %124 = arith.truncf %123 : vector<32x8xf32> to vector<32x8xbf16>
    %125 = vector.extract_strided_slice %22 {offsets = [24, 0], sizes = [8, 32], strides = [1, 1]} : vector<32x32xbf16> to vector<8x32xbf16>
    %cst_61 = arith.constant dense<0.000000e+00> : vector<32x32xf32>
    %126 = tpu.matmul %124, %125, %cst_61 {dimension_numbers = #tpu.dot_dimension_numbers<[1], [0], [0], [1], [0, 0, 1, 1], [], []>} : vector<32x8xbf16>, vector<8x32xbf16>, vector<32x32xf32> -> vector<32x32xf32>
    %127 = arith.addf %101, %126 : vector<32x32xf32>
    %128 = arith.extui %0 : i1 to i32
    %c0_i32_62 = arith.constant 0 : i32
    %129 = arith.cmpi ne, %128, %c0_i32_62 : i32
    scf.if %129 {
      %225 = vector.shape_cast %41 : vector<8x4x4xf32> to vector<8x1x4x4xf32>
      %226 = vector.shape_cast %67 : vector<8x4x4xf32> to vector<8x1x4x4xf32>
      %227 = vector.shape_cast %93 : vector<8x4x4xf32> to vector<8x1x4x4xf32>
      %228 = vector.shape_cast %119 : vector<8x4x4xf32> to vector<8x1x4x4xf32>
      %229 = tpu.concatenate %225, %226, %227, %228 in 1 : vector<8x1x4x4xf32>, vector<8x1x4x4xf32>, vector<8x1x4x4xf32>, vector<8x1x4x4xf32> -> vector<8x4x4x4xf32>
      %c0_109 = arith.constant 0 : index
      %c0_110 = arith.constant 0 : index
      %c0_111 = arith.constant 0 : index
      %c0_112 = arith.constant 0 : index
      %230 = vector.load %arg15[%c0_109, %c0_110, %c0_111, %c0_112] : memref<8x4x4x4xf32, #tpu.memory_space<vmem>>, vector<8x4x4x4xf32>
      tpu.vector_store %arg15[%c0_109, %c0_110, %c0_111, %c0_112], %229 {strides = array<i32>} : memref<8x4x4x4xf32, #tpu.memory_space<vmem>>, vector<8x4x4x4xf32>,
    } else {
    }
    %c0_63 = arith.constant 0 : index
    %c0_64 = arith.constant 0 : index
    %c0_65 = arith.constant 0 : index
    %130 = vector.load %arg5[%c0_63, %c0_64, %c0_65] : memref<1x1x32xf32, #tpu.memory_space<vmem>>, vector<1x1x32xf32>
    %131 = vector.shape_cast %130 : vector<1x1x32xf32> to vector<1x32xf32>
    %132 = vector.broadcast %131 : vector<1x32xf32> to vector<32x32xf32>
    %133 = arith.addf %127, %132 : vector<32x32xf32>
    %134 = vector.shape_cast %133 : vector<32x32xf32> to vector<8x4x32xf32>
    %135 = arith.addf %4, %134 : vector<8x4x32xf32>
    %cst_66 = arith.constant dense<0.000000e+00> : vector<32xf32>
    %136 = vector.multi_reduction <add>, %135, %cst_66 [0, 1] : vector<8x4x32xf32> to vector<32xf32>
    %137 = vector.shape_cast %136 : vector<32xf32> to vector<1x1x32xf32>
    %cst_67 = arith.constant 3.200000e+01 : f32
    %138 = vector.broadcast %cst_67 : f32 to vector<1x1x32xf32>
    %139 = arith.divf %137, %138 : vector<1x1x32xf32>
    %140 = vector.broadcast %139 : vector<1x1x32xf32> to vector<8x4x32xf32>
    %141 = arith.subf %135, %140 : vector<8x4x32xf32>
    %142 = arith.mulf %141, %141 : vector<8x4x32xf32>
    %cst_68 = arith.constant dense<0.000000e+00> : vector<32xf32>
    %143 = vector.multi_reduction <add>, %142, %cst_68 [0, 1] : vector<8x4x32xf32> to vector<32xf32>
    %144 = vector.shape_cast %143 : vector<32xf32> to vector<1x1x32xf32>
    %cst_69 = arith.constant 3.200000e+01 : f32
    %145 = vector.broadcast %cst_69 : f32 to vector<1x1x32xf32>
    %146 = arith.divf %144, %145 : vector<1x1x32xf32>
    %147 = vector.broadcast %139 : vector<1x1x32xf32> to vector<8x4x32xf32>
    %148 = arith.subf %135, %147 : vector<8x4x32xf32>
    %cst_70 = arith.constant 9.99999974E-6 : f32
    %149 = vector.broadcast %cst_70 : f32 to vector<1x1x32xf32>
    %150 = arith.addf %146, %149 : vector<1x1x32xf32>
    %151 = math.rsqrt %150 : vector<1x1x32xf32>
    %152 = vector.broadcast %151 : vector<1x1x32xf32> to vector<8x4x32xf32>
    %153 = arith.mulf %148, %152 : vector<8x4x32xf32>
    %c0_71 = arith.constant 0 : index
    %c0_72 = arith.constant 0 : index
    %c0_73 = arith.constant 0 : index
    %154 = vector.load %arg6[%c0_71, %c0_72, %c0_73] : memref<1x1x32xf32, #tpu.memory_space<vmem>>, vector<1x1x32xf32>
    %155 = vector.shape_cast %154 : vector<1x1x32xf32> to vector<1x32xf32>
    %156 = vector.shape_cast %155 : vector<1x32xf32> to vector<1x1x32xf32>
    %157 = vector.broadcast %156 : vector<1x1x32xf32> to vector<8x4x32xf32>
    %158 = arith.mulf %153, %157 : vector<8x4x32xf32>
    %c0_74 = arith.constant 0 : index
    %c0_75 = arith.constant 0 : index
    %c0_76 = arith.constant 0 : index
    %159 = vector.load %arg7[%c0_74, %c0_75, %c0_76] : memref<1x1x32xf32, #tpu.memory_space<vmem>>, vector<1x1x32xf32>
    %160 = vector.shape_cast %159 : vector<1x1x32xf32> to vector<1x32xf32>
    %161 = vector.shape_cast %160 : vector<1x32xf32> to vector<1x1x32xf32>
    %162 = vector.broadcast %161 : vector<1x1x32xf32> to vector<8x4x32xf32>
    %163 = arith.addf %158, %162 : vector<8x4x32xf32>
    %164 = vector.shape_cast %163 : vector<8x4x32xf32> to vector<32x32xf32>
    %165 = arith.truncf %164 : vector<32x32xf32> to vector<32x32xbf16>
    %c0_77 = arith.constant 0 : index
    %c0_78 = arith.constant 0 : index
    %c0_79 = arith.constant 0 : index
    %166 = vector.load %arg8[%c0_77, %c0_78, %c0_79] : memref<1x32x64xbf16, #tpu.memory_space<vmem>>, vector<1x32x64xbf16>
    %167 = vector.shape_cast %166 : vector<1x32x64xbf16> to vector<32x64xbf16>
    %cst_80 = arith.constant dense<0.000000e+00> : vector<32x64xf32>
    %168 = tpu.matmul %165, %167, %cst_80 {dimension_numbers = #tpu.dot_dimension_numbers<[1], [0], [0], [1], [0, 0, 1, 1], [], []>} : vector<32x32xbf16>, vector<32x64xbf16>, vector<32x64xf32> -> vector<32x64xf32>
    %c0_81 = arith.constant 0 : index
    %c0_82 = arith.constant 0 : index
    %c0_83 = arith.constant 0 : index
    %169 = vector.load %arg9[%c0_81, %c0_82, %c0_83] : memref<1x1x64xf32, #tpu.memory_space<vmem>>, vector<1x1x64xf32>
    %170 = vector.shape_cast %169 : vector<1x1x64xf32> to vector<1x64xf32>
    %171 = vector.broadcast %170 : vector<1x64xf32> to vector<32x64xf32>
    %172 = arith.addf %168, %171 : vector<32x64xf32>
    %173 = arith.mulf %172, %172 : vector<32x64xf32>
    %174 = arith.mulf %172, %173 : vector<32x64xf32>
    %cst_84 = arith.constant 4.471500e-02 : f32
    %175 = vector.broadcast %cst_84 : f32 to vector<32x64xf32>
    %176 = arith.mulf %175, %174 : vector<32x64xf32>
    %177 = arith.addf %172, %176 : vector<32x64xf32>
    %cst_85 = arith.constant 0.797884583 : f32
    %178 = vector.broadcast %cst_85 : f32 to vector<32x64xf32>
    %179 = arith.mulf %178, %177 : vector<32x64xf32>
    %180 = math.tanh %179 : vector<32x64xf32>
    %cst_86 = arith.constant 1.000000e+00 : f32
    %181 = vector.broadcast %cst_86 : f32 to vector<32x64xf32>
    %182 = arith.addf %181, %180 : vector<32x64xf32>
    %cst_87 = arith.constant 5.000000e-01 : f32
    %183 = vector.broadcast %cst_87 : f32 to vector<32x64xf32>
    %184 = arith.mulf %183, %182 : vector<32x64xf32>
    %185 = arith.mulf %172, %184 : vector<32x64xf32>
    %186 = arith.truncf %185 : vector<32x64xf32> to vector<32x64xbf16>
    %c0_88 = arith.constant 0 : index
    %c0_89 = arith.constant 0 : index
    %c0_90 = arith.constant 0 : index
    %187 = vector.load %arg10[%c0_88, %c0_89, %c0_90] : memref<1x64x32xbf16, #tpu.memory_space<vmem>>, vector<1x64x32xbf16>
    %188 = vector.shape_cast %187 : vector<1x64x32xbf16> to vector<64x32xbf16>
    %cst_91 = arith.constant dense<0.000000e+00> : vector<32x32xf32>
    %189 = tpu.matmul %186, %188, %cst_91 {dimension_numbers = #tpu.dot_dimension_numbers<[1], [0], [0], [1], [0, 0, 1, 1], [], []>} : vector<32x64xbf16>, vector<64x32xbf16>, vector<32x32xf32> -> vector<32x32xf32>
    %c0_92 = arith.constant 0 : index
    %c0_93 = arith.constant 0 : index
    %c0_94 = arith.constant 0 : index
    %190 = vector.load %arg11[%c0_92, %c0_93, %c0_94] : memref<1x1x32xf32, #tpu.memory_space<vmem>>, vector<1x1x32xf32>
    %191 = vector.shape_cast %190 : vector<1x1x32xf32> to vector<1x32xf32>
    %192 = vector.broadcast %191 : vector<1x32xf32> to vector<32x32xf32>
    %193 = arith.addf %189, %192 : vector<32x32xf32>
    %194 = vector.shape_cast %193 : vector<32x32xf32> to vector<8x4x32xf32>
    %195 = arith.addf %163, %194 : vector<8x4x32xf32>
    %cst_95 = arith.constant dense<0.000000e+00> : vector<32xf32>
    %196 = vector.multi_reduction <add>, %195, %cst_95 [0, 1] : vector<8x4x32xf32> to vector<32xf32>
    %197 = vector.shape_cast %196 : vector<32xf32> to vector<1x1x32xf32>
    %cst_96 = arith.constant 3.200000e+01 : f32
    %198 = vector.broadcast %cst_96 : f32 to vector<1x1x32xf32>
    %199 = arith.divf %197, %198 : vector<1x1x32xf32>
    %200 = vector.broadcast %199 : vector<1x1x32xf32> to vector<8x4x32xf32>
    %201 = arith.subf %195, %200 : vector<8x4x32xf32>
    %202 = arith.mulf %201, %201 : vector<8x4x32xf32>
    %cst_97 = arith.constant dense<0.000000e+00> : vector<32xf32>
    %203 = vector.multi_reduction <add>, %202, %cst_97 [0, 1] : vector<8x4x32xf32> to vector<32xf32>
    %204 = vector.shape_cast %203 : vector<32xf32> to vector<1x1x32xf32>
    %cst_98 = arith.constant 3.200000e+01 : f32
    %205 = vector.broadcast %cst_98 : f32 to vector<1x1x32xf32>
    %206 = arith.divf %204, %205 : vector<1x1x32xf32>
    %207 = vector.broadcast %199 : vector<1x1x32xf32> to vector<8x4x32xf32>
    %208 = arith.subf %195, %207 : vector<8x4x32xf32>
    %cst_99 = arith.constant 9.99999974E-6 : f32
    %209 = vector.broadcast %cst_99 : f32 to vector<1x1x32xf32>
    %210 = arith.addf %206, %209 : vector<1x1x32xf32>
    %211 = math.rsqrt %210 : vector<1x1x32xf32>
    %212 = vector.broadcast %211 : vector<1x1x32xf32> to vector<8x4x32xf32>
    %213 = arith.mulf %208, %212 : vector<8x4x32xf32>
    %c0_100 = arith.constant 0 : index
    %c0_101 = arith.constant 0 : index
    %c0_102 = arith.constant 0 : index
    %214 = vector.load %arg12[%c0_100, %c0_101, %c0_102] : memref<1x1x32xf32, #tpu.memory_space<vmem>>, vector<1x1x32xf32>
    %215 = vector.shape_cast %214 : vector<1x1x32xf32> to vector<1x32xf32>
    %216 = vector.shape_cast %215 : vector<1x32xf32> to vector<1x1x32xf32>
    %217 = vector.broadcast %216 : vector<1x1x32xf32> to vector<8x4x32xf32>
    %218 = arith.mulf %213, %217 : vector<8x4x32xf32>
    %c0_103 = arith.constant 0 : index
    %c0_104 = arith.constant 0 : index
    %c0_105 = arith.constant 0 : index
    %219 = vector.load %arg13[%c0_103, %c0_104, %c0_105] : memref<1x1x32xf32, #tpu.memory_space<vmem>>, vector<1x1x32xf32>
    %220 = vector.shape_cast %219 : vector<1x1x32xf32> to vector<1x32xf32>
    %221 = vector.shape_cast %220 : vector<1x32xf32> to vector<1x1x32xf32>
    %222 = vector.broadcast %221 : vector<1x1x32xf32> to vector<8x4x32xf32>
    %223 = arith.addf %218, %222 : vector<8x4x32xf32>
    %c0_106 = arith.constant 0 : index
    %c0_107 = arith.constant 0 : index
    %c0_108 = arith.constant 0 : index
    %224 = vector.load %arg14[%c0_106, %c0_107, %c0_108] : memref<8x4x32xf32, #tpu.memory_space<vmem>>, vector<8x4x32xf32>
    tpu.vector_store %arg14[%c0_106, %c0_107, %c0_108], %223 {strides = array<i32>} : memref<8x4x32xf32, #tpu.memory_space<vmem>>, vector<8x4x32xf32>,
    return
  }
  func.func @transform_1(%arg0: i32) -> (i32, i32, i32) {
    %c0_i32 = arith.constant 0 : i32
    %c0_i32_0 = arith.constant 0 : i32
    %c0_i32_1 = arith.constant 0 : i32
    return %arg0, %c0_i32, %c0_i32_0 : i32, i32, i32
  }
  func.func @transform_2(%arg0: i32) -> (i32, i32, i32) {
    %c0_i32 = arith.constant 0 : i32
    %c0_i32_0 = arith.constant 0 : i32
    %c0_i32_1 = arith.constant 0 : i32
    return %arg0, %c0_i32, %c0_i32_0 : i32, i32, i32
  }
  func.func @transform_3(%arg0: i32) -> (i32, i32, i32) {
    %c0_i32 = arith.constant 0 : i32
    %c0_i32_0 = arith.constant 0 : i32
    %c0_i32_1 = arith.constant 0 : i32
    return %arg0, %c0_i32, %c0_i32_0 : i32, i32, i32
  }
  func.func @transform_4(%arg0: i32) -> (i32, i32, i32) {
    %c0_i32 = arith.constant 0 : i32
    %c0_i32_0 = arith.constant 0 : i32
    %c0_i32_1 = arith.constant 0 : i32
    return %arg0, %c0_i32, %c0_i32_0 : i32, i32, i32
  }
  func.func @transform_5(%arg0: i32) -> (i32, i32, i32) {
    %c0_i32 = arith.constant 0 : i32
    %c0_i32_0 = arith.constant 0 : i32
    %c0_i32_1 = arith.constant 0 : i32
    return %arg0, %c0_i32, %c0_i32_0 : i32, i32, i32
  }
  func.func @transform_6(%arg0: i32) -> (i32, i32, i32) {
    %c0_i32 = arith.constant 0 : i32
    %c0_i32_0 = arith.constant 0 : i32
    %c0_i32_1 = arith.constant 0 : i32
    return %arg0, %c0_i32, %c0_i32_0 : i32, i32, i32
  }
  func.func @transform_7(%arg0: i32) -> (i32, i32, i32) {
    %c0_i32 = arith.constant 0 : i32
    %c0_i32_0 = arith.constant 0 : i32
    %c0_i32_1 = arith.constant 0 : i32
    return %arg0, %c0_i32, %c0_i32_0 : i32, i32, i32
  }
  func.func @transform_8(%arg0: i32) -> (i32, i32, i32) {
    %c0_i32 = arith.constant 0 : i32
    %c0_i32_0 = arith.constant 0 : i32
    %c0_i32_1 = arith.constant 0 : i32
    return %arg0, %c0_i32, %c0_i32_0 : i32, i32, i32
  }
  func.func @transform_9(%arg0: i32) -> (i32, i32, i32) {
    %c0_i32 = arith.constant 0 : i32
    %c0_i32_0 = arith.constant 0 : i32
    %c0_i32_1 = arith.constant 0 : i32
    return %arg0, %c0_i32, %c0_i32_0 : i32, i32, i32
  }
  func.func @transform_10(%arg0: i32) -> (i32, i32, i32) {
    %c0_i32 = arith.constant 0 : i32
    %c0_i32_0 = arith.constant 0 : i32
    %c0_i32_1 = arith.constant 0 : i32
    return %arg0, %c0_i32, %c0_i32_0 : i32, i32, i32
  }
  func.func @transform_11(%arg0: i32) -> (i32, i32, i32) {
    %c0_i32 = arith.constant 0 : i32
    %c0_i32_0 = arith.constant 0 : i32
    %c0_i32_1 = arith.constant 0 : i32
    return %arg0, %c0_i32, %c0_i32_0 : i32, i32, i32
  }
  func.func @transform_12(%arg0: i32) -> (i32, i32, i32) {
    %c0_i32 = arith.constant 0 : i32
    %c0_i32_0 = arith.constant 0 : i32
    %c0_i32_1 = arith.constant 0 : i32
    return %arg0, %c0_i32, %c0_i32_0 : i32, i32, i32
  }
  func.func @transform_13(%arg0: i32) -> (i32, i32, i32) {
    %c0_i32 = arith.constant 0 : i32
    %c0_i32_0 = arith.constant 0 : i32
    %c0_i32_1 = arith.constant 0 : i32
    %c0_i32_2 = arith.constant 0 : i32
    return %c0_i32, %c0_i32_0, %c0_i32_1 : i32, i32, i32
  }
  func.func @transform_14(%arg0: i32) -> (i32, i32, i32, i32) {
    %c0_i32 = arith.constant 0 : i32
    %c0_i32_0 = arith.constant 0 : i32
    %c0_i32_1 = arith.constant 0 : i32
    %c0_i32_2 = arith.constant 0 : i32
    %c0_i32_3 = arith.constant 0 : i32
    return %c0_i32, %c0_i32_0, %c0_i32_1, %c0_i32_2 : i32, i32, i32, i32
  }
}

module attributes {stable_mosaic.version = 11 : i64} {
  func.func @_head_kernel(%arg0: i32, %arg1: i32, %arg2: memref<8x384xf32, #tpu.memory_space<vmem>>, %arg3: memref<384x8xbf16, #tpu.memory_space<vmem>>, %arg4: memref<1x8xf32, #tpu.memory_space<vmem>>, %arg5: memref<8x8xf32, #tpu.memory_space<vmem>>, %arg6: memref<8x8xf32, #tpu.memory_space<vmem>>) attributes {dimension_semantics = [#tpu.dimension_semantics<parallel>, #tpu.dimension_semantics<arbitrary>], iteration_bounds = array<i64: 1, 1>, scalar_prefetch = 0 : i64, scratch_operands = 1 : i64, tpu.core_type = #tpu.core_type<tc>, window_params = [{transform_indices = @transform_0, window_bounds = array<i64: 8, 384>}, {transform_indices = @transform_1, window_bounds = array<i64: 384, 8>}, {pipeline_mode = #tpu.pipeline_mode<synchronous>, transform_indices = @transform_2, window_bounds = array<i64: 1, 8>}, {transform_indices = @transform_3, window_bounds = array<i64: 8, 8>}]} {
    %c0_i32 = arith.constant 0 : i32
    %0 = arith.cmpi eq, %arg1, %c0_i32 : i32
    %1 = arith.extui %0 : i1 to i32
    %c0_i32_0 = arith.constant 0 : i32
    %2 = arith.cmpi ne, %1, %c0_i32_0 : i32
    scf.if %2 {
      %cst_10 = arith.constant 0.000000e+00 : f32
      %13 = vector.broadcast %cst_10 : f32 to vector<8x8xf32>
      %c0_11 = arith.constant 0 : index
      %c0_12 = arith.constant 0 : index
      %14 = vector.load %arg6[%c0_11, %c0_12] : memref<8x8xf32, #tpu.memory_space<vmem>>, vector<8x8xf32>
      tpu.vector_store %arg6[%c0_11, %c0_12], %13 {strides = array<i32>} : memref<8x8xf32, #tpu.memory_space<vmem>>, vector<8x8xf32>,
    } else {
    }
    %c0 = arith.constant 0 : index
    %c0_1 = arith.constant 0 : index
    %3 = vector.load %arg6[%c0, %c0_1] : memref<8x8xf32, #tpu.memory_space<vmem>>, vector<8x8xf32>
    %c0_2 = arith.constant 0 : index
    %c0_3 = arith.constant 0 : index
    %4 = vector.load %arg2[%c0_2, %c0_3] : memref<8x384xf32, #tpu.memory_space<vmem>>, vector<8x384xf32>
    %5 = arith.truncf %4 : vector<8x384xf32> to vector<8x384xbf16>
    %c0_4 = arith.constant 0 : index
    %c0_5 = arith.constant 0 : index
    %6 = vector.load %arg3[%c0_4, %c0_5] : memref<384x8xbf16, #tpu.memory_space<vmem>>, vector<384x8xbf16>
    %cst = arith.constant dense<0.000000e+00> : vector<8x8xf32>
    %7 = tpu.matmul %5, %6, %cst {dimension_numbers = #tpu.dot_dimension_numbers<[1], [0], [0], [1], [0, 0, 1, 1], [], []>} : vector<8x384xbf16>, vector<384x8xbf16>, vector<8x8xf32> -> vector<8x8xf32>
    %8 = arith.addf %3, %7 : vector<8x8xf32>
    %c0_6 = arith.constant 0 : index
    %c0_7 = arith.constant 0 : index
    %9 = vector.load %arg6[%c0_6, %c0_7] : memref<8x8xf32, #tpu.memory_space<vmem>>, vector<8x8xf32>
    tpu.vector_store %arg6[%c0_6, %c0_7], %8 {strides = array<i32>} : memref<8x8xf32, #tpu.memory_space<vmem>>, vector<8x8xf32>,
    %c0_i32_8 = arith.constant 0 : i32
    %10 = arith.cmpi eq, %arg1, %c0_i32_8 : i32
    %11 = arith.extui %10 : i1 to i32
    %c0_i32_9 = arith.constant 0 : i32
    %12 = arith.cmpi ne, %11, %c0_i32_9 : i32
    scf.if %12 {
      %c0_10 = arith.constant 0 : index
      %c0_11 = arith.constant 0 : index
      %13 = vector.load %arg6[%c0_10, %c0_11] : memref<8x8xf32, #tpu.memory_space<vmem>>, vector<8x8xf32>
      %c0_12 = arith.constant 0 : index
      %c0_13 = arith.constant 0 : index
      %14 = vector.load %arg4[%c0_12, %c0_13] : memref<1x8xf32, #tpu.memory_space<vmem>>, vector<1x8xf32>
      %15 = vector.broadcast %14 : vector<1x8xf32> to vector<8x8xf32>
      %16 = arith.addf %13, %15 : vector<8x8xf32>
      %c0_14 = arith.constant 0 : index
      %c0_15 = arith.constant 0 : index
      %17 = vector.load %arg5[%c0_14, %c0_15] : memref<8x8xf32, #tpu.memory_space<vmem>>, vector<8x8xf32>
      tpu.vector_store %arg5[%c0_14, %c0_15], %16 {strides = array<i32>} : memref<8x8xf32, #tpu.memory_space<vmem>>, vector<8x8xf32>,
    } else {
    }
    return
  }
  func.func @transform_0(%arg0: i32, %arg1: i32) -> (i32, i32) {
    %c0_i32 = arith.constant 0 : i32
    return %arg0, %arg1 : i32, i32
  }
  func.func @transform_1(%arg0: i32, %arg1: i32) -> (i32, i32) {
    %c0_i32 = arith.constant 0 : i32
    %c0_i32_0 = arith.constant 0 : i32
    return %arg1, %c0_i32 : i32, i32
  }
  func.func @transform_2(%arg0: i32, %arg1: i32) -> (i32, i32) {
    %c0_i32 = arith.constant 0 : i32
    %c0_i32_0 = arith.constant 0 : i32
    %c0_i32_1 = arith.constant 0 : i32
    return %c0_i32, %c0_i32_0 : i32, i32
  }
  func.func @transform_3(%arg0: i32, %arg1: i32) -> (i32, i32) {
    %c0_i32 = arith.constant 0 : i32
    %c0_i32_0 = arith.constant 0 : i32
    return %arg0, %c0_i32 : i32, i32
  }
}

</mosaic_0001>

<llo_original>
// kernel: mgtst_forward.5
$region0: #{mgtst_forward.5}
  #allocation0 [shape = 'u32[]', space=smem, size = 0x4, offset = 0x4, fixed_abs, tag = 'smem constant byte address 0x4 - core index']
  #allocation1 [shape = 'u32[72,128]{1,0:T(1,128)}', space=vmem, size = 0x9000, scoped, tag = 'internal scratch']
  %s0 = inlined_call_operand.vmem [shape: f32[8,8,4], index: 0, kind: input, shape index: {}]
  %s1 = inlined_call_operand.vmem [shape: bf16[4,32], index: 1, kind: input, shape index: {}]
  %s2 = inlined_call_operand.vmem [shape: f32[1,32], index: 2, kind: input, shape index: {}]
  %s3 = inlined_call_operand.vmem [shape: f32[8,32], index: 3, kind: input, shape index: {}]
  %s4 = inlined_call_operand.vmem [shape: f32[8,8,32], index: 4, kind: output, shape index: {}]
  %s5 = sld [smem:[#allocation0]]
  $region26: #{mgtst_forward.5} parent=0
    _
  %s7 = ssub.s32 1, %s5
  %s8 = scalar_select 0, %s7, %s5
  // Predicated region
  $region2: #{mgtst_forward.5} parent=0 // pred_check
    _
  $region3: #{mgtst_forward.5} parent=0 // pred_check_branch
    %10 = sbr.rel (0) target = $region5
  $region4: #{mgtst_forward.5} parent=0 // pred_region
    _
  $region5: #{mgtst_forward.5} parent=0 // pred_fallthru
    _
  // Predicated region
  $region6: #{mgtst_forward.5} parent=0 // pred_check
    _
  $region7: #{mgtst_forward.5} parent=0 // pred_check_branch
    %12 = sbr.rel (0) target = $region9
  $region8: #{mgtst_forward.5} parent=0 // pred_region
    _
  $region9: #{mgtst_forward.5} parent=0 // pred_fallthru
    _
  // Predicated region
  $region10: #{mgtst_forward.5} parent=0 // pred_check
    _
  $region11: #{mgtst_forward.5} parent=0 // pred_check_branch
    %14 = sbr.rel (0) target = $region13
  $region12: #{mgtst_forward.5} parent=0 // pred_region
    _
  $region13: #{mgtst_forward.5} parent=0 // pred_fallthru
    _
  // Predicated region
  $region14: #{mgtst_forward.5} parent=0 // pred_check
    _
  $region15: #{mgtst_forward.5} parent=0 // pred_check_branch
    %16 = sbr.rel (0) target = $region17
  $region16: #{mgtst_forward.5} parent=0 // pred_region
    _
  $region17: #{mgtst_forward.5} parent=0 // pred_fallthru
    _
  %v18 = vld [vmem:[%s0] sm:$0xff]
  %v19 = vld [vmem:[%s0 + $0x8] sm:$0xff]
  %v20 = vld [vmem:[%s0 + $0x10] sm:$0xff]
  %v21 = vld [vmem:[%s0 + $0x18] sm:$0xff]
  %v22 = vld [vmem:[%s0 + $0x20] sm:$0xff]
  %v23 = vld [vmem:[%s0 + $0x28] sm:$0xff]
  %v24 = vld [vmem:[%s0 + $0x30] sm:$0xff]
  %v25 = vld [vmem:[%s0 + $0x38] sm:$0xff]
  %v26 = vpack.c.bf16 %v19, %v18
  %v27 = vpack.c.bf16 %v21, %v20
  %v28 = vpack.c.bf16 %v23, %v22
  %v29 = vpack.c.bf16 %v25, %v24
  %v30 = vld [vmem:[%s1] sm:$0x3]
  %v31 = vld [vmem:[%s2] sm:$0x1]
  %v33 = vperm.slane %v31, 0
  %vm35 = vcmask 31744
  %v37 = vsel %vm35, %v26, 0
  %v40 = vsel %vm35, %v27, 0
  %v43 = vsel %vm35, %v28, 0
  %v46 = vsel %vm35, %v29, 0
  %vm48 = vcmask 1041408
  %v50 = vsel %vm48, %v30, 0
  %52 = vmatpush.bf16.msra.mxu0 0
  %53 = vmatpush.bf16.msra.mxu0 0
  %54 = vmatpush.bf16.msra.mxu0 0
  %55 = vmatpush.bf16.msra.mxu0 0
  %56 = vmatpush.bf16.msra.mxu0 0
  %57 = vmatpush.bf16.msra.mxu0 0
  %58 = vmatpush.bf16.msra.mxu0 0
  %59 = vmatpush.bf16.msra.mxu0 %v50
  %60 = vmatmul.bf16.gmra.mxu0 %v37
  %v61 = vpop.f32.mrf.mxu0
  %v62 = vadd.f32 %v33, %v61
  %v63 = vpop.f32.mrf.mxu0
  %v64 = vadd.f32 %v33, %v63
  %65 = vmatmul.bf16.gmra.mxu0 %v40
  %v66 = vpop.f32.mrf.mxu0
  %v67 = vadd.f32 %v33, %v66
  %v68 = vpop.f32.mrf.mxu0
  %v69 = vadd.f32 %v33, %v68
  %70 = vmatmul.bf16.gmra.mxu0 %v43
  %v71 = vpop.f32.mrf.mxu0
  %v72 = vadd.f32 %v33, %v71
  %v73 = vpop.f32.mrf.mxu0
  %v74 = vadd.f32 %v33, %v73
  %75 = vmatmul.bf16.gmra.mxu0 %v46
  %v76 = vpop.f32.mrf.mxu0
  %v77 = vadd.f32 %v33, %v76
  %v78 = vpop.f32.mrf.mxu0
  %v79 = vadd.f32 %v33, %v78
  %80 = vdwg.mxu0
  %v81 = vld [vmem:[%s3] sm:$0xff]
  %v82 = vadd.f32 %v62, %v81
  %v83 = vadd.f32 %v64, %v81
  %v84 = vadd.f32 %v67, %v81
  %v85 = vadd.f32 %v69, %v81
  %v86 = vadd.f32 %v72, %v81
  %v87 = vadd.f32 %v74, %v81
  %v88 = vadd.f32 %v77, %v81
  %v89 = vadd.f32 %v79, %v81
  %vm90 = vcmask 261120
  %91 = vst.msk [vmem:[%s4] sm:$0xff] %vm90, %v82
  %92 = vst.msk [vmem:[%s4 + $0x8] sm:$0xff] %vm90, %v83
  %93 = vst.msk [vmem:[%s4 + $0x10] sm:$0xff] %vm90, %v84
  %94 = vst.msk [vmem:[%s4 + $0x18] sm:$0xff] %vm90, %v85
  %95 = vst.msk [vmem:[%s4 + $0x20] sm:$0xff] %vm90, %v86
  %96 = vst.msk [vmem:[%s4 + $0x28] sm:$0xff] %vm90, %v87
  %97 = vst.msk [vmem:[%s4 + $0x30] sm:$0xff] %vm90, %v88
  %98 = vst.msk [vmem:[%s4 + $0x38] sm:$0xff] %vm90, %v89
  // Predicated region
  $region18: #{mgtst_forward.5} parent=0 // pred_check
    _
  $region19: #{mgtst_forward.5} parent=0 // pred_check_branch
    %100 = sbr.rel (0) target = $region21
  $region20: #{mgtst_forward.5} parent=0 // pred_region
    _
  $region21: #{mgtst_forward.5} parent=0 // pred_fallthru
    _
  // Predicated region
  $region22: #{mgtst_forward.5} parent=0 // pred_check
    _
  $region23: #{mgtst_forward.5} parent=0 // pred_check_branch
    %102 = sbr.rel (0) target = $region25
  $region24: #{mgtst_forward.5} parent=0 // pred_region
    _
  $region25: #{mgtst_forward.5} parent=0 // pred_fallthru
    _

// kernel: mgtst_forward.7
$region0: #{mgtst_forward.7}
  #allocation0 [shape = 'u32[]', space=smem, size = 0x4, offset = 0x4, fixed_abs, tag = 'smem constant byte address 0x4 - core index']
  #allocation1 [shape = 'u32[72,128]{1,0:T(1,128)}', space=vmem, size = 0x9000, scoped, tag = 'internal scratch']
  %s0 = inlined_call_operand.vmem [shape: f32[8,4,8], index: 0, kind: input, shape index: {}]
  %s1 = inlined_call_operand.vmem [shape: bf16[8,32], index: 1, kind: input, shape index: {}]
  %s2 = inlined_call_operand.vmem [shape: f32[1,32], index: 2, kind: input, shape index: {}]
  %s3 = inlined_call_operand.vmem [shape: f32[4,32], index: 3, kind: input, shape index: {}]
  %s4 = inlined_call_operand.vmem [shape: f32[8,4,32], index: 4, kind: output, shape index: {}]
  %s5 = sld [smem:[#allocation0]]
  $region26: #{mgtst_forward.7} parent=0
    _
  %s7 = ssub.s32 1, %s5
  %s8 = scalar_select 0, %s7, %s5
  // Predicated region
  $region2: #{mgtst_forward.7} parent=0 // pred_check
    _
  $region3: #{mgtst_forward.7} parent=0 // pred_check_branch
    %10 = sbr.rel (0) target = $region5
  $region4: #{mgtst_forward.7} parent=0 // pred_region
    _
  $region5: #{mgtst_forward.7} parent=0 // pred_fallthru
    _
  // Predicated region
  $region6: #{mgtst_forward.7} parent=0 // pred_check
    _
  $region7: #{mgtst_forward.7} parent=0 // pred_check_branch
    %12 = sbr.rel (0) target = $region9
  $region8: #{mgtst_forward.7} parent=0 // pred_region
    _
  $region9: #{mgtst_forward.7} parent=0 // pred_fallthru
    _
  // Predicated region
  $region10: #{mgtst_forward.7} parent=0 // pred_check
    _
  $region11: #{mgtst_forward.7} parent=0 // pred_check_branch
    %14 = sbr.rel (0) target = $region13
  $region12: #{mgtst_forward.7} parent=0 // pred_region
    _
  $region13: #{mgtst_forward.7} parent=0 // pred_fallthru
    _
  // Predicated region
  $region14: #{mgtst_forward.7} parent=0 // pred_check
    _
  $region15: #{mgtst_forward.7} parent=0 // pred_check_branch
    %16 = sbr.rel (0) target = $region17
  $region16: #{mgtst_forward.7} parent=0 // pred_region
    _
  $region17: #{mgtst_forward.7} parent=0 // pred_fallthru
    _
  %v18 = vld [vmem:[%s0] sm:$0xf]
  %v19 = vld [vmem:[%s0 + $0x4] sm:$0xf]
  %v20 = vld [vmem:[%s0 + $0x8] sm:$0xf]
  %v21 = vld [vmem:[%s0 + $0xc] sm:$0xf]
  %v22 = vld [vmem:[%s0 + $0x10] sm:$0xf]
  %v23 = vld [vmem:[%s0 + $0x14] sm:$0xf]
  %v24 = vld [vmem:[%s0 + $0x18] sm:$0xf]
  %v25 = vld [vmem:[%s0 + $0x1c] sm:$0xf]
  %34 = vst [vmem:[#allocation1] ss:$2 sm:$0xff] %v18
  %s35 = scalar_lea.vmem [#allocation1], 1
  %36 = vst [vmem:[%s35] ss:$2 sm:$0xff] %v19
  %s37 = scalar_lea.vmem [#allocation1], 16
  %38 = vst [vmem:[%s37] ss:$2 sm:$0xff] %v20
  %s39 = scalar_lea.vmem [#allocation1], 17
  %40 = vst [vmem:[%s39] ss:$2 sm:$0xff] %v21
  %s41 = scalar_lea.vmem [#allocation1], 32
  %42 = vst [vmem:[%s41] ss:$2 sm:$0xff] %v22
  %s43 = scalar_lea.vmem [#allocation1], 33
  %44 = vst [vmem:[%s43] ss:$2 sm:$0xff] %v23
  %s45 = scalar_lea.vmem [#allocation1], 48
  %46 = vst [vmem:[%s45] ss:$2 sm:$0xff] %v24
  %s47 = scalar_lea.vmem [#allocation1], 49
  %48 = vst [vmem:[%s47] ss:$2 sm:$0xff] %v25
  %v49 = vld.sshfl [vmem:[#allocation1] sm:$0xff pattern:$0x75316420]
  %v50 = vld.sshfl [vmem:[#allocation1 + $0x10] sm:$0xff pattern:$0x75316420]
  %v51 = vld.sshfl [vmem:[#allocation1 + $0x20] sm:$0xff pattern:$0x75316420]
  %v52 = vld.sshfl [vmem:[#allocation1 + $0x30] sm:$0xff pattern:$0x75316420]
  %v57 = vpack.c.bf16 %v50, %v49
  %v58 = vpack.c.bf16 %v52, %v51
  %v59 = vld [vmem:[%s1] sm:$0xf]
  %v60 = vld [vmem:[%s2] sm:$0x1]
  %v62 = vperm.slane %v60, 0
  %vm64 = vcmask 64512
  %v66 = vsel %vm64, %v57, 0
  %v69 = vsel %vm64, %v58, 0
  %vm71 = vcmask 1043456
  %v73 = vsel %vm71, %v59, 0
  %75 = vmatpush.bf16.msra.mxu0 0
  %76 = vmatpush.bf16.msra.mxu0 0
  %77 = vmatpush.bf16.msra.mxu0 0
  %78 = vmatpush.bf16.msra.mxu0 0
  %79 = vmatpush.bf16.msra.mxu0 0
  %80 = vmatpush.bf16.msra.mxu0 0
  %81 = vmatpush.bf16.msra.mxu0 0
  %82 = vmatpush.bf16.msra.mxu0 %v73
  %83 = vmatmul.bf16.gmra.mxu0 %v66
  %v84 = vpop.f32.mrf.mxu0
  %v85 = vadd.f32 %v62, %v84
  %v86 = vpop.f32.mrf.mxu0
  %v87 = vadd.f32 %v62, %v86
  %88 = vmatmul.bf16.gmra.mxu0 %v69
  %v89 = vpop.f32.mrf.mxu0
  %v90 = vadd.f32 %v62, %v89
  %v91 = vpop.f32.mrf.mxu0
  %v92 = vadd.f32 %v62, %v91
  %93 = vdwg.mxu0
  %v98 = vrot.slane %v85, 4
  %v99 = vrot.slane %v87, 4
  %v100 = vrot.slane %v90, 4
  %v101 = vrot.slane %v92, 4
  %v106 = vld [vmem:[%s3] sm:$0xf]
  %v107 = vadd.f32 %v85, %v106
  %v108 = vadd.f32 %v98, %v106
  %v109 = vadd.f32 %v87, %v106
  %v110 = vadd.f32 %v99, %v106
  %v111 = vadd.f32 %v90, %v106
  %v112 = vadd.f32 %v100, %v106
  %v113 = vadd.f32 %v92, %v106
  %v114 = vadd.f32 %v101, %v106
  %vm115 = vcmask 257024
  %116 = vst.msk [vmem:[%s4] sm:$0xf] %vm115, %v107
  %117 = vst.msk [vmem:[%s4 + $0x4] sm:$0xf] %vm115, %v108
  %118 = vst.msk [vmem:[%s4 + $0x8] sm:$0xf] %vm115, %v109
  %119 = vst.msk [vmem:[%s4 + $0xc] sm:$0xf] %vm115, %v110
  %120 = vst.msk [vmem:[%s4 + $0x10] sm:$0xf] %vm115, %v111
  %121 = vst.msk [vmem:[%s4 + $0x14] sm:$0xf] %vm115, %v112
  %122 = vst.msk [vmem:[%s4 + $0x18] sm:$0xf] %vm115, %v113
  %123 = vst.msk [vmem:[%s4 + $0x1c] sm:$0xf] %vm115, %v114
  // Predicated region
  $region18: #{mgtst_forward.7} parent=0 // pred_check
    _
  $region19: #{mgtst_forward.7} parent=0 // pred_check_branch
    %125 = sbr.rel (0) target = $region21
  $region20: #{mgtst_forward.7} parent=0 // pred_region
    _
  $region21: #{mgtst_forward.7} parent=0 // pred_fallthru
    _
  // Predicated region
  $region22: #{mgtst_forward.7} parent=0 // pred_check
    _
  $region23: #{mgtst_forward.7} parent=0 // pred_check_branch
    %127 = sbr.rel (0) target = $region25
  $region24: #{mgtst_forward.7} parent=0 // pred_region
    _
  $region25: #{mgtst_forward.7} parent=0 // pred_fallthru
    _

// kernel: mgtst_forward.9
$region0: #{mgtst_forward.9}
  #allocation0 [shape = 'u32[]', space=smem, size = 0x4, offset = 0x4, fixed_abs, tag = 'smem constant byte address 0x4 - core index']
  #allocation1 [shape = 'u32[72,128]{1,0:T(1,128)}', space=vmem, size = 0x9000, scoped, tag = 'internal scratch']
  #allocation2 [shape = 'f32[8,8]{1,0:T(8,128)}', space=vmem, size = 0x1000, scoped, tag = 'scratch operand']
  %s0 = inlined_call_operand.vmem [shape: f32[8,384], index: 0, kind: input, shape index: {}]
  %s1 = inlined_call_operand.vmem [shape: bf16[384,8], index: 1, kind: input, shape index: {}]
  %s2 = inlined_call_operand.vmem [shape: f32[1,8], index: 2, kind: input, shape index: {}]
  %s3 = inlined_call_operand.hbm [shape: f32[8,8], index: 3, kind: output, shape index: {}]
  %s4 = sld [smem:[#allocation0]]
  $region30: #{mgtst_forward.9} parent=0
    _
  %s6 = ssub.s32 1, %s4
  %s7 = scalar_select 0, %s6, %s4
  $region1: #{mgtst_forward.9} parent=0
    #allocation3 [shape = 'u8[4096]{0}', space=vmem, size = 0x1000, scoped, tag = 'output window, operand 0, single buffered']
    #allocation4 [shape = 's32[1]{0}', space=sflag, size = 0x4, scoped, tag = 'scoped memory for mgtst_forward.9']
    %8 = vsyncpa [#allocation4], 0
    // Predicated region
    $region2: #{mgtst_forward.9} parent=1 // pred_check
      _
    $region3: #{mgtst_forward.9} parent=1 // pred_check_branch
      %10 = sbr.rel (0) target = $region5
    $region4: #{mgtst_forward.9} parent=1 // pred_region
      _
    $region5: #{mgtst_forward.9} parent=1 // pred_fallthru
      _
    // Predicated region
    $region6: #{mgtst_forward.9} parent=1 // pred_check
      _
    $region7: #{mgtst_forward.9} parent=1 // pred_check_branch
      %12 = sbr.rel (0) target = $region9
    $region8: #{mgtst_forward.9} parent=1 // pred_region
      _
    $region9: #{mgtst_forward.9} parent=1 // pred_fallthru
      _
    // Predicated region
    $region10: #{mgtst_forward.9} parent=1 // pred_check
      _
    $region11: #{mgtst_forward.9} parent=1 // pred_check_branch
      %14 = sbr.rel (0) target = $region13
    $region12: #{mgtst_forward.9} parent=1 // pred_region
      _
    $region13: #{mgtst_forward.9} parent=1 // pred_fallthru
      _
    %p15 = scmp.eq.s32.totalorder 0, 0
    // Predicated region
    $region14: #{mgtst_forward.9} parent=1 // pred_check
      %p16 = pneg %p15
    $region15: #{mgtst_forward.9} parent=1 // pred_check_branch
      %18 = sbr.rel (%p16) target = $region17
    $region16: #{mgtst_forward.9} parent=1 // pred_region
      %vm19 = vcmask 64512
      %20 = vst.msk [vmem:[#allocation2] sm:$0xff] %vm19, 0.0
    $region17: #{mgtst_forward.9} parent=1 // pred_fallthru
      _
    %v21 = vld [vmem:[#allocation2] sm:$0xff]
    %v22 = vld [vmem:[%s0] sm:$0xff]
    %v23 = vld [vmem:[%s0 + $0x8] sm:$0xff]
    %v24 = vld [vmem:[%s0 + $0x10] sm:$0xff]
    %v25 = vpack.c.bf16 %v22, %v22
    %v26 = vpack.c.bf16 %v23, %v23
    %v27 = vpack.c.bf16 %v24, %v24
    %v28 = vld [vmem:[%s1] sm:$0xf]
    %v29 = vld [vmem:[%s1 + $0x4] sm:$0xf]
    %v30 = vld [vmem:[%s1 + $0x8] sm:$0xf]
    %v31 = vld [vmem:[%s1 + $0xc] sm:$0xf]
    %v32 = vld [vmem:[%s1 + $0x10] sm:$0xf]
    %v33 = vld [vmem:[%s1 + $0x14] sm:$0xf]
    %v34 = vld [vmem:[%s1 + $0x18] sm:$0xf]
    %v35 = vld [vmem:[%s1 + $0x1c] sm:$0xf]
    %v36 = vld [vmem:[%s1 + $0x20] sm:$0xf]
    %v37 = vld [vmem:[%s1 + $0x24] sm:$0xf]
    %v38 = vld [vmem:[%s1 + $0x28] sm:$0xf]
    %v39 = vld [vmem:[%s1 + $0x2c] sm:$0xf]
    %v40 = vld [vmem:[%s1 + $0x30] sm:$0xf]
    %v41 = vld [vmem:[%s1 + $0x34] sm:$0xf]
    %v42 = vld [vmem:[%s1 + $0x38] sm:$0xf]
    %v43 = vld [vmem:[%s1 + $0x3c] sm:$0xf]
    %v44 = vld [vmem:[%s1 + $0x40] sm:$0xf]
    %v45 = vld [vmem:[%s1 + $0x44] sm:$0xf]
    %v46 = vld [vmem:[%s1 + $0x48] sm:$0xf]
    %v47 = vld [vmem:[%s1 + $0x4c] sm:$0xf]
    %v48 = vld [vmem:[%s1 + $0x50] sm:$0xf]
    %v49 = vld [vmem:[%s1 + $0x54] sm:$0xf]
    %v50 = vld [vmem:[%s1 + $0x58] sm:$0xf]
    %v51 = vld [vmem:[%s1 + $0x5c] sm:$0xf]
    %v52 = vld [vmem:[%s1 + $0x60] sm:$0xf]
    %v53 = vld [vmem:[%s1 + $0x64] sm:$0xf]
    %v54 = vld [vmem:[%s1 + $0x68] sm:$0xf]
    %v55 = vld [vmem:[%s1 + $0x6c] sm:$0xf]
    %v56 = vld [vmem:[%s1 + $0x70] sm:$0xf]
    %v57 = vld [vmem:[%s1 + $0x74] sm:$0xf]
    %v58 = vld [vmem:[%s1 + $0x78] sm:$0xf]
    %v59 = vld [vmem:[%s1 + $0x7c] sm:$0xf]
    %v60 = vld [vmem:[%s1 + $0x80] sm:$0xf]
    %v61 = vld [vmem:[%s1 + $0x84] sm:$0xf]
    %v62 = vld [vmem:[%s1 + $0x88] sm:$0xf]
    %v63 = vld [vmem:[%s1 + $0x8c] sm:$0xf]
    %v64 = vld [vmem:[%s1 + $0x90] sm:$0xf]
    %v65 = vld [vmem:[%s1 + $0x94] sm:$0xf]
    %v66 = vld [vmem:[%s1 + $0x98] sm:$0xf]
    %v67 = vld [vmem:[%s1 + $0x9c] sm:$0xf]
    %v68 = vld [vmem:[%s1 + $0xa0] sm:$0xf]
    %v69 = vld [vmem:[%s1 + $0xa4] sm:$0xf]
    %v70 = vld [vmem:[%s1 + $0xa8] sm:$0xf]
    %v71 = vld [vmem:[%s1 + $0xac] sm:$0xf]
    %v72 = vld [vmem:[%s1 + $0xb0] sm:$0xf]
    %v73 = vld [vmem:[%s1 + $0xb4] sm:$0xf]
    %v74 = vld [vmem:[%s1 + $0xb8] sm:$0xf]
    %v75 = vld [vmem:[%s1 + $0xbc] sm:$0xf]
    %v124 = vunpack.c.l.b16 %v28
    %v125 = vunpack.c.l.b16 %v29
    %v126 = vunpack.c.l.b16 %v30
    %v127 = vunpack.c.l.b16 %v31
    %v128 = vunpack.c.l.b16 %v32
    %v129 = vunpack.c.l.b16 %v33
    %v130 = vunpack.c.l.b16 %v34
    %v131 = vunpack.c.l.b16 %v35
    %v132 = vunpack.c.l.b16 %v36
    %v133 = vunpack.c.l.b16 %v37
    %v134 = vunpack.c.l.b16 %v38
    %v135 = vunpack.c.l.b16 %v39
    %v136 = vunpack.c.l.b16 %v40
    %v137 = vunpack.c.l.b16 %v41
    %v138 = vunpack.c.l.b16 %v42
    %v139 = vunpack.c.l.b16 %v43
    %v140 = vunpack.c.l.b16 %v44
    %v141 = vunpack.c.l.b16 %v45
    %v142 = vunpack.c.l.b16 %v46
    %v143 = vunpack.c.l.b16 %v47
    %v144 = vunpack.c.l.b16 %v48
    %v145 = vunpack.c.l.b16 %v49
    %v146 = vunpack.c.l.b16 %v50
    %v147 = vunpack.c.l.b16 %v51
    %v148 = vunpack.c.l.b16 %v52
    %v149 = vunpack.c.l.b16 %v53
    %v150 = vunpack.c.l.b16 %v54
    %v151 = vunpack.c.l.b16 %v55
    %v152 = vunpack.c.l.b16 %v56
    %v153 = vunpack.c.l.b16 %v57
    %v154 = vunpack.c.l.b16 %v58
    %v155 = vunpack.c.l.b16 %v59
    %v156 = vunpack.c.l.b16 %v60
    %v157 = vunpack.c.l.b16 %v61
    %v158 = vunpack.c.l.b16 %v62
    %v159 = vunpack.c.l.b16 %v63
    %v160 = vunpack.c.l.b16 %v64
    %v161 = vunpack.c.l.b16 %v65
    %v162 = vunpack.c.l.b16 %v66
    %v163 = vunpack.c.l.b16 %v67
    %v164 = vunpack.c.l.b16 %v68
    %v165 = vunpack.c.l.b16 %v69
    %v166 = vunpack.c.l.b16 %v70
    %v167 = vunpack.c.l.b16 %v71
    %v168 = vunpack.c.l.b16 %v72
    %v169 = vunpack.c.l.b16 %v73
    %v170 = vunpack.c.l.b16 %v74
    %v171 = vunpack.c.l.b16 %v75
    %v172 = vpack.c.b16 %v125, %v124
    %v173 = vpack.c.b16 %v127, %v126
    %v174 = vpack.c.b16 %v129, %v128
    %v175 = vpack.c.b16 %v131, %v130
    %v176 = vpack.c.b16 %v133, %v132
    %v177 = vpack.c.b16 %v135, %v134
    %v178 = vpack.c.b16 %v137, %v136
    %v179 = vpack.c.b16 %v139, %v138
    %v180 = vpack.c.b16 %v141, %v140
    %v181 = vpack.c.b16 %v143, %v142
    %v182 = vpack.c.b16 %v145, %v144
    %v183 = vpack.c.b16 %v147, %v146
    %v184 = vpack.c.b16 %v149, %v148
    %v185 = vpack.c.b16 %v151, %v150
    %v186 = vpack.c.b16 %v153, %v152
    %v187 = vpack.c.b16 %v155, %v154
    %v188 = vpack.c.b16 %v157, %v156
    %v189 = vpack.c.b16 %v159, %v158
    %v190 = vpack.c.b16 %v161, %v160
    %v191 = vpack.c.b16 %v163, %v162
    %v192 = vpack.c.b16 %v165, %v164
    %v193 = vpack.c.b16 %v167, %v166
    %v194 = vpack.c.b16 %v169, %v168
    %v195 = vpack.c.b16 %v171, %v170
    %220 = vmatpush.bf16.msra.mxu0 %v179
    %221 = vmatpush.bf16.msra.mxu0 %v178
    %222 = vmatpush.bf16.msra.mxu0 %v177
    %223 = vmatpush.bf16.msra.mxu0 %v176
    %224 = vmatpush.bf16.msra.mxu0 %v175
    %225 = vmatpush.bf16.msra.mxu0 %v174
    %226 = vmatpush.bf16.msra.mxu0 %v173
    %227 = vmatpush.bf16.msra.mxu0 %v172
    %228 = vmatmul.bf16.gmra.mxu0 %v25
    %v229 = vpop.f32.mrf.mxu0
    %v230 = vadd.f32 0.0, %v229
    %v231 = vpop.f32.mrf.mxu0
    %232 = vdwg.mxu0
    %233 = vmatpush.bf16.msra.mxu0 %v187
    %234 = vmatpush.bf16.msra.mxu0 %v186
    %235 = vmatpush.bf16.msra.mxu0 %v185
    %236 = vmatpush.bf16.msra.mxu0 %v184
    %237 = vmatpush.bf16.msra.mxu0 %v183
    %238 = vmatpush.bf16.msra.mxu0 %v182
    %239 = vmatpush.bf16.msra.mxu0 %v181
    %240 = vmatpush.bf16.msra.mxu0 %v180
    %241 = vmatmul.bf16.gmra.mxu0 %v26
    %v242 = vpop.f32.mrf.mxu0
    %v243 = vadd.f32 %v230, %v242
    %v244 = vpop.f32.mrf.mxu0
    %245 = vdwg.mxu0
    %246 = vmatpush.bf16.msra.mxu0 %v195
    %247 = vmatpush.bf16.msra.mxu0 %v194
    %248 = vmatpush.bf16.msra.mxu0 %v193
    %249 = vmatpush.bf16.msra.mxu0 %v192
    %250 = vmatpush.bf16.msra.mxu0 %v191
    %251 = vmatpush.bf16.msra.mxu0 %v190
    %252 = vmatpush.bf16.msra.mxu0 %v189
    %253 = vmatpush.bf16.msra.mxu0 %v188
    %254 = vmatmul.bf16.gmra.mxu0 %v27
    %v255 = vpop.f32.mrf.mxu0
    %v256 = vadd.f32 %v243, %v255
    %v257 = vpop.f32.mrf.mxu0
    %258 = vdwg.mxu0
    %v259 = vadd.f32 %v21, %v256
    %vm260 = vcmask 64512
    %261 = vst.msk [vmem:[#allocation2] sm:$0xff] %vm260, %v259
    // Predicated region
    $region18: #{mgtst_forward.9} parent=1 // pred_check
      %p262 = pneg %p15
    $region19: #{mgtst_forward.9} parent=1 // pred_check_branch
      %264 = sbr.rel (%p262) target = $region21
    $region20: #{mgtst_forward.9} parent=1 // pred_region
      %v265 = vld [vmem:[#allocation2] sm:$0xff]
      %v266 = vld [vmem:[%s2] sm:$0x1]
      %v268 = vperm.slane %v266, 0
      %v270 = vadd.f32 %v265, %v268
      %271 = vst.msk [vmem:[#allocation3] sm:$0xff] %vm260, %v270
    $region21: #{mgtst_forward.9} parent=1 // pred_fallthru
      _
    // Predicated region
    $region22: #{mgtst_forward.9} parent=1 // pred_check
      _
    $region23: #{mgtst_forward.9} parent=1 // pred_check_branch
      %273 = sbr.rel (0) target = $region25
    $region24: #{mgtst_forward.9} parent=1 // pred_region
      %275 = vsyncadd [#allocation4], 0
      %s277 = sshll.u32 [#allocation3], 4
      %s278 = int_to_ptr.vmem [resolvable:$true] %s277
      %s279 = sshll.u32 %s3, 4
      %s280 = int_to_ptr.hbm [resolvable:$true] %s279
      %282 = dma.vmem_to_hbm [thread:$0]  %s278, 128, %s280, [#allocation4]
    $region25: #{mgtst_forward.9} parent=1 // pred_fallthru
      _
    // Predicated region
    $region26: #{mgtst_forward.9} parent=1 // pred_check
      _
    $region27: #{mgtst_forward.9} parent=1 // pred_check_branch
      %284 = sbr.rel (0) target = $region29
    $region28: #{mgtst_forward.9} parent=1 // pred_region
      %286 = dma.done [#allocation4], 128
    $region29: #{mgtst_forward.9} parent=1 // pred_fallthru
      _
    %287 = vsyncpa [#allocation4], 1

// kernel: mgtst_forward.6
$region0: #{mgtst_forward.6}
  #allocation0 [shape = 'u32[]', space=smem, size = 0x4, offset = 0x4, fixed_abs, tag = 'smem constant byte address 0x4 - core index']
  #allocation1 [shape = 'u32[72,128]{1,0:T(1,128)}', space=vmem, size = 0x9000, scoped, tag = 'internal scratch']
  #allocation2 [shape = 'f32[4,8,8,8]{3,2,1,0:T(8,128)}', space=vmem, size = 0x20000, scoped, tag = 'scratch operand']
  #allocation3 [shape = 's32[1]{0}', space=sflag, size = 0x4, scoped, tag = 'scratch operand']
  #allocation6 [shape = 's32[]', space=sflag, size = 0x4, offset = 0, fixed_abs, tag = 'sflag constant byte address 0x0 - dummy sync flag']
  %s0 = inlined_call_operand.vmem [shape: f32[8,8,32], index: 0, kind: input, shape index: {}]
  %s1 = inlined_call_operand.vmem [shape: bf16[2,32,96], index: 1, kind: input, shape index: {}]
  %s2 = inlined_call_operand.vmem [shape: f32[2,1,96], index: 2, kind: input, shape index: {}]
  %s3 = inlined_call_operand.vmem [shape: bf16[2,32,32], index: 3, kind: input, shape index: {}]
  %s4 = inlined_call_operand.vmem [shape: f32[2,1,32], index: 4, kind: input, shape index: {}]
  %s5 = inlined_call_operand.vmem [shape: f32[2,1,32], index: 5, kind: input, shape index: {}]
  %s6 = inlined_call_operand.vmem [shape: f32[2,1,32], index: 6, kind: input, shape index: {}]
  %s7 = inlined_call_operand.vmem [shape: bf16[2,32,64], index: 7, kind: input, shape index: {}]
  %s8 = inlined_call_operand.vmem [shape: f32[2,1,64], index: 8, kind: input, shape index: {}]
  %s9 = inlined_call_operand.vmem [shape: bf16[2,64,32], index: 9, kind: input, shape index: {}]
  %s10 = inlined_call_operand.vmem [shape: f32[2,1,32], index: 10, kind: input, shape index: {}]
  %s11 = inlined_call_operand.vmem [shape: f32[2,1,32], index: 11, kind: input, shape index: {}]
  %s12 = inlined_call_operand.vmem [shape: f32[2,1,32], index: 12, kind: input, shape index: {}]
  %s13 = inlined_call_operand.vmem [shape: f32[8,8,32], index: 13, kind: output, shape index: {0}]
  %s14 = inlined_call_operand.hbm [shape: f32[8,4,8,8], index: 14, kind: output, shape index: {1}]
  %15 = xla_tuple %s13, %s14
  %s16 = sld [smem:[#allocation0]]
  $region116: #{mgtst_forward.6} parent=0
    _
  %s18 = ssub.s32 1, %s16
  %s19 = scalar_select 0, %s18, %s16
  $region1: #{mgtst_forward.6} parent=0
    #allocation4 [shape = 'u8[131072]{0}', space=vmem, size = 0x20000, scoped, tag = 'output window, operand 1, single buffered']
    #allocation5 [shape = 's32[2]{0}', space=sflag, size = 0x8, scoped, tag = 'scoped memory for mgtst_forward.6']
    %20 = vsyncpa [#allocation5], 0
    loop: start=0, step=1, limit=4
    $region2: #{mgtst_forward.6} parent=1 // loop_pre_header
      _
    $region3: #{mgtst_forward.6} parent=1 // loop_header
      %s22 = sphi 0, %s26
      %p23 = scmp.ge.s32.totalorder %s22, 4
      %s32 = sphi 0, %s34
      %s35 = sphi 0, %s32
      %s36 = sphi 0, %s35
      %s52 = sphi 0, %s36
      %s58 = sphi 0, %s60
      %s61 = sphi 0, %s58
      %s62 = sphi 0, %s61
      %s78 = sphi 0, %s62
      %s84 = sphi 0, %s86
      %s87 = sphi 0, %s84
      %s88 = sphi 0, %s87
      %s104 = sphi 0, %s88
      %s110 = sphi 0, %s112
      %s113 = sphi 0, %s110
      %s114 = sphi 0, %s113
      %s130 = sphi 0, %s114
      %s136 = sphi 0, %s138
      %s139 = sphi 0, %s136
      %s140 = sphi 0, %s139
      %s156 = sphi 0, %s140
      %s162 = sphi 0, %s164
      %s165 = sphi 0, %s162
      %s166 = sphi 0, %s165
      %s182 = sphi 0, %s166
      %s188 = sphi 0, %s190
      %s191 = sphi 0, %s188
      %s192 = sphi 0, %s191
      %s208 = sphi 0, %s192
      %s214 = sphi 0, %s216
      %s217 = sphi 0, %s214
      %s218 = sphi 0, %s217
      %s234 = sphi 0, %s218
      %s240 = sphi 0, %s242
      %s243 = sphi 0, %s240
      %s244 = sphi 0, %s243
      %s260 = sphi 0, %s244
      %s266 = sphi 0, %s268
      %s269 = sphi 0, %s266
      %s270 = sphi 0, %s269
      %s286 = sphi 0, %s270
      %s292 = sphi 0, %s294
      %s295 = sphi 0, %s292
      %s296 = sphi 0, %s295
      %s312 = sphi 0, %s296
      %s318 = sphi 0, %s320
      %s321 = sphi 0, %s318
      %s322 = sphi 0, %s321
      %s338 = sphi 0, %s322
      %s342 = sphi 0, %s342
      %s344 = sphi 0, %s342
      %s345 = sphi 0, %s344
      %s359 = sphi 0, %s345
      %s363 = sphi 0, %s363
      %s365 = sphi 0, %s363
      %s366 = sphi 0, %s365
      %s380 = sphi 0, %s366
    $region4: #{mgtst_forward.6} parent=1 // loop_header_branch
      %25 = sbr.rel (%p23) target = $region8
    $region5: #{mgtst_forward.6} parent=1 // loop_body
      %s27 = ssub.s32 %s22, 1
      %s28 = ssub.s32 %s22, 2
      %s29 = sadd.s32 %s22, 1
      %s30 = ssub.s32 %s22, %s29
      %p31 = scmp.eq.s32.totalorder %s30, 0
      %s33 = sadd.s32 %s32, 1
      %s34 = scalar_select %p31, %s32, %s33
      %p37 = pneg %p31
      %p38 = scmp.eq.s32.totalorder %s22, 1
      %p39 = por %p37, %p38
      %p40 = scmp.ne.s32.totalorder %s32, %s35
      %p41 = scmp.eq.s32.totalorder %s22, 0
      %p42 = por %p40, %p41
      %p43 = scmp.ne.s32.totalorder %s32, %s35
      %p44 = scmp.eq.s32.totalorder %s27, 1
      %p45 = por %p43, %p44
      %p46 = scmp.ne.s32.totalorder %s35, %s36
      %p47 = scmp.eq.s32.totalorder %s27, 0
      %p48 = por %p46, %p47
      %p49 = scmp.ne.s32.totalorder %s35, %s36
      %p50 = scmp.eq.s32.totalorder %s28, 1
      %p51 = por %p49, %p50
      %p53 = scmp.ne.s32.totalorder %s36, %s52
      %p54 = scmp.eq.s32.totalorder %s28, 0
      %p55 = por %p53, %p54
      %s56 = ssub.s32 %s22, %s29
      %p57 = scmp.eq.s32.totalorder %s56, 0
      %s59 = sadd.s32 %s58, 1
      %s60 = scalar_select %p57, %s58, %s59
      %p63 = pneg %p57
      %p64 = scmp.eq.s32.totalorder %s22, 1
      %p65 = por %p63, %p64
      %p66 = scmp.ne.s32.totalorder %s58, %s61
      %p67 = scmp.eq.s32.totalorder %s22, 0
      %p68 = por %p66, %p67
      %p69 = scmp.ne.s32.totalorder %s58, %s61
      %p70 = scmp.eq.s32.totalorder %s27, 1
      %p71 = por %p69, %p70
      %p72 = scmp.ne.s32.totalorder %s61, %s62
      %p73 = scmp.eq.s32.totalorder %s27, 0
      %p74 = por %p72, %p73
      %p75 = scmp.ne.s32.totalorder %s61, %s62
      %p76 = scmp.eq.s32.totalorder %s28, 1
      %p77 = por %p75, %p76
      %p79 = scmp.ne.s32.totalorder %s62, %s78
      %p80 = scmp.eq.s32.totalorder %s28, 0
      %p81 = por %p79, %p80
      %s82 = ssub.s32 %s22, %s29
      %p83 = scmp.eq.s32.totalorder %s82, 0
      %s85 = sadd.s32 %s84, 1
      %s86 = scalar_select %p83, %s84, %s85
      %p89 = pneg %p83
      %p90 = scmp.eq.s32.totalorder %s22, 1
      %p91 = por %p89, %p90
      %p92 = scmp.ne.s32.totalorder %s84, %s87
      %p93 = scmp.eq.s32.totalorder %s22, 0
      %p94 = por %p92, %p93
      %p95 = scmp.ne.s32.totalorder %s84, %s87
      %p96 = scmp.eq.s32.totalorder %s27, 1
      %p97 = por %p95, %p96
      %p98 = scmp.ne.s32.totalorder %s87, %s88
      %p99 = scmp.eq.s32.totalorder %s27, 0
      %p100 = por %p98, %p99
      %p101 = scmp.ne.s32.totalorder %s87, %s88
      %p102 = scmp.eq.s32.totalorder %s28, 1
      %p103 = por %p101, %p102
      %p105 = scmp.ne.s32.totalorder %s88, %s104
      %p106 = scmp.eq.s32.totalorder %s28, 0
      %p107 = por %p105, %p106
      %s108 = ssub.s32 %s22, %s29
      %p109 = scmp.eq.s32.totalorder %s108, 0
      %s111 = sadd.s32 %s110, 1
      %s112 = scalar_select %p109, %s110, %s111
      %p115 = pneg %p109
      %p116 = scmp.eq.s32.totalorder %s22, 1
      %p117 = por %p115, %p116
      %p118 = scmp.ne.s32.totalorder %s110, %s113
      %p119 = scmp.eq.s32.totalorder %s22, 0
      %p120 = por %p118, %p119
      %p121 = scmp.ne.s32.totalorder %s110, %s113
      %p122 = scmp.eq.s32.totalorder %s27, 1
      %p123 = por %p121, %p122
      %p124 = scmp.ne.s32.totalorder %s113, %s114
      %p125 = scmp.eq.s32.totalorder %s27, 0
      %p126 = por %p124, %p125
      %p127 = scmp.ne.s32.totalorder %s113, %s114
      %p128 = scmp.eq.s32.totalorder %s28, 1
      %p129 = por %p127, %p128
      %p131 = scmp.ne.s32.totalorder %s114, %s130
      %p132 = scmp.eq.s32.totalorder %s28, 0
      %p133 = por %p131, %p132
      %s134 = ssub.s32 %s22, %s29
      %p135 = scmp.eq.s32.totalorder %s134, 0
      %s137 = sadd.s32 %s136, 1
      %s138 = scalar_select %p135, %s136, %s137
      %p141 = pneg %p135
      %p142 = scmp.eq.s32.totalorder %s22, 1
      %p143 = por %p141, %p142
      %p144 = scmp.ne.s32.totalorder %s136, %s139
      %p145 = scmp.eq.s32.totalorder %s22, 0
      %p146 = por %p144, %p145
      %p147 = scmp.ne.s32.totalorder %s136, %s139
      %p148 = scmp.eq.s32.totalorder %s27, 1
      %p149 = por %p147, %p148
      %p150 = scmp.ne.s32.totalorder %s139, %s140
      %p151 = scmp.eq.s32.totalorder %s27, 0
      %p152 = por %p150, %p151
      %p153 = scmp.ne.s32.totalorder %s139, %s140
      %p154 = scmp.eq.s32.totalorder %s28, 1
      %p155 = por %p153, %p154
      %p157 = scmp.ne.s32.totalorder %s140, %s156
      %p158 = scmp.eq.s32.totalorder %s28, 0
      %p159 = por %p157, %p158
      %s160 = ssub.s32 %s22, %s29
      %p161 = scmp.eq.s32.totalorder %s160, 0
      %s163 = sadd.s32 %s162, 1
      %s164 = scalar_select %p161, %s162, %s163
      %p167 = pneg %p161
      %p168 = scmp.eq.s32.totalorder %s22, 1
      %p169 = por %p167, %p168
      %p170 = scmp.ne.s32.totalorder %s162, %s165
      %p171 = scmp.eq.s32.totalorder %s22, 0
      %p172 = por %p170, %p171
      %p173 = scmp.ne.s32.totalorder %s162, %s165
      %p174 = scmp.eq.s32.totalorder %s27, 1
      %p175 = por %p173, %p174
      %p176 = scmp.ne.s32.totalorder %s165, %s166
      %p177 = scmp.eq.s32.totalorder %s27, 0
      %p178 = por %p176, %p177
      %p179 = scmp.ne.s32.totalorder %s165, %s166
      %p180 = scmp.eq.s32.totalorder %s28, 1
      %p181 = por %p179, %p180
      %p183 = scmp.ne.s32.totalorder %s166, %s182
      %p184 = scmp.eq.s32.totalorder %s28, 0
      %p185 = por %p183, %p184
      %s186 = ssub.s32 %s22, %s29
      %p187 = scmp.eq.s32.totalorder %s186, 0
      %s189 = sadd.s32 %s188, 1
      %s190 = scalar_select %p187, %s188, %s189
      %p193 = pneg %p187
      %p194 = scmp.eq.s32.totalorder %s22, 1
      %p195 = por %p193, %p194
      %p196 = scmp.ne.s32.totalorder %s188, %s191
      %p197 = scmp.eq.s32.totalorder %s22, 0
      %p198 = por %p196, %p197
      %p199 = scmp.ne.s32.totalorder %s188, %s191
      %p200 = scmp.eq.s32.totalorder %s27, 1
      %p201 = por %p199, %p200
      %p202 = scmp.ne.s32.totalorder %s191, %s192
      %p203 = scmp.eq.s32.totalorder %s27, 0
      %p204 = por %p202, %p203
      %p205 = scmp.ne.s32.totalorder %s191, %s192
      %p206 = scmp.eq.s32.totalorder %s28, 1
      %p207 = por %p205, %p206
      %p209 = scmp.ne.s32.totalorder %s192, %s208
      %p210 = scmp.eq.s32.totalorder %s28, 0
      %p211 = por %p209, %p210
      %s212 = ssub.s32 %s22, %s29
      %p213 = scmp.eq.s32.totalorder %s212, 0
      %s215 = sadd.s32 %s214, 1
      %s216 = scalar_select %p213, %s214, %s215
      %p219 = pneg %p213
      %p220 = scmp.eq.s32.totalorder %s22, 1
      %p221 = por %p219, %p220
      %p222 = scmp.ne.s32.totalorder %s214, %s217
      %p223 = scmp.eq.s32.totalorder %s22, 0
      %p224 = por %p222, %p223
      %p225 = scmp.ne.s32.totalorder %s214, %s217
      %p226 = scmp.eq.s32.totalorder %s27, 1
      %p227 = por %p225, %p226
      %p228 = scmp.ne.s32.totalorder %s217, %s218
      %p229 = scmp.eq.s32.totalorder %s27, 0
      %p230 = por %p228, %p229
      %p231 = scmp.ne.s32.totalorder %s217, %s218
      %p232 = scmp.eq.s32.totalorder %s28, 1
      %p233 = por %p231, %p232
      %p235 = scmp.ne.s32.totalorder %s218, %s234
      %p236 = scmp.eq.s32.totalorder %s28, 0
      %p237 = por %p235, %p236
      %s238 = ssub.s32 %s22, %s29
      %p239 = scmp.eq.s32.totalorder %s238, 0
      %s241 = sadd.s32 %s240, 1
      %s242 = scalar_select %p239, %s240, %s241
      %p245 = pneg %p239
      %p246 = scmp.eq.s32.totalorder %s22, 1
      %p247 = por %p245, %p246
      %p248 = scmp.ne.s32.totalorder %s240, %s243
      %p249 = scmp.eq.s32.totalorder %s22, 0
      %p250 = por %p248, %p249
      %p251 = scmp.ne.s32.totalorder %s240, %s243
      %p252 = scmp.eq.s32.totalorder %s27, 1
      %p253 = por %p251, %p252
      %p254 = scmp.ne.s32.totalorder %s243, %s244
      %p255 = scmp.eq.s32.totalorder %s27, 0
      %p256 = por %p254, %p255
      %p257 = scmp.ne.s32.totalorder %s243, %s244
      %p258 = scmp.eq.s32.totalorder %s28, 1
      %p259 = por %p257, %p258
      %p261 = scmp.ne.s32.totalorder %s244, %s260
      %p262 = scmp.eq.s32.totalorder %s28, 0
      %p263 = por %p261, %p262
      %s264 = ssub.s32 %s22, %s29
      %p265 = scmp.eq.s32.totalorder %s264, 0
      %s267 = sadd.s32 %s266, 1
      %s268 = scalar_select %p265, %s266, %s267
      %p271 = pneg %p265
      %p272 = scmp.eq.s32.totalorder %s22, 1
      %p273 = por %p271, %p272
      %p274 = scmp.ne.s32.totalorder %s266, %s269
      %p275 = scmp.eq.s32.totalorder %s22, 0
      %p276 = por %p274, %p275
      %p277 = scmp.ne.s32.totalorder %s266, %s269
      %p278 = scmp.eq.s32.totalorder %s27, 1
      %p279 = por %p277, %p278
      %p280 = scmp.ne.s32.totalorder %s269, %s270
      %p281 = scmp.eq.s32.totalorder %s27, 0
      %p282 = por %p280, %p281
      %p283 = scmp.ne.s32.totalorder %s269, %s270
      %p284 = scmp.eq.s32.totalorder %s28, 1
      %p285 = por %p283, %p284
      %p287 = scmp.ne.s32.totalorder %s270, %s286
      %p288 = scmp.eq.s32.totalorder %s28, 0
      %p289 = por %p287, %p288
      %s290 = ssub.s32 %s22, %s29
      %p291 = scmp.eq.s32.totalorder %s290, 0
      %s293 = sadd.s32 %s292, 1
      %s294 = scalar_select %p291, %s292, %s293
      %p297 = pneg %p291
      %p298 = scmp.eq.s32.totalorder %s22, 1
      %p299 = por %p297, %p298
      %p300 = scmp.ne.s32.totalorder %s292, %s295
      %p301 = scmp.eq.s32.totalorder %s22, 0
      %p302 = por %p300, %p301
      %p303 = scmp.ne.s32.totalorder %s292, %s295
      %p304 = scmp.eq.s32.totalorder %s27, 1
      %p305 = por %p303, %p304
      %p306 = scmp.ne.s32.totalorder %s295, %s296
      %p307 = scmp.eq.s32.totalorder %s27, 0
      %p308 = por %p306, %p307
      %p309 = scmp.ne.s32.totalorder %s295, %s296
      %p310 = scmp.eq.s32.totalorder %s28, 1
      %p311 = por %p309, %p310
      %p313 = scmp.ne.s32.totalorder %s296, %s312
      %p314 = scmp.eq.s32.totalorder %s28, 0
      %p315 = por %p313, %p314
      %s316 = ssub.s32 %s22, %s29
      %p317 = scmp.eq.s32.totalorder %s316, 0
      %s319 = sadd.s32 %s318, 1
      %s320 = scalar_select %p317, %s318, %s319
      %p323 = pneg %p317
      %p324 = scmp.eq.s32.totalorder %s22, 1
      %p325 = por %p323, %p324
      %p326 = scmp.ne.s32.totalorder %s318, %s321
      %p327 = scmp.eq.s32.totalorder %s22, 0
      %p328 = por %p326, %p327
      %p329 = scmp.ne.s32.totalorder %s318, %s321
      %p330 = scmp.eq.s32.totalorder %s27, 1
      %p331 = por %p329, %p330
      %p332 = scmp.ne.s32.totalorder %s321, %s322
      %p333 = scmp.eq.s32.totalorder %s27, 0
      %p334 = por %p332, %p333
      %p335 = scmp.ne.s32.totalorder %s321, %s322
      %p336 = scmp.eq.s32.totalorder %s28, 1
      %p337 = por %p335, %p336
      %p339 = scmp.ne.s32.totalorder %s322, %s338
      %p340 = scmp.eq.s32.totalorder %s28, 0
      %p341 = por %p339, %p340
      %s343 = sadd.s32 %s342, 1
      %p346 = scmp.eq.s32.totalorder %s22, 1
      %p347 = scmp.ne.s32.totalorder %s342, %s344
      %p348 = scmp.eq.s32.totalorder %s22, 0
      %p349 = por %p347, %p348
      %p350 = scmp.ne.s32.totalorder %s342, %s344
      %p351 = scmp.eq.s32.totalorder %s27, 1
      %p352 = por %p350, %p351
      %p353 = scmp.ne.s32.totalorder %s344, %s345
      %p354 = scmp.eq.s32.totalorder %s27, 0
      %p355 = por %p353, %p354
      %p356 = scmp.ne.s32.totalorder %s344, %s345
      %p357 = scmp.eq.s32.totalorder %s28, 1
      %p358 = por %p356, %p357
      %p360 = scmp.ne.s32.totalorder %s345, %s359
      %p361 = scmp.eq.s32.totalorder %s28, 0
      %p362 = por %p360, %p361
      %s364 = sadd.s32 %s363, 1
      %p367 = scmp.eq.s32.totalorder %s22, 1
      %p368 = scmp.ne.s32.totalorder %s363, %s365
      %p369 = scmp.eq.s32.totalorder %s22, 0
      %p370 = por %p368, %p369
      %p371 = scmp.ne.s32.totalorder %s363, %s365
      %p372 = scmp.eq.s32.totalorder %s27, 1
      %p373 = por %p371, %p372
      %p374 = scmp.ne.s32.totalorder %s365, %s366
      %p375 = scmp.eq.s32.totalorder %s27, 0
      %p376 = por %p374, %p375
      %p377 = scmp.ne.s32.totalorder %s365, %s366
      %p378 = scmp.eq.s32.totalorder %s28, 1
      %p379 = por %p377, %p378
      %p381 = scmp.ne.s32.totalorder %s366, %s380
      %p382 = scmp.eq.s32.totalorder %s28, 0
      %p383 = por %p381, %p382
      %p384 = scmp.le.s32.totalorder 1, %s22
      %p385 = scmp.lt.s32.totalorder %s22, 3
      %p386 = pnand %p384, %p385
      %p387 = pneg %p386
      // Predicated region
      $region9: #{mgtst_forward.6} parent=5 // pred_check
        _
      $region10: #{mgtst_forward.6} parent=5 // pred_check_branch
        %389 = sbr.rel (%p386) target = $region12
      $region11: #{mgtst_forward.6} parent=5 // pred_region
        %s390 = ssub.s32 %s22, 1
      $region12: #{mgtst_forward.6} parent=5 // pred_fallthru
        _
      %p391 = scmp.lt.s32.totalorder %s22, 2
      // Predicated region
      $region13: #{mgtst_forward.6} parent=5 // pred_check
        %p392 = pneg %p391
      $region14: #{mgtst_forward.6} parent=5 // pred_check_branch
        %394 = sbr.rel (%p392) target = $region16
      $region15: #{mgtst_forward.6} parent=5 // pred_region
        // Predicated region
        $region17: #{mgtst_forward.6} parent=15 // pred_check
          %p395 = pneg %p42
        $region18: #{mgtst_forward.6} parent=15 // pred_check_branch
          %397 = sbr.rel (%p395) target = $region20
        $region19: #{mgtst_forward.6} parent=15 // pred_region
          %p398 = scmp.lt.s32.totalorder %s22, 1
          %s399 = scalar_select %p398, %s22, 1
          %s400 = smul.addr %s399, 4
          %s401 = smul.addr %s400, 4
          %s402 = scalar_lea.vmem %s1, %s401
        $region20: #{mgtst_forward.6} parent=15 // pred_fallthru
          _
        // Predicated region
        $region21: #{mgtst_forward.6} parent=15 // pred_check
          %p403 = pneg %p68
        $region22: #{mgtst_forward.6} parent=15 // pred_check_branch
          %405 = sbr.rel (%p403) target = $region24
        $region23: #{mgtst_forward.6} parent=15 // pred_region
          %p406 = scmp.lt.s32.totalorder %s22, 1
          %s407 = scalar_select %p406, %s22, 1
          %s408 = scalar_lea.vmem %s2, %s407
        $region24: #{mgtst_forward.6} parent=15 // pred_fallthru
          _
        // Predicated region
        $region25: #{mgtst_forward.6} parent=15 // pred_check
          %p409 = pneg %p94
        $region26: #{mgtst_forward.6} parent=15 // pred_check_branch
          %411 = sbr.rel (%p409) target = $region28
        $region27: #{mgtst_forward.6} parent=15 // pred_region
          %p412 = scmp.lt.s32.totalorder %s22, 1
          %s413 = scalar_select %p412, %s22, 1
          %s414 = smul.addr %s413, 4
          %s415 = smul.addr %s414, 4
          %s416 = scalar_lea.vmem %s3, %s415
        $region28: #{mgtst_forward.6} parent=15 // pred_fallthru
          _
        // Predicated region
        $region29: #{mgtst_forward.6} parent=15 // pred_check
          %p417 = pneg %p120
        $region30: #{mgtst_forward.6} parent=15 // pred_check_branch
          %419 = sbr.rel (%p417) target = $region32
        $region31: #{mgtst_forward.6} parent=15 // pred_region
          %p420 = scmp.lt.s32.totalorder %s22, 1
          %s421 = scalar_select %p420, %s22, 1
          %s422 = scalar_lea.vmem %s4, %s421
        $region32: #{mgtst_forward.6} parent=15 // pred_fallthru
          _
        // Predicated region
        $region33: #{mgtst_forward.6} parent=15 // pred_check
          %p423 = pneg %p146
        $region34: #{mgtst_forward.6} parent=15 // pred_check_branch
          %425 = sbr.rel (%p423) target = $region36
        $region35: #{mgtst_forward.6} parent=15 // pred_region
          %p426 = scmp.lt.s32.totalorder %s22, 1
          %s427 = scalar_select %p426, %s22, 1
          %s428 = scalar_lea.vmem %s5, %s427
        $region36: #{mgtst_forward.6} parent=15 // pred_fallthru
          _
        // Predicated region
        $region37: #{mgtst_forward.6} parent=15 // pred_check
          %p429 = pneg %p172
        $region38: #{mgtst_forward.6} parent=15 // pred_check_branch
          %431 = sbr.rel (%p429) target = $region40
        $region39: #{mgtst_forward.6} parent=15 // pred_region
          %p432 = scmp.lt.s32.totalorder %s22, 1
          %s433 = scalar_select %p432, %s22, 1
          %s434 = scalar_lea.vmem %s6, %s433
        $region40: #{mgtst_forward.6} parent=15 // pred_fallthru
          _
        // Predicated region
        $region41: #{mgtst_forward.6} parent=15 // pred_check
          %p435 = pneg %p198
        $region42: #{mgtst_forward.6} parent=15 // pred_check_branch
          %437 = sbr.rel (%p435) target = $region44
        $region43: #{mgtst_forward.6} parent=15 // pred_region
          %p438 = scmp.lt.s32.totalorder %s22, 1
          %s439 = scalar_select %p438, %s22, 1
          %s440 = smul.addr %s439, 4
          %s441 = smul.addr %s440, 4
          %s442 = scalar_lea.vmem %s7, %s441
        $region44: #{mgtst_forward.6} parent=15 // pred_fallthru
          _
        // Predicated region
        $region45: #{mgtst_forward.6} parent=15 // pred_check
          %p443 = pneg %p224
        $region46: #{mgtst_forward.6} parent=15 // pred_check_branch
          %445 = sbr.rel (%p443) target = $region48
        $region47: #{mgtst_forward.6} parent=15 // pred_region
          %p446 = scmp.lt.s32.totalorder %s22, 1
          %s447 = scalar_select %p446, %s22, 1
          %s448 = scalar_lea.vmem %s8, %s447
        $region48: #{mgtst_forward.6} parent=15 // pred_fallthru
          _
        // Predicated region
        $region49: #{mgtst_forward.6} parent=15 // pred_check
          %p449 = pneg %p250
        $region50: #{mgtst_forward.6} parent=15 // pred_check_branch
          %451 = sbr.rel (%p449) target = $region52
        $region51: #{mgtst_forward.6} parent=15 // pred_region
          %p452 = scmp.lt.s32.totalorder %s22, 1
          %s453 = scalar_select %p452, %s22, 1
          %s454 = smul.addr %s453, 8
          %s455 = smul.addr %s454, 4
          %s456 = scalar_lea.vmem %s9, %s455
        $region52: #{mgtst_forward.6} parent=15 // pred_fallthru
          _
        // Predicated region
        $region53: #{mgtst_forward.6} parent=15 // pred_check
          %p457 = pneg %p276
        $region54: #{mgtst_forward.6} parent=15 // pred_check_branch
          %459 = sbr.rel (%p457) target = $region56
        $region55: #{mgtst_forward.6} parent=15 // pred_region
          %p460 = scmp.lt.s32.totalorder %s22, 1
          %s461 = scalar_select %p460, %s22, 1
          %s462 = scalar_lea.vmem %s10, %s461
        $region56: #{mgtst_forward.6} parent=15 // pred_fallthru
          _
        // Predicated region
        $region57: #{mgtst_forward.6} parent=15 // pred_check
          %p463 = pneg %p302
        $region58: #{mgtst_forward.6} parent=15 // pred_check_branch
          %465 = sbr.rel (%p463) target = $region60
        $region59: #{mgtst_forward.6} parent=15 // pred_region
          %p466 = scmp.lt.s32.totalorder %s22, 1
          %s467 = scalar_select %p466, %s22, 1
          %s468 = scalar_lea.vmem %s11, %s467
        $region60: #{mgtst_forward.6} parent=15 // pred_fallthru
          _
        // Predicated region
        $region61: #{mgtst_forward.6} parent=15 // pred_check
          %p469 = pneg %p328
        $region62: #{mgtst_forward.6} parent=15 // pred_check_branch
          %471 = sbr.rel (%p469) target = $region64
        $region63: #{mgtst_forward.6} parent=15 // pred_region
          %p472 = scmp.lt.s32.totalorder %s22, 1
          %s473 = scalar_select %p472, %s22, 1
          %s474 = scalar_lea.vmem %s12, %s473
        $region64: #{mgtst_forward.6} parent=15 // pred_fallthru
          _
      $region16: #{mgtst_forward.6} parent=5 // pred_fallthru
        _
      %p475 = scmp.le.s32.totalorder 1, %s22
      %p476 = scmp.lt.s32.totalorder %s22, 3
      %p477 = pnand %p475, %p476
      %p478 = pneg %p477
      // Predicated region
      $region65: #{mgtst_forward.6} parent=5 // pred_check
        _
      $region66: #{mgtst_forward.6} parent=5 // pred_check_branch
        %480 = sbr.rel (%p477) target = $region68
      $region67: #{mgtst_forward.6} parent=5 // pred_region
        %s481 = ssub.s32 %s22, 1
        %p482 = scmp.lt.s32.totalorder %s27, 1
        %s483 = scalar_select %p482, %s27, 1
        %s484 = smul.addr %s483, 4
        %s485 = smul.addr %s484, 4
        %s486 = scalar_lea.vmem %s1, %s485
        %p487 = pneg %p48
        %p488 = pneg %p45
        %p489 = scmp.lt.s32.totalorder %s27, 1
        %s490 = scalar_select %p489, %s27, 1
        %s491 = scalar_lea.vmem %s2, %s490
        %p492 = pneg %p74
        %p493 = pneg %p71
        %p494 = scmp.lt.s32.totalorder %s27, 1
        %s495 = scalar_select %p494, %s27, 1
        %s496 = smul.addr %s495, 4
        %s497 = smul.addr %s496, 4
        %s498 = scalar_lea.vmem %s3, %s497
        %p499 = pneg %p100
        %p500 = pneg %p97
        %p501 = scmp.lt.s32.totalorder %s27, 1
        %s502 = scalar_select %p501, %s27, 1
        %s503 = scalar_lea.vmem %s4, %s502
        %p504 = pneg %p126
        %p505 = pneg %p123
        %p506 = scmp.lt.s32.totalorder %s27, 1
        %s507 = scalar_select %p506, %s27, 1
        %s508 = scalar_lea.vmem %s5, %s507
        %p509 = pneg %p152
        %p510 = pneg %p149
        %p511 = scmp.lt.s32.totalorder %s27, 1
        %s512 = scalar_select %p511, %s27, 1
        %s513 = scalar_lea.vmem %s6, %s512
        %p514 = pneg %p178
        %p515 = pneg %p175
        %p516 = scmp.lt.s32.totalorder %s27, 1
        %s517 = scalar_select %p516, %s27, 1
        %s518 = smul.addr %s517, 4
        %s519 = smul.addr %s518, 4
        %s520 = scalar_lea.vmem %s7, %s519
        %p521 = pneg %p204
        %p522 = pneg %p201
        %p523 = scmp.lt.s32.totalorder %s27, 1
        %s524 = scalar_select %p523, %s27, 1
        %s525 = scalar_lea.vmem %s8, %s524
        %p526 = pneg %p230
        %p527 = pneg %p227
        %p528 = scmp.lt.s32.totalorder %s27, 1
        %s529 = scalar_select %p528, %s27, 1
        %s530 = smul.addr %s529, 8
        %s531 = smul.addr %s530, 4
        %s532 = scalar_lea.vmem %s9, %s531
        %p533 = pneg %p256
        %p534 = pneg %p253
        %p535 = scmp.lt.s32.totalorder %s27, 1
        %s536 = scalar_select %p535, %s27, 1
        %s537 = scalar_lea.vmem %s10, %s536
        %p538 = pneg %p282
        %p539 = pneg %p279
        %p540 = scmp.lt.s32.totalorder %s27, 1
        %s541 = scalar_select %p540, %s27, 1
        %s542 = scalar_lea.vmem %s11, %s541
        %p543 = pneg %p308
        %p544 = pneg %p305
        %p545 = scmp.lt.s32.totalorder %s27, 1
        %s546 = scalar_select %p545, %s27, 1
        %s547 = scalar_lea.vmem %s12, %s546
        %p548 = pneg %p334
        %p549 = pneg %p331
        %p550 = pneg %p355
        %p551 = pneg %p352
        %p552 = pneg %p376
        %p553 = pneg %p373
        %p554 = scmp.lt.s32.totalorder %s27, 1
        %s555 = scalar_select %p554, %s27, 1
        %s556 = smul.addr %s555, 4
        %s557 = smul.addr %s556, 4
        %s558 = scalar_lea.vmem %s1, %s557
        %p559 = scmp.lt.s32.totalorder %s27, 1
        %s560 = scalar_select %p559, %s27, 1
        %s561 = scalar_lea.vmem %s2, %s560
        %p562 = scmp.lt.s32.totalorder %s27, 1
        %s563 = scalar_select %p562, %s27, 1
        %s564 = smul.addr %s563, 4
        %s565 = smul.addr %s564, 4
        %s566 = scalar_lea.vmem %s3, %s565
        %p567 = scmp.lt.s32.totalorder %s27, 1
        %s568 = scalar_select %p567, %s27, 1
        %s569 = scalar_lea.vmem %s4, %s568
        %p570 = scmp.lt.s32.totalorder %s27, 1
        %s571 = scalar_select %p570, %s27, 1
        %s572 = scalar_lea.vmem %s5, %s571
        %p573 = scmp.lt.s32.totalorder %s27, 1
        %s574 = scalar_select %p573, %s27, 1
        %s575 = scalar_lea.vmem %s6, %s574
        %p576 = scmp.lt.s32.totalorder %s27, 1
        %s577 = scalar_select %p576, %s27, 1
        %s578 = smul.addr %s577, 4
        %s579 = smul.addr %s578, 4
        %s580 = scalar_lea.vmem %s7, %s579
        %p581 = scmp.lt.s32.totalorder %s27, 1
        %s582 = scalar_select %p581, %s27, 1
        %s583 = scalar_lea.vmem %s8, %s582
        %p584 = scmp.lt.s32.totalorder %s27, 1
        %s585 = scalar_select %p584, %s27, 1
        %s586 = smul.addr %s585, 8
        %s587 = smul.addr %s586, 4
        %s588 = scalar_lea.vmem %s9, %s587
        %p589 = scmp.lt.s32.totalorder %s27, 1
        %s590 = scalar_select %p589, %s27, 1
        %s591 = scalar_lea.vmem %s10, %s590
        %p592 = scmp.lt.s32.totalorder %s27, 1
        %s593 = scalar_select %p592, %s27, 1
        %s594 = scalar_lea.vmem %s11, %s593
        %p595 = scmp.lt.s32.totalorder %s27, 1
        %s596 = scalar_select %p595, %s27, 1
        %s597 = scalar_lea.vmem %s12, %s596
        %p599 = scmp.eq.s32.totalorder %s27, 1
        %p600 = scmp.eq.s32.totalorder %s27, 0
        // Predicated region
        $region69: #{mgtst_forward.6} parent=67 // pred_check
          %p601 = pneg %p600
        $region70: #{mgtst_forward.6} parent=67 // pred_check_branch
          %603 = sbr.rel (%p601) target = $region72
        $region71: #{mgtst_forward.6} parent=67 // pred_region
          // Predicated region
          $region73: #{mgtst_forward.6} parent=71 // pred_check
            _
          $region74: #{mgtst_forward.6} parent=71 // pred_check_branch
            %605 = sbr.rel (0) target = $region76
          $region75: #{mgtst_forward.6} parent=71 // pred_region
            loop: start=0, step=1, limit=1
            $region77: #{mgtst_forward.6} parent=75 // loop_pre_header
              _
            $region78: #{mgtst_forward.6} parent=75 // loop_header
              %s607 = sphi 0, %s611
              %p608 = scmp.ge.s32.totalorder %s607, 1
              %s612 = sphi %s0, %s0
              %s613 = sphi %s13, %s13
            $region79: #{mgtst_forward.6} parent=75 // loop_header_branch
              %610 = sbr.rel (%p608) target = $region83
            $region80: #{mgtst_forward.6} parent=75 // loop_body
              %v614 = vld [vmem:[%s612] sm:$0xff]
              %615 = vst [vmem:[%s613] sm:$0xff] %v614
              %v616 = vld [vmem:[%s612 + $0x8] sm:$0xff]
              %617 = vst [vmem:[%s613 + $0x8] sm:$0xff] %v616
              %v618 = vld [vmem:[%s612 + $0x10] sm:$0xff]
              %619 = vst [vmem:[%s613 + $0x10] sm:$0xff] %v618
              %v620 = vld [vmem:[%s612 + $0x18] sm:$0xff]
              %621 = vst [vmem:[%s613 + $0x18] sm:$0xff] %v620
              %v622 = vld [vmem:[%s612 + $0x20] sm:$0xff]
              %623 = vst [vmem:[%s613 + $0x20] sm:$0xff] %v622
              %v624 = vld [vmem:[%s612 + $0x28] sm:$0xff]
              %625 = vst [vmem:[%s613 + $0x28] sm:$0xff] %v624
              %v626 = vld [vmem:[%s612 + $0x30] sm:$0xff]
              %627 = vst [vmem:[%s613 + $0x30] sm:$0xff] %v626
              %v628 = vld [vmem:[%s612 + $0x38] sm:$0xff]
              %629 = vst [vmem:[%s613 + $0x38] sm:$0xff] %v628
            $region81: #{mgtst_forward.6} parent=75 // loop_footer
              %s611 = sadd.s32 1, %s607
            $region82: #{mgtst_forward.6} parent=75 // loop_footer_branch
              %606 = sbr.rel target = $region78
            $region83: #{mgtst_forward.6} parent=75 // loop_exit
              _
          $region76: #{mgtst_forward.6} parent=71 // pred_fallthru
            _
          // Predicated region
          $region84: #{mgtst_forward.6} parent=71 // pred_check
            _
          $region85: #{mgtst_forward.6} parent=71 // pred_check_branch
            %631 = sbr.rel target = $region87
          $region86: #{mgtst_forward.6} parent=71 // pred_region
            _
          $region87: #{mgtst_forward.6} parent=71 // pred_fallthru
            _
          // Predicated region
          $region88: #{mgtst_forward.6} parent=71 // pred_check
            _
          $region89: #{mgtst_forward.6} parent=71 // pred_check_branch
            %634 = sbr.rel (0) target = $region91
          $region90: #{mgtst_forward.6} parent=71 // pred_region
            %635 = vsyncadd [#allocation3], 1024
          $region91: #{mgtst_forward.6} parent=71 // pred_fallthru
            _
          %s636 = smul.u32 8, 8
          %s637 = smul.u32 %s636, 1
          %s638 = sshll.u32 %s637, 4
          %639 = dma.done [#allocation3], %s638
          %vm640 = vcmask 64512
          %641 = vst.msk [vmem:[#allocation2] sm:$0xff] %vm640, 0.0
          %642 = vst.msk [vmem:[#allocation2 + $0x8] sm:$0xff] %vm640, 0.0
          %643 = vst.msk [vmem:[#allocation2 + $0x10] sm:$0xff] %vm640, 0.0
          %644 = vst.msk [vmem:[#allocation2 + $0x18] sm:$0xff] %vm640, 0.0
          %645 = vst.msk [vmem:[#allocation2 + $0x20] sm:$0xff] %vm640, 0.0
          %646 = vst.msk [vmem:[#allocation2 + $0x28] sm:$0xff] %vm640, 0.0
          %647 = vst.msk [vmem:[#allocation2 + $0x30] sm:$0xff] %vm640, 0.0
          %648 = vst.msk [vmem:[#allocation2 + $0x38] sm:$0xff] %vm640, 0.0
          %649 = vst.msk [vmem:[#allocation2 + $0x40] sm:$0xff] %vm640, 0.0
          %650 = vst.msk [vmem:[#allocation2 + $0x48] sm:$0xff] %vm640, 0.0
          %651 = vst.msk [vmem:[#allocation2 + $0x50] sm:$0xff] %vm640, 0.0
          %652 = vst.msk [vmem:[#allocation2 + $0x58] sm:$0xff] %vm640, 0.0
          %653 = vst.msk [vmem:[#allocation2 + $0x60] sm:$0xff] %vm640, 0.0
          %654 = vst.msk [vmem:[#allocation2 + $0x68] sm:$0xff] %vm640, 0.0
          %655 = vst.msk [vmem:[#allocation2 + $0x70] sm:$0xff] %vm640, 0.0
          %656 = vst.msk [vmem:[#allocation2 + $0x78] sm:$0xff] %vm640, 0.0
          %657 = vst.msk [vmem:[#allocation2 + $0x80] sm:$0xff] %vm640, 0.0
          %658 = vst.msk [vmem:[#allocation2 + $0x88] sm:$0xff] %vm640, 0.0
          %659 = vst.msk [vmem:[#allocation2 + $0x90] sm:$0xff] %vm640, 0.0
          %660 = vst.msk [vmem:[#allocation2 + $0x98] sm:$0xff] %vm640, 0.0
          %661 = vst.msk [vmem:[#allocation2 + $0xa0] sm:$0xff] %vm640, 0.0
          %662 = vst.msk [vmem:[#allocation2 + $0xa8] sm:$0xff] %vm640, 0.0
          %663 = vst.msk [vmem:[#allocation2 + $0xb0] sm:$0xff] %vm640, 0.0
          %664 = vst.msk [vmem:[#allocation2 + $0xb8] sm:$0xff] %vm640, 0.0
          %665 = vst.msk [vmem:[#allocation2 + $0xc0] sm:$0xff] %vm640, 0.0
          %666 = vst.msk [vmem:[#allocation2 + $0xc8] sm:$0xff] %vm640, 0.0
          %667 = vst.msk [vmem:[#allocation2 + $0xd0] sm:$0xff] %vm640, 0.0
          %668 = vst.msk [vmem:[#allocation2 + $0xd8] sm:$0xff] %vm640, 0.0
          %669 = vst.msk [vmem:[#allocation2 + $0xe0] sm:$0xff] %vm640, 0.0
          %670 = vst.msk [vmem:[#allocation2 + $0xe8] sm:$0xff] %vm640, 0.0
          %671 = vst.msk [vmem:[#allocation2 + $0xf0] sm:$0xff] %vm640, 0.0
          %672 = vst.msk [vmem:[#allocation2 + $0xf8] sm:$0xff] %vm640, 0.0
        $region72: #{mgtst_forward.6} parent=67 // pred_fallthru
          _
        %v673 = vld [vmem:[%s13] sm:$0xff]
        %v674 = vld [vmem:[%s13 + $0x8] sm:$0xff]
        %v675 = vld [vmem:[%s13 + $0x10] sm:$0xff]
        %v676 = vld [vmem:[%s13 + $0x18] sm:$0xff]
        %v677 = vld [vmem:[%s13 + $0x20] sm:$0xff]
        %v678 = vld [vmem:[%s13 + $0x28] sm:$0xff]
        %v679 = vld [vmem:[%s13 + $0x30] sm:$0xff]
        %v680 = vld [vmem:[%s13 + $0x38] sm:$0xff]
        %v681 = vpack.c.bf16 %v674, %v673
        %v682 = vpack.c.bf16 %v676, %v675
        %v683 = vpack.c.bf16 %v678, %v677
        %v684 = vpack.c.bf16 %v680, %v679
        %v685 = vld [vmem:[%s558] sm:$0xf]
        %v686 = vld [vmem:[%s558 + $0x4] sm:$0xf]
        %v687 = vld [vmem:[%s558 + $0x8] sm:$0xf]
        %v688 = vld [vmem:[%s558 + $0xc] sm:$0xf]
        %v689 = vld [vmem:[%s561] sm:$0x1]
        %v691 = vperm.slane %v689, 0
        %v697 = vunpack.c.l.b16 %v685
        %v698 = vunpack.c.l.b16 %v686
        %v699 = vunpack.c.l.b16 %v687
        %v700 = vunpack.c.l.b16 %v688
        %v701 = vpack.c.b16 %v698, %v697
        %v702 = vpack.c.b16 %v700, %v699
        %vm705 = vcmask 261120
        %v707 = vsel %vm705, %v681, 0
        %v710 = vsel %vm705, %v682, 0
        %v713 = vsel %vm705, %v683, 0
        %v716 = vsel %vm705, %v684, 0
        %718 = vmatpush.bf16.msra.mxu0 0
        %719 = vmatpush.bf16.msra.mxu0 0
        %720 = vmatpush.bf16.msra.mxu0 0
        %721 = vmatpush.bf16.msra.mxu0 0
        %722 = vmatpush.bf16.msra.mxu0 0
        %723 = vmatpush.bf16.msra.mxu0 0
        %724 = vmatpush.bf16.msra.mxu0 %v702
        %725 = vmatpush.bf16.msra.mxu0 %v701
        %726 = vmatmul.bf16.gmra.mxu0 %v707
        %v727 = vpop.f32.mrf.mxu0
        %v728 = vadd.f32 %v691, %v727
        %v729 = vpop.f32.mrf.mxu0
        %v730 = vadd.f32 %v691, %v729
        %731 = vmatmul.bf16.gmra.mxu0 %v710
        %v732 = vpop.f32.mrf.mxu0
        %v733 = vadd.f32 %v691, %v732
        %v734 = vpop.f32.mrf.mxu0
        %v735 = vadd.f32 %v691, %v734
        %736 = vmatmul.bf16.gmra.mxu0 %v713
        %v737 = vpop.f32.mrf.mxu0
        %v738 = vadd.f32 %v691, %v737
        %v739 = vpop.f32.mrf.mxu0
        %v740 = vadd.f32 %v691, %v739
        %741 = vmatmul.bf16.gmra.mxu0 %v716
        %v742 = vpop.f32.mrf.mxu0
        %v743 = vadd.f32 %v691, %v742
        %v744 = vpop.f32.mrf.mxu0
        %v745 = vadd.f32 %v691, %v744
        %746 = vdwg.mxu0
        %v747 = vpack.c.bf16 %v728, %v728
        %v748 = vpack.c.bf16 %v730, %v730
        %v749 = vpack.c.bf16 %v733, %v733
        %v750 = vpack.c.bf16 %v735, %v735
        %v751 = vpack.c.bf16 %v738, %v738
        %v752 = vpack.c.bf16 %v740, %v740
        %v753 = vpack.c.bf16 %v743, %v743
        %v754 = vpack.c.bf16 %v745, %v745
        %v755 = vld [vmem:[%s566] sm:$0xf]
        %v756 = vld [vmem:[%s566 + $0x4] sm:$0xf]
        %v757 = vld [vmem:[%s566 + $0x8] sm:$0xf]
        %v758 = vld [vmem:[%s566 + $0xc] sm:$0xf]
        %v759 = vld [vmem:[#allocation2] sm:$0xff]
        %v760 = vld [vmem:[#allocation2 + $0x8] sm:$0xff]
        %v761 = vld [vmem:[#allocation2 + $0x10] sm:$0xff]
        %v762 = vld [vmem:[#allocation2 + $0x18] sm:$0xff]
        %v763 = vld [vmem:[#allocation2 + $0x20] sm:$0xff]
        %v764 = vld [vmem:[#allocation2 + $0x28] sm:$0xff]
        %v765 = vld [vmem:[#allocation2 + $0x30] sm:$0xff]
        %v766 = vld [vmem:[#allocation2 + $0x38] sm:$0xff]
        %v768 = vunpack.c.l.b16 %v747
        %v769 = vpack.c.b16 %v768, %v768
        %770 = vrot.lane.b32.xlu0 %v769, 96
        %v771 = vpop.permute.xlu0 %770
        %vm772 = vcmask 64512
        %v774 = vsel %vm772, %v747, 0
        %v777 = vsel %vm772, %v771, 0
        %779 = vmatpush.bf16.xpose.msra.mxu0 0
        %780 = vmatpush.bf16.xpose.msra.mxu0 0
        %781 = vmatpush.bf16.xpose.msra.mxu0 0
        %782 = vmatpush.bf16.xpose.msra.mxu0 0
        %783 = vmatpush.bf16.xpose.msra.mxu0 0
        %784 = vmatpush.bf16.xpose.msra.mxu0 0
        %785 = vmatpush.bf16.xpose.msra.mxu0 0
        %786 = vmatpush.bf16.xpose.msra.mxu0 %v777
        %787 = vmatmul.bf16.gmra.mxu0 %v774
        %v788 = vpop.f32.mrf.mxu0
        %v789 = vadd.f32 %v759, %v788
        %v790 = vpop.f32.mrf.mxu0
        %791 = vdwg.mxu0
        %v793 = vunpack.c.l.b16 %v748
        %v794 = vpack.c.b16 %v793, %v793
        %795 = vrot.lane.b32.xlu0 %v794, 96
        %v796 = vpop.permute.xlu0 %795
        %v798 = vsel %vm772, %v748, 0
        %v801 = vsel %vm772, %v796, 0
        %803 = vmatpush.bf16.xpose.msra.mxu0 0
        %804 = vmatpush.bf16.xpose.msra.mxu0 0
        %805 = vmatpush.bf16.xpose.msra.mxu0 0
        %806 = vmatpush.bf16.xpose.msra.mxu0 0
        %807 = vmatpush.bf16.xpose.msra.mxu0 0
        %808 = vmatpush.bf16.xpose.msra.mxu0 0
        %809 = vmatpush.bf16.xpose.msra.mxu0 0
        %810 = vmatpush.bf16.xpose.msra.mxu0 %v801
        %811 = vmatmul.bf16.gmra.mxu0 %v798
        %v812 = vpop.f32.mrf.mxu0
        %v813 = vadd.f32 %v760, %v812
        %v814 = vpop.f32.mrf.mxu0
        %815 = vdwg.mxu0
        %v817 = vunpack.c.l.b16 %v749
        %v818 = vpack.c.b16 %v817, %v817
        %819 = vrot.lane.b32.xlu0 %v818, 96
        %v820 = vpop.permute.xlu0 %819
        %v822 = vsel %vm772, %v749, 0
        %v825 = vsel %vm772, %v820, 0
        %827 = vmatpush.bf16.xpose.msra.mxu0 0
        %828 = vmatpush.bf16.xpose.msra.mxu0 0
        %829 = vmatpush.bf16.xpose.msra.mxu0 0
        %830 = vmatpush.bf16.xpose.msra.mxu0 0
        %831 = vmatpush.bf16.xpose.msra.mxu0 0
        %832 = vmatpush.bf16.xpose.msra.mxu0 0
        %833 = vmatpush.bf16.xpose.msra.mxu0 0
        %834 = vmatpush.bf16.xpose.msra.mxu0 %v825
        %835 = vmatmul.bf16.gmra.mxu0 %v822
        %v836 = vpop.f32.mrf.mxu0
        %v837 = vadd.f32 %v761, %v836
        %v838 = vpop.f32.mrf.mxu0
        %839 = vdwg.mxu0
        %v841 = vunpack.c.l.b16 %v750
        %v842 = vpack.c.b16 %v841, %v841
        %843 = vrot.lane.b32.xlu0 %v842, 96
        %v844 = vpop.permute.xlu0 %843
        %v846 = vsel %vm772, %v750, 0
        %v849 = vsel %vm772, %v844, 0
        %851 = vmatpush.bf16.xpose.msra.mxu0 0
        %852 = vmatpush.bf16.xpose.msra.mxu0 0
        %853 = vmatpush.bf16.xpose.msra.mxu0 0
        %854 = vmatpush.bf16.xpose.msra.mxu0 0
        %855 = vmatpush.bf16.xpose.msra.mxu0 0
        %856 = vmatpush.bf16.xpose.msra.mxu0 0
        %857 = vmatpush.bf16.xpose.msra.mxu0 0
        %858 = vmatpush.bf16.xpose.msra.mxu0 %v849
        %859 = vmatmul.bf16.gmra.mxu0 %v846
        %v860 = vpop.f32.mrf.mxu0
        %v861 = vadd.f32 %v762, %v860
        %v862 = vpop.f32.mrf.mxu0
        %863 = vdwg.mxu0
        %v865 = vunpack.c.l.b16 %v751
        %v866 = vpack.c.b16 %v865, %v865
        %867 = vrot.lane.b32.xlu0 %v866, 96
        %v868 = vpop.permute.xlu0 %867
        %v870 = vsel %vm772, %v751, 0
        %v873 = vsel %vm772, %v868, 0
        %875 = vmatpush.bf16.xpose.msra.mxu0 0
        %876 = vmatpush.bf16.xpose.msra.mxu0 0
        %877 = vmatpush.bf16.xpose.msra.mxu0 0
        %878 = vmatpush.bf16.xpose.msra.mxu0 0
        %879 = vmatpush.bf16.xpose.msra.mxu0 0
        %880 = vmatpush.bf16.xpose.msra.mxu0 0
        %881 = vmatpush.bf16.xpose.msra.mxu0 0
        %882 = vmatpush.bf16.xpose.msra.mxu0 %v873
        %883 = vmatmul.bf16.gmra.mxu0 %v870
        %v884 = vpop.f32.mrf.mxu0
        %v885 = vadd.f32 %v763, %v884
        %v886 = vpop.f32.mrf.mxu0
        %887 = vdwg.mxu0
        %v889 = vunpack.c.l.b16 %v752
        %v890 = vpack.c.b16 %v889, %v889
        %891 = vrot.lane.b32.xlu0 %v890, 96
        %v892 = vpop.permute.xlu0 %891
        %v894 = vsel %vm772, %v752, 0
        %v897 = vsel %vm772, %v892, 0
        %899 = vmatpush.bf16.xpose.msra.mxu0 0
        %900 = vmatpush.bf16.xpose.msra.mxu0 0
        %901 = vmatpush.bf16.xpose.msra.mxu0 0
        %902 = vmatpush.bf16.xpose.msra.mxu0 0
        %903 = vmatpush.bf16.xpose.msra.mxu0 0
        %904 = vmatpush.bf16.xpose.msra.mxu0 0
        %905 = vmatpush.bf16.xpose.msra.mxu0 0
        %906 = vmatpush.bf16.xpose.msra.mxu0 %v897
        %907 = vmatmul.bf16.gmra.mxu0 %v894
        %v908 = vpop.f32.mrf.mxu0
        %v909 = vadd.f32 %v764, %v908
        %v910 = vpop.f32.mrf.mxu0
        %911 = vdwg.mxu0
        %v913 = vunpack.c.l.b16 %v753
        %v914 = vpack.c.b16 %v913, %v913
        %915 = vrot.lane.b32.xlu0 %v914, 96
        %v916 = vpop.permute.xlu0 %915
        %v918 = vsel %vm772, %v753, 0
        %v921 = vsel %vm772, %v916, 0
        %923 = vmatpush.bf16.xpose.msra.mxu0 0
        %924 = vmatpush.bf16.xpose.msra.mxu0 0
        %925 = vmatpush.bf16.xpose.msra.mxu0 0
        %926 = vmatpush.bf16.xpose.msra.mxu0 0
        %927 = vmatpush.bf16.xpose.msra.mxu0 0
        %928 = vmatpush.bf16.xpose.msra.mxu0 0
        %929 = vmatpush.bf16.xpose.msra.mxu0 0
        %930 = vmatpush.bf16.xpose.msra.mxu0 %v921
        %931 = vmatmul.bf16.gmra.mxu0 %v918
        %v932 = vpop.f32.mrf.mxu0
        %v933 = vadd.f32 %v765, %v932
        %v934 = vpop.f32.mrf.mxu0
        %935 = vdwg.mxu0
        %v937 = vunpack.c.l.b16 %v754
        %v938 = vpack.c.b16 %v937, %v937
        %939 = vrot.lane.b32.xlu0 %v938, 96
        %v940 = vpop.permute.xlu0 %939
        %v942 = vsel %vm772, %v754, 0
        %v945 = vsel %vm772, %v940, 0
        %947 = vmatpush.bf16.xpose.msra.mxu0 0
        %948 = vmatpush.bf16.xpose.msra.mxu0 0
        %949 = vmatpush.bf16.xpose.msra.mxu0 0
        %950 = vmatpush.bf16.xpose.msra.mxu0 0
        %951 = vmatpush.bf16.xpose.msra.mxu0 0
        %952 = vmatpush.bf16.xpose.msra.mxu0 0
        %953 = vmatpush.bf16.xpose.msra.mxu0 0
        %954 = vmatpush.bf16.xpose.msra.mxu0 %v945
        %955 = vmatmul.bf16.gmra.mxu0 %v942
        %v956 = vpop.f32.mrf.mxu0
        %v957 = vadd.f32 %v766, %v956
        %v958 = vpop.f32.mrf.mxu0
        %959 = vdwg.mxu0
        %960 = vst.msk [vmem:[#allocation2] sm:$0xff] %vm772, %v789
        %961 = vst.msk [vmem:[#allocation2 + $0x8] sm:$0xff] %vm772, %v813
        %962 = vst.msk [vmem:[#allocation2 + $0x10] sm:$0xff] %vm772, %v837
        %963 = vst.msk [vmem:[#allocation2 + $0x18] sm:$0xff] %vm772, %v861
        %964 = vst.msk [vmem:[#allocation2 + $0x20] sm:$0xff] %vm772, %v885
        %965 = vst.msk [vmem:[#allocation2 + $0x28] sm:$0xff] %vm772, %v909
        %966 = vst.msk [vmem:[#allocation2 + $0x30] sm:$0xff] %vm772, %v933
        %967 = vst.msk [vmem:[#allocation2 + $0x38] sm:$0xff] %vm772, %v957
        %v968 = vsel %vm772, %v789, -inf
        %969 = vmax.xlane.f32.xlu0 %v968
        %v970 = vpop.xlane.xlu0 %969
        %v971 = vsel %vm772, %v813, -inf
        %972 = vmax.xlane.f32.xlu0 %v971
        %v973 = vpop.xlane.xlu0 %972
        %v974 = vsel %vm772, %v837, -inf
        %975 = vmax.xlane.f32.xlu0 %v974
        %v976 = vpop.xlane.xlu0 %975
        %v977 = vsel %vm772, %v861, -inf
        %978 = vmax.xlane.f32.xlu0 %v977
        %v979 = vpop.xlane.xlu0 %978
        %v980 = vsel %vm772, %v885, -inf
        %981 = vmax.xlane.f32.xlu0 %v980
        %v982 = vpop.xlane.xlu0 %981
        %v983 = vsel %vm772, %v909, -inf
        %984 = vmax.xlane.f32.xlu0 %v983
        %v985 = vpop.xlane.xlu0 %984
        %v986 = vsel %vm772, %v933, -inf
        %987 = vmax.xlane.f32.xlu0 %v986
        %v988 = vpop.xlane.xlu0 %987
        %v989 = vsel %vm772, %v957, -inf
        %990 = vmax.xlane.f32.xlu0 %v989
        %v991 = vpop.xlane.xlu0 %990
        %v992 = vsub.f32 %v789, %v970
        %v993 = vsub.f32 %v813, %v973
        %v994 = vsub.f32 %v837, %v976
        %v995 = vsub.f32 %v861, %v979
        %v996 = vsub.f32 %v885, %v982
        %v997 = vsub.f32 %v909, %v985
        %v998 = vsub.f32 %v933, %v988
        %v999 = vsub.f32 %v957, %v991
        %v1000 = vmul.f32 %v992, 1.442695
        %v1001 = vpow.pop %v1000
        %v1002 = vmul.f32 %v993, 1.442695
        %v1003 = vpow.pop %v1002
        %v1004 = vmul.f32 %v994, 1.442695
        %v1005 = vpow.pop %v1004
        %v1006 = vmul.f32 %v995, 1.442695
        %v1007 = vpow.pop %v1006
        %v1008 = vmul.f32 %v996, 1.442695
        %v1009 = vpow.pop %v1008
        %v1010 = vmul.f32 %v997, 1.442695
        %v1011 = vpow.pop %v1010
        %v1012 = vmul.f32 %v998, 1.442695
        %v1013 = vpow.pop %v1012
        %v1014 = vmul.f32 %v999, 1.442695
        %v1015 = vpow.pop %v1014
        %v1016 = vsel %vm772, %v1001, 0.0
        %1017 = vadd.xlane.f32.xlu0 %v1016
        %v1018 = vpop.xlane.xlu0 %1017
        %v1019 = vsel %vm772, %v1003, 0.0
        %1020 = vadd.xlane.f32.xlu0 %v1019
        %v1021 = vpop.xlane.xlu0 %1020
        %v1022 = vsel %vm772, %v1005, 0.0
        %1023 = vadd.xlane.f32.xlu0 %v1022
        %v1024 = vpop.xlane.xlu0 %1023
        %v1025 = vsel %vm772, %v1007, 0.0
        %1026 = vadd.xlane.f32.xlu0 %v1025
        %v1027 = vpop.xlane.xlu0 %1026
        %v1028 = vsel %vm772, %v1009, 0.0
        %1029 = vadd.xlane.f32.xlu0 %v1028
        %v1030 = vpop.xlane.xlu0 %1029
        %v1031 = vsel %vm772, %v1011, 0.0
        %1032 = vadd.xlane.f32.xlu0 %v1031
        %v1033 = vpop.xlane.xlu0 %1032
        %v1034 = vsel %vm772, %v1013, 0.0
        %1035 = vadd.xlane.f32.xlu0 %v1034
        %v1036 = vpop.xlane.xlu0 %1035
        %v1037 = vsel %vm772, %v1015, 0.0
        %1038 = vadd.xlane.f32.xlu0 %v1037
        %v1039 = vpop.xlane.xlu0 %1038
        %v1040 = vrcp.pop %v1018
        %v1041 = vmul.f32 %v1018, %v1040
        %v1042 = vsub.f32 1.0, %v1041
        %v1043 = vmul.f32 %v1040, %v1042
        %v1044 = vadd.f32 %v1040, %v1043
        %vm1045 = vweird.f32 %v1018
        %vm1046 = vweird.f32 %v1040
        %vm1047 = vmor %vm1045, %vm1046
        %v1048 = vsel %vm1047, %v1040, %v1044
        %v1049 = vand.u32 2147483647, %v1018
        %vm1050 = vcmp.eq.f32.partialorder %v1049, 8.507059e+37
        %v1051 = vand.u32 %v1018, 2147483648
        %v1052 = vor.u32 1.1754944e-38, %v1051
        %v1053 = vsel %vm1050, %v1052, %v1048
        %v1054 = vmul.f32 %v1001, %v1053
        %v1055 = vrcp.pop %v1021
        %v1056 = vmul.f32 %v1021, %v1055
        %v1057 = vsub.f32 1.0, %v1056
        %v1058 = vmul.f32 %v1055, %v1057
        %v1059 = vadd.f32 %v1055, %v1058
        %vm1060 = vweird.f32 %v1021
        %vm1061 = vweird.f32 %v1055
        %vm1062 = vmor %vm1060, %vm1061
        %v1063 = vsel %vm1062, %v1055, %v1059
        %v1064 = vand.u32 2147483647, %v1021
        %vm1065 = vcmp.eq.f32.partialorder %v1064, 8.507059e+37
        %v1066 = vand.u32 %v1021, 2147483648
        %v1067 = vor.u32 1.1754944e-38, %v1066
        %v1068 = vsel %vm1065, %v1067, %v1063
        %v1069 = vmul.f32 %v1003, %v1068
        %v1070 = vrcp.pop %v1024
        %v1071 = vmul.f32 %v1024, %v1070
        %v1072 = vsub.f32 1.0, %v1071
        %v1073 = vmul.f32 %v1070, %v1072
        %v1074 = vadd.f32 %v1070, %v1073
        %vm1075 = vweird.f32 %v1024
        %vm1076 = vweird.f32 %v1070
        %vm1077 = vmor %vm1075, %vm1076
        %v1078 = vsel %vm1077, %v1070, %v1074
        %v1079 = vand.u32 2147483647, %v1024
        %vm1080 = vcmp.eq.f32.partialorder %v1079, 8.507059e+37
        %v1081 = vand.u32 %v1024, 2147483648
        %v1082 = vor.u32 1.1754944e-38, %v1081
        %v1083 = vsel %vm1080, %v1082, %v1078
        %v1084 = vmul.f32 %v1005, %v1083
        %v1085 = vrcp.pop %v1027
        %v1086 = vmul.f32 %v1027, %v1085
        %v1087 = vsub.f32 1.0, %v1086
        %v1088 = vmul.f32 %v1085, %v1087
        %v1089 = vadd.f32 %v1085, %v1088
        %vm1090 = vweird.f32 %v1027
        %vm1091 = vweird.f32 %v1085
        %vm1092 = vmor %vm1090, %vm1091
        %v1093 = vsel %vm1092, %v1085, %v1089
        %v1094 = vand.u32 2147483647, %v1027
        %vm1095 = vcmp.eq.f32.partialorder %v1094, 8.507059e+37
        %v1096 = vand.u32 %v1027, 2147483648
        %v1097 = vor.u32 1.1754944e-38, %v1096
        %v1098 = vsel %vm1095, %v1097, %v1093
        %v1099 = vmul.f32 %v1007, %v1098
        %v1100 = vrcp.pop %v1030
        %v1101 = vmul.f32 %v1030, %v1100
        %v1102 = vsub.f32 1.0, %v1101
        %v1103 = vmul.f32 %v1100, %v1102
        %v1104 = vadd.f32 %v1100, %v1103
        %vm1105 = vweird.f32 %v1030
        %vm1106 = vweird.f32 %v1100
        %vm1107 = vmor %vm1105, %vm1106
        %v1108 = vsel %vm1107, %v1100, %v1104
        %v1109 = vand.u32 2147483647, %v1030
        %vm1110 = vcmp.eq.f32.partialorder %v1109, 8.507059e+37
        %v1111 = vand.u32 %v1030, 2147483648
        %v1112 = vor.u32 1.1754944e-38, %v1111
        %v1113 = vsel %vm1110, %v1112, %v1108
        %v1114 = vmul.f32 %v1009, %v1113
        %v1115 = vrcp.pop %v1033
        %v1116 = vmul.f32 %v1033, %v1115
        %v1117 = vsub.f32 1.0, %v1116
        %v1118 = vmul.f32 %v1115, %v1117
        %v1119 = vadd.f32 %v1115, %v1118
        %vm1120 = vweird.f32 %v1033
        %vm1121 = vweird.f32 %v1115
        %vm1122 = vmor %vm1120, %vm1121
        %v1123 = vsel %vm1122, %v1115, %v1119
        %v1124 = vand.u32 2147483647, %v1033
        %vm1125 = vcmp.eq.f32.partialorder %v1124, 8.507059e+37
        %v1126 = vand.u32 %v1033, 2147483648
        %v1127 = vor.u32 1.1754944e-38, %v1126
        %v1128 = vsel %vm1125, %v1127, %v1123
        %v1129 = vmul.f32 %v1011, %v1128
        %v1130 = vrcp.pop %v1036
        %v1131 = vmul.f32 %v1036, %v1130
        %v1132 = vsub.f32 1.0, %v1131
        %v1133 = vmul.f32 %v1130, %v1132
        %v1134 = vadd.f32 %v1130, %v1133
        %vm1135 = vweird.f32 %v1036
        %vm1136 = vweird.f32 %v1130
        %vm1137 = vmor %vm1135, %vm1136
        %v1138 = vsel %vm1137, %v1130, %v1134
        %v1139 = vand.u32 2147483647, %v1036
        %vm1140 = vcmp.eq.f32.partialorder %v1139, 8.507059e+37
        %v1141 = vand.u32 %v1036, 2147483648
        %v1142 = vor.u32 1.1754944e-38, %v1141
        %v1143 = vsel %vm1140, %v1142, %v1138
        %v1144 = vmul.f32 %v1013, %v1143
        %v1145 = vrcp.pop %v1039
        %v1146 = vmul.f32 %v1039, %v1145
        %v1147 = vsub.f32 1.0, %v1146
        %v1148 = vmul.f32 %v1145, %v1147
        %v1149 = vadd.f32 %v1145, %v1148
        %vm1150 = vweird.f32 %v1039
        %vm1151 = vweird.f32 %v1145
        %vm1152 = vmor %vm1150, %vm1151
        %v1153 = vsel %vm1152, %v1145, %v1149
        %v1154 = vand.u32 2147483647, %v1039
        %vm1155 = vcmp.eq.f32.partialorder %v1154, 8.507059e+37
        %v1156 = vand.u32 %v1039, 2147483648
        %v1157 = vor.u32 1.1754944e-38, %v1156
        %v1158 = vsel %vm1155, %v1157, %v1153
        %v1159 = vmul.f32 %v1015, %v1158
        %v1160 = vpack.c.bf16 %v1054, %v1054
        %v1161 = vpack.c.bf16 %v1069, %v1069
        %v1162 = vpack.c.bf16 %v1084, %v1084
        %v1163 = vpack.c.bf16 %v1099, %v1099
        %v1164 = vpack.c.bf16 %v1114, %v1114
        %v1165 = vpack.c.bf16 %v1129, %v1129
        %v1166 = vpack.c.bf16 %v1144, %v1144
        %v1167 = vpack.c.bf16 %v1159, %v1159
        %1168 = vrot.lane.b32.xlu0 %v769, 64
        %v1169 = vpop.permute.xlu0 %1168
        %v1171 = vsel %vm772, %v1160, 0
        %vm1173 = vcmask 1043456
        %v1175 = vsel %vm1173, %v1169, 0
        %1177 = vmatpush.bf16.msra.mxu0 0
        %1178 = vmatpush.bf16.msra.mxu0 0
        %1179 = vmatpush.bf16.msra.mxu0 0
        %1180 = vmatpush.bf16.msra.mxu0 0
        %1181 = vmatpush.bf16.msra.mxu0 0
        %1182 = vmatpush.bf16.msra.mxu0 0
        %1183 = vmatpush.bf16.msra.mxu0 0
        %1184 = vmatpush.bf16.msra.mxu0 %v1175
        %1185 = vmatmul.bf16.gmra.mxu0 %v1171
        %v1186 = vpop.f32.mrf.mxu0
        %v1187 = vadd.f32 0.0, %v1186
        %v1188 = vpop.f32.mrf.mxu0
        %1189 = vdwg.mxu0
        %1190 = vrot.lane.b32.xlu0 %v794, 64
        %v1191 = vpop.permute.xlu0 %1190
        %v1193 = vsel %vm772, %v1161, 0
        %v1196 = vsel %vm1173, %v1191, 0
        %1198 = vmatpush.bf16.msra.mxu0 0
        %1199 = vmatpush.bf16.msra.mxu0 0
        %1200 = vmatpush.bf16.msra.mxu0 0
        %1201 = vmatpush.bf16.msra.mxu0 0
        %1202 = vmatpush.bf16.msra.mxu0 0
        %1203 = vmatpush.bf16.msra.mxu0 0
        %1204 = vmatpush.bf16.msra.mxu0 0
        %1205 = vmatpush.bf16.msra.mxu0 %v1196
        %1206 = vmatmul.bf16.gmra.mxu0 %v1193
        %v1207 = vpop.f32.mrf.mxu0
        %v1208 = vadd.f32 0.0, %v1207
        %v1209 = vpop.f32.mrf.mxu0
        %1210 = vdwg.mxu0
        %1211 = vrot.lane.b32.xlu0 %v818, 64
        %v1212 = vpop.permute.xlu0 %1211
        %v1214 = vsel %vm772, %v1162, 0
        %v1217 = vsel %vm1173, %v1212, 0
        %1219 = vmatpush.bf16.msra.mxu0 0
        %1220 = vmatpush.bf16.msra.mxu0 0
        %1221 = vmatpush.bf16.msra.mxu0 0
        %1222 = vmatpush.bf16.msra.mxu0 0
        %1223 = vmatpush.bf16.msra.mxu0 0
        %1224 = vmatpush.bf16.msra.mxu0 0
        %1225 = vmatpush.bf16.msra.mxu0 0
        %1226 = vmatpush.bf16.msra.mxu0 %v1217
        %1227 = vmatmul.bf16.gmra.mxu0 %v1214
        %v1228 = vpop.f32.mrf.mxu0
        %v1229 = vadd.f32 0.0, %v1228
        %v1230 = vpop.f32.mrf.mxu0
        %1231 = vdwg.mxu0
        %1232 = vrot.lane.b32.xlu0 %v842, 64
        %v1233 = vpop.permute.xlu0 %1232
        %v1235 = vsel %vm772, %v1163, 0
        %v1238 = vsel %vm1173, %v1233, 0
        %1240 = vmatpush.bf16.msra.mxu0 0
        %1241 = vmatpush.bf16.msra.mxu0 0
        %1242 = vmatpush.bf16.msra.mxu0 0
        %1243 = vmatpush.bf16.msra.mxu0 0
        %1244 = vmatpush.bf16.msra.mxu0 0
        %1245 = vmatpush.bf16.msra.mxu0 0
        %1246 = vmatpush.bf16.msra.mxu0 0
        %1247 = vmatpush.bf16.msra.mxu0 %v1238
        %1248 = vmatmul.bf16.gmra.mxu0 %v1235
        %v1249 = vpop.f32.mrf.mxu0
        %v1250 = vadd.f32 0.0, %v1249
        %v1251 = vpop.f32.mrf.mxu0
        %1252 = vdwg.mxu0
        %1253 = vrot.lane.b32.xlu0 %v866, 64
        %v1254 = vpop.permute.xlu0 %1253
        %v1256 = vsel %vm772, %v1164, 0
        %v1259 = vsel %vm1173, %v1254, 0
        %1261 = vmatpush.bf16.msra.mxu0 0
        %1262 = vmatpush.bf16.msra.mxu0 0
        %1263 = vmatpush.bf16.msra.mxu0 0
        %1264 = vmatpush.bf16.msra.mxu0 0
        %1265 = vmatpush.bf16.msra.mxu0 0
        %1266 = vmatpush.bf16.msra.mxu0 0
        %1267 = vmatpush.bf16.msra.mxu0 0
        %1268 = vmatpush.bf16.msra.mxu0 %v1259
        %1269 = vmatmul.bf16.gmra.mxu0 %v1256
        %v1270 = vpop.f32.mrf.mxu0
        %v1271 = vadd.f32 0.0, %v1270
        %v1272 = vpop.f32.mrf.mxu0
        %1273 = vdwg.mxu0
        %1274 = vrot.lane.b32.xlu0 %v890, 64
        %v1275 = vpop.permute.xlu0 %1274
        %v1277 = vsel %vm772, %v1165, 0
        %v1280 = vsel %vm1173, %v1275, 0
        %1282 = vmatpush.bf16.msra.mxu0 0
        %1283 = vmatpush.bf16.msra.mxu0 0
        %1284 = vmatpush.bf16.msra.mxu0 0
        %1285 = vmatpush.bf16.msra.mxu0 0
        %1286 = vmatpush.bf16.msra.mxu0 0
        %1287 = vmatpush.bf16.msra.mxu0 0
        %1288 = vmatpush.bf16.msra.mxu0 0
        %1289 = vmatpush.bf16.msra.mxu0 %v1280
        %1290 = vmatmul.bf16.gmra.mxu0 %v1277
        %v1291 = vpop.f32.mrf.mxu0
        %v1292 = vadd.f32 0.0, %v1291
        %v1293 = vpop.f32.mrf.mxu0
        %1294 = vdwg.mxu0
        %1295 = vrot.lane.b32.xlu0 %v914, 64
        %v1296 = vpop.permute.xlu0 %1295
        %v1298 = vsel %vm772, %v1166, 0
        %v1301 = vsel %vm1173, %v1296, 0
        %1303 = vmatpush.bf16.msra.mxu0 0
        %1304 = vmatpush.bf16.msra.mxu0 0
        %1305 = vmatpush.bf16.msra.mxu0 0
        %1306 = vmatpush.bf16.msra.mxu0 0
        %1307 = vmatpush.bf16.msra.mxu0 0
        %1308 = vmatpush.bf16.msra.mxu0 0
        %1309 = vmatpush.bf16.msra.mxu0 0
        %1310 = vmatpush.bf16.msra.mxu0 %v1301
        %1311 = vmatmul.bf16.gmra.mxu0 %v1298
        %v1312 = vpop.f32.mrf.mxu0
        %v1313 = vadd.f32 0.0, %v1312
        %v1314 = vpop.f32.mrf.mxu0
        %1315 = vdwg.mxu0
        %1316 = vrot.lane.b32.xlu0 %v938, 64
        %v1317 = vpop.permute.xlu0 %1316
        %v1319 = vsel %vm772, %v1167, 0
        %v1322 = vsel %vm1173, %v1317, 0
        %1324 = vmatpush.bf16.msra.mxu0 0
        %1325 = vmatpush.bf16.msra.mxu0 0
        %1326 = vmatpush.bf16.msra.mxu0 0
        %1327 = vmatpush.bf16.msra.mxu0 0
        %1328 = vmatpush.bf16.msra.mxu0 0
        %1329 = vmatpush.bf16.msra.mxu0 0
        %1330 = vmatpush.bf16.msra.mxu0 0
        %1331 = vmatpush.bf16.msra.mxu0 %v1322
        %1332 = vmatmul.bf16.gmra.mxu0 %v1319
        %v1333 = vpop.f32.mrf.mxu0
        %v1334 = vadd.f32 0.0, %v1333
        %v1335 = vpop.f32.mrf.mxu0
        %1336 = vdwg.mxu0
        %v1337 = vpack.c.bf16 %v1208, %v1187
        %v1338 = vpack.c.bf16 %v1250, %v1229
        %v1339 = vpack.c.bf16 %v1292, %v1271
        %v1340 = vpack.c.bf16 %v1334, %v1313
        %s1341 = scalar_lea.vmem [#allocation2], 64
        %v1342 = vld [vmem:[%s1341] sm:$0xff]
        %v1343 = vld [vmem:[%s1341 + $0x8] sm:$0xff]
        %v1344 = vld [vmem:[%s1341 + $0x10] sm:$0xff]
        %v1345 = vld [vmem:[%s1341 + $0x18] sm:$0xff]
        %v1346 = vld [vmem:[%s1341 + $0x20] sm:$0xff]
        %v1347 = vld [vmem:[%s1341 + $0x28] sm:$0xff]
        %v1348 = vld [vmem:[%s1341 + $0x30] sm:$0xff]
        %v1349 = vld [vmem:[%s1341 + $0x38] sm:$0xff]
        %1350 = vrot.lane.b32.xlu0 %v769, 120
        %v1351 = vpop.permute.xlu0 %1350
        %1352 = vrot.lane.b32.xlu0 %v769, 88
        %v1353 = vpop.permute.xlu0 %1352
        %v1355 = vsel %vm772, %v1351, 0
        %v1358 = vsel %vm772, %v1353, 0
        %1360 = vmatpush.bf16.xpose.msra.mxu0 0
        %1361 = vmatpush.bf16.xpose.msra.mxu0 0
        %1362 = vmatpush.bf16.xpose.msra.mxu0 0
        %1363 = vmatpush.bf16.xpose.msra.mxu0 0
        %1364 = vmatpush.bf16.xpose.msra.mxu0 0
        %1365 = vmatpush.bf16.xpose.msra.mxu0 0
        %1366 = vmatpush.bf16.xpose.msra.mxu0 0
        %1367 = vmatpush.bf16.xpose.msra.mxu0 %v1358
        %1368 = vmatmul.bf16.gmra.mxu0 %v1355
        %v1369 = vpop.f32.mrf.mxu0
        %v1370 = vadd.f32 %v1342, %v1369
        %v1371 = vpop.f32.mrf.mxu0
        %1372 = vdwg.mxu0
        %1373 = vrot.lane.b32.xlu0 %v794, 120
        %v1374 = vpop.permute.xlu0 %1373
        %1375 = vrot.lane.b32.xlu0 %v794, 88
        %v1376 = vpop.permute.xlu0 %1375
        %v1378 = vsel %vm772, %v1374, 0
        %v1381 = vsel %vm772, %v1376, 0
        %1383 = vmatpush.bf16.xpose.msra.mxu0 0
        %1384 = vmatpush.bf16.xpose.msra.mxu0 0
        %1385 = vmatpush.bf16.xpose.msra.mxu0 0
        %1386 = vmatpush.bf16.xpose.msra.mxu0 0
        %1387 = vmatpush.bf16.xpose.msra.mxu0 0
        %1388 = vmatpush.bf16.xpose.msra.mxu0 0
        %1389 = vmatpush.bf16.xpose.msra.mxu0 0
        %1390 = vmatpush.bf16.xpose.msra.mxu0 %v1381
        %1391 = vmatmul.bf16.gmra.mxu0 %v1378
        %v1392 = vpop.f32.mrf.mxu0
        %v1393 = vadd.f32 %v1343, %v1392
        %v1394 = vpop.f32.mrf.mxu0
        %1395 = vdwg.mxu0
        %1396 = vrot.lane.b32.xlu0 %v818, 120
        %v1397 = vpop.permute.xlu0 %1396
        %1398 = vrot.lane.b32.xlu0 %v818, 88
        %v1399 = vpop.permute.xlu0 %1398
        %v1401 = vsel %vm772, %v1397, 0
        %v1404 = vsel %vm772, %v1399, 0
        %1406 = vmatpush.bf16.xpose.msra.mxu0 0
        %1407 = vmatpush.bf16.xpose.msra.mxu0 0
        %1408 = vmatpush.bf16.xpose.msra.mxu0 0
        %1409 = vmatpush.bf16.xpose.msra.mxu0 0
        %1410 = vmatpush.bf16.xpose.msra.mxu0 0
        %1411 = vmatpush.bf16.xpose.msra.mxu0 0
        %1412 = vmatpush.bf16.xpose.msra.mxu0 0
        %1413 = vmatpush.bf16.xpose.msra.mxu0 %v1404
        %1414 = vmatmul.bf16.gmra.mxu0 %v1401
        %v1415 = vpop.f32.mrf.mxu0
        %v1416 = vadd.f32 %v1344, %v1415
        %v1417 = vpop.f32.mrf.mxu0
        %1418 = vdwg.mxu0
        %1419 = vrot.lane.b32.xlu0 %v842, 120
        %v1420 = vpop.permute.xlu0 %1419
        %1421 = vrot.lane.b32.xlu0 %v842, 88
        %v1422 = vpop.permute.xlu0 %1421
        %v1424 = vsel %vm772, %v1420, 0
        %v1427 = vsel %vm772, %v1422, 0
        %1429 = vmatpush.bf16.xpose.msra.mxu0 0
        %1430 = vmatpush.bf16.xpose.msra.mxu0 0
        %1431 = vmatpush.bf16.xpose.msra.mxu0 0
        %1432 = vmatpush.bf16.xpose.msra.mxu0 0
        %1433 = vmatpush.bf16.xpose.msra.mxu0 0
        %1434 = vmatpush.bf16.xpose.msra.mxu0 0
        %1435 = vmatpush.bf16.xpose.msra.mxu0 0
        %1436 = vmatpush.bf16.xpose.msra.mxu0 %v1427
        %1437 = vmatmul.bf16.gmra.mxu0 %v1424
        %v1438 = vpop.f32.mrf.mxu0
        %v1439 = vadd.f32 %v1345, %v1438
        %v1440 = vpop.f32.mrf.mxu0
        %1441 = vdwg.mxu0
        %1442 = vrot.lane.b32.xlu0 %v866, 120
        %v1443 = vpop.permute.xlu0 %1442
        %1444 = vrot.lane.b32.xlu0 %v866, 88
        %v1445 = vpop.permute.xlu0 %1444
        %v1447 = vsel %vm772, %v1443, 0
        %v1450 = vsel %vm772, %v1445, 0
        %1452 = vmatpush.bf16.xpose.msra.mxu0 0
        %1453 = vmatpush.bf16.xpose.msra.mxu0 0
        %1454 = vmatpush.bf16.xpose.msra.mxu0 0
        %1455 = vmatpush.bf16.xpose.msra.mxu0 0
        %1456 = vmatpush.bf16.xpose.msra.mxu0 0
        %1457 = vmatpush.bf16.xpose.msra.mxu0 0
        %1458 = vmatpush.bf16.xpose.msra.mxu0 0
        %1459 = vmatpush.bf16.xpose.msra.mxu0 %v1450
        %1460 = vmatmul.bf16.gmra.mxu0 %v1447
        %v1461 = vpop.f32.mrf.mxu0
        %v1462 = vadd.f32 %v1346, %v1461
        %v1463 = vpop.f32.mrf.mxu0
        %1464 = vdwg.mxu0
        %1465 = vrot.lane.b32.xlu0 %v890, 120
        %v1466 = vpop.permute.xlu0 %1465
        %1467 = vrot.lane.b32.xlu0 %v890, 88
        %v1468 = vpop.permute.xlu0 %1467
        %v1470 = vsel %vm772, %v1466, 0
        %v1473 = vsel %vm772, %v1468, 0
        %1475 = vmatpush.bf16.xpose.msra.mxu0 0
        %1476 = vmatpush.bf16.xpose.msra.mxu0 0
        %1477 = vmatpush.bf16.xpose.msra.mxu0 0
        %1478 = vmatpush.bf16.xpose.msra.mxu0 0
        %1479 = vmatpush.bf16.xpose.msra.mxu0 0
        %1480 = vmatpush.bf16.xpose.msra.mxu0 0
        %1481 = vmatpush.bf16.xpose.msra.mxu0 0
        %1482 = vmatpush.bf16.xpose.msra.mxu0 %v1473
        %1483 = vmatmul.bf16.gmra.mxu0 %v1470
        %v1484 = vpop.f32.mrf.mxu0
        %v1485 = vadd.f32 %v1347, %v1484
        %v1486 = vpop.f32.mrf.mxu0
        %1487 = vdwg.mxu0
        %1488 = vrot.lane.b32.xlu0 %v914, 120
        %v1489 = vpop.permute.xlu0 %1488
        %1490 = vrot.lane.b32.xlu0 %v914, 88
        %v1491 = vpop.permute.xlu0 %1490
        %v1493 = vsel %vm772, %v1489, 0
        %v1496 = vsel %vm772, %v1491, 0
        %1498 = vmatpush.bf16.xpose.msra.mxu0 0
        %1499 = vmatpush.bf16.xpose.msra.mxu0 0
        %1500 = vmatpush.bf16.xpose.msra.mxu0 0
        %1501 = vmatpush.bf16.xpose.msra.mxu0 0
        %1502 = vmatpush.bf16.xpose.msra.mxu0 0
        %1503 = vmatpush.bf16.xpose.msra.mxu0 0
        %1504 = vmatpush.bf16.xpose.msra.mxu0 0
        %1505 = vmatpush.bf16.xpose.msra.mxu0 %v1496
        %1506 = vmatmul.bf16.gmra.mxu0 %v1493
        %v1507 = vpop.f32.mrf.mxu0
        %v1508 = vadd.f32 %v1348, %v1507
        %v1509 = vpop.f32.mrf.mxu0
        %1510 = vdwg.mxu0
        %1511 = vrot.lane.b32.xlu0 %v938, 120
        %v1512 = vpop.permute.xlu0 %1511
        %1513 = vrot.lane.b32.xlu0 %v938, 88
        %v1514 = vpop.permute.xlu0 %1513
        %v1516 = vsel %vm772, %v1512, 0
        %v1519 = vsel %vm772, %v1514, 0
        %1521 = vmatpush.bf16.xpose.msra.mxu0 0
        %1522 = vmatpush.bf16.xpose.msra.mxu0 0
        %1523 = vmatpush.bf16.xpose.msra.mxu0 0
        %1524 = vmatpush.bf16.xpose.msra.mxu0 0
        %1525 = vmatpush.bf16.xpose.msra.mxu0 0
        %1526 = vmatpush.bf16.xpose.msra.mxu0 0
        %1527 = vmatpush.bf16.xpose.msra.mxu0 0
        %1528 = vmatpush.bf16.xpose.msra.mxu0 %v1519
        %1529 = vmatmul.bf16.gmra.mxu0 %v1516
        %v1530 = vpop.f32.mrf.mxu0
        %v1531 = vadd.f32 %v1349, %v1530
        %v1532 = vpop.f32.mrf.mxu0
        %1533 = vdwg.mxu0
        %1534 = vst.msk [vmem:[%s1341] sm:$0xff] %vm772, %v1370
        %1535 = vst.msk [vmem:[%s1341 + $0x8] sm:$0xff] %vm772, %v1393
        %1536 = vst.msk [vmem:[%s1341 + $0x10] sm:$0xff] %vm772, %v1416
        %1537 = vst.msk [vmem:[%s1341 + $0x18] sm:$0xff] %vm772, %v1439
        %1538 = vst.msk [vmem:[%s1341 + $0x20] sm:$0xff] %vm772, %v1462
        %1539 = vst.msk [vmem:[%s1341 + $0x28] sm:$0xff] %vm772, %v1485
        %1540 = vst.msk [vmem:[%s1341 + $0x30] sm:$0xff] %vm772, %v1508
        %1541 = vst.msk [vmem:[%s1341 + $0x38] sm:$0xff] %vm772, %v1531
        %v1542 = vsel %vm772, %v1370, -inf
        %1543 = vmax.xlane.f32.xlu0 %v1542
        %v1544 = vpop.xlane.xlu0 %1543
        %v1545 = vsel %vm772, %v1393, -inf
        %1546 = vmax.xlane.f32.xlu0 %v1545
        %v1547 = vpop.xlane.xlu0 %1546
        %v1548 = vsel %vm772, %v1416, -inf
        %1549 = vmax.xlane.f32.xlu0 %v1548
        %v1550 = vpop.xlane.xlu0 %1549
        %v1551 = vsel %vm772, %v1439, -inf
        %1552 = vmax.xlane.f32.xlu0 %v1551
        %v1553 = vpop.xlane.xlu0 %1552
        %v1554 = vsel %vm772, %v1462, -inf
        %1555 = vmax.xlane.f32.xlu0 %v1554
        %v1556 = vpop.xlane.xlu0 %1555
        %v1557 = vsel %vm772, %v1485, -inf
        %1558 = vmax.xlane.f32.xlu0 %v1557
        %v1559 = vpop.xlane.xlu0 %1558
        %v1560 = vsel %vm772, %v1508, -inf
        %1561 = vmax.xlane.f32.xlu0 %v1560
        %v1562 = vpop.xlane.xlu0 %1561
        %v1563 = vsel %vm772, %v1531, -inf
        %1564 = vmax.xlane.f32.xlu0 %v1563
        %v1565 = vpop.xlane.xlu0 %1564
        %v1566 = vsub.f32 %v1370, %v1544
        %v1567 = vsub.f32 %v1393, %v1547
        %v1568 = vsub.f32 %v1416, %v1550
        %v1569 = vsub.f32 %v1439, %v1553
        %v1570 = vsub.f32 %v1462, %v1556
        %v1571 = vsub.f32 %v1485, %v1559
        %v1572 = vsub.f32 %v1508, %v1562
        %v1573 = vsub.f32 %v1531, %v1565
        %v1574 = vmul.f32 %v1566, 1.442695
        %v1575 = vpow.pop %v1574
        %v1576 = vmul.f32 %v1567, 1.442695
        %v1577 = vpow.pop %v1576
        %v1578 = vmul.f32 %v1568, 1.442695
        %v1579 = vpow.pop %v1578
        %v1580 = vmul.f32 %v1569, 1.442695
        %v1581 = vpow.pop %v1580
        %v1582 = vmul.f32 %v1570, 1.442695
        %v1583 = vpow.pop %v1582
        %v1584 = vmul.f32 %v1571, 1.442695
        %v1585 = vpow.pop %v1584
        %v1586 = vmul.f32 %v1572, 1.442695
        %v1587 = vpow.pop %v1586
        %v1588 = vmul.f32 %v1573, 1.442695
        %v1589 = vpow.pop %v1588
        %v1590 = vsel %vm772, %v1575, 0.0
        %1591 = vadd.xlane.f32.xlu0 %v1590
        %v1592 = vpop.xlane.xlu0 %1591
        %v1593 = vsel %vm772, %v1577, 0.0
        %1594 = vadd.xlane.f32.xlu0 %v1593
        %v1595 = vpop.xlane.xlu0 %1594
        %v1596 = vsel %vm772, %v1579, 0.0
        %1597 = vadd.xlane.f32.xlu0 %v1596
        %v1598 = vpop.xlane.xlu0 %1597
        %v1599 = vsel %vm772, %v1581, 0.0
        %1600 = vadd.xlane.f32.xlu0 %v1599
        %v1601 = vpop.xlane.xlu0 %1600
        %v1602 = vsel %vm772, %v1583, 0.0
        %1603 = vadd.xlane.f32.xlu0 %v1602
        %v1604 = vpop.xlane.xlu0 %1603
        %v1605 = vsel %vm772, %v1585, 0.0
        %1606 = vadd.xlane.f32.xlu0 %v1605
        %v1607 = vpop.xlane.xlu0 %1606
        %v1608 = vsel %vm772, %v1587, 0.0
        %1609 = vadd.xlane.f32.xlu0 %v1608
        %v1610 = vpop.xlane.xlu0 %1609
        %v1611 = vsel %vm772, %v1589, 0.0
        %1612 = vadd.xlane.f32.xlu0 %v1611
        %v1613 = vpop.xlane.xlu0 %1612
        %v1614 = vrcp.pop %v1592
        %v1615 = vmul.f32 %v1592, %v1614
        %v1616 = vsub.f32 1.0, %v1615
        %v1617 = vmul.f32 %v1614, %v1616
        %v1618 = vadd.f32 %v1614, %v1617
        %vm1619 = vweird.f32 %v1592
        %vm1620 = vweird.f32 %v1614
        %vm1621 = vmor %vm1619, %vm1620
        %v1622 = vsel %vm1621, %v1614, %v1618
        %v1623 = vand.u32 2147483647, %v1592
        %vm1624 = vcmp.eq.f32.partialorder %v1623, 8.507059e+37
        %v1625 = vand.u32 %v1592, 2147483648
        %v1626 = vor.u32 1.1754944e-38, %v1625
        %v1627 = vsel %vm1624, %v1626, %v1622
        %v1628 = vmul.f32 %v1575, %v1627
        %v1629 = vrcp.pop %v1595
        %v1630 = vmul.f32 %v1595, %v1629
        %v1631 = vsub.f32 1.0, %v1630
        %v1632 = vmul.f32 %v1629, %v1631
        %v1633 = vadd.f32 %v1629, %v1632
        %vm1634 = vweird.f32 %v1595
        %vm1635 = vweird.f32 %v1629
        %vm1636 = vmor %vm1634, %vm1635
        %v1637 = vsel %vm1636, %v1629, %v1633
        %v1638 = vand.u32 2147483647, %v1595
        %vm1639 = vcmp.eq.f32.partialorder %v1638, 8.507059e+37
        %v1640 = vand.u32 %v1595, 2147483648
        %v1641 = vor.u32 1.1754944e-38, %v1640
        %v1642 = vsel %vm1639, %v1641, %v1637
        %v1643 = vmul.f32 %v1577, %v1642
        %v1644 = vrcp.pop %v1598
        %v1645 = vmul.f32 %v1598, %v1644
        %v1646 = vsub.f32 1.0, %v1645
        %v1647 = vmul.f32 %v1644, %v1646
        %v1648 = vadd.f32 %v1644, %v1647
        %vm1649 = vweird.f32 %v1598
        %vm1650 = vweird.f32 %v1644
        %vm1651 = vmor %vm1649, %vm1650
        %v1652 = vsel %vm1651, %v1644, %v1648
        %v1653 = vand.u32 2147483647, %v1598
        %vm1654 = vcmp.eq.f32.partialorder %v1653, 8.507059e+37
        %v1655 = vand.u32 %v1598, 2147483648
        %v1656 = vor.u32 1.1754944e-38, %v1655
        %v1657 = vsel %vm1654, %v1656, %v1652
        %v1658 = vmul.f32 %v1579, %v1657
        %v1659 = vrcp.pop %v1601
        %v1660 = vmul.f32 %v1601, %v1659
        %v1661 = vsub.f32 1.0, %v1660
        %v1662 = vmul.f32 %v1659, %v1661
        %v1663 = vadd.f32 %v1659, %v1662
        %vm1664 = vweird.f32 %v1601
        %vm1665 = vweird.f32 %v1659
        %vm1666 = vmor %vm1664, %vm1665
        %v1667 = vsel %vm1666, %v1659, %v1663
        %v1668 = vand.u32 2147483647, %v1601
        %vm1669 = vcmp.eq.f32.partialorder %v1668, 8.507059e+37
        %v1670 = vand.u32 %v1601, 2147483648
        %v1671 = vor.u32 1.1754944e-38, %v1670
        %v1672 = vsel %vm1669, %v1671, %v1667
        %v1673 = vmul.f32 %v1581, %v1672
        %v1674 = vrcp.pop %v1604
        %v1675 = vmul.f32 %v1604, %v1674
        %v1676 = vsub.f32 1.0, %v1675
        %v1677 = vmul.f32 %v1674, %v1676
        %v1678 = vadd.f32 %v1674, %v1677
        %vm1679 = vweird.f32 %v1604
        %vm1680 = vweird.f32 %v1674
        %vm1681 = vmor %vm1679, %vm1680
        %v1682 = vsel %vm1681, %v1674, %v1678
        %v1683 = vand.u32 2147483647, %v1604
        %vm1684 = vcmp.eq.f32.partialorder %v1683, 8.507059e+37
        %v1685 = vand.u32 %v1604, 2147483648
        %v1686 = vor.u32 1.1754944e-38, %v1685
        %v1687 = vsel %vm1684, %v1686, %v1682
        %v1688 = vmul.f32 %v1583, %v1687
        %v1689 = vrcp.pop %v1607
        %v1690 = vmul.f32 %v1607, %v1689
        %v1691 = vsub.f32 1.0, %v1690
        %v1692 = vmul.f32 %v1689, %v1691
        %v1693 = vadd.f32 %v1689, %v1692
        %vm1694 = vweird.f32 %v1607
        %vm1695 = vweird.f32 %v1689
        %vm1696 = vmor %vm1694, %vm1695
        %v1697 = vsel %vm1696, %v1689, %v1693
        %v1698 = vand.u32 2147483647, %v1607
        %vm1699 = vcmp.eq.f32.partialorder %v1698, 8.507059e+37
        %v1700 = vand.u32 %v1607, 2147483648
        %v1701 = vor.u32 1.1754944e-38, %v1700
        %v1702 = vsel %vm1699, %v1701, %v1697
        %v1703 = vmul.f32 %v1585, %v1702
        %v1704 = vrcp.pop %v1610
        %v1705 = vmul.f32 %v1610, %v1704
        %v1706 = vsub.f32 1.0, %v1705
        %v1707 = vmul.f32 %v1704, %v1706
        %v1708 = vadd.f32 %v1704, %v1707
        %vm1709 = vweird.f32 %v1610
        %vm1710 = vweird.f32 %v1704
        %vm1711 = vmor %vm1709, %vm1710
        %v1712 = vsel %vm1711, %v1704, %v1708
        %v1713 = vand.u32 2147483647, %v1610
        %vm1714 = vcmp.eq.f32.partialorder %v1713, 8.507059e+37
        %v1715 = vand.u32 %v1610, 2147483648
        %v1716 = vor.u32 1.1754944e-38, %v1715
        %v1717 = vsel %vm1714, %v1716, %v1712
        %v1718 = vmul.f32 %v1587, %v1717
        %v1719 = vrcp.pop %v1613
        %v1720 = vmul.f32 %v1613, %v1719
        %v1721 = vsub.f32 1.0, %v1720
        %v1722 = vmul.f32 %v1719, %v1721
        %v1723 = vadd.f32 %v1719, %v1722
        %vm1724 = vweird.f32 %v1613
        %vm1725 = vweird.f32 %v1719
        %vm1726 = vmor %vm1724, %vm1725
        %v1727 = vsel %vm1726, %v1719, %v1723
        %v1728 = vand.u32 2147483647, %v1613
        %vm1729 = vcmp.eq.f32.partialorder %v1728, 8.507059e+37
        %v1730 = vand.u32 %v1613, 2147483648
        %v1731 = vor.u32 1.1754944e-38, %v1730
        %v1732 = vsel %vm1729, %v1731, %v1727
        %v1733 = vmul.f32 %v1589, %v1732
        %v1734 = vpack.c.bf16 %v1628, %v1628
        %v1735 = vpack.c.bf16 %v1643, %v1643
        %v1736 = vpack.c.bf16 %v1658, %v1658
        %v1737 = vpack.c.bf16 %v1673, %v1673
        %v1738 = vpack.c.bf16 %v1688, %v1688
        %v1739 = vpack.c.bf16 %v1703, %v1703
        %v1740 = vpack.c.bf16 %v1718, %v1718
        %v1741 = vpack.c.bf16 %v1733, %v1733
        %1742 = vrot.lane.b32.xlu0 %v769, 56
        %v1743 = vpop.permute.xlu0 %1742
        %v1745 = vsel %vm772, %v1734, 0
        %v1748 = vsel %vm1173, %v1743, 0
        %1750 = vmatpush.bf16.msra.mxu0 0
        %1751 = vmatpush.bf16.msra.mxu0 0
        %1752 = vmatpush.bf16.msra.mxu0 0
        %1753 = vmatpush.bf16.msra.mxu0 0
        %1754 = vmatpush.bf16.msra.mxu0 0
        %1755 = vmatpush.bf16.msra.mxu0 0
        %1756 = vmatpush.bf16.msra.mxu0 0
        %1757 = vmatpush.bf16.msra.mxu0 %v1748
        %1758 = vmatmul.bf16.gmra.mxu0 %v1745
        %v1759 = vpop.f32.mrf.mxu0
        %v1760 = vadd.f32 0.0, %v1759
        %v1761 = vpop.f32.mrf.mxu0
        %1762 = vdwg.mxu0
        %1763 = vrot.lane.b32.xlu0 %v794, 56
        %v1764 = vpop.permute.xlu0 %1763
        %v1766 = vsel %vm772, %v1735, 0
        %v1769 = vsel %vm1173, %v1764, 0
        %1771 = vmatpush.bf16.msra.mxu0 0
        %1772 = vmatpush.bf16.msra.mxu0 0
        %1773 = vmatpush.bf16.msra.mxu0 0
        %1774 = vmatpush.bf16.msra.mxu0 0
        %1775 = vmatpush.bf16.msra.mxu0 0
        %1776 = vmatpush.bf16.msra.mxu0 0
        %1777 = vmatpush.bf16.msra.mxu0 0
        %1778 = vmatpush.bf16.msra.mxu0 %v1769
        %1779 = vmatmul.bf16.gmra.mxu0 %v1766
        %v1780 = vpop.f32.mrf.mxu0
        %v1781 = vadd.f32 0.0, %v1780
        %v1782 = vpop.f32.mrf.mxu0
        %1783 = vdwg.mxu0
        %1784 = vrot.lane.b32.xlu0 %v818, 56
        %v1785 = vpop.permute.xlu0 %1784
        %v1787 = vsel %vm772, %v1736, 0
        %v1790 = vsel %vm1173, %v1785, 0
        %1792 = vmatpush.bf16.msra.mxu0 0
        %1793 = vmatpush.bf16.msra.mxu0 0
        %1794 = vmatpush.bf16.msra.mxu0 0
        %1795 = vmatpush.bf16.msra.mxu0 0
        %1796 = vmatpush.bf16.msra.mxu0 0
        %1797 = vmatpush.bf16.msra.mxu0 0
        %1798 = vmatpush.bf16.msra.mxu0 0
        %1799 = vmatpush.bf16.msra.mxu0 %v1790
        %1800 = vmatmul.bf16.gmra.mxu0 %v1787
        %v1801 = vpop.f32.mrf.mxu0
        %v1802 = vadd.f32 0.0, %v1801
        %v1803 = vpop.f32.mrf.mxu0
        %1804 = vdwg.mxu0
        %1805 = vrot.lane.b32.xlu0 %v842, 56
        %v1806 = vpop.permute.xlu0 %1805
        %v1808 = vsel %vm772, %v1737, 0
        %v1811 = vsel %vm1173, %v1806, 0
        %1813 = vmatpush.bf16.msra.mxu0 0
        %1814 = vmatpush.bf16.msra.mxu0 0
        %1815 = vmatpush.bf16.msra.mxu0 0
        %1816 = vmatpush.bf16.msra.mxu0 0
        %1817 = vmatpush.bf16.msra.mxu0 0
        %1818 = vmatpush.bf16.msra.mxu0 0
        %1819 = vmatpush.bf16.msra.mxu0 0
        %1820 = vmatpush.bf16.msra.mxu0 %v1811
        %1821 = vmatmul.bf16.gmra.mxu0 %v1808
        %v1822 = vpop.f32.mrf.mxu0
        %v1823 = vadd.f32 0.0, %v1822
        %v1824 = vpop.f32.mrf.mxu0
        %1825 = vdwg.mxu0
        %1826 = vrot.lane.b32.xlu0 %v866, 56
        %v1827 = vpop.permute.xlu0 %1826
        %v1829 = vsel %vm772, %v1738, 0
        %v1832 = vsel %vm1173, %v1827, 0
        %1834 = vmatpush.bf16.msra.mxu0 0
        %1835 = vmatpush.bf16.msra.mxu0 0
        %1836 = vmatpush.bf16.msra.mxu0 0
        %1837 = vmatpush.bf16.msra.mxu0 0
        %1838 = vmatpush.bf16.msra.mxu0 0
        %1839 = vmatpush.bf16.msra.mxu0 0
        %1840 = vmatpush.bf16.msra.mxu0 0
        %1841 = vmatpush.bf16.msra.mxu0 %v1832
        %1842 = vmatmul.bf16.gmra.mxu0 %v1829
        %v1843 = vpop.f32.mrf.mxu0
        %v1844 = vadd.f32 0.0, %v1843
        %v1845 = vpop.f32.mrf.mxu0
        %1846 = vdwg.mxu0
        %1847 = vrot.lane.b32.xlu0 %v890, 56
        %v1848 = vpop.permute.xlu0 %1847
        %v1850 = vsel %vm772, %v1739, 0
        %v1853 = vsel %vm1173, %v1848, 0
        %1855 = vmatpush.bf16.msra.mxu0 0
        %1856 = vmatpush.bf16.msra.mxu0 0
        %1857 = vmatpush.bf16.msra.mxu0 0
        %1858 = vmatpush.bf16.msra.mxu0 0
        %1859 = vmatpush.bf16.msra.mxu0 0
        %1860 = vmatpush.bf16.msra.mxu0 0
        %1861 = vmatpush.bf16.msra.mxu0 0
        %1862 = vmatpush.bf16.msra.mxu0 %v1853
        %1863 = vmatmul.bf16.gmra.mxu0 %v1850
        %v1864 = vpop.f32.mrf.mxu0
        %v1865 = vadd.f32 0.0, %v1864
        %v1866 = vpop.f32.mrf.mxu0
        %1867 = vdwg.mxu0
        %1868 = vrot.lane.b32.xlu0 %v914, 56
        %v1869 = vpop.permute.xlu0 %1868
        %v1871 = vsel %vm772, %v1740, 0
        %v1874 = vsel %vm1173, %v1869, 0
        %1876 = vmatpush.bf16.msra.mxu0 0
        %1877 = vmatpush.bf16.msra.mxu0 0
        %1878 = vmatpush.bf16.msra.mxu0 0
        %1879 = vmatpush.bf16.msra.mxu0 0
        %1880 = vmatpush.bf16.msra.mxu0 0
        %1881 = vmatpush.bf16.msra.mxu0 0
        %1882 = vmatpush.bf16.msra.mxu0 0
        %1883 = vmatpush.bf16.msra.mxu0 %v1874
        %1884 = vmatmul.bf16.gmra.mxu0 %v1871
        %v1885 = vpop.f32.mrf.mxu0
        %v1886 = vadd.f32 0.0, %v1885
        %v1887 = vpop.f32.mrf.mxu0
        %1888 = vdwg.mxu0
        %1889 = vrot.lane.b32.xlu0 %v938, 56
        %v1890 = vpop.permute.xlu0 %1889
        %v1892 = vsel %vm772, %v1741, 0
        %v1895 = vsel %vm1173, %v1890, 0
        %1897 = vmatpush.bf16.msra.mxu0 0
        %1898 = vmatpush.bf16.msra.mxu0 0
        %1899 = vmatpush.bf16.msra.mxu0 0
        %1900 = vmatpush.bf16.msra.mxu0 0
        %1901 = vmatpush.bf16.msra.mxu0 0
        %1902 = vmatpush.bf16.msra.mxu0 0
        %1903 = vmatpush.bf16.msra.mxu0 0
        %1904 = vmatpush.bf16.msra.mxu0 %v1895
        %1905 = vmatmul.bf16.gmra.mxu0 %v1892
        %v1906 = vpop.f32.mrf.mxu0
        %v1907 = vadd.f32 0.0, %v1906
        %v1908 = vpop.f32.mrf.mxu0
        %1909 = vdwg.mxu0
        %v1910 = vpack.c.bf16 %v1781, %v1760
        %v1911 = vpack.c.bf16 %v1823, %v1802
        %v1912 = vpack.c.bf16 %v1865, %v1844
        %v1913 = vpack.c.bf16 %v1907, %v1886
        %v1915 = vsel %vm772, %v1910, 0
        %v1918 = vsel %vm772, %v1911, 0
        %v1921 = vsel %vm772, %v1912, 0
        %v1924 = vsel %vm772, %v1913, 0
        %v1927 = vsel %vm1173, %v756, 0
        %1929 = vmatpush.bf16.msra.mxu0 0
        %1930 = vmatpush.bf16.msra.mxu0 0
        %1931 = vmatpush.bf16.msra.mxu0 0
        %1932 = vmatpush.bf16.msra.mxu0 0
        %1933 = vmatpush.bf16.msra.mxu0 0
        %1934 = vmatpush.bf16.msra.mxu0 0
        %1935 = vmatpush.bf16.msra.mxu0 0
        %1936 = vmatpush.bf16.msra.mxu0 %v1927
        %1937 = vmatmul.bf16.gmra.mxu0 %v1915
        %v1938 = vpop.f32.mrf.mxu0
        %v1939 = vadd.f32 0.0, %v1938
        %v1940 = vpop.f32.mrf.mxu0
        %v1941 = vadd.f32 0.0, %v1940
        %1942 = vmatmul.bf16.gmra.mxu0 %v1918
        %v1943 = vpop.f32.mrf.mxu0
        %v1944 = vadd.f32 0.0, %v1943
        %v1945 = vpop.f32.mrf.mxu0
        %v1946 = vadd.f32 0.0, %v1945
        %1947 = vmatmul.bf16.gmra.mxu0 %v1921
        %v1948 = vpop.f32.mrf.mxu0
        %v1949 = vadd.f32 0.0, %v1948
        %v1950 = vpop.f32.mrf.mxu0
        %v1951 = vadd.f32 0.0, %v1950
        %1952 = vmatmul.bf16.gmra.mxu0 %v1924
        %v1953 = vpop.f32.mrf.mxu0
        %v1954 = vadd.f32 0.0, %v1953
        %v1955 = vpop.f32.mrf.mxu0
        %v1956 = vadd.f32 0.0, %v1955
        %1957 = vdwg.mxu0
        %v1959 = vsel %vm772, %v1337, 0
        %v1962 = vsel %vm772, %v1338, 0
        %v1965 = vsel %vm772, %v1339, 0
        %v1968 = vsel %vm772, %v1340, 0
        %v1971 = vsel %vm1173, %v755, 0
        %1973 = vmatpush.bf16.msra.mxu0 0
        %1974 = vmatpush.bf16.msra.mxu0 0
        %1975 = vmatpush.bf16.msra.mxu0 0
        %1976 = vmatpush.bf16.msra.mxu0 0
        %1977 = vmatpush.bf16.msra.mxu0 0
        %1978 = vmatpush.bf16.msra.mxu0 0
        %1979 = vmatpush.bf16.msra.mxu0 0
        %1980 = vmatpush.bf16.msra.mxu0 %v1971
        %1981 = vmatmul.bf16.gmra.mxu0 %v1959
        %v1982 = vpop.f32.mrf.mxu0
        %v1983 = vadd.f32 %v1939, %v1982
        %v1984 = vpop.f32.mrf.mxu0
        %v1985 = vadd.f32 %v1941, %v1984
        %1986 = vmatmul.bf16.gmra.mxu0 %v1962
        %v1987 = vpop.f32.mrf.mxu0
        %v1988 = vadd.f32 %v1944, %v1987
        %v1989 = vpop.f32.mrf.mxu0
        %v1990 = vadd.f32 %v1946, %v1989
        %1991 = vmatmul.bf16.gmra.mxu0 %v1965
        %v1992 = vpop.f32.mrf.mxu0
        %v1993 = vadd.f32 %v1949, %v1992
        %v1994 = vpop.f32.mrf.mxu0
        %v1995 = vadd.f32 %v1951, %v1994
        %1996 = vmatmul.bf16.gmra.mxu0 %v1968
        %v1997 = vpop.f32.mrf.mxu0
        %v1998 = vadd.f32 %v1954, %v1997
        %v1999 = vpop.f32.mrf.mxu0
        %v2000 = vadd.f32 %v1956, %v1999
        %2001 = vdwg.mxu0
        %s2002 = scalar_lea.vmem [#allocation2], 128
        %v2003 = vld [vmem:[%s2002] sm:$0xff]
        %v2004 = vld [vmem:[%s2002 + $0x8] sm:$0xff]
        %v2005 = vld [vmem:[%s2002 + $0x10] sm:$0xff]
        %v2006 = vld [vmem:[%s2002 + $0x18] sm:$0xff]
        %v2007 = vld [vmem:[%s2002 + $0x20] sm:$0xff]
        %v2008 = vld [vmem:[%s2002 + $0x28] sm:$0xff]
        %v2009 = vld [vmem:[%s2002 + $0x30] sm:$0xff]
        %v2010 = vld [vmem:[%s2002 + $0x38] sm:$0xff]
        %2011 = vrot.lane.b32.xlu0 %v769, 112
        %v2012 = vpop.permute.xlu0 %2011
        %2013 = vrot.lane.b32.xlu0 %v769, 80
        %v2014 = vpop.permute.xlu0 %2013
        %v2016 = vsel %vm772, %v2012, 0
        %v2019 = vsel %vm772, %v2014, 0
        %2021 = vmatpush.bf16.xpose.msra.mxu0 0
        %2022 = vmatpush.bf16.xpose.msra.mxu0 0
        %2023 = vmatpush.bf16.xpose.msra.mxu0 0
        %2024 = vmatpush.bf16.xpose.msra.mxu0 0
        %2025 = vmatpush.bf16.xpose.msra.mxu0 0
        %2026 = vmatpush.bf16.xpose.msra.mxu0 0
        %2027 = vmatpush.bf16.xpose.msra.mxu0 0
        %2028 = vmatpush.bf16.xpose.msra.mxu0 %v2019
        %2029 = vmatmul.bf16.gmra.mxu0 %v2016
        %v2030 = vpop.f32.mrf.mxu0
        %v2031 = vadd.f32 %v2003, %v2030
        %v2032 = vpop.f32.mrf.mxu0
        %2033 = vdwg.mxu0
        %2034 = vrot.lane.b32.xlu0 %v794, 112
        %v2035 = vpop.permute.xlu0 %2034
        %2036 = vrot.lane.b32.xlu0 %v794, 80
        %v2037 = vpop.permute.xlu0 %2036
        %v2039 = vsel %vm772, %v2035, 0
        %v2042 = vsel %vm772, %v2037, 0
        %2044 = vmatpush.bf16.xpose.msra.mxu0 0
        %2045 = vmatpush.bf16.xpose.msra.mxu0 0
        %2046 = vmatpush.bf16.xpose.msra.mxu0 0
        %2047 = vmatpush.bf16.xpose.msra.mxu0 0
        %2048 = vmatpush.bf16.xpose.msra.mxu0 0
        %2049 = vmatpush.bf16.xpose.msra.mxu0 0
        %2050 = vmatpush.bf16.xpose.msra.mxu0 0
        %2051 = vmatpush.bf16.xpose.msra.mxu0 %v2042
        %2052 = vmatmul.bf16.gmra.mxu0 %v2039
        %v2053 = vpop.f32.mrf.mxu0
        %v2054 = vadd.f32 %v2004, %v2053
        %v2055 = vpop.f32.mrf.mxu0
        %2056 = vdwg.mxu0
        %2057 = vrot.lane.b32.xlu0 %v818, 112
        %v2058 = vpop.permute.xlu0 %2057
        %2059 = vrot.lane.b32.xlu0 %v818, 80
        %v2060 = vpop.permute.xlu0 %2059
        %v2062 = vsel %vm772, %v2058, 0
        %v2065 = vsel %vm772, %v2060, 0
        %2067 = vmatpush.bf16.xpose.msra.mxu0 0
        %2068 = vmatpush.bf16.xpose.msra.mxu0 0
        %2069 = vmatpush.bf16.xpose.msra.mxu0 0
        %2070 = vmatpush.bf16.xpose.msra.mxu0 0
        %2071 = vmatpush.bf16.xpose.msra.mxu0 0
        %2072 = vmatpush.bf16.xpose.msra.mxu0 0
        %2073 = vmatpush.bf16.xpose.msra.mxu0 0
        %2074 = vmatpush.bf16.xpose.msra.mxu0 %v2065
        %2075 = vmatmul.bf16.gmra.mxu0 %v2062
        %v2076 = vpop.f32.mrf.mxu0
        %v2077 = vadd.f32 %v2005, %v2076
        %v2078 = vpop.f32.mrf.mxu0
        %2079 = vdwg.mxu0
        %2080 = vrot.lane.b32.xlu0 %v842, 112
        %v2081 = vpop.permute.xlu0 %2080
        %2082 = vrot.lane.b32.xlu0 %v842, 80
        %v2083 = vpop.permute.xlu0 %2082
        %v2085 = vsel %vm772, %v2081, 0
        %v2088 = vsel %vm772, %v2083, 0
        %2090 = vmatpush.bf16.xpose.msra.mxu0 0
        %2091 = vmatpush.bf16.xpose.msra.mxu0 0
        %2092 = vmatpush.bf16.xpose.msra.mxu0 0
        %2093 = vmatpush.bf16.xpose.msra.mxu0 0
        %2094 = vmatpush.bf16.xpose.msra.mxu0 0
        %2095 = vmatpush.bf16.xpose.msra.mxu0 0
        %2096 = vmatpush.bf16.xpose.msra.mxu0 0
        %2097 = vmatpush.bf16.xpose.msra.mxu0 %v2088
        %2098 = vmatmul.bf16.gmra.mxu0 %v2085
        %v2099 = vpop.f32.mrf.mxu0
        %v2100 = vadd.f32 %v2006, %v2099
        %v2101 = vpop.f32.mrf.mxu0
        %2102 = vdwg.mxu0
        %2103 = vrot.lane.b32.xlu0 %v866, 112
        %v2104 = vpop.permute.xlu0 %2103
        %2105 = vrot.lane.b32.xlu0 %v866, 80
        %v2106 = vpop.permute.xlu0 %2105
        %v2108 = vsel %vm772, %v2104, 0
        %v2111 = vsel %vm772, %v2106, 0
        %2113 = vmatpush.bf16.xpose.msra.mxu0 0
        %2114 = vmatpush.bf16.xpose.msra.mxu0 0
        %2115 = vmatpush.bf16.xpose.msra.mxu0 0
        %2116 = vmatpush.bf16.xpose.msra.mxu0 0
        %2117 = vmatpush.bf16.xpose.msra.mxu0 0
        %2118 = vmatpush.bf16.xpose.msra.mxu0 0
        %2119 = vmatpush.bf16.xpose.msra.mxu0 0
        %2120 = vmatpush.bf16.xpose.msra.mxu0 %v2111
        %2121 = vmatmul.bf16.gmra.mxu0 %v2108
        %v2122 = vpop.f32.mrf.mxu0
        %v2123 = vadd.f32 %v2007, %v2122
        %v2124 = vpop.f32.mrf.mxu0
        %2125 = vdwg.mxu0
        %2126 = vrot.lane.b32.xlu0 %v890, 112
        %v2127 = vpop.permute.xlu0 %2126
        %2128 = vrot.lane.b32.xlu0 %v890, 80
        %v2129 = vpop.permute.xlu0 %2128
        %v2131 = vsel %vm772, %v2127, 0
        %v2134 = vsel %vm772, %v2129, 0
        %2136 = vmatpush.bf16.xpose.msra.mxu0 0
        %2137 = vmatpush.bf16.xpose.msra.mxu0 0
        %2138 = vmatpush.bf16.xpose.msra.mxu0 0
        %2139 = vmatpush.bf16.xpose.msra.mxu0 0
        %2140 = vmatpush.bf16.xpose.msra.mxu0 0
        %2141 = vmatpush.bf16.xpose.msra.mxu0 0
        %2142 = vmatpush.bf16.xpose.msra.mxu0 0
        %2143 = vmatpush.bf16.xpose.msra.mxu0 %v2134
        %2144 = vmatmul.bf16.gmra.mxu0 %v2131
        %v2145 = vpop.f32.mrf.mxu0
        %v2146 = vadd.f32 %v2008, %v2145
        %v2147 = vpop.f32.mrf.mxu0
        %2148 = vdwg.mxu0
        %2149 = vrot.lane.b32.xlu0 %v914, 112
        %v2150 = vpop.permute.xlu0 %2149
        %2151 = vrot.lane.b32.xlu0 %v914, 80
        %v2152 = vpop.permute.xlu0 %2151
        %v2154 = vsel %vm772, %v2150, 0
        %v2157 = vsel %vm772, %v2152, 0
        %2159 = vmatpush.bf16.xpose.msra.mxu0 0
        %2160 = vmatpush.bf16.xpose.msra.mxu0 0
        %2161 = vmatpush.bf16.xpose.msra.mxu0 0
        %2162 = vmatpush.bf16.xpose.msra.mxu0 0
        %2163 = vmatpush.bf16.xpose.msra.mxu0 0
        %2164 = vmatpush.bf16.xpose.msra.mxu0 0
        %2165 = vmatpush.bf16.xpose.msra.mxu0 0
        %2166 = vmatpush.bf16.xpose.msra.mxu0 %v2157
        %2167 = vmatmul.bf16.gmra.mxu0 %v2154
        %v2168 = vpop.f32.mrf.mxu0
        %v2169 = vadd.f32 %v2009, %v2168
        %v2170 = vpop.f32.mrf.mxu0
        %2171 = vdwg.mxu0
        %2172 = vrot.lane.b32.xlu0 %v938, 112
        %v2173 = vpop.permute.xlu0 %2172
        %2174 = vrot.lane.b32.xlu0 %v938, 80
        %v2175 = vpop.permute.xlu0 %2174
        %v2177 = vsel %vm772, %v2173, 0
        %v2180 = vsel %vm772, %v2175, 0
        %2182 = vmatpush.bf16.xpose.msra.mxu0 0
        %2183 = vmatpush.bf16.xpose.msra.mxu0 0
        %2184 = vmatpush.bf16.xpose.msra.mxu0 0
        %2185 = vmatpush.bf16.xpose.msra.mxu0 0
        %2186 = vmatpush.bf16.xpose.msra.mxu0 0
        %2187 = vmatpush.bf16.xpose.msra.mxu0 0
        %2188 = vmatpush.bf16.xpose.msra.mxu0 0
        %2189 = vmatpush.bf16.xpose.msra.mxu0 %v2180
        %2190 = vmatmul.bf16.gmra.mxu0 %v2177
        %v2191 = vpop.f32.mrf.mxu0
        %v2192 = vadd.f32 %v2010, %v2191
        %v2193 = vpop.f32.mrf.mxu0
        %2194 = vdwg.mxu0
        %2195 = vst.msk [vmem:[%s2002] sm:$0xff] %vm772, %v2031
        %2196 = vst.msk [vmem:[%s2002 + $0x8] sm:$0xff] %vm772, %v2054
        %2197 = vst.msk [vmem:[%s2002 + $0x10] sm:$0xff] %vm772, %v2077
        %2198 = vst.msk [vmem:[%s2002 + $0x18] sm:$0xff] %vm772, %v2100
        %2199 = vst.msk [vmem:[%s2002 + $0x20] sm:$0xff] %vm772, %v2123
        %2200 = vst.msk [vmem:[%s2002 + $0x28] sm:$0xff] %vm772, %v2146
        %2201 = vst.msk [vmem:[%s2002 + $0x30] sm:$0xff] %vm772, %v2169
        %2202 = vst.msk [vmem:[%s2002 + $0x38] sm:$0xff] %vm772, %v2192
        %v2203 = vsel %vm772, %v2031, -inf
        %2204 = vmax.xlane.f32.xlu0 %v2203
        %v2205 = vpop.xlane.xlu0 %2204
        %v2206 = vsel %vm772, %v2054, -inf
        %2207 = vmax.xlane.f32.xlu0 %v2206
        %v2208 = vpop.xlane.xlu0 %2207
        %v2209 = vsel %vm772, %v2077, -inf
        %2210 = vmax.xlane.f32.xlu0 %v2209
        %v2211 = vpop.xlane.xlu0 %2210
        %v2212 = vsel %vm772, %v2100, -inf
        %2213 = vmax.xlane.f32.xlu0 %v2212
        %v2214 = vpop.xlane.xlu0 %2213
        %v2215 = vsel %vm772, %v2123, -inf
        %2216 = vmax.xlane.f32.xlu0 %v2215
        %v2217 = vpop.xlane.xlu0 %2216
        %v2218 = vsel %vm772, %v2146, -inf
        %2219 = vmax.xlane.f32.xlu0 %v2218
        %v2220 = vpop.xlane.xlu0 %2219
        %v2221 = vsel %vm772, %v2169, -inf
        %2222 = vmax.xlane.f32.xlu0 %v2221
        %v2223 = vpop.xlane.xlu0 %2222
        %v2224 = vsel %vm772, %v2192, -inf
        %2225 = vmax.xlane.f32.xlu0 %v2224
        %v2226 = vpop.xlane.xlu0 %2225
        %v2227 = vsub.f32 %v2031, %v2205
        %v2228 = vsub.f32 %v2054, %v2208
        %v2229 = vsub.f32 %v2077, %v2211
        %v2230 = vsub.f32 %v2100, %v2214
        %v2231 = vsub.f32 %v2123, %v2217
        %v2232 = vsub.f32 %v2146, %v2220
        %v2233 = vsub.f32 %v2169, %v2223
        %v2234 = vsub.f32 %v2192, %v2226
        %v2235 = vmul.f32 %v2227, 1.442695
        %v2236 = vpow.pop %v2235
        %v2237 = vmul.f32 %v2228, 1.442695
        %v2238 = vpow.pop %v2237
        %v2239 = vmul.f32 %v2229, 1.442695
        %v2240 = vpow.pop %v2239
        %v2241 = vmul.f32 %v2230, 1.442695
        %v2242 = vpow.pop %v2241
        %v2243 = vmul.f32 %v2231, 1.442695
        %v2244 = vpow.pop %v2243
        %v2245 = vmul.f32 %v2232, 1.442695
        %v2246 = vpow.pop %v2245
        %v2247 = vmul.f32 %v2233, 1.442695
        %v2248 = vpow.pop %v2247
        %v2249 = vmul.f32 %v2234, 1.442695
        %v2250 = vpow.pop %v2249
        %v2251 = vsel %vm772, %v2236, 0.0
        %2252 = vadd.xlane.f32.xlu0 %v2251
        %v2253 = vpop.xlane.xlu0 %2252
        %v2254 = vsel %vm772, %v2238, 0.0
        %2255 = vadd.xlane.f32.xlu0 %v2254
        %v2256 = vpop.xlane.xlu0 %2255
        %v2257 = vsel %vm772, %v2240, 0.0
        %2258 = vadd.xlane.f32.xlu0 %v2257
        %v2259 = vpop.xlane.xlu0 %2258
        %v2260 = vsel %vm772, %v2242, 0.0
        %2261 = vadd.xlane.f32.xlu0 %v2260
        %v2262 = vpop.xlane.xlu0 %2261
        %v2263 = vsel %vm772, %v2244, 0.0
        %2264 = vadd.xlane.f32.xlu0 %v2263
        %v2265 = vpop.xlane.xlu0 %2264
        %v2266 = vsel %vm772, %v2246, 0.0
        %2267 = vadd.xlane.f32.xlu0 %v2266
        %v2268 = vpop.xlane.xlu0 %2267
        %v2269 = vsel %vm772, %v2248, 0.0
        %2270 = vadd.xlane.f32.xlu0 %v2269
        %v2271 = vpop.xlane.xlu0 %2270
        %v2272 = vsel %vm772, %v2250, 0.0
        %2273 = vadd.xlane.f32.xlu0 %v2272
        %v2274 = vpop.xlane.xlu0 %2273
        %v2275 = vrcp.pop %v2253
        %v2276 = vmul.f32 %v2253, %v2275
        %v2277 = vsub.f32 1.0, %v2276
        %v2278 = vmul.f32 %v2275, %v2277
        %v2279 = vadd.f32 %v2275, %v2278
        %vm2280 = vweird.f32 %v2253
        %vm2281 = vweird.f32 %v2275
        %vm2282 = vmor %vm2280, %vm2281
        %v2283 = vsel %vm2282, %v2275, %v2279
        %v2284 = vand.u32 2147483647, %v2253
        %vm2285 = vcmp.eq.f32.partialorder %v2284, 8.507059e+37
        %v2286 = vand.u32 %v2253, 2147483648
        %v2287 = vor.u32 1.1754944e-38, %v2286
        %v2288 = vsel %vm2285, %v2287, %v2283
        %v2289 = vmul.f32 %v2236, %v2288
        %v2290 = vrcp.pop %v2256
        %v2291 = vmul.f32 %v2256, %v2290
        %v2292 = vsub.f32 1.0, %v2291
        %v2293 = vmul.f32 %v2290, %v2292
        %v2294 = vadd.f32 %v2290, %v2293
        %vm2295 = vweird.f32 %v2256
        %vm2296 = vweird.f32 %v2290
        %vm2297 = vmor %vm2295, %vm2296
        %v2298 = vsel %vm2297, %v2290, %v2294
        %v2299 = vand.u32 2147483647, %v2256
        %vm2300 = vcmp.eq.f32.partialorder %v2299, 8.507059e+37
        %v2301 = vand.u32 %v2256, 2147483648
        %v2302 = vor.u32 1.1754944e-38, %v2301
        %v2303 = vsel %vm2300, %v2302, %v2298
        %v2304 = vmul.f32 %v2238, %v2303
        %v2305 = vrcp.pop %v2259
        %v2306 = vmul.f32 %v2259, %v2305
        %v2307 = vsub.f32 1.0, %v2306
        %v2308 = vmul.f32 %v2305, %v2307
        %v2309 = vadd.f32 %v2305, %v2308
        %vm2310 = vweird.f32 %v2259
        %vm2311 = vweird.f32 %v2305
        %vm2312 = vmor %vm2310, %vm2311
        %v2313 = vsel %vm2312, %v2305, %v2309
        %v2314 = vand.u32 2147483647, %v2259
        %vm2315 = vcmp.eq.f32.partialorder %v2314, 8.507059e+37
        %v2316 = vand.u32 %v2259, 2147483648
        %v2317 = vor.u32 1.1754944e-38, %v2316
        %v2318 = vsel %vm2315, %v2317, %v2313
        %v2319 = vmul.f32 %v2240, %v2318
        %v2320 = vrcp.pop %v2262
        %v2321 = vmul.f32 %v2262, %v2320
        %v2322 = vsub.f32 1.0, %v2321
        %v2323 = vmul.f32 %v2320, %v2322
        %v2324 = vadd.f32 %v2320, %v2323
        %vm2325 = vweird.f32 %v2262
        %vm2326 = vweird.f32 %v2320
        %vm2327 = vmor %vm2325, %vm2326
        %v2328 = vsel %vm2327, %v2320, %v2324
        %v2329 = vand.u32 2147483647, %v2262
        %vm2330 = vcmp.eq.f32.partialorder %v2329, 8.507059e+37
        %v2331 = vand.u32 %v2262, 2147483648
        %v2332 = vor.u32 1.1754944e-38, %v2331
        %v2333 = vsel %vm2330, %v2332, %v2328
        %v2334 = vmul.f32 %v2242, %v2333
        %v2335 = vrcp.pop %v2265
        %v2336 = vmul.f32 %v2265, %v2335
        %v2337 = vsub.f32 1.0, %v2336
        %v2338 = vmul.f32 %v2335, %v2337
        %v2339 = vadd.f32 %v2335, %v2338
        %vm2340 = vweird.f32 %v2265
        %vm2341 = vweird.f32 %v2335
        %vm2342 = vmor %vm2340, %vm2341
        %v2343 = vsel %vm2342, %v2335, %v2339
        %v2344 = vand.u32 2147483647, %v2265
        %vm2345 = vcmp.eq.f32.partialorder %v2344, 8.507059e+37
        %v2346 = vand.u32 %v2265, 2147483648
        %v2347 = vor.u32 1.1754944e-38, %v2346
        %v2348 = vsel %vm2345, %v2347, %v2343
        %v2349 = vmul.f32 %v2244, %v2348
        %v2350 = vrcp.pop %v2268
        %v2351 = vmul.f32 %v2268, %v2350
        %v2352 = vsub.f32 1.0, %v2351
        %v2353 = vmul.f32 %v2350, %v2352
        %v2354 = vadd.f32 %v2350, %v2353
        %vm2355 = vweird.f32 %v2268
        %vm2356 = vweird.f32 %v2350
        %vm2357 = vmor %vm2355, %vm2356
        %v2358 = vsel %vm2357, %v2350, %v2354
        %v2359 = vand.u32 2147483647, %v2268
        %vm2360 = vcmp.eq.f32.partialorder %v2359, 8.507059e+37
        %v2361 = vand.u32 %v2268, 2147483648
        %v2362 = vor.u32 1.1754944e-38, %v2361
        %v2363 = vsel %vm2360, %v2362, %v2358
        %v2364 = vmul.f32 %v2246, %v2363
        %v2365 = vrcp.pop %v2271
        %v2366 = vmul.f32 %v2271, %v2365
        %v2367 = vsub.f32 1.0, %v2366
        %v2368 = vmul.f32 %v2365, %v2367
        %v2369 = vadd.f32 %v2365, %v2368
        %vm2370 = vweird.f32 %v2271
        %vm2371 = vweird.f32 %v2365
        %vm2372 = vmor %vm2370, %vm2371
        %v2373 = vsel %vm2372, %v2365, %v2369
        %v2374 = vand.u32 2147483647, %v2271
        %vm2375 = vcmp.eq.f32.partialorder %v2374, 8.507059e+37
        %v2376 = vand.u32 %v2271, 2147483648
        %v2377 = vor.u32 1.1754944e-38, %v2376
        %v2378 = vsel %vm2375, %v2377, %v2373
        %v2379 = vmul.f32 %v2248, %v2378
        %v2380 = vrcp.pop %v2274
        %v2381 = vmul.f32 %v2274, %v2380
        %v2382 = vsub.f32 1.0, %v2381
        %v2383 = vmul.f32 %v2380, %v2382
        %v2384 = vadd.f32 %v2380, %v2383
        %vm2385 = vweird.f32 %v2274
        %vm2386 = vweird.f32 %v2380
        %vm2387 = vmor %vm2385, %vm2386
        %v2388 = vsel %vm2387, %v2380, %v2384
        %v2389 = vand.u32 2147483647, %v2274
        %vm2390 = vcmp.eq.f32.partialorder %v2389, 8.507059e+37
        %v2391 = vand.u32 %v2274, 2147483648
        %v2392 = vor.u32 1.1754944e-38, %v2391
        %v2393 = vsel %vm2390, %v2392, %v2388
        %v2394 = vmul.f32 %v2250, %v2393
        %v2395 = vpack.c.bf16 %v2289, %v2289
        %v2396 = vpack.c.bf16 %v2304, %v2304
        %v2397 = vpack.c.bf16 %v2319, %v2319
        %v2398 = vpack.c.bf16 %v2334, %v2334
        %v2399 = vpack.c.bf16 %v2349, %v2349
        %v2400 = vpack.c.bf16 %v2364, %v2364
        %v2401 = vpack.c.bf16 %v2379, %v2379
        %v2402 = vpack.c.bf16 %v2394, %v2394
        %2403 = vrot.lane.b32.xlu0 %v769, 48
        %v2404 = vpop.permute.xlu0 %2403
        %v2406 = vsel %vm772, %v2395, 0
        %v2409 = vsel %vm1173, %v2404, 0
        %2411 = vmatpush.bf16.msra.mxu0 0
        %2412 = vmatpush.bf16.msra.mxu0 0
        %2413 = vmatpush.bf16.msra.mxu0 0
        %2414 = vmatpush.bf16.msra.mxu0 0
        %2415 = vmatpush.bf16.msra.mxu0 0
        %2416 = vmatpush.bf16.msra.mxu0 0
        %2417 = vmatpush.bf16.msra.mxu0 0
        %2418 = vmatpush.bf16.msra.mxu0 %v2409
        %2419 = vmatmul.bf16.gmra.mxu0 %v2406
        %v2420 = vpop.f32.mrf.mxu0
        %v2421 = vadd.f32 0.0, %v2420
        %v2422 = vpop.f32.mrf.mxu0
        %2423 = vdwg.mxu0
        %2424 = vrot.lane.b32.xlu0 %v794, 48
        %v2425 = vpop.permute.xlu0 %2424
        %v2427 = vsel %vm772, %v2396, 0
        %v2430 = vsel %vm1173, %v2425, 0
        %2432 = vmatpush.bf16.msra.mxu0 0
        %2433 = vmatpush.bf16.msra.mxu0 0
        %2434 = vmatpush.bf16.msra.mxu0 0
        %2435 = vmatpush.bf16.msra.mxu0 0
        %2436 = vmatpush.bf16.msra.mxu0 0
        %2437 = vmatpush.bf16.msra.mxu0 0
        %2438 = vmatpush.bf16.msra.mxu0 0
        %2439 = vmatpush.bf16.msra.mxu0 %v2430
        %2440 = vmatmul.bf16.gmra.mxu0 %v2427
        %v2441 = vpop.f32.mrf.mxu0
        %v2442 = vadd.f32 0.0, %v2441
        %v2443 = vpop.f32.mrf.mxu0
        %2444 = vdwg.mxu0
        %2445 = vrot.lane.b32.xlu0 %v818, 48
        %v2446 = vpop.permute.xlu0 %2445
        %v2448 = vsel %vm772, %v2397, 0
        %v2451 = vsel %vm1173, %v2446, 0
        %2453 = vmatpush.bf16.msra.mxu0 0
        %2454 = vmatpush.bf16.msra.mxu0 0
        %2455 = vmatpush.bf16.msra.mxu0 0
        %2456 = vmatpush.bf16.msra.mxu0 0
        %2457 = vmatpush.bf16.msra.mxu0 0
        %2458 = vmatpush.bf16.msra.mxu0 0
        %2459 = vmatpush.bf16.msra.mxu0 0
        %2460 = vmatpush.bf16.msra.mxu0 %v2451
        %2461 = vmatmul.bf16.gmra.mxu0 %v2448
        %v2462 = vpop.f32.mrf.mxu0
        %v2463 = vadd.f32 0.0, %v2462
        %v2464 = vpop.f32.mrf.mxu0
        %2465 = vdwg.mxu0
        %2466 = vrot.lane.b32.xlu0 %v842, 48
        %v2467 = vpop.permute.xlu0 %2466
        %v2469 = vsel %vm772, %v2398, 0
        %v2472 = vsel %vm1173, %v2467, 0
        %2474 = vmatpush.bf16.msra.mxu0 0
        %2475 = vmatpush.bf16.msra.mxu0 0
        %2476 = vmatpush.bf16.msra.mxu0 0
        %2477 = vmatpush.bf16.msra.mxu0 0
        %2478 = vmatpush.bf16.msra.mxu0 0
        %2479 = vmatpush.bf16.msra.mxu0 0
        %2480 = vmatpush.bf16.msra.mxu0 0
        %2481 = vmatpush.bf16.msra.mxu0 %v2472
        %2482 = vmatmul.bf16.gmra.mxu0 %v2469
        %v2483 = vpop.f32.mrf.mxu0
        %v2484 = vadd.f32 0.0, %v2483
        %v2485 = vpop.f32.mrf.mxu0
        %2486 = vdwg.mxu0
        %2487 = vrot.lane.b32.xlu0 %v866, 48
        %v2488 = vpop.permute.xlu0 %2487
        %v2490 = vsel %vm772, %v2399, 0
        %v2493 = vsel %vm1173, %v2488, 0
        %2495 = vmatpush.bf16.msra.mxu0 0
        %2496 = vmatpush.bf16.msra.mxu0 0
        %2497 = vmatpush.bf16.msra.mxu0 0
        %2498 = vmatpush.bf16.msra.mxu0 0
        %2499 = vmatpush.bf16.msra.mxu0 0
        %2500 = vmatpush.bf16.msra.mxu0 0
        %2501 = vmatpush.bf16.msra.mxu0 0
        %2502 = vmatpush.bf16.msra.mxu0 %v2493
        %2503 = vmatmul.bf16.gmra.mxu0 %v2490
        %v2504 = vpop.f32.mrf.mxu0
        %v2505 = vadd.f32 0.0, %v2504
        %v2506 = vpop.f32.mrf.mxu0
        %2507 = vdwg.mxu0
        %2508 = vrot.lane.b32.xlu0 %v890, 48
        %v2509 = vpop.permute.xlu0 %2508
        %v2511 = vsel %vm772, %v2400, 0
        %v2514 = vsel %vm1173, %v2509, 0
        %2516 = vmatpush.bf16.msra.mxu0 0
        %2517 = vmatpush.bf16.msra.mxu0 0
        %2518 = vmatpush.bf16.msra.mxu0 0
        %2519 = vmatpush.bf16.msra.mxu0 0
        %2520 = vmatpush.bf16.msra.mxu0 0
        %2521 = vmatpush.bf16.msra.mxu0 0
        %2522 = vmatpush.bf16.msra.mxu0 0
        %2523 = vmatpush.bf16.msra.mxu0 %v2514
        %2524 = vmatmul.bf16.gmra.mxu0 %v2511
        %v2525 = vpop.f32.mrf.mxu0
        %v2526 = vadd.f32 0.0, %v2525
        %v2527 = vpop.f32.mrf.mxu0
        %2528 = vdwg.mxu0
        %2529 = vrot.lane.b32.xlu0 %v914, 48
        %v2530 = vpop.permute.xlu0 %2529
        %v2532 = vsel %vm772, %v2401, 0
        %v2535 = vsel %vm1173, %v2530, 0
        %2537 = vmatpush.bf16.msra.mxu0 0
        %2538 = vmatpush.bf16.msra.mxu0 0
        %2539 = vmatpush.bf16.msra.mxu0 0
        %2540 = vmatpush.bf16.msra.mxu0 0
        %2541 = vmatpush.bf16.msra.mxu0 0
        %2542 = vmatpush.bf16.msra.mxu0 0
        %2543 = vmatpush.bf16.msra.mxu0 0
        %2544 = vmatpush.bf16.msra.mxu0 %v2535
        %2545 = vmatmul.bf16.gmra.mxu0 %v2532
        %v2546 = vpop.f32.mrf.mxu0
        %v2547 = vadd.f32 0.0, %v2546
        %v2548 = vpop.f32.mrf.mxu0
        %2549 = vdwg.mxu0
        %2550 = vrot.lane.b32.xlu0 %v938, 48
        %v2551 = vpop.permute.xlu0 %2550
        %v2553 = vsel %vm772, %v2402, 0
        %v2556 = vsel %vm1173, %v2551, 0
        %2558 = vmatpush.bf16.msra.mxu0 0
        %2559 = vmatpush.bf16.msra.mxu0 0
        %2560 = vmatpush.bf16.msra.mxu0 0
        %2561 = vmatpush.bf16.msra.mxu0 0
        %2562 = vmatpush.bf16.msra.mxu0 0
        %2563 = vmatpush.bf16.msra.mxu0 0
        %2564 = vmatpush.bf16.msra.mxu0 0
        %2565 = vmatpush.bf16.msra.mxu0 %v2556
        %2566 = vmatmul.bf16.gmra.mxu0 %v2553
        %v2567 = vpop.f32.mrf.mxu0
        %v2568 = vadd.f32 0.0, %v2567
        %v2569 = vpop.f32.mrf.mxu0
        %2570 = vdwg.mxu0
        %v2571 = vpack.c.bf16 %v2442, %v2421
        %v2572 = vpack.c.bf16 %v2484, %v2463
        %v2573 = vpack.c.bf16 %v2526, %v2505
        %v2574 = vpack.c.bf16 %v2568, %v2547
        %v2576 = vsel %vm772, %v2571, 0
        %v2579 = vsel %vm772, %v2572, 0
        %v2582 = vsel %vm772, %v2573, 0
        %v2585 = vsel %vm772, %v2574, 0
        %v2588 = vsel %vm1173, %v757, 0
        %2590 = vmatpush.bf16.msra.mxu0 0
        %2591 = vmatpush.bf16.msra.mxu0 0
        %2592 = vmatpush.bf16.msra.mxu0 0
        %2593 = vmatpush.bf16.msra.mxu0 0
        %2594 = vmatpush.bf16.msra.mxu0 0
        %2595 = vmatpush.bf16.msra.mxu0 0
        %2596 = vmatpush.bf16.msra.mxu0 0
        %2597 = vmatpush.bf16.msra.mxu0 %v2588
        %2598 = vmatmul.bf16.gmra.mxu0 %v2576
        %v2599 = vpop.f32.mrf.mxu0
        %v2600 = vadd.f32 0.0, %v2599
        %v2601 = vpop.f32.mrf.mxu0
        %v2602 = vadd.f32 0.0, %v2601
        %2603 = vmatmul.bf16.gmra.mxu0 %v2579
        %v2604 = vpop.f32.mrf.mxu0
        %v2605 = vadd.f32 0.0, %v2604
        %v2606 = vpop.f32.mrf.mxu0
        %v2607 = vadd.f32 0.0, %v2606
        %2608 = vmatmul.bf16.gmra.mxu0 %v2582
        %v2609 = vpop.f32.mrf.mxu0
        %v2610 = vadd.f32 0.0, %v2609
        %v2611 = vpop.f32.mrf.mxu0
        %v2612 = vadd.f32 0.0, %v2611
        %2613 = vmatmul.bf16.gmra.mxu0 %v2585
        %v2614 = vpop.f32.mrf.mxu0
        %v2615 = vadd.f32 0.0, %v2614
        %v2616 = vpop.f32.mrf.mxu0
        %v2617 = vadd.f32 0.0, %v2616
        %2618 = vdwg.mxu0
        %v2619 = vadd.f32 %v1983, %v2600
        %v2620 = vadd.f32 %v1985, %v2602
        %v2621 = vadd.f32 %v1988, %v2605
        %v2622 = vadd.f32 %v1990, %v2607
        %v2623 = vadd.f32 %v1993, %v2610
        %v2624 = vadd.f32 %v1995, %v2612
        %v2625 = vadd.f32 %v1998, %v2615
        %v2626 = vadd.f32 %v2000, %v2617
        %s2627 = scalar_lea.vmem [#allocation2], 192
        %v2628 = vld [vmem:[%s2627] sm:$0xff]
        %v2629 = vld [vmem:[%s2627 + $0x8] sm:$0xff]
        %v2630 = vld [vmem:[%s2627 + $0x10] sm:$0xff]
        %v2631 = vld [vmem:[%s2627 + $0x18] sm:$0xff]
        %v2632 = vld [vmem:[%s2627 + $0x20] sm:$0xff]
        %v2633 = vld [vmem:[%s2627 + $0x28] sm:$0xff]
        %v2634 = vld [vmem:[%s2627 + $0x30] sm:$0xff]
        %v2635 = vld [vmem:[%s2627 + $0x38] sm:$0xff]
        %2636 = vrot.lane.b32.xlu0 %v769, 104
        %v2637 = vpop.permute.xlu0 %2636
        %2638 = vrot.lane.b32.xlu0 %v769, 72
        %v2639 = vpop.permute.xlu0 %2638
        %v2641 = vsel %vm772, %v2637, 0
        %v2644 = vsel %vm772, %v2639, 0
        %2646 = vmatpush.bf16.xpose.msra.mxu0 0
        %2647 = vmatpush.bf16.xpose.msra.mxu0 0
        %2648 = vmatpush.bf16.xpose.msra.mxu0 0
        %2649 = vmatpush.bf16.xpose.msra.mxu0 0
        %2650 = vmatpush.bf16.xpose.msra.mxu0 0
        %2651 = vmatpush.bf16.xpose.msra.mxu0 0
        %2652 = vmatpush.bf16.xpose.msra.mxu0 0
        %2653 = vmatpush.bf16.xpose.msra.mxu0 %v2644
        %2654 = vmatmul.bf16.gmra.mxu0 %v2641
        %v2655 = vpop.f32.mrf.mxu0
        %v2656 = vadd.f32 %v2628, %v2655
        %v2657 = vpop.f32.mrf.mxu0
        %2658 = vdwg.mxu0
        %2659 = vrot.lane.b32.xlu0 %v794, 104
        %v2660 = vpop.permute.xlu0 %2659
        %2661 = vrot.lane.b32.xlu0 %v794, 72
        %v2662 = vpop.permute.xlu0 %2661
        %v2664 = vsel %vm772, %v2660, 0
        %v2667 = vsel %vm772, %v2662, 0
        %2669 = vmatpush.bf16.xpose.msra.mxu0 0
        %2670 = vmatpush.bf16.xpose.msra.mxu0 0
        %2671 = vmatpush.bf16.xpose.msra.mxu0 0
        %2672 = vmatpush.bf16.xpose.msra.mxu0 0
        %2673 = vmatpush.bf16.xpose.msra.mxu0 0
        %2674 = vmatpush.bf16.xpose.msra.mxu0 0
        %2675 = vmatpush.bf16.xpose.msra.mxu0 0
        %2676 = vmatpush.bf16.xpose.msra.mxu0 %v2667
        %2677 = vmatmul.bf16.gmra.mxu0 %v2664
        %v2678 = vpop.f32.mrf.mxu0
        %v2679 = vadd.f32 %v2629, %v2678
        %v2680 = vpop.f32.mrf.mxu0
        %2681 = vdwg.mxu0
        %2682 = vrot.lane.b32.xlu0 %v818, 104
        %v2683 = vpop.permute.xlu0 %2682
        %2684 = vrot.lane.b32.xlu0 %v818, 72
        %v2685 = vpop.permute.xlu0 %2684
        %v2687 = vsel %vm772, %v2683, 0
        %v2690 = vsel %vm772, %v2685, 0
        %2692 = vmatpush.bf16.xpose.msra.mxu0 0
        %2693 = vmatpush.bf16.xpose.msra.mxu0 0
        %2694 = vmatpush.bf16.xpose.msra.mxu0 0
        %2695 = vmatpush.bf16.xpose.msra.mxu0 0
        %2696 = vmatpush.bf16.xpose.msra.mxu0 0
        %2697 = vmatpush.bf16.xpose.msra.mxu0 0
        %2698 = vmatpush.bf16.xpose.msra.mxu0 0
        %2699 = vmatpush.bf16.xpose.msra.mxu0 %v2690
        %2700 = vmatmul.bf16.gmra.mxu0 %v2687
        %v2701 = vpop.f32.mrf.mxu0
        %v2702 = vadd.f32 %v2630, %v2701
        %v2703 = vpop.f32.mrf.mxu0
        %2704 = vdwg.mxu0
        %2705 = vrot.lane.b32.xlu0 %v842, 104
        %v2706 = vpop.permute.xlu0 %2705
        %2707 = vrot.lane.b32.xlu0 %v842, 72
        %v2708 = vpop.permute.xlu0 %2707
        %v2710 = vsel %vm772, %v2706, 0
        %v2713 = vsel %vm772, %v2708, 0
        %2715 = vmatpush.bf16.xpose.msra.mxu0 0
        %2716 = vmatpush.bf16.xpose.msra.mxu0 0
        %2717 = vmatpush.bf16.xpose.msra.mxu0 0
        %2718 = vmatpush.bf16.xpose.msra.mxu0 0
        %2719 = vmatpush.bf16.xpose.msra.mxu0 0
        %2720 = vmatpush.bf16.xpose.msra.mxu0 0
        %2721 = vmatpush.bf16.xpose.msra.mxu0 0
        %2722 = vmatpush.bf16.xpose.msra.mxu0 %v2713
        %2723 = vmatmul.bf16.gmra.mxu0 %v2710
        %v2724 = vpop.f32.mrf.mxu0
        %v2725 = vadd.f32 %v2631, %v2724
        %v2726 = vpop.f32.mrf.mxu0
        %2727 = vdwg.mxu0
        %2728 = vrot.lane.b32.xlu0 %v866, 104
        %v2729 = vpop.permute.xlu0 %2728
        %2730 = vrot.lane.b32.xlu0 %v866, 72
        %v2731 = vpop.permute.xlu0 %2730
        %v2733 = vsel %vm772, %v2729, 0
        %v2736 = vsel %vm772, %v2731, 0
        %2738 = vmatpush.bf16.xpose.msra.mxu0 0
        %2739 = vmatpush.bf16.xpose.msra.mxu0 0
        %2740 = vmatpush.bf16.xpose.msra.mxu0 0
        %2741 = vmatpush.bf16.xpose.msra.mxu0 0
        %2742 = vmatpush.bf16.xpose.msra.mxu0 0
        %2743 = vmatpush.bf16.xpose.msra.mxu0 0
        %2744 = vmatpush.bf16.xpose.msra.mxu0 0
        %2745 = vmatpush.bf16.xpose.msra.mxu0 %v2736
        %2746 = vmatmul.bf16.gmra.mxu0 %v2733
        %v2747 = vpop.f32.mrf.mxu0
        %v2748 = vadd.f32 %v2632, %v2747
        %v2749 = vpop.f32.mrf.mxu0
        %2750 = vdwg.mxu0
        %2751 = vrot.lane.b32.xlu0 %v890, 104
        %v2752 = vpop.permute.xlu0 %2751
        %2753 = vrot.lane.b32.xlu0 %v890, 72
        %v2754 = vpop.permute.xlu0 %2753
        %v2756 = vsel %vm772, %v2752, 0
        %v2759 = vsel %vm772, %v2754, 0
        %2761 = vmatpush.bf16.xpose.msra.mxu0 0
        %2762 = vmatpush.bf16.xpose.msra.mxu0 0
        %2763 = vmatpush.bf16.xpose.msra.mxu0 0
        %2764 = vmatpush.bf16.xpose.msra.mxu0 0
        %2765 = vmatpush.bf16.xpose.msra.mxu0 0
        %2766 = vmatpush.bf16.xpose.msra.mxu0 0
        %2767 = vmatpush.bf16.xpose.msra.mxu0 0
        %2768 = vmatpush.bf16.xpose.msra.mxu0 %v2759
        %2769 = vmatmul.bf16.gmra.mxu0 %v2756
        %v2770 = vpop.f32.mrf.mxu0
        %v2771 = vadd.f32 %v2633, %v2770
        %v2772 = vpop.f32.mrf.mxu0
        %2773 = vdwg.mxu0
        %2774 = vrot.lane.b32.xlu0 %v914, 104
        %v2775 = vpop.permute.xlu0 %2774
        %2776 = vrot.lane.b32.xlu0 %v914, 72
        %v2777 = vpop.permute.xlu0 %2776
        %v2779 = vsel %vm772, %v2775, 0
        %v2782 = vsel %vm772, %v2777, 0
        %2784 = vmatpush.bf16.xpose.msra.mxu0 0
        %2785 = vmatpush.bf16.xpose.msra.mxu0 0
        %2786 = vmatpush.bf16.xpose.msra.mxu0 0
        %2787 = vmatpush.bf16.xpose.msra.mxu0 0
        %2788 = vmatpush.bf16.xpose.msra.mxu0 0
        %2789 = vmatpush.bf16.xpose.msra.mxu0 0
        %2790 = vmatpush.bf16.xpose.msra.mxu0 0
        %2791 = vmatpush.bf16.xpose.msra.mxu0 %v2782
        %2792 = vmatmul.bf16.gmra.mxu0 %v2779
        %v2793 = vpop.f32.mrf.mxu0
        %v2794 = vadd.f32 %v2634, %v2793
        %v2795 = vpop.f32.mrf.mxu0
        %2796 = vdwg.mxu0
        %2797 = vrot.lane.b32.xlu0 %v938, 104
        %v2798 = vpop.permute.xlu0 %2797
        %2799 = vrot.lane.b32.xlu0 %v938, 72
        %v2800 = vpop.permute.xlu0 %2799
        %v2802 = vsel %vm772, %v2798, 0
        %v2805 = vsel %vm772, %v2800, 0
        %2807 = vmatpush.bf16.xpose.msra.mxu0 0
        %2808 = vmatpush.bf16.xpose.msra.mxu0 0
        %2809 = vmatpush.bf16.xpose.msra.mxu0 0
        %2810 = vmatpush.bf16.xpose.msra.mxu0 0
        %2811 = vmatpush.bf16.xpose.msra.mxu0 0
        %2812 = vmatpush.bf16.xpose.msra.mxu0 0
        %2813 = vmatpush.bf16.xpose.msra.mxu0 0
        %2814 = vmatpush.bf16.xpose.msra.mxu0 %v2805
        %2815 = vmatmul.bf16.gmra.mxu0 %v2802
        %v2816 = vpop.f32.mrf.mxu0
        %v2817 = vadd.f32 %v2635, %v2816
        %v2818 = vpop.f32.mrf.mxu0
        %2819 = vdwg.mxu0
        %2820 = vst.msk [vmem:[%s2627] sm:$0xff] %vm772, %v2656
        %2821 = vst.msk [vmem:[%s2627 + $0x8] sm:$0xff] %vm772, %v2679
        %2822 = vst.msk [vmem:[%s2627 + $0x10] sm:$0xff] %vm772, %v2702
        %2823 = vst.msk [vmem:[%s2627 + $0x18] sm:$0xff] %vm772, %v2725
        %2824 = vst.msk [vmem:[%s2627 + $0x20] sm:$0xff] %vm772, %v2748
        %2825 = vst.msk [vmem:[%s2627 + $0x28] sm:$0xff] %vm772, %v2771
        %2826 = vst.msk [vmem:[%s2627 + $0x30] sm:$0xff] %vm772, %v2794
        %2827 = vst.msk [vmem:[%s2627 + $0x38] sm:$0xff] %vm772, %v2817
        %v2828 = vsel %vm772, %v2656, -inf
        %2829 = vmax.xlane.f32.xlu0 %v2828
        %v2830 = vpop.xlane.xlu0 %2829
        %v2831 = vsel %vm772, %v2679, -inf
        %2832 = vmax.xlane.f32.xlu0 %v2831
        %v2833 = vpop.xlane.xlu0 %2832
        %v2834 = vsel %vm772, %v2702, -inf
        %2835 = vmax.xlane.f32.xlu0 %v2834
        %v2836 = vpop.xlane.xlu0 %2835
        %v2837 = vsel %vm772, %v2725, -inf
        %2838 = vmax.xlane.f32.xlu0 %v2837
        %v2839 = vpop.xlane.xlu0 %2838
        %v2840 = vsel %vm772, %v2748, -inf
        %2841 = vmax.xlane.f32.xlu0 %v2840
        %v2842 = vpop.xlane.xlu0 %2841
        %v2843 = vsel %vm772, %v2771, -inf
        %2844 = vmax.xlane.f32.xlu0 %v2843
        %v2845 = vpop.xlane.xlu0 %2844
        %v2846 = vsel %vm772, %v2794, -inf
        %2847 = vmax.xlane.f32.xlu0 %v2846
        %v2848 = vpop.xlane.xlu0 %2847
        %v2849 = vsel %vm772, %v2817, -inf
        %2850 = vmax.xlane.f32.xlu0 %v2849
        %v2851 = vpop.xlane.xlu0 %2850
        %v2852 = vsub.f32 %v2656, %v2830
        %v2853 = vsub.f32 %v2679, %v2833
        %v2854 = vsub.f32 %v2702, %v2836
        %v2855 = vsub.f32 %v2725, %v2839
        %v2856 = vsub.f32 %v2748, %v2842
        %v2857 = vsub.f32 %v2771, %v2845
        %v2858 = vsub.f32 %v2794, %v2848
        %v2859 = vsub.f32 %v2817, %v2851
        %v2860 = vmul.f32 %v2852, 1.442695
        %v2861 = vpow.pop %v2860
        %v2862 = vmul.f32 %v2853, 1.442695
        %v2863 = vpow.pop %v2862
        %v2864 = vmul.f32 %v2854, 1.442695
        %v2865 = vpow.pop %v2864
        %v2866 = vmul.f32 %v2855, 1.442695
        %v2867 = vpow.pop %v2866
        %v2868 = vmul.f32 %v2856, 1.442695
        %v2869 = vpow.pop %v2868
        %v2870 = vmul.f32 %v2857, 1.442695
        %v2871 = vpow.pop %v2870
        %v2872 = vmul.f32 %v2858, 1.442695
        %v2873 = vpow.pop %v2872
        %v2874 = vmul.f32 %v2859, 1.442695
        %v2875 = vpow.pop %v2874
        %v2876 = vsel %vm772, %v2861, 0.0
        %2877 = vadd.xlane.f32.xlu0 %v2876
        %v2878 = vpop.xlane.xlu0 %2877
        %v2879 = vsel %vm772, %v2863, 0.0
        %2880 = vadd.xlane.f32.xlu0 %v2879
        %v2881 = vpop.xlane.xlu0 %2880
        %v2882 = vsel %vm772, %v2865, 0.0
        %2883 = vadd.xlane.f32.xlu0 %v2882
        %v2884 = vpop.xlane.xlu0 %2883
        %v2885 = vsel %vm772, %v2867, 0.0
        %2886 = vadd.xlane.f32.xlu0 %v2885
        %v2887 = vpop.xlane.xlu0 %2886
        %v2888 = vsel %vm772, %v2869, 0.0
        %2889 = vadd.xlane.f32.xlu0 %v2888
        %v2890 = vpop.xlane.xlu0 %2889
        %v2891 = vsel %vm772, %v2871, 0.0
        %2892 = vadd.xlane.f32.xlu0 %v2891
        %v2893 = vpop.xlane.xlu0 %2892
        %v2894 = vsel %vm772, %v2873, 0.0
        %2895 = vadd.xlane.f32.xlu0 %v2894
        %v2896 = vpop.xlane.xlu0 %2895
        %v2897 = vsel %vm772, %v2875, 0.0
        %2898 = vadd.xlane.f32.xlu0 %v2897
        %v2899 = vpop.xlane.xlu0 %2898
        %v2900 = vrcp.pop %v2878
        %v2901 = vmul.f32 %v2878, %v2900
        %v2902 = vsub.f32 1.0, %v2901
        %v2903 = vmul.f32 %v2900, %v2902
        %v2904 = vadd.f32 %v2900, %v2903
        %vm2905 = vweird.f32 %v2878
        %vm2906 = vweird.f32 %v2900
        %vm2907 = vmor %vm2905, %vm2906
        %v2908 = vsel %vm2907, %v2900, %v2904
        %v2909 = vand.u32 2147483647, %v2878
        %vm2910 = vcmp.eq.f32.partialorder %v2909, 8.507059e+37
        %v2911 = vand.u32 %v2878, 2147483648
        %v2912 = vor.u32 1.1754944e-38, %v2911
        %v2913 = vsel %vm2910, %v2912, %v2908
        %v2914 = vmul.f32 %v2861, %v2913
        %v2915 = vrcp.pop %v2881
        %v2916 = vmul.f32 %v2881, %v2915
        %v2917 = vsub.f32 1.0, %v2916
        %v2918 = vmul.f32 %v2915, %v2917
        %v2919 = vadd.f32 %v2915, %v2918
        %vm2920 = vweird.f32 %v2881
        %vm2921 = vweird.f32 %v2915
        %vm2922 = vmor %vm2920, %vm2921
        %v2923 = vsel %vm2922, %v2915, %v2919
        %v2924 = vand.u32 2147483647, %v2881
        %vm2925 = vcmp.eq.f32.partialorder %v2924, 8.507059e+37
        %v2926 = vand.u32 %v2881, 2147483648
        %v2927 = vor.u32 1.1754944e-38, %v2926
        %v2928 = vsel %vm2925, %v2927, %v2923
        %v2929 = vmul.f32 %v2863, %v2928
        %v2930 = vrcp.pop %v2884
        %v2931 = vmul.f32 %v2884, %v2930
        %v2932 = vsub.f32 1.0, %v2931
        %v2933 = vmul.f32 %v2930, %v2932
        %v2934 = vadd.f32 %v2930, %v2933
        %vm2935 = vweird.f32 %v2884
        %vm2936 = vweird.f32 %v2930
        %vm2937 = vmor %vm2935, %vm2936
        %v2938 = vsel %vm2937, %v2930, %v2934
        %v2939 = vand.u32 2147483647, %v2884
        %vm2940 = vcmp.eq.f32.partialorder %v2939, 8.507059e+37
        %v2941 = vand.u32 %v2884, 2147483648
        %v2942 = vor.u32 1.1754944e-38, %v2941
        %v2943 = vsel %vm2940, %v2942, %v2938
        %v2944 = vmul.f32 %v2865, %v2943
        %v2945 = vrcp.pop %v2887
        %v2946 = vmul.f32 %v2887, %v2945
        %v2947 = vsub.f32 1.0, %v2946
        %v2948 = vmul.f32 %v2945, %v2947
        %v2949 = vadd.f32 %v2945, %v2948
        %vm2950 = vweird.f32 %v2887
        %vm2951 = vweird.f32 %v2945
        %vm2952 = vmor %vm2950, %vm2951
        %v2953 = vsel %vm2952, %v2945, %v2949
        %v2954 = vand.u32 2147483647, %v2887
        %vm2955 = vcmp.eq.f32.partialorder %v2954, 8.507059e+37
        %v2956 = vand.u32 %v2887, 2147483648
        %v2957 = vor.u32 1.1754944e-38, %v2956
        %v2958 = vsel %vm2955, %v2957, %v2953
        %v2959 = vmul.f32 %v2867, %v2958
        %v2960 = vrcp.pop %v2890
        %v2961 = vmul.f32 %v2890, %v2960
        %v2962 = vsub.f32 1.0, %v2961
        %v2963 = vmul.f32 %v2960, %v2962
        %v2964 = vadd.f32 %v2960, %v2963
        %vm2965 = vweird.f32 %v2890
        %vm2966 = vweird.f32 %v2960
        %vm2967 = vmor %vm2965, %vm2966
        %v2968 = vsel %vm2967, %v2960, %v2964
        %v2969 = vand.u32 2147483647, %v2890
        %vm2970 = vcmp.eq.f32.partialorder %v2969, 8.507059e+37
        %v2971 = vand.u32 %v2890, 2147483648
        %v2972 = vor.u32 1.1754944e-38, %v2971
        %v2973 = vsel %vm2970, %v2972, %v2968
        %v2974 = vmul.f32 %v2869, %v2973
        %v2975 = vrcp.pop %v2893
        %v2976 = vmul.f32 %v2893, %v2975
        %v2977 = vsub.f32 1.0, %v2976
        %v2978 = vmul.f32 %v2975, %v2977
        %v2979 = vadd.f32 %v2975, %v2978
        %vm2980 = vweird.f32 %v2893
        %vm2981 = vweird.f32 %v2975
        %vm2982 = vmor %vm2980, %vm2981
        %v2983 = vsel %vm2982, %v2975, %v2979
        %v2984 = vand.u32 2147483647, %v2893
        %vm2985 = vcmp.eq.f32.partialorder %v2984, 8.507059e+37
        %v2986 = vand.u32 %v2893, 2147483648
        %v2987 = vor.u32 1.1754944e-38, %v2986
        %v2988 = vsel %vm2985, %v2987, %v2983
        %v2989 = vmul.f32 %v2871, %v2988
        %v2990 = vrcp.pop %v2896
        %v2991 = vmul.f32 %v2896, %v2990
        %v2992 = vsub.f32 1.0, %v2991
        %v2993 = vmul.f32 %v2990, %v2992
        %v2994 = vadd.f32 %v2990, %v2993
        %vm2995 = vweird.f32 %v2896
        %vm2996 = vweird.f32 %v2990
        %vm2997 = vmor %vm2995, %vm2996
        %v2998 = vsel %vm2997, %v2990, %v2994
        %v2999 = vand.u32 2147483647, %v2896
        %vm3000 = vcmp.eq.f32.partialorder %v2999, 8.507059e+37
        %v3001 = vand.u32 %v2896, 2147483648
        %v3002 = vor.u32 1.1754944e-38, %v3001
        %v3003 = vsel %vm3000, %v3002, %v2998
        %v3004 = vmul.f32 %v2873, %v3003
        %v3005 = vrcp.pop %v2899
        %v3006 = vmul.f32 %v2899, %v3005
        %v3007 = vsub.f32 1.0, %v3006
        %v3008 = vmul.f32 %v3005, %v3007
        %v3009 = vadd.f32 %v3005, %v3008
        %vm3010 = vweird.f32 %v2899
        %vm3011 = vweird.f32 %v3005
        %vm3012 = vmor %vm3010, %vm3011
        %v3013 = vsel %vm3012, %v3005, %v3009
        %v3014 = vand.u32 2147483647, %v2899
        %vm3015 = vcmp.eq.f32.partialorder %v3014, 8.507059e+37
        %v3016 = vand.u32 %v2899, 2147483648
        %v3017 = vor.u32 1.1754944e-38, %v3016
        %v3018 = vsel %vm3015, %v3017, %v3013
        %v3019 = vmul.f32 %v2875, %v3018
        %v3020 = vpack.c.bf16 %v2914, %v2914
        %v3021 = vpack.c.bf16 %v2929, %v2929
        %v3022 = vpack.c.bf16 %v2944, %v2944
        %v3023 = vpack.c.bf16 %v2959, %v2959
        %v3024 = vpack.c.bf16 %v2974, %v2974
        %v3025 = vpack.c.bf16 %v2989, %v2989
        %v3026 = vpack.c.bf16 %v3004, %v3004
        %v3027 = vpack.c.bf16 %v3019, %v3019
        %3028 = vrot.lane.b32.xlu0 %v769, 40
        %v3029 = vpop.permute.xlu0 %3028
        %v3031 = vsel %vm772, %v3020, 0
        %v3034 = vsel %vm1173, %v3029, 0
        %3036 = vmatpush.bf16.msra.mxu0 0
        %3037 = vmatpush.bf16.msra.mxu0 0
        %3038 = vmatpush.bf16.msra.mxu0 0
        %3039 = vmatpush.bf16.msra.mxu0 0
        %3040 = vmatpush.bf16.msra.mxu0 0
        %3041 = vmatpush.bf16.msra.mxu0 0
        %3042 = vmatpush.bf16.msra.mxu0 0
        %3043 = vmatpush.bf16.msra.mxu0 %v3034
        %3044 = vmatmul.bf16.gmra.mxu0 %v3031
        %v3045 = vpop.f32.mrf.mxu0
        %v3046 = vadd.f32 0.0, %v3045
        %v3047 = vpop.f32.mrf.mxu0
        %3048 = vdwg.mxu0
        %3049 = vrot.lane.b32.xlu0 %v794, 40
        %v3050 = vpop.permute.xlu0 %3049
        %v3052 = vsel %vm772, %v3021, 0
        %v3055 = vsel %vm1173, %v3050, 0
        %3057 = vmatpush.bf16.msra.mxu0 0
        %3058 = vmatpush.bf16.msra.mxu0 0
        %3059 = vmatpush.bf16.msra.mxu0 0
        %3060 = vmatpush.bf16.msra.mxu0 0
        %3061 = vmatpush.bf16.msra.mxu0 0
        %3062 = vmatpush.bf16.msra.mxu0 0
        %3063 = vmatpush.bf16.msra.mxu0 0
        %3064 = vmatpush.bf16.msra.mxu0 %v3055
        %3065 = vmatmul.bf16.gmra.mxu0 %v3052
        %v3066 = vpop.f32.mrf.mxu0
        %v3067 = vadd.f32 0.0, %v3066
        %v3068 = vpop.f32.mrf.mxu0
        %3069 = vdwg.mxu0
        %3070 = vrot.lane.b32.xlu0 %v818, 40
        %v3071 = vpop.permute.xlu0 %3070
        %v3073 = vsel %vm772, %v3022, 0
        %v3076 = vsel %vm1173, %v3071, 0
        %3078 = vmatpush.bf16.msra.mxu0 0
        %3079 = vmatpush.bf16.msra.mxu0 0
        %3080 = vmatpush.bf16.msra.mxu0 0
        %3081 = vmatpush.bf16.msra.mxu0 0
        %3082 = vmatpush.bf16.msra.mxu0 0
        %3083 = vmatpush.bf16.msra.mxu0 0
        %3084 = vmatpush.bf16.msra.mxu0 0
        %3085 = vmatpush.bf16.msra.mxu0 %v3076
        %3086 = vmatmul.bf16.gmra.mxu0 %v3073
        %v3087 = vpop.f32.mrf.mxu0
        %v3088 = vadd.f32 0.0, %v3087
        %v3089 = vpop.f32.mrf.mxu0
        %3090 = vdwg.mxu0
        %3091 = vrot.lane.b32.xlu0 %v842, 40
        %v3092 = vpop.permute.xlu0 %3091
        %v3094 = vsel %vm772, %v3023, 0
        %v3097 = vsel %vm1173, %v3092, 0
        %3099 = vmatpush.bf16.msra.mxu0 0
        %3100 = vmatpush.bf16.msra.mxu0 0
        %3101 = vmatpush.bf16.msra.mxu0 0
        %3102 = vmatpush.bf16.msra.mxu0 0
        %3103 = vmatpush.bf16.msra.mxu0 0
        %3104 = vmatpush.bf16.msra.mxu0 0
        %3105 = vmatpush.bf16.msra.mxu0 0
        %3106 = vmatpush.bf16.msra.mxu0 %v3097
        %3107 = vmatmul.bf16.gmra.mxu0 %v3094
        %v3108 = vpop.f32.mrf.mxu0
        %v3109 = vadd.f32 0.0, %v3108
        %v3110 = vpop.f32.mrf.mxu0
        %3111 = vdwg.mxu0
        %3112 = vrot.lane.b32.xlu0 %v866, 40
        %v3113 = vpop.permute.xlu0 %3112
        %v3115 = vsel %vm772, %v3024, 0
        %v3118 = vsel %vm1173, %v3113, 0
        %3120 = vmatpush.bf16.msra.mxu0 0
        %3121 = vmatpush.bf16.msra.mxu0 0
        %3122 = vmatpush.bf16.msra.mxu0 0
        %3123 = vmatpush.bf16.msra.mxu0 0
        %3124 = vmatpush.bf16.msra.mxu0 0
        %3125 = vmatpush.bf16.msra.mxu0 0
        %3126 = vmatpush.bf16.msra.mxu0 0
        %3127 = vmatpush.bf16.msra.mxu0 %v3118
        %3128 = vmatmul.bf16.gmra.mxu0 %v3115
        %v3129 = vpop.f32.mrf.mxu0
        %v3130 = vadd.f32 0.0, %v3129
        %v3131 = vpop.f32.mrf.mxu0
        %3132 = vdwg.mxu0
        %3133 = vrot.lane.b32.xlu0 %v890, 40
        %v3134 = vpop.permute.xlu0 %3133
        %v3136 = vsel %vm772, %v3025, 0
        %v3139 = vsel %vm1173, %v3134, 0
        %3141 = vmatpush.bf16.msra.mxu0 0
        %3142 = vmatpush.bf16.msra.mxu0 0
        %3143 = vmatpush.bf16.msra.mxu0 0
        %3144 = vmatpush.bf16.msra.mxu0 0
        %3145 = vmatpush.bf16.msra.mxu0 0
        %3146 = vmatpush.bf16.msra.mxu0 0
        %3147 = vmatpush.bf16.msra.mxu0 0
        %3148 = vmatpush.bf16.msra.mxu0 %v3139
        %3149 = vmatmul.bf16.gmra.mxu0 %v3136
        %v3150 = vpop.f32.mrf.mxu0
        %v3151 = vadd.f32 0.0, %v3150
        %v3152 = vpop.f32.mrf.mxu0
        %3153 = vdwg.mxu0
        %3154 = vrot.lane.b32.xlu0 %v914, 40
        %v3155 = vpop.permute.xlu0 %3154
        %v3157 = vsel %vm772, %v3026, 0
        %v3160 = vsel %vm1173, %v3155, 0
        %3162 = vmatpush.bf16.msra.mxu0 0
        %3163 = vmatpush.bf16.msra.mxu0 0
        %3164 = vmatpush.bf16.msra.mxu0 0
        %3165 = vmatpush.bf16.msra.mxu0 0
        %3166 = vmatpush.bf16.msra.mxu0 0
        %3167 = vmatpush.bf16.msra.mxu0 0
        %3168 = vmatpush.bf16.msra.mxu0 0
        %3169 = vmatpush.bf16.msra.mxu0 %v3160
        %3170 = vmatmul.bf16.gmra.mxu0 %v3157
        %v3171 = vpop.f32.mrf.mxu0
        %v3172 = vadd.f32 0.0, %v3171
        %v3173 = vpop.f32.mrf.mxu0
        %3174 = vdwg.mxu0
        %3175 = vrot.lane.b32.xlu0 %v938, 40
        %v3176 = vpop.permute.xlu0 %3175
        %v3178 = vsel %vm772, %v3027, 0
        %v3181 = vsel %vm1173, %v3176, 0
        %3183 = vmatpush.bf16.msra.mxu0 0
        %3184 = vmatpush.bf16.msra.mxu0 0
        %3185 = vmatpush.bf16.msra.mxu0 0
        %3186 = vmatpush.bf16.msra.mxu0 0
        %3187 = vmatpush.bf16.msra.mxu0 0
        %3188 = vmatpush.bf16.msra.mxu0 0
        %3189 = vmatpush.bf16.msra.mxu0 0
        %3190 = vmatpush.bf16.msra.mxu0 %v3181
        %3191 = vmatmul.bf16.gmra.mxu0 %v3178
        %v3192 = vpop.f32.mrf.mxu0
        %v3193 = vadd.f32 0.0, %v3192
        %v3194 = vpop.f32.mrf.mxu0
        %3195 = vdwg.mxu0
        %v3196 = vpack.c.bf16 %v3067, %v3046
        %v3197 = vpack.c.bf16 %v3109, %v3088
        %v3198 = vpack.c.bf16 %v3151, %v3130
        %v3199 = vpack.c.bf16 %v3193, %v3172
        %v3201 = vsel %vm772, %v3196, 0
        %v3204 = vsel %vm772, %v3197, 0
        %v3207 = vsel %vm772, %v3198, 0
        %v3210 = vsel %vm772, %v3199, 0
        %v3213 = vsel %vm1173, %v758, 0
        %3215 = vmatpush.bf16.msra.mxu0 0
        %3216 = vmatpush.bf16.msra.mxu0 0
        %3217 = vmatpush.bf16.msra.mxu0 0
        %3218 = vmatpush.bf16.msra.mxu0 0
        %3219 = vmatpush.bf16.msra.mxu0 0
        %3220 = vmatpush.bf16.msra.mxu0 0
        %3221 = vmatpush.bf16.msra.mxu0 0
        %3222 = vmatpush.bf16.msra.mxu0 %v3213
        %3223 = vmatmul.bf16.gmra.mxu0 %v3201
        %v3224 = vpop.f32.mrf.mxu0
        %v3225 = vadd.f32 0.0, %v3224
        %v3226 = vpop.f32.mrf.mxu0
        %v3227 = vadd.f32 0.0, %v3226
        %3228 = vmatmul.bf16.gmra.mxu0 %v3204
        %v3229 = vpop.f32.mrf.mxu0
        %v3230 = vadd.f32 0.0, %v3229
        %v3231 = vpop.f32.mrf.mxu0
        %v3232 = vadd.f32 0.0, %v3231
        %3233 = vmatmul.bf16.gmra.mxu0 %v3207
        %v3234 = vpop.f32.mrf.mxu0
        %v3235 = vadd.f32 0.0, %v3234
        %v3236 = vpop.f32.mrf.mxu0
        %v3237 = vadd.f32 0.0, %v3236
        %3238 = vmatmul.bf16.gmra.mxu0 %v3210
        %v3239 = vpop.f32.mrf.mxu0
        %v3240 = vadd.f32 0.0, %v3239
        %v3241 = vpop.f32.mrf.mxu0
        %v3242 = vadd.f32 0.0, %v3241
        %3243 = vdwg.mxu0
        %v3244 = vadd.f32 %v2619, %v3225
        %v3245 = vadd.f32 %v2620, %v3227
        %v3246 = vadd.f32 %v2621, %v3230
        %v3247 = vadd.f32 %v2622, %v3232
        %v3248 = vadd.f32 %v2623, %v3235
        %v3249 = vadd.f32 %v2624, %v3237
        %v3250 = vadd.f32 %v2625, %v3240
        %v3251 = vadd.f32 %v2626, %v3242
        // Predicated region
        $region92: #{mgtst_forward.6} parent=67 // pred_check
          %p3252 = pneg %p599
        $region93: #{mgtst_forward.6} parent=67 // pred_check_branch
          %3254 = sbr.rel (%p3252) target = $region95
        $region94: #{mgtst_forward.6} parent=67 // pred_region
          %3255 = vst.msk [vmem:[#allocation4] sm:$0xff] %vm772, %v1054
          %3256 = vst.msk [vmem:[#allocation4 + $0x8] sm:$0xff] %vm772, %v1628
          %3257 = vst.msk [vmem:[#allocation4 + $0x10] sm:$0xff] %vm772, %v2289
          %3258 = vst.msk [vmem:[#allocation4 + $0x18] sm:$0xff] %vm772, %v2914
          %3259 = vst.msk [vmem:[#allocation4 + $0x20] sm:$0xff] %vm772, %v1069
          %3260 = vst.msk [vmem:[#allocation4 + $0x28] sm:$0xff] %vm772, %v1643
          %3261 = vst.msk [vmem:[#allocation4 + $0x30] sm:$0xff] %vm772, %v2304
          %3262 = vst.msk [vmem:[#allocation4 + $0x38] sm:$0xff] %vm772, %v2929
          %3263 = vst.msk [vmem:[#allocation4 + $0x40] sm:$0xff] %vm772, %v1084
          %3264 = vst.msk [vmem:[#allocation4 + $0x48] sm:$0xff] %vm772, %v1658
          %3265 = vst.msk [vmem:[#allocation4 + $0x50] sm:$0xff] %vm772, %v2319
          %3266 = vst.msk [vmem:[#allocation4 + $0x58] sm:$0xff] %vm772, %v2944
          %3267 = vst.msk [vmem:[#allocation4 + $0x60] sm:$0xff] %vm772, %v1099
          %3268 = vst.msk [vmem:[#allocation4 + $0x68] sm:$0xff] %vm772, %v1673
          %3269 = vst.msk [vmem:[#allocation4 + $0x70] sm:$0xff] %vm772, %v2334
          %3270 = vst.msk [vmem:[#allocation4 + $0x78] sm:$0xff] %vm772, %v2959
          %3271 = vst.msk [vmem:[#allocation4 + $0x80] sm:$0xff] %vm772, %v1114
          %3272 = vst.msk [vmem:[#allocation4 + $0x88] sm:$0xff] %vm772, %v1688
          %3273 = vst.msk [vmem:[#allocation4 + $0x90] sm:$0xff] %vm772, %v2349
          %3274 = vst.msk [vmem:[#allocation4 + $0x98] sm:$0xff] %vm772, %v2974
          %3275 = vst.msk [vmem:[#allocation4 + $0xa0] sm:$0xff] %vm772, %v1129
          %3276 = vst.msk [vmem:[#allocation4 + $0xa8] sm:$0xff] %vm772, %v1703
          %3277 = vst.msk [vmem:[#allocation4 + $0xb0] sm:$0xff] %vm772, %v2364
          %3278 = vst.msk [vmem:[#allocation4 + $0xb8] sm:$0xff] %vm772, %v2989
          %3279 = vst.msk [vmem:[#allocation4 + $0xc0] sm:$0xff] %vm772, %v1144
          %3280 = vst.msk [vmem:[#allocation4 + $0xc8] sm:$0xff] %vm772, %v1718
          %3281 = vst.msk [vmem:[#allocation4 + $0xd0] sm:$0xff] %vm772, %v2379
          %3282 = vst.msk [vmem:[#allocation4 + $0xd8] sm:$0xff] %vm772, %v3004
          %3283 = vst.msk [vmem:[#allocation4 + $0xe0] sm:$0xff] %vm772, %v1159
          %3284 = vst.msk [vmem:[#allocation4 + $0xe8] sm:$0xff] %vm772, %v1733
          %3285 = vst.msk [vmem:[#allocation4 + $0xf0] sm:$0xff] %vm772, %v2394
          %3286 = vst.msk [vmem:[#allocation4 + $0xf8] sm:$0xff] %vm772, %v3019
        $region95: #{mgtst_forward.6} parent=67 // pred_fallthru
          _
        %v3287 = vld [vmem:[%s569] sm:$0x1]
        %v3289 = vperm.slane %v3287, 0
        %v3291 = vadd.f32 %v3244, %v3289
        %v3292 = vadd.f32 %v3245, %v3289
        %v3293 = vadd.f32 %v3246, %v3289
        %v3294 = vadd.f32 %v3247, %v3289
        %v3295 = vadd.f32 %v3248, %v3289
        %v3296 = vadd.f32 %v3249, %v3289
        %v3297 = vadd.f32 %v3250, %v3289
        %v3298 = vadd.f32 %v3251, %v3289
        %v3299 = vadd.f32 %v673, %v3291
        %v3300 = vadd.f32 %v674, %v3292
        %v3301 = vadd.f32 %v675, %v3293
        %v3302 = vadd.f32 %v676, %v3294
        %v3303 = vadd.f32 %v677, %v3295
        %v3304 = vadd.f32 %v678, %v3296
        %v3305 = vadd.f32 %v679, %v3297
        %v3306 = vadd.f32 %v680, %v3298
        %v3307 = vsel %vm705, %v3299, 0.0
        %v3308 = vsel %vm705, %v3300, 0.0
        %v3309 = vadd.f32 %v3307, %v3308
        %v3310 = vsel %vm705, %v3301, 0.0
        %v3311 = vadd.f32 %v3309, %v3310
        %v3312 = vsel %vm705, %v3302, 0.0
        %v3313 = vadd.f32 %v3311, %v3312
        %v3314 = vsel %vm705, %v3303, 0.0
        %v3315 = vadd.f32 %v3313, %v3314
        %v3316 = vsel %vm705, %v3304, 0.0
        %v3317 = vadd.f32 %v3315, %v3316
        %v3318 = vsel %vm705, %v3305, 0.0
        %v3319 = vadd.f32 %v3317, %v3318
        %v3320 = vsel %vm705, %v3306, 0.0
        %v3321 = vadd.f32 %v3319, %v3320
        %v3322 = vrot.slane %v3321, 4
        %v3323 = vadd.f32 %v3321, %v3322
        %v3324 = vrot.slane %v3323, 2
        %v3325 = vadd.f32 %v3323, %v3324
        %v3326 = vrot.slane %v3325, 1
        %v3327 = vadd.f32 %v3325, %v3326
        %v3328 = vrcp.pop 64.0
        %v3329 = vmul.f32 64.0, %v3328
        %v3330 = vsub.f32 1.0, %v3329
        %v3331 = vmul.f32 %v3328, %v3330
        %v3332 = vadd.f32 %v3328, %v3331
        %vm3333 = vweird.f32 %v3328
        %v3334 = vsel %vm3333, %v3328, %v3332
        %v3335 = vmul.f32 %v3327, %v3334
        %v3336 = vsub.f32 %v3299, %v3335
        %v3337 = vsub.f32 %v3300, %v3335
        %v3338 = vsub.f32 %v3301, %v3335
        %v3339 = vsub.f32 %v3302, %v3335
        %v3340 = vsub.f32 %v3303, %v3335
        %v3341 = vsub.f32 %v3304, %v3335
        %v3342 = vsub.f32 %v3305, %v3335
        %v3343 = vsub.f32 %v3306, %v3335
        %v3344 = vmul.f32 %v3336, %v3336
        %v3345 = vmul.f32 %v3337, %v3337
        %v3346 = vmul.f32 %v3338, %v3338
        %v3347 = vmul.f32 %v3339, %v3339
        %v3348 = vmul.f32 %v3340, %v3340
        %v3349 = vmul.f32 %v3341, %v3341
        %v3350 = vmul.f32 %v3342, %v3342
        %v3351 = vmul.f32 %v3343, %v3343
        %v3352 = vsel %vm705, %v3344, 0.0
        %v3353 = vsel %vm705, %v3345, 0.0
        %v3354 = vadd.f32 %v3352, %v3353
        %v3355 = vsel %vm705, %v3346, 0.0
        %v3356 = vadd.f32 %v3354, %v3355
        %v3357 = vsel %vm705, %v3347, 0.0
        %v3358 = vadd.f32 %v3356, %v3357
        %v3359 = vsel %vm705, %v3348, 0.0
        %v3360 = vadd.f32 %v3358, %v3359
        %v3361 = vsel %vm705, %v3349, 0.0
        %v3362 = vadd.f32 %v3360, %v3361
        %v3363 = vsel %vm705, %v3350, 0.0
        %v3364 = vadd.f32 %v3362, %v3363
        %v3365 = vsel %vm705, %v3351, 0.0
        %v3366 = vadd.f32 %v3364, %v3365
        %v3367 = vrot.slane %v3366, 4
        %v3368 = vadd.f32 %v3366, %v3367
        %v3369 = vrot.slane %v3368, 2
        %v3370 = vadd.f32 %v3368, %v3369
        %v3371 = vrot.slane %v3370, 1
        %v3372 = vadd.f32 %v3370, %v3371
        %v3373 = vmul.f32 %v3372, %v3334
        %v3374 = vadd.f32 %v3373, 1e-05
        %v3375 = vrsqrt.pop %v3374
        %v3376 = vmul.f32 %v3375, %v3374
        %v3377 = vmul.f32 %v3376, %v3375
        %v3378 = vmul.f32 0.5, %v3377
        %v3379 = vsub.f32 1.5, %v3378
        %v3380 = vmul.f32 %v3375, %v3379
        %vm3381 = vweird.f32 %v3374
        %vm3382 = vweird.f32 %v3375
        %vm3383 = vmor %vm3381, %vm3382
        %v3384 = vsel %vm3383, %v3375, %v3380
        %v3385 = vmul.f32 %v3336, %v3384
        %v3386 = vmul.f32 %v3337, %v3384
        %v3387 = vmul.f32 %v3338, %v3384
        %v3388 = vmul.f32 %v3339, %v3384
        %v3389 = vmul.f32 %v3340, %v3384
        %v3390 = vmul.f32 %v3341, %v3384
        %v3391 = vmul.f32 %v3342, %v3384
        %v3392 = vmul.f32 %v3343, %v3384
        %v3393 = vld [vmem:[%s572] sm:$0x1]
        %v3395 = vperm.slane %v3393, 0
        %v3397 = vmul.f32 %v3385, %v3395
        %v3398 = vmul.f32 %v3386, %v3395
        %v3399 = vmul.f32 %v3387, %v3395
        %v3400 = vmul.f32 %v3388, %v3395
        %v3401 = vmul.f32 %v3389, %v3395
        %v3402 = vmul.f32 %v3390, %v3395
        %v3403 = vmul.f32 %v3391, %v3395
        %v3404 = vmul.f32 %v3392, %v3395
        %v3405 = vld [vmem:[%s575] sm:$0x1]
        %v3407 = vperm.slane %v3405, 0
        %v3409 = vadd.f32 %v3397, %v3407
        %v3410 = vadd.f32 %v3398, %v3407
        %v3411 = vadd.f32 %v3399, %v3407
        %v3412 = vadd.f32 %v3400, %v3407
        %v3413 = vadd.f32 %v3401, %v3407
        %v3414 = vadd.f32 %v3402, %v3407
        %v3415 = vadd.f32 %v3403, %v3407
        %v3416 = vadd.f32 %v3404, %v3407
        %v3417 = vpack.c.bf16 %v3410, %v3409
        %v3418 = vpack.c.bf16 %v3412, %v3411
        %v3419 = vpack.c.bf16 %v3414, %v3413
        %v3420 = vpack.c.bf16 %v3416, %v3415
        %v3421 = vld [vmem:[%s580] sm:$0xf]
        %v3422 = vld [vmem:[%s580 + $0x4] sm:$0xf]
        %v3423 = vld [vmem:[%s580 + $0x8] sm:$0xf]
        %v3424 = vld [vmem:[%s580 + $0xc] sm:$0xf]
        %v3425 = vld [vmem:[%s583] sm:$0x1]
        %v3427 = vperm.slane %v3425, 0
        %v3433 = vunpack.c.l.b16 %v3421
        %v3434 = vunpack.c.l.b16 %v3422
        %v3435 = vunpack.c.l.b16 %v3423
        %v3436 = vunpack.c.l.b16 %v3424
        %v3437 = vpack.c.b16 %v3434, %v3433
        %v3438 = vpack.c.b16 %v3436, %v3435
        %v3442 = vsel %vm705, %v3417, 0
        %v3445 = vsel %vm705, %v3418, 0
        %v3448 = vsel %vm705, %v3419, 0
        %v3451 = vsel %vm705, %v3420, 0
        %3453 = vmatpush.bf16.msra.mxu0 0
        %3454 = vmatpush.bf16.msra.mxu0 0
        %3455 = vmatpush.bf16.msra.mxu0 0
        %3456 = vmatpush.bf16.msra.mxu0 0
        %3457 = vmatpush.bf16.msra.mxu0 0
        %3458 = vmatpush.bf16.msra.mxu0 0
        %3459 = vmatpush.bf16.msra.mxu0 %v3438
        %3460 = vmatpush.bf16.msra.mxu0 %v3437
        %3461 = vmatmul.bf16.gmra.mxu0 %v3442
        %v3462 = vpop.f32.mrf.mxu0
        %v3463 = vadd.f32 %v3427, %v3462
        %v3464 = vpop.f32.mrf.mxu0
        %v3465 = vadd.f32 %v3427, %v3464
        %3466 = vmatmul.bf16.gmra.mxu0 %v3445
        %v3467 = vpop.f32.mrf.mxu0
        %v3468 = vadd.f32 %v3427, %v3467
        %v3469 = vpop.f32.mrf.mxu0
        %v3470 = vadd.f32 %v3427, %v3469
        %3471 = vmatmul.bf16.gmra.mxu0 %v3448
        %v3472 = vpop.f32.mrf.mxu0
        %v3473 = vadd.f32 %v3427, %v3472
        %v3474 = vpop.f32.mrf.mxu0
        %v3475 = vadd.f32 %v3427, %v3474
        %3476 = vmatmul.bf16.gmra.mxu0 %v3451
        %v3477 = vpop.f32.mrf.mxu0
        %v3478 = vadd.f32 %v3427, %v3477
        %v3479 = vpop.f32.mrf.mxu0
        %v3480 = vadd.f32 %v3427, %v3479
        %3481 = vdwg.mxu0
        %v3482 = vmul.f32 %v3463, %v3463
        %v3483 = vmul.f32 %v3465, %v3465
        %v3484 = vmul.f32 %v3468, %v3468
        %v3485 = vmul.f32 %v3470, %v3470
        %v3486 = vmul.f32 %v3473, %v3473
        %v3487 = vmul.f32 %v3475, %v3475
        %v3488 = vmul.f32 %v3478, %v3478
        %v3489 = vmul.f32 %v3480, %v3480
        %v3490 = vmul.f32 %v3463, %v3482
        %v3491 = vmul.f32 %v3465, %v3483
        %v3492 = vmul.f32 %v3468, %v3484
        %v3493 = vmul.f32 %v3470, %v3485
        %v3494 = vmul.f32 %v3473, %v3486
        %v3495 = vmul.f32 %v3475, %v3487
        %v3496 = vmul.f32 %v3478, %v3488
        %v3497 = vmul.f32 %v3480, %v3489
        %v3498 = vmul.f32 %v3490, 0.044715
        %v3499 = vmul.f32 %v3491, 0.044715
        %v3500 = vmul.f32 %v3492, 0.044715
        %v3501 = vmul.f32 %v3493, 0.044715
        %v3502 = vmul.f32 %v3494, 0.044715
        %v3503 = vmul.f32 %v3495, 0.044715
        %v3504 = vmul.f32 %v3496, 0.044715
        %v3505 = vmul.f32 %v3497, 0.044715
        %v3506 = vadd.f32 %v3463, %v3498
        %v3507 = vadd.f32 %v3465, %v3499
        %v3508 = vadd.f32 %v3468, %v3500
        %v3509 = vadd.f32 %v3470, %v3501
        %v3510 = vadd.f32 %v3473, %v3502
        %v3511 = vadd.f32 %v3475, %v3503
        %v3512 = vadd.f32 %v3478, %v3504
        %v3513 = vadd.f32 %v3480, %v3505
        %v3514 = vmul.f32 %v3506, 0.7978846
        %v3515 = vmul.f32 %v3507, 0.7978846
        %v3516 = vmul.f32 %v3508, 0.7978846
        %v3517 = vmul.f32 %v3509, 0.7978846
        %v3518 = vmul.f32 %v3510, 0.7978846
        %v3519 = vmul.f32 %v3511, 0.7978846
        %v3520 = vmul.f32 %v3512, 0.7978846
        %v3521 = vmul.f32 %v3513, 0.7978846
        %v3522 = vtanh.pop %v3514
        %v3523 = vtanh.pop %v3515
        %v3524 = vtanh.pop %v3516
        %v3525 = vtanh.pop %v3517
        %v3526 = vtanh.pop %v3518
        %v3527 = vtanh.pop %v3519
        %v3528 = vtanh.pop %v3520
        %v3529 = vtanh.pop %v3521
        %v3530 = vadd.f32 %v3522, 1.0
        %v3531 = vadd.f32 %v3523, 1.0
        %v3532 = vadd.f32 %v3524, 1.0
        %v3533 = vadd.f32 %v3525, 1.0
        %v3534 = vadd.f32 %v3526, 1.0
        %v3535 = vadd.f32 %v3527, 1.0
        %v3536 = vadd.f32 %v3528, 1.0
        %v3537 = vadd.f32 %v3529, 1.0
        %v3538 = vmul.f32 %v3530, 0.5
        %v3539 = vmul.f32 %v3531, 0.5
        %v3540 = vmul.f32 %v3532, 0.5
        %v3541 = vmul.f32 %v3533, 0.5
        %v3542 = vmul.f32 %v3534, 0.5
        %v3543 = vmul.f32 %v3535, 0.5
        %v3544 = vmul.f32 %v3536, 0.5
        %v3545 = vmul.f32 %v3537, 0.5
        %v3546 = vmul.f32 %v3463, %v3538
        %v3547 = vmul.f32 %v3465, %v3539
        %v3548 = vmul.f32 %v3468, %v3540
        %v3549 = vmul.f32 %v3470, %v3541
        %v3550 = vmul.f32 %v3473, %v3542
        %v3551 = vmul.f32 %v3475, %v3543
        %v3552 = vmul.f32 %v3478, %v3544
        %v3553 = vmul.f32 %v3480, %v3545
        %v3554 = vpack.c.bf16 %v3547, %v3546
        %v3555 = vpack.c.bf16 %v3549, %v3548
        %v3556 = vpack.c.bf16 %v3551, %v3550
        %v3557 = vpack.c.bf16 %v3553, %v3552
        %v3558 = vld [vmem:[%s588] sm:$0xf]
        %v3559 = vld [vmem:[%s588 + $0x4] sm:$0xf]
        %v3560 = vld [vmem:[%s588 + $0x8] sm:$0xf]
        %v3561 = vld [vmem:[%s588 + $0xc] sm:$0xf]
        %v3562 = vld [vmem:[%s588 + $0x10] sm:$0xf]
        %v3563 = vld [vmem:[%s588 + $0x14] sm:$0xf]
        %v3564 = vld [vmem:[%s588 + $0x18] sm:$0xf]
        %v3565 = vld [vmem:[%s588 + $0x1c] sm:$0xf]
        %v3566 = vld [vmem:[%s591] sm:$0x1]
        %v3568 = vperm.slane %v3566, 0
        %v3578 = vunpack.c.l.b16 %v3558
        %v3579 = vunpack.c.l.b16 %v3559
        %v3580 = vunpack.c.l.b16 %v3560
        %v3581 = vunpack.c.l.b16 %v3561
        %v3582 = vunpack.c.l.b16 %v3562
        %v3583 = vunpack.c.l.b16 %v3563
        %v3584 = vunpack.c.l.b16 %v3564
        %v3585 = vunpack.c.l.b16 %v3565
        %v3586 = vpack.c.b16 %v3579, %v3578
        %v3587 = vpack.c.b16 %v3581, %v3580
        %v3588 = vpack.c.b16 %v3583, %v3582
        %v3589 = vpack.c.b16 %v3585, %v3584
        %vm3594 = vcmask 523264
        %v3596 = vsel %vm3594, %v3554, 0
        %v3599 = vsel %vm3594, %v3555, 0
        %v3602 = vsel %vm3594, %v3556, 0
        %v3605 = vsel %vm3594, %v3557, 0
        %3607 = vmatpush.bf16.msra.mxu0 0
        %3608 = vmatpush.bf16.msra.mxu0 0
        %3609 = vmatpush.bf16.msra.mxu0 0
        %3610 = vmatpush.bf16.msra.mxu0 0
        %3611 = vmatpush.bf16.msra.mxu0 %v3589
        %3612 = vmatpush.bf16.msra.mxu0 %v3588
        %3613 = vmatpush.bf16.msra.mxu0 %v3587
        %3614 = vmatpush.bf16.msra.mxu0 %v3586
        %3615 = vmatmul.bf16.gmra.mxu0 %v3596
        %v3616 = vpop.f32.mrf.mxu0
        %v3617 = vadd.f32 %v3568, %v3616
        %v3618 = vpop.f32.mrf.mxu0
        %v3619 = vadd.f32 %v3568, %v3618
        %3620 = vmatmul.bf16.gmra.mxu0 %v3599
        %v3621 = vpop.f32.mrf.mxu0
        %v3622 = vadd.f32 %v3568, %v3621
        %v3623 = vpop.f32.mrf.mxu0
        %v3624 = vadd.f32 %v3568, %v3623
        %3625 = vmatmul.bf16.gmra.mxu0 %v3602
        %v3626 = vpop.f32.mrf.mxu0
        %v3627 = vadd.f32 %v3568, %v3626
        %v3628 = vpop.f32.mrf.mxu0
        %v3629 = vadd.f32 %v3568, %v3628
        %3630 = vmatmul.bf16.gmra.mxu0 %v3605
        %v3631 = vpop.f32.mrf.mxu0
        %v3632 = vadd.f32 %v3568, %v3631
        %v3633 = vpop.f32.mrf.mxu0
        %v3634 = vadd.f32 %v3568, %v3633
        %3635 = vdwg.mxu0
        %v3636 = vadd.f32 %v3409, %v3617
        %v3637 = vadd.f32 %v3410, %v3619
        %v3638 = vadd.f32 %v3411, %v3622
        %v3639 = vadd.f32 %v3412, %v3624
        %v3640 = vadd.f32 %v3413, %v3627
        %v3641 = vadd.f32 %v3414, %v3629
        %v3642 = vadd.f32 %v3415, %v3632
        %v3643 = vadd.f32 %v3416, %v3634
        %v3644 = vsel %vm705, %v3636, 0.0
        %v3645 = vsel %vm705, %v3637, 0.0
        %v3646 = vadd.f32 %v3644, %v3645
        %v3647 = vsel %vm705, %v3638, 0.0
        %v3648 = vadd.f32 %v3646, %v3647
        %v3649 = vsel %vm705, %v3639, 0.0
        %v3650 = vadd.f32 %v3648, %v3649
        %v3651 = vsel %vm705, %v3640, 0.0
        %v3652 = vadd.f32 %v3650, %v3651
        %v3653 = vsel %vm705, %v3641, 0.0
        %v3654 = vadd.f32 %v3652, %v3653
        %v3655 = vsel %vm705, %v3642, 0.0
        %v3656 = vadd.f32 %v3654, %v3655
        %v3657 = vsel %vm705, %v3643, 0.0
        %v3658 = vadd.f32 %v3656, %v3657
        %v3659 = vrot.slane %v3658, 4
        %v3660 = vadd.f32 %v3658, %v3659
        %v3661 = vrot.slane %v3660, 2
        %v3662 = vadd.f32 %v3660, %v3661
        %v3663 = vrot.slane %v3662, 1
        %v3664 = vadd.f32 %v3662, %v3663
        %v3665 = vmul.f32 %v3664, %v3334
        %v3666 = vsub.f32 %v3636, %v3665
        %v3667 = vsub.f32 %v3637, %v3665
        %v3668 = vsub.f32 %v3638, %v3665
        %v3669 = vsub.f32 %v3639, %v3665
        %v3670 = vsub.f32 %v3640, %v3665
        %v3671 = vsub.f32 %v3641, %v3665
        %v3672 = vsub.f32 %v3642, %v3665
        %v3673 = vsub.f32 %v3643, %v3665
        %v3674 = vmul.f32 %v3666, %v3666
        %v3675 = vmul.f32 %v3667, %v3667
        %v3676 = vmul.f32 %v3668, %v3668
        %v3677 = vmul.f32 %v3669, %v3669
        %v3678 = vmul.f32 %v3670, %v3670
        %v3679 = vmul.f32 %v3671, %v3671
        %v3680 = vmul.f32 %v3672, %v3672
        %v3681 = vmul.f32 %v3673, %v3673
        %v3682 = vsel %vm705, %v3674, 0.0
        %v3683 = vsel %vm705, %v3675, 0.0
        %v3684 = vadd.f32 %v3682, %v3683
        %v3685 = vsel %vm705, %v3676, 0.0
        %v3686 = vadd.f32 %v3684, %v3685
        %v3687 = vsel %vm705, %v3677, 0.0
        %v3688 = vadd.f32 %v3686, %v3687
        %v3689 = vsel %vm705, %v3678, 0.0
        %v3690 = vadd.f32 %v3688, %v3689
        %v3691 = vsel %vm705, %v3679, 0.0
        %v3692 = vadd.f32 %v3690, %v3691
        %v3693 = vsel %vm705, %v3680, 0.0
        %v3694 = vadd.f32 %v3692, %v3693
        %v3695 = vsel %vm705, %v3681, 0.0
        %v3696 = vadd.f32 %v3694, %v3695
        %v3697 = vrot.slane %v3696, 4
        %v3698 = vadd.f32 %v3696, %v3697
        %v3699 = vrot.slane %v3698, 2
        %v3700 = vadd.f32 %v3698, %v3699
        %v3701 = vrot.slane %v3700, 1
        %v3702 = vadd.f32 %v3700, %v3701
        %v3703 = vmul.f32 %v3702, %v3334
        %v3704 = vadd.f32 %v3703, 1e-05
        %v3705 = vrsqrt.pop %v3704
        %v3706 = vmul.f32 %v3705, %v3704
        %v3707 = vmul.f32 %v3706, %v3705
        %v3708 = vmul.f32 0.5, %v3707
        %v3709 = vsub.f32 1.5, %v3708
        %v3710 = vmul.f32 %v3705, %v3709
        %vm3711 = vweird.f32 %v3704
        %vm3712 = vweird.f32 %v3705
        %vm3713 = vmor %vm3711, %vm3712
        %v3714 = vsel %vm3713, %v3705, %v3710
        %v3715 = vmul.f32 %v3666, %v3714
        %v3716 = vmul.f32 %v3667, %v3714
        %v3717 = vmul.f32 %v3668, %v3714
        %v3718 = vmul.f32 %v3669, %v3714
        %v3719 = vmul.f32 %v3670, %v3714
        %v3720 = vmul.f32 %v3671, %v3714
        %v3721 = vmul.f32 %v3672, %v3714
        %v3722 = vmul.f32 %v3673, %v3714
        %v3723 = vld [vmem:[%s594] sm:$0x1]
        %v3725 = vperm.slane %v3723, 0
        %v3727 = vmul.f32 %v3715, %v3725
        %v3728 = vmul.f32 %v3716, %v3725
        %v3729 = vmul.f32 %v3717, %v3725
        %v3730 = vmul.f32 %v3718, %v3725
        %v3731 = vmul.f32 %v3719, %v3725
        %v3732 = vmul.f32 %v3720, %v3725
        %v3733 = vmul.f32 %v3721, %v3725
        %v3734 = vmul.f32 %v3722, %v3725
        %v3735 = vld [vmem:[%s597] sm:$0x1]
        %v3737 = vperm.slane %v3735, 0
        %v3739 = vadd.f32 %v3727, %v3737
        %v3740 = vadd.f32 %v3728, %v3737
        %v3741 = vadd.f32 %v3729, %v3737
        %v3742 = vadd.f32 %v3730, %v3737
        %v3743 = vadd.f32 %v3731, %v3737
        %v3744 = vadd.f32 %v3732, %v3737
        %v3745 = vadd.f32 %v3733, %v3737
        %v3746 = vadd.f32 %v3734, %v3737
        %3747 = vst.msk [vmem:[%s13] sm:$0xff] %vm705, %v3739
        %3748 = vst.msk [vmem:[%s13 + $0x8] sm:$0xff] %vm705, %v3740
        %3749 = vst.msk [vmem:[%s13 + $0x10] sm:$0xff] %vm705, %v3741
        %3750 = vst.msk [vmem:[%s13 + $0x18] sm:$0xff] %vm705, %v3742
        %3751 = vst.msk [vmem:[%s13 + $0x20] sm:$0xff] %vm705, %v3743
        %3752 = vst.msk [vmem:[%s13 + $0x28] sm:$0xff] %vm705, %v3744
        %3753 = vst.msk [vmem:[%s13 + $0x30] sm:$0xff] %vm705, %v3745
        %3754 = vst.msk [vmem:[%s13 + $0x38] sm:$0xff] %vm705, %v3746
        // Predicated region
        $region96: #{mgtst_forward.6} parent=67 // pred_check
          %p3755 = pneg %p352
        $region97: #{mgtst_forward.6} parent=67 // pred_check_branch
          %3757 = sbr.rel (%p3755) target = $region99
        $region98: #{mgtst_forward.6} parent=67 // pred_region
          _
        $region99: #{mgtst_forward.6} parent=67 // pred_fallthru
          _
        // Predicated region
        $region100: #{mgtst_forward.6} parent=67 // pred_check
          %p3758 = pneg %p373
        $region101: #{mgtst_forward.6} parent=67 // pred_check_branch
          %3760 = sbr.rel (%p3758) target = $region103
        $region102: #{mgtst_forward.6} parent=67 // pred_region
          %3762 = vsyncadd [#allocation5], 0
          %s3763 = sshll.u32 [#allocation4], 4
          %s3764 = int_to_ptr.vmem [resolvable:$true] %s3763
          %s3765 = sshll.u32 %s14, 4
          %s3766 = int_to_ptr.hbm [resolvable:$true] %s3765
          %3771 = dma.vmem_to_hbm [thread:$0]  %s3764, 4096, %s3766, [#allocation5], 128, 128, 8
        $region103: #{mgtst_forward.6} parent=67 // pred_fallthru
          _
        // Predicated region
        $region104: #{mgtst_forward.6} parent=67 // pred_check
          %p3772 = pneg %p352
        $region105: #{mgtst_forward.6} parent=67 // pred_check_branch
          %3774 = sbr.rel (%p3772) target = $region107
        $region106: #{mgtst_forward.6} parent=67 // pred_region
          _
        $region107: #{mgtst_forward.6} parent=67 // pred_fallthru
          _
        // Predicated region
        $region108: #{mgtst_forward.6} parent=67 // pred_check
          %p3775 = pneg %p373
        $region109: #{mgtst_forward.6} parent=67 // pred_check_branch
          %3777 = sbr.rel (%p3775) target = $region111
        $region110: #{mgtst_forward.6} parent=67 // pred_region
          %3779 = dma.done [#allocation5], 4096
        $region111: #{mgtst_forward.6} parent=67 // pred_fallthru
          _
      $region68: #{mgtst_forward.6} parent=5 // pred_fallthru
        _
      %p3780 = scmp.le.s32.totalorder 2, %s22
      // Predicated region
      $region112: #{mgtst_forward.6} parent=5 // pred_check
        %p3781 = pneg %p3780
      $region113: #{mgtst_forward.6} parent=5 // pred_check_branch
        %3783 = sbr.rel (%p3781) target = $region115
      $region114: #{mgtst_forward.6} parent=5 // pred_region
        %s3784 = ssub.s32 %s22, 2
      $region115: #{mgtst_forward.6} parent=5 // pred_fallthru
        _
    $region6: #{mgtst_forward.6} parent=1 // loop_footer
      %s26 = sadd.s32 1, %s22
    $region7: #{mgtst_forward.6} parent=1 // loop_footer_branch
      %21 = sbr.rel target = $region3
    $region8: #{mgtst_forward.6} parent=1 // loop_exit
      _
    %3785 = vsyncpa [#allocation5], 1
    %s3786 = scalar_lea.sflag [#allocation5], 1
    %3787 = vsyncpa %s3786, 1
  %3788 = vsyncmov [#allocation3]
  %s3789 = vpop.sfrf %3788
  %p3790 = scmp.eq.s32.totalorder %s3789, 0
  %p3791 = pneg %p3790
  %3793 = shalt.err (%p3791)

// kernel: mgtst_forward.8
$region0: #{mgtst_forward.8}
  #allocation0 [shape = 'u32[]', space=smem, size = 0x4, offset = 0x4, fixed_abs, tag = 'smem constant byte address 0x4 - core index']
  #allocation1 [shape = 'u32[72,128]{1,0:T(1,128)}', space=vmem, size = 0x9000, scoped, tag = 'internal scratch']
  #allocation2 [shape = 'f32[4,8,4,4]{3,2,1,0:T(4,128)}', space=vmem, size = 0x10000, scoped, tag = 'scratch operand']
  #allocation3 [shape = 's32[1]{0}', space=sflag, size = 0x4, scoped, tag = 'scratch operand']
  #allocation4 [shape = 's32[]', space=sflag, size = 0x4, offset = 0, fixed_abs, tag = 'sflag constant byte address 0x0 - dummy sync flag']
  %s0 = inlined_call_operand.vmem [shape: f32[8,4,32], index: 0, kind: input, shape index: {}]
  %s1 = inlined_call_operand.vmem [shape: bf16[2,32,96], index: 1, kind: input, shape index: {}]
  %s2 = inlined_call_operand.vmem [shape: f32[2,1,96], index: 2, kind: input, shape index: {}]
  %s3 = inlined_call_operand.vmem [shape: bf16[2,32,32], index: 3, kind: input, shape index: {}]
  %s4 = inlined_call_operand.vmem [shape: f32[2,1,32], index: 4, kind: input, shape index: {}]
  %s5 = inlined_call_operand.vmem [shape: f32[2,1,32], index: 5, kind: input, shape index: {}]
  %s6 = inlined_call_operand.vmem [shape: f32[2,1,32], index: 6, kind: input, shape index: {}]
  %s7 = inlined_call_operand.vmem [shape: bf16[2,32,64], index: 7, kind: input, shape index: {}]
  %s8 = inlined_call_operand.vmem [shape: f32[2,1,64], index: 8, kind: input, shape index: {}]
  %s9 = inlined_call_operand.vmem [shape: bf16[2,64,32], index: 9, kind: input, shape index: {}]
  %s10 = inlined_call_operand.vmem [shape: f32[2,1,32], index: 10, kind: input, shape index: {}]
  %s11 = inlined_call_operand.vmem [shape: f32[2,1,32], index: 11, kind: input, shape index: {}]
  %s12 = inlined_call_operand.vmem [shape: f32[2,1,32], index: 12, kind: input, shape index: {}]
  %s13 = inlined_call_operand.vmem [shape: f32[8,4,32], index: 13, kind: output, shape index: {0}]
  %s14 = inlined_call_operand.vmem [shape: f32[8,4,4,4], index: 14, kind: output, shape index: {1}]
  %15 = xla_tuple %s13, %s14
  %s16 = sld [smem:[#allocation0]]
  $region116: #{mgtst_forward.8} parent=0
    _
  %s18 = ssub.s32 1, %s16
  %s19 = scalar_select 0, %s18, %s16
  loop: start=0, step=1, limit=4
  $region2: #{mgtst_forward.8} parent=0 // loop_pre_header
    _
  $region3: #{mgtst_forward.8} parent=0 // loop_header
    %s21 = sphi 0, %s25
    %p22 = scmp.ge.s32.totalorder %s21, 4
    %s31 = sphi 0, %s33
    %s34 = sphi 0, %s31
    %s35 = sphi 0, %s34
    %s51 = sphi 0, %s35
    %s57 = sphi 0, %s59
    %s60 = sphi 0, %s57
    %s61 = sphi 0, %s60
    %s77 = sphi 0, %s61
    %s83 = sphi 0, %s85
    %s86 = sphi 0, %s83
    %s87 = sphi 0, %s86
    %s103 = sphi 0, %s87
    %s109 = sphi 0, %s111
    %s112 = sphi 0, %s109
    %s113 = sphi 0, %s112
    %s129 = sphi 0, %s113
    %s135 = sphi 0, %s137
    %s138 = sphi 0, %s135
    %s139 = sphi 0, %s138
    %s155 = sphi 0, %s139
    %s161 = sphi 0, %s163
    %s164 = sphi 0, %s161
    %s165 = sphi 0, %s164
    %s181 = sphi 0, %s165
    %s187 = sphi 0, %s189
    %s190 = sphi 0, %s187
    %s191 = sphi 0, %s190
    %s207 = sphi 0, %s191
    %s213 = sphi 0, %s215
    %s216 = sphi 0, %s213
    %s217 = sphi 0, %s216
    %s233 = sphi 0, %s217
    %s239 = sphi 0, %s241
    %s242 = sphi 0, %s239
    %s243 = sphi 0, %s242
    %s259 = sphi 0, %s243
    %s265 = sphi 0, %s267
    %s268 = sphi 0, %s265
    %s269 = sphi 0, %s268
    %s285 = sphi 0, %s269
    %s291 = sphi 0, %s293
    %s294 = sphi 0, %s291
    %s295 = sphi 0, %s294
    %s311 = sphi 0, %s295
    %s317 = sphi 0, %s319
    %s320 = sphi 0, %s317
    %s321 = sphi 0, %s320
    %s337 = sphi 0, %s321
    %s341 = sphi 0, %s341
    %s343 = sphi 0, %s341
    %s344 = sphi 0, %s343
    %s358 = sphi 0, %s344
    %s362 = sphi 0, %s362
    %s364 = sphi 0, %s362
    %s365 = sphi 0, %s364
    %s379 = sphi 0, %s365
  $region4: #{mgtst_forward.8} parent=0 // loop_header_branch
    %24 = sbr.rel (%p22) target = $region8
  $region5: #{mgtst_forward.8} parent=0 // loop_body
    %s26 = ssub.s32 %s21, 1
    %s27 = ssub.s32 %s21, 2
    %s28 = sadd.s32 %s21, 1
    %s29 = ssub.s32 %s21, %s28
    %p30 = scmp.eq.s32.totalorder %s29, 0
    %s32 = sadd.s32 %s31, 1
    %s33 = scalar_select %p30, %s31, %s32
    %p36 = pneg %p30
    %p37 = scmp.eq.s32.totalorder %s21, 1
    %p38 = por %p36, %p37
    %p39 = scmp.ne.s32.totalorder %s31, %s34
    %p40 = scmp.eq.s32.totalorder %s21, 0
    %p41 = por %p39, %p40
    %p42 = scmp.ne.s32.totalorder %s31, %s34
    %p43 = scmp.eq.s32.totalorder %s26, 1
    %p44 = por %p42, %p43
    %p45 = scmp.ne.s32.totalorder %s34, %s35
    %p46 = scmp.eq.s32.totalorder %s26, 0
    %p47 = por %p45, %p46
    %p48 = scmp.ne.s32.totalorder %s34, %s35
    %p49 = scmp.eq.s32.totalorder %s27, 1
    %p50 = por %p48, %p49
    %p52 = scmp.ne.s32.totalorder %s35, %s51
    %p53 = scmp.eq.s32.totalorder %s27, 0
    %p54 = por %p52, %p53
    %s55 = ssub.s32 %s21, %s28
    %p56 = scmp.eq.s32.totalorder %s55, 0
    %s58 = sadd.s32 %s57, 1
    %s59 = scalar_select %p56, %s57, %s58
    %p62 = pneg %p56
    %p63 = scmp.eq.s32.totalorder %s21, 1
    %p64 = por %p62, %p63
    %p65 = scmp.ne.s32.totalorder %s57, %s60
    %p66 = scmp.eq.s32.totalorder %s21, 0
    %p67 = por %p65, %p66
    %p68 = scmp.ne.s32.totalorder %s57, %s60
    %p69 = scmp.eq.s32.totalorder %s26, 1
    %p70 = por %p68, %p69
    %p71 = scmp.ne.s32.totalorder %s60, %s61
    %p72 = scmp.eq.s32.totalorder %s26, 0
    %p73 = por %p71, %p72
    %p74 = scmp.ne.s32.totalorder %s60, %s61
    %p75 = scmp.eq.s32.totalorder %s27, 1
    %p76 = por %p74, %p75
    %p78 = scmp.ne.s32.totalorder %s61, %s77
    %p79 = scmp.eq.s32.totalorder %s27, 0
    %p80 = por %p78, %p79
    %s81 = ssub.s32 %s21, %s28
    %p82 = scmp.eq.s32.totalorder %s81, 0
    %s84 = sadd.s32 %s83, 1
    %s85 = scalar_select %p82, %s83, %s84
    %p88 = pneg %p82
    %p89 = scmp.eq.s32.totalorder %s21, 1
    %p90 = por %p88, %p89
    %p91 = scmp.ne.s32.totalorder %s83, %s86
    %p92 = scmp.eq.s32.totalorder %s21, 0
    %p93 = por %p91, %p92
    %p94 = scmp.ne.s32.totalorder %s83, %s86
    %p95 = scmp.eq.s32.totalorder %s26, 1
    %p96 = por %p94, %p95
    %p97 = scmp.ne.s32.totalorder %s86, %s87
    %p98 = scmp.eq.s32.totalorder %s26, 0
    %p99 = por %p97, %p98
    %p100 = scmp.ne.s32.totalorder %s86, %s87
    %p101 = scmp.eq.s32.totalorder %s27, 1
    %p102 = por %p100, %p101
    %p104 = scmp.ne.s32.totalorder %s87, %s103
    %p105 = scmp.eq.s32.totalorder %s27, 0
    %p106 = por %p104, %p105
    %s107 = ssub.s32 %s21, %s28
    %p108 = scmp.eq.s32.totalorder %s107, 0
    %s110 = sadd.s32 %s109, 1
    %s111 = scalar_select %p108, %s109, %s110
    %p114 = pneg %p108
    %p115 = scmp.eq.s32.totalorder %s21, 1
    %p116 = por %p114, %p115
    %p117 = scmp.ne.s32.totalorder %s109, %s112
    %p118 = scmp.eq.s32.totalorder %s21, 0
    %p119 = por %p117, %p118
    %p120 = scmp.ne.s32.totalorder %s109, %s112
    %p121 = scmp.eq.s32.totalorder %s26, 1
    %p122 = por %p120, %p121
    %p123 = scmp.ne.s32.totalorder %s112, %s113
    %p124 = scmp.eq.s32.totalorder %s26, 0
    %p125 = por %p123, %p124
    %p126 = scmp.ne.s32.totalorder %s112, %s113
    %p127 = scmp.eq.s32.totalorder %s27, 1
    %p128 = por %p126, %p127
    %p130 = scmp.ne.s32.totalorder %s113, %s129
    %p131 = scmp.eq.s32.totalorder %s27, 0
    %p132 = por %p130, %p131
    %s133 = ssub.s32 %s21, %s28
    %p134 = scmp.eq.s32.totalorder %s133, 0
    %s136 = sadd.s32 %s135, 1
    %s137 = scalar_select %p134, %s135, %s136
    %p140 = pneg %p134
    %p141 = scmp.eq.s32.totalorder %s21, 1
    %p142 = por %p140, %p141
    %p143 = scmp.ne.s32.totalorder %s135, %s138
    %p144 = scmp.eq.s32.totalorder %s21, 0
    %p145 = por %p143, %p144
    %p146 = scmp.ne.s32.totalorder %s135, %s138
    %p147 = scmp.eq.s32.totalorder %s26, 1
    %p148 = por %p146, %p147
    %p149 = scmp.ne.s32.totalorder %s138, %s139
    %p150 = scmp.eq.s32.totalorder %s26, 0
    %p151 = por %p149, %p150
    %p152 = scmp.ne.s32.totalorder %s138, %s139
    %p153 = scmp.eq.s32.totalorder %s27, 1
    %p154 = por %p152, %p153
    %p156 = scmp.ne.s32.totalorder %s139, %s155
    %p157 = scmp.eq.s32.totalorder %s27, 0
    %p158 = por %p156, %p157
    %s159 = ssub.s32 %s21, %s28
    %p160 = scmp.eq.s32.totalorder %s159, 0
    %s162 = sadd.s32 %s161, 1
    %s163 = scalar_select %p160, %s161, %s162
    %p166 = pneg %p160
    %p167 = scmp.eq.s32.totalorder %s21, 1
    %p168 = por %p166, %p167
    %p169 = scmp.ne.s32.totalorder %s161, %s164
    %p170 = scmp.eq.s32.totalorder %s21, 0
    %p171 = por %p169, %p170
    %p172 = scmp.ne.s32.totalorder %s161, %s164
    %p173 = scmp.eq.s32.totalorder %s26, 1
    %p174 = por %p172, %p173
    %p175 = scmp.ne.s32.totalorder %s164, %s165
    %p176 = scmp.eq.s32.totalorder %s26, 0
    %p177 = por %p175, %p176
    %p178 = scmp.ne.s32.totalorder %s164, %s165
    %p179 = scmp.eq.s32.totalorder %s27, 1
    %p180 = por %p178, %p179
    %p182 = scmp.ne.s32.totalorder %s165, %s181
    %p183 = scmp.eq.s32.totalorder %s27, 0
    %p184 = por %p182, %p183
    %s185 = ssub.s32 %s21, %s28
    %p186 = scmp.eq.s32.totalorder %s185, 0
    %s188 = sadd.s32 %s187, 1
    %s189 = scalar_select %p186, %s187, %s188
    %p192 = pneg %p186
    %p193 = scmp.eq.s32.totalorder %s21, 1
    %p194 = por %p192, %p193
    %p195 = scmp.ne.s32.totalorder %s187, %s190
    %p196 = scmp.eq.s32.totalorder %s21, 0
    %p197 = por %p195, %p196
    %p198 = scmp.ne.s32.totalorder %s187, %s190
    %p199 = scmp.eq.s32.totalorder %s26, 1
    %p200 = por %p198, %p199
    %p201 = scmp.ne.s32.totalorder %s190, %s191
    %p202 = scmp.eq.s32.totalorder %s26, 0
    %p203 = por %p201, %p202
    %p204 = scmp.ne.s32.totalorder %s190, %s191
    %p205 = scmp.eq.s32.totalorder %s27, 1
    %p206 = por %p204, %p205
    %p208 = scmp.ne.s32.totalorder %s191, %s207
    %p209 = scmp.eq.s32.totalorder %s27, 0
    %p210 = por %p208, %p209
    %s211 = ssub.s32 %s21, %s28
    %p212 = scmp.eq.s32.totalorder %s211, 0
    %s214 = sadd.s32 %s213, 1
    %s215 = scalar_select %p212, %s213, %s214
    %p218 = pneg %p212
    %p219 = scmp.eq.s32.totalorder %s21, 1
    %p220 = por %p218, %p219
    %p221 = scmp.ne.s32.totalorder %s213, %s216
    %p222 = scmp.eq.s32.totalorder %s21, 0
    %p223 = por %p221, %p222
    %p224 = scmp.ne.s32.totalorder %s213, %s216
    %p225 = scmp.eq.s32.totalorder %s26, 1
    %p226 = por %p224, %p225
    %p227 = scmp.ne.s32.totalorder %s216, %s217
    %p228 = scmp.eq.s32.totalorder %s26, 0
    %p229 = por %p227, %p228
    %p230 = scmp.ne.s32.totalorder %s216, %s217
    %p231 = scmp.eq.s32.totalorder %s27, 1
    %p232 = por %p230, %p231
    %p234 = scmp.ne.s32.totalorder %s217, %s233
    %p235 = scmp.eq.s32.totalorder %s27, 0
    %p236 = por %p234, %p235
    %s237 = ssub.s32 %s21, %s28
    %p238 = scmp.eq.s32.totalorder %s237, 0
    %s240 = sadd.s32 %s239, 1
    %s241 = scalar_select %p238, %s239, %s240
    %p244 = pneg %p238
    %p245 = scmp.eq.s32.totalorder %s21, 1
    %p246 = por %p244, %p245
    %p247 = scmp.ne.s32.totalorder %s239, %s242
    %p248 = scmp.eq.s32.totalorder %s21, 0
    %p249 = por %p247, %p248
    %p250 = scmp.ne.s32.totalorder %s239, %s242
    %p251 = scmp.eq.s32.totalorder %s26, 1
    %p252 = por %p250, %p251
    %p253 = scmp.ne.s32.totalorder %s242, %s243
    %p254 = scmp.eq.s32.totalorder %s26, 0
    %p255 = por %p253, %p254
    %p256 = scmp.ne.s32.totalorder %s242, %s243
    %p257 = scmp.eq.s32.totalorder %s27, 1
    %p258 = por %p256, %p257
    %p260 = scmp.ne.s32.totalorder %s243, %s259
    %p261 = scmp.eq.s32.totalorder %s27, 0
    %p262 = por %p260, %p261
    %s263 = ssub.s32 %s21, %s28
    %p264 = scmp.eq.s32.totalorder %s263, 0
    %s266 = sadd.s32 %s265, 1
    %s267 = scalar_select %p264, %s265, %s266
    %p270 = pneg %p264
    %p271 = scmp.eq.s32.totalorder %s21, 1
    %p272 = por %p270, %p271
    %p273 = scmp.ne.s32.totalorder %s265, %s268
    %p274 = scmp.eq.s32.totalorder %s21, 0
    %p275 = por %p273, %p274
    %p276 = scmp.ne.s32.totalorder %s265, %s268
    %p277 = scmp.eq.s32.totalorder %s26, 1
    %p278 = por %p276, %p277
    %p279 = scmp.ne.s32.totalorder %s268, %s269
    %p280 = scmp.eq.s32.totalorder %s26, 0
    %p281 = por %p279, %p280
    %p282 = scmp.ne.s32.totalorder %s268, %s269
    %p283 = scmp.eq.s32.totalorder %s27, 1
    %p284 = por %p282, %p283
    %p286 = scmp.ne.s32.totalorder %s269, %s285
    %p287 = scmp.eq.s32.totalorder %s27, 0
    %p288 = por %p286, %p287
    %s289 = ssub.s32 %s21, %s28
    %p290 = scmp.eq.s32.totalorder %s289, 0
    %s292 = sadd.s32 %s291, 1
    %s293 = scalar_select %p290, %s291, %s292
    %p296 = pneg %p290
    %p297 = scmp.eq.s32.totalorder %s21, 1
    %p298 = por %p296, %p297
    %p299 = scmp.ne.s32.totalorder %s291, %s294
    %p300 = scmp.eq.s32.totalorder %s21, 0
    %p301 = por %p299, %p300
    %p302 = scmp.ne.s32.totalorder %s291, %s294
    %p303 = scmp.eq.s32.totalorder %s26, 1
    %p304 = por %p302, %p303
    %p305 = scmp.ne.s32.totalorder %s294, %s295
    %p306 = scmp.eq.s32.totalorder %s26, 0
    %p307 = por %p305, %p306
    %p308 = scmp.ne.s32.totalorder %s294, %s295
    %p309 = scmp.eq.s32.totalorder %s27, 1
    %p310 = por %p308, %p309
    %p312 = scmp.ne.s32.totalorder %s295, %s311
    %p313 = scmp.eq.s32.totalorder %s27, 0
    %p314 = por %p312, %p313
    %s315 = ssub.s32 %s21, %s28
    %p316 = scmp.eq.s32.totalorder %s315, 0
    %s318 = sadd.s32 %s317, 1
    %s319 = scalar_select %p316, %s317, %s318
    %p322 = pneg %p316
    %p323 = scmp.eq.s32.totalorder %s21, 1
    %p324 = por %p322, %p323
    %p325 = scmp.ne.s32.totalorder %s317, %s320
    %p326 = scmp.eq.s32.totalorder %s21, 0
    %p327 = por %p325, %p326
    %p328 = scmp.ne.s32.totalorder %s317, %s320
    %p329 = scmp.eq.s32.totalorder %s26, 1
    %p330 = por %p328, %p329
    %p331 = scmp.ne.s32.totalorder %s320, %s321
    %p332 = scmp.eq.s32.totalorder %s26, 0
    %p333 = por %p331, %p332
    %p334 = scmp.ne.s32.totalorder %s320, %s321
    %p335 = scmp.eq.s32.totalorder %s27, 1
    %p336 = por %p334, %p335
    %p338 = scmp.ne.s32.totalorder %s321, %s337
    %p339 = scmp.eq.s32.totalorder %s27, 0
    %p340 = por %p338, %p339
    %s342 = sadd.s32 %s341, 1
    %p345 = scmp.eq.s32.totalorder %s21, 1
    %p346 = scmp.ne.s32.totalorder %s341, %s343
    %p347 = scmp.eq.s32.totalorder %s21, 0
    %p348 = por %p346, %p347
    %p349 = scmp.ne.s32.totalorder %s341, %s343
    %p350 = scmp.eq.s32.totalorder %s26, 1
    %p351 = por %p349, %p350
    %p352 = scmp.ne.s32.totalorder %s343, %s344
    %p353 = scmp.eq.s32.totalorder %s26, 0
    %p354 = por %p352, %p353
    %p355 = scmp.ne.s32.totalorder %s343, %s344
    %p356 = scmp.eq.s32.totalorder %s27, 1
    %p357 = por %p355, %p356
    %p359 = scmp.ne.s32.totalorder %s344, %s358
    %p360 = scmp.eq.s32.totalorder %s27, 0
    %p361 = por %p359, %p360
    %s363 = sadd.s32 %s362, 1
    %p366 = scmp.eq.s32.totalorder %s21, 1
    %p367 = scmp.ne.s32.totalorder %s362, %s364
    %p368 = scmp.eq.s32.totalorder %s21, 0
    %p369 = por %p367, %p368
    %p370 = scmp.ne.s32.totalorder %s362, %s364
    %p371 = scmp.eq.s32.totalorder %s26, 1
    %p372 = por %p370, %p371
    %p373 = scmp.ne.s32.totalorder %s364, %s365
    %p374 = scmp.eq.s32.totalorder %s26, 0
    %p375 = por %p373, %p374
    %p376 = scmp.ne.s32.totalorder %s364, %s365
    %p377 = scmp.eq.s32.totalorder %s27, 1
    %p378 = por %p376, %p377
    %p380 = scmp.ne.s32.totalorder %s365, %s379
    %p381 = scmp.eq.s32.totalorder %s27, 0
    %p382 = por %p380, %p381
    %p383 = scmp.le.s32.totalorder 1, %s21
    %p384 = scmp.lt.s32.totalorder %s21, 3
    %p385 = pnand %p383, %p384
    %p386 = pneg %p385
    // Predicated region
    $region9: #{mgtst_forward.8} parent=5 // pred_check
      _
    $region10: #{mgtst_forward.8} parent=5 // pred_check_branch
      %388 = sbr.rel (%p385) target = $region12
    $region11: #{mgtst_forward.8} parent=5 // pred_region
      %s389 = ssub.s32 %s21, 1
    $region12: #{mgtst_forward.8} parent=5 // pred_fallthru
      _
    %p390 = scmp.lt.s32.totalorder %s21, 2
    // Predicated region
    $region13: #{mgtst_forward.8} parent=5 // pred_check
      %p391 = pneg %p390
    $region14: #{mgtst_forward.8} parent=5 // pred_check_branch
      %393 = sbr.rel (%p391) target = $region16
    $region15: #{mgtst_forward.8} parent=5 // pred_region
      // Predicated region
      $region17: #{mgtst_forward.8} parent=15 // pred_check
        %p394 = pneg %p41
      $region18: #{mgtst_forward.8} parent=15 // pred_check_branch
        %396 = sbr.rel (%p394) target = $region20
      $region19: #{mgtst_forward.8} parent=15 // pred_region
        %p397 = scmp.lt.s32.totalorder %s21, 1
        %s398 = scalar_select %p397, %s21, 1
        %s399 = smul.addr %s398, 4
        %s400 = smul.addr %s399, 4
        %s401 = scalar_lea.vmem %s1, %s400
      $region20: #{mgtst_forward.8} parent=15 // pred_fallthru
        _
      // Predicated region
      $region21: #{mgtst_forward.8} parent=15 // pred_check
        %p402 = pneg %p67
      $region22: #{mgtst_forward.8} parent=15 // pred_check_branch
        %404 = sbr.rel (%p402) target = $region24
      $region23: #{mgtst_forward.8} parent=15 // pred_region
        %p405 = scmp.lt.s32.totalorder %s21, 1
        %s406 = scalar_select %p405, %s21, 1
        %s407 = scalar_lea.vmem %s2, %s406
      $region24: #{mgtst_forward.8} parent=15 // pred_fallthru
        _
      // Predicated region
      $region25: #{mgtst_forward.8} parent=15 // pred_check
        %p408 = pneg %p93
      $region26: #{mgtst_forward.8} parent=15 // pred_check_branch
        %410 = sbr.rel (%p408) target = $region28
      $region27: #{mgtst_forward.8} parent=15 // pred_region
        %p411 = scmp.lt.s32.totalorder %s21, 1
        %s412 = scalar_select %p411, %s21, 1
        %s413 = smul.addr %s412, 4
        %s414 = smul.addr %s413, 4
        %s415 = scalar_lea.vmem %s3, %s414
      $region28: #{mgtst_forward.8} parent=15 // pred_fallthru
        _
      // Predicated region
      $region29: #{mgtst_forward.8} parent=15 // pred_check
        %p416 = pneg %p119
      $region30: #{mgtst_forward.8} parent=15 // pred_check_branch
        %418 = sbr.rel (%p416) target = $region32
      $region31: #{mgtst_forward.8} parent=15 // pred_region
        %p419 = scmp.lt.s32.totalorder %s21, 1
        %s420 = scalar_select %p419, %s21, 1
        %s421 = scalar_lea.vmem %s4, %s420
      $region32: #{mgtst_forward.8} parent=15 // pred_fallthru
        _
      // Predicated region
      $region33: #{mgtst_forward.8} parent=15 // pred_check
        %p422 = pneg %p145
      $region34: #{mgtst_forward.8} parent=15 // pred_check_branch
        %424 = sbr.rel (%p422) target = $region36
      $region35: #{mgtst_forward.8} parent=15 // pred_region
        %p425 = scmp.lt.s32.totalorder %s21, 1
        %s426 = scalar_select %p425, %s21, 1
        %s427 = scalar_lea.vmem %s5, %s426
      $region36: #{mgtst_forward.8} parent=15 // pred_fallthru
        _
      // Predicated region
      $region37: #{mgtst_forward.8} parent=15 // pred_check
        %p428 = pneg %p171
      $region38: #{mgtst_forward.8} parent=15 // pred_check_branch
        %430 = sbr.rel (%p428) target = $region40
      $region39: #{mgtst_forward.8} parent=15 // pred_region
        %p431 = scmp.lt.s32.totalorder %s21, 1
        %s432 = scalar_select %p431, %s21, 1
        %s433 = scalar_lea.vmem %s6, %s432
      $region40: #{mgtst_forward.8} parent=15 // pred_fallthru
        _
      // Predicated region
      $region41: #{mgtst_forward.8} parent=15 // pred_check
        %p434 = pneg %p197
      $region42: #{mgtst_forward.8} parent=15 // pred_check_branch
        %436 = sbr.rel (%p434) target = $region44
      $region43: #{mgtst_forward.8} parent=15 // pred_region
        %p437 = scmp.lt.s32.totalorder %s21, 1
        %s438 = scalar_select %p437, %s21, 1
        %s439 = smul.addr %s438, 4
        %s440 = smul.addr %s439, 4
        %s441 = scalar_lea.vmem %s7, %s440
      $region44: #{mgtst_forward.8} parent=15 // pred_fallthru
        _
      // Predicated region
      $region45: #{mgtst_forward.8} parent=15 // pred_check
        %p442 = pneg %p223
      $region46: #{mgtst_forward.8} parent=15 // pred_check_branch
        %444 = sbr.rel (%p442) target = $region48
      $region47: #{mgtst_forward.8} parent=15 // pred_region
        %p445 = scmp.lt.s32.totalorder %s21, 1
        %s446 = scalar_select %p445, %s21, 1
        %s447 = scalar_lea.vmem %s8, %s446
      $region48: #{mgtst_forward.8} parent=15 // pred_fallthru
        _
      // Predicated region
      $region49: #{mgtst_forward.8} parent=15 // pred_check
        %p448 = pneg %p249
      $region50: #{mgtst_forward.8} parent=15 // pred_check_branch
        %450 = sbr.rel (%p448) target = $region52
      $region51: #{mgtst_forward.8} parent=15 // pred_region
        %p451 = scmp.lt.s32.totalorder %s21, 1
        %s452 = scalar_select %p451, %s21, 1
        %s453 = smul.addr %s452, 8
        %s454 = smul.addr %s453, 4
        %s455 = scalar_lea.vmem %s9, %s454
      $region52: #{mgtst_forward.8} parent=15 // pred_fallthru
        _
      // Predicated region
      $region53: #{mgtst_forward.8} parent=15 // pred_check
        %p456 = pneg %p275
      $region54: #{mgtst_forward.8} parent=15 // pred_check_branch
        %458 = sbr.rel (%p456) target = $region56
      $region55: #{mgtst_forward.8} parent=15 // pred_region
        %p459 = scmp.lt.s32.totalorder %s21, 1
        %s460 = scalar_select %p459, %s21, 1
        %s461 = scalar_lea.vmem %s10, %s460
      $region56: #{mgtst_forward.8} parent=15 // pred_fallthru
        _
      // Predicated region
      $region57: #{mgtst_forward.8} parent=15 // pred_check
        %p462 = pneg %p301
      $region58: #{mgtst_forward.8} parent=15 // pred_check_branch
        %464 = sbr.rel (%p462) target = $region60
      $region59: #{mgtst_forward.8} parent=15 // pred_region
        %p465 = scmp.lt.s32.totalorder %s21, 1
        %s466 = scalar_select %p465, %s21, 1
        %s467 = scalar_lea.vmem %s11, %s466
      $region60: #{mgtst_forward.8} parent=15 // pred_fallthru
        _
      // Predicated region
      $region61: #{mgtst_forward.8} parent=15 // pred_check
        %p468 = pneg %p327
      $region62: #{mgtst_forward.8} parent=15 // pred_check_branch
        %470 = sbr.rel (%p468) target = $region64
      $region63: #{mgtst_forward.8} parent=15 // pred_region
        %p471 = scmp.lt.s32.totalorder %s21, 1
        %s472 = scalar_select %p471, %s21, 1
        %s473 = scalar_lea.vmem %s12, %s472
      $region64: #{mgtst_forward.8} parent=15 // pred_fallthru
        _
    $region16: #{mgtst_forward.8} parent=5 // pred_fallthru
      _
    %p474 = scmp.le.s32.totalorder 1, %s21
    %p475 = scmp.lt.s32.totalorder %s21, 3
    %p476 = pnand %p474, %p475
    %p477 = pneg %p476
    // Predicated region
    $region65: #{mgtst_forward.8} parent=5 // pred_check
      _
    $region66: #{mgtst_forward.8} parent=5 // pred_check_branch
      %479 = sbr.rel (%p476) target = $region68
    $region67: #{mgtst_forward.8} parent=5 // pred_region
      %s480 = ssub.s32 %s21, 1
      %p481 = scmp.lt.s32.totalorder %s26, 1
      %s482 = scalar_select %p481, %s26, 1
      %s483 = smul.addr %s482, 4
      %s484 = smul.addr %s483, 4
      %s485 = scalar_lea.vmem %s1, %s484
      %p486 = pneg %p47
      %p487 = pneg %p44
      %p488 = scmp.lt.s32.totalorder %s26, 1
      %s489 = scalar_select %p488, %s26, 1
      %s490 = scalar_lea.vmem %s2, %s489
      %p491 = pneg %p73
      %p492 = pneg %p70
      %p493 = scmp.lt.s32.totalorder %s26, 1
      %s494 = scalar_select %p493, %s26, 1
      %s495 = smul.addr %s494, 4
      %s496 = smul.addr %s495, 4
      %s497 = scalar_lea.vmem %s3, %s496
      %p498 = pneg %p99
      %p499 = pneg %p96
      %p500 = scmp.lt.s32.totalorder %s26, 1
      %s501 = scalar_select %p500, %s26, 1
      %s502 = scalar_lea.vmem %s4, %s501
      %p503 = pneg %p125
      %p504 = pneg %p122
      %p505 = scmp.lt.s32.totalorder %s26, 1
      %s506 = scalar_select %p505, %s26, 1
      %s507 = scalar_lea.vmem %s5, %s506
      %p508 = pneg %p151
      %p509 = pneg %p148
      %p510 = scmp.lt.s32.totalorder %s26, 1
      %s511 = scalar_select %p510, %s26, 1
      %s512 = scalar_lea.vmem %s6, %s511
      %p513 = pneg %p177
      %p514 = pneg %p174
      %p515 = scmp.lt.s32.totalorder %s26, 1
      %s516 = scalar_select %p515, %s26, 1
      %s517 = smul.addr %s516, 4
      %s518 = smul.addr %s517, 4
      %s519 = scalar_lea.vmem %s7, %s518
      %p520 = pneg %p203
      %p521 = pneg %p200
      %p522 = scmp.lt.s32.totalorder %s26, 1
      %s523 = scalar_select %p522, %s26, 1
      %s524 = scalar_lea.vmem %s8, %s523
      %p525 = pneg %p229
      %p526 = pneg %p226
      %p527 = scmp.lt.s32.totalorder %s26, 1
      %s528 = scalar_select %p527, %s26, 1
      %s529 = smul.addr %s528, 8
      %s530 = smul.addr %s529, 4
      %s531 = scalar_lea.vmem %s9, %s530
      %p532 = pneg %p255
      %p533 = pneg %p252
      %p534 = scmp.lt.s32.totalorder %s26, 1
      %s535 = scalar_select %p534, %s26, 1
      %s536 = scalar_lea.vmem %s10, %s535
      %p537 = pneg %p281
      %p538 = pneg %p278
      %p539 = scmp.lt.s32.totalorder %s26, 1
      %s540 = scalar_select %p539, %s26, 1
      %s541 = scalar_lea.vmem %s11, %s540
      %p542 = pneg %p307
      %p543 = pneg %p304
      %p544 = scmp.lt.s32.totalorder %s26, 1
      %s545 = scalar_select %p544, %s26, 1
      %s546 = scalar_lea.vmem %s12, %s545
      %p547 = pneg %p333
      %p548 = pneg %p330
      %p549 = pneg %p354
      %p550 = pneg %p351
      %p551 = pneg %p375
      %p552 = pneg %p372
      %p553 = scmp.lt.s32.totalorder %s26, 1
      %s554 = scalar_select %p553, %s26, 1
      %s555 = smul.addr %s554, 4
      %s556 = smul.addr %s555, 4
      %s557 = scalar_lea.vmem %s1, %s556
      %p558 = scmp.lt.s32.totalorder %s26, 1
      %s559 = scalar_select %p558, %s26, 1
      %s560 = scalar_lea.vmem %s2, %s559
      %p561 = scmp.lt.s32.totalorder %s26, 1
      %s562 = scalar_select %p561, %s26, 1
      %s563 = smul.addr %s562, 4
      %s564 = smul.addr %s563, 4
      %s565 = scalar_lea.vmem %s3, %s564
      %p566 = scmp.lt.s32.totalorder %s26, 1
      %s567 = scalar_select %p566, %s26, 1
      %s568 = scalar_lea.vmem %s4, %s567
      %p569 = scmp.lt.s32.totalorder %s26, 1
      %s570 = scalar_select %p569, %s26, 1
      %s571 = scalar_lea.vmem %s5, %s570
      %p572 = scmp.lt.s32.totalorder %s26, 1
      %s573 = scalar_select %p572, %s26, 1
      %s574 = scalar_lea.vmem %s6, %s573
      %p575 = scmp.lt.s32.totalorder %s26, 1
      %s576 = scalar_select %p575, %s26, 1
      %s577 = smul.addr %s576, 4
      %s578 = smul.addr %s577, 4
      %s579 = scalar_lea.vmem %s7, %s578
      %p580 = scmp.lt.s32.totalorder %s26, 1
      %s581 = scalar_select %p580, %s26, 1
      %s582 = scalar_lea.vmem %s8, %s581
      %p583 = scmp.lt.s32.totalorder %s26, 1
      %s584 = scalar_select %p583, %s26, 1
      %s585 = smul.addr %s584, 8
      %s586 = smul.addr %s585, 4
      %s587 = scalar_lea.vmem %s9, %s586
      %p588 = scmp.lt.s32.totalorder %s26, 1
      %s589 = scalar_select %p588, %s26, 1
      %s590 = scalar_lea.vmem %s10, %s589
      %p591 = scmp.lt.s32.totalorder %s26, 1
      %s592 = scalar_select %p591, %s26, 1
      %s593 = scalar_lea.vmem %s11, %s592
      %p594 = scmp.lt.s32.totalorder %s26, 1
      %s595 = scalar_select %p594, %s26, 1
      %s596 = scalar_lea.vmem %s12, %s595
      %p598 = scmp.eq.s32.totalorder %s26, 1
      %p599 = scmp.eq.s32.totalorder %s26, 0
      // Predicated region
      $region69: #{mgtst_forward.8} parent=67 // pred_check
        %p600 = pneg %p599
      $region70: #{mgtst_forward.8} parent=67 // pred_check_branch
        %602 = sbr.rel (%p600) target = $region72
      $region71: #{mgtst_forward.8} parent=67 // pred_region
        // Predicated region
        $region73: #{mgtst_forward.8} parent=71 // pred_check
          _
        $region74: #{mgtst_forward.8} parent=71 // pred_check_branch
          %604 = sbr.rel (0) target = $region76
        $region75: #{mgtst_forward.8} parent=71 // pred_region
          loop: start=0, step=1, limit=1
          $region77: #{mgtst_forward.8} parent=75 // loop_pre_header
            _
          $region78: #{mgtst_forward.8} parent=75 // loop_header
            %s606 = sphi 0, %s610
            %p607 = scmp.ge.s32.totalorder %s606, 1
            %s611 = sphi %s0, %s0
            %s612 = sphi %s13, %s13
          $region79: #{mgtst_forward.8} parent=75 // loop_header_branch
            %609 = sbr.rel (%p607) target = $region83
          $region80: #{mgtst_forward.8} parent=75 // loop_body
            %v613 = vld [vmem:[%s611] sm:$0xff]
            %614 = vst [vmem:[%s612] sm:$0xff] %v613
            %v615 = vld [vmem:[%s611 + $0x8] sm:$0xff]
            %616 = vst [vmem:[%s612 + $0x8] sm:$0xff] %v615
            %v617 = vld [vmem:[%s611 + $0x10] sm:$0xff]
            %618 = vst [vmem:[%s612 + $0x10] sm:$0xff] %v617
            %v619 = vld [vmem:[%s611 + $0x18] sm:$0xff]
            %620 = vst [vmem:[%s612 + $0x18] sm:$0xff] %v619
          $region81: #{mgtst_forward.8} parent=75 // loop_footer
            %s610 = sadd.s32 1, %s606
          $region82: #{mgtst_forward.8} parent=75 // loop_footer_branch
            %605 = sbr.rel target = $region78
          $region83: #{mgtst_forward.8} parent=75 // loop_exit
            _
        $region76: #{mgtst_forward.8} parent=71 // pred_fallthru
          _
        // Predicated region
        $region84: #{mgtst_forward.8} parent=71 // pred_check
          _
        $region85: #{mgtst_forward.8} parent=71 // pred_check_branch
          %622 = sbr.rel target = $region87
        $region86: #{mgtst_forward.8} parent=71 // pred_region
          _
        $region87: #{mgtst_forward.8} parent=71 // pred_fallthru
          _
        // Predicated region
        $region88: #{mgtst_forward.8} parent=71 // pred_check
          _
        $region89: #{mgtst_forward.8} parent=71 // pred_check_branch
          %625 = sbr.rel (0) target = $region91
        $region90: #{mgtst_forward.8} parent=71 // pred_region
          %626 = vsyncadd [#allocation3], 512
        $region91: #{mgtst_forward.8} parent=71 // pred_fallthru
          _
        %s627 = smul.u32 8, 4
        %s628 = smul.u32 %s627, 1
        %s629 = sshll.u32 %s628, 4
        %630 = dma.done [#allocation3], %s629
        %vm631 = vcmask 27648
        %632 = vst.msk [vmem:[#allocation2] sm:$0xf] %vm631, 0.0
        %633 = vst.msk [vmem:[#allocation2 + $0x4] sm:$0xf] %vm631, 0.0
        %634 = vst.msk [vmem:[#allocation2 + $0x8] sm:$0xf] %vm631, 0.0
        %635 = vst.msk [vmem:[#allocation2 + $0xc] sm:$0xf] %vm631, 0.0
        %636 = vst.msk [vmem:[#allocation2 + $0x10] sm:$0xf] %vm631, 0.0
        %637 = vst.msk [vmem:[#allocation2 + $0x14] sm:$0xf] %vm631, 0.0
        %638 = vst.msk [vmem:[#allocation2 + $0x18] sm:$0xf] %vm631, 0.0
        %639 = vst.msk [vmem:[#allocation2 + $0x1c] sm:$0xf] %vm631, 0.0
        %640 = vst.msk [vmem:[#allocation2 + $0x20] sm:$0xf] %vm631, 0.0
        %641 = vst.msk [vmem:[#allocation2 + $0x24] sm:$0xf] %vm631, 0.0
        %642 = vst.msk [vmem:[#allocation2 + $0x28] sm:$0xf] %vm631, 0.0
        %643 = vst.msk [vmem:[#allocation2 + $0x2c] sm:$0xf] %vm631, 0.0
        %644 = vst.msk [vmem:[#allocation2 + $0x30] sm:$0xf] %vm631, 0.0
        %645 = vst.msk [vmem:[#allocation2 + $0x34] sm:$0xf] %vm631, 0.0
        %646 = vst.msk [vmem:[#allocation2 + $0x38] sm:$0xf] %vm631, 0.0
        %647 = vst.msk [vmem:[#allocation2 + $0x3c] sm:$0xf] %vm631, 0.0
        %648 = vst.msk [vmem:[#allocation2 + $0x40] sm:$0xf] %vm631, 0.0
        %649 = vst.msk [vmem:[#allocation2 + $0x44] sm:$0xf] %vm631, 0.0
        %650 = vst.msk [vmem:[#allocation2 + $0x48] sm:$0xf] %vm631, 0.0
        %651 = vst.msk [vmem:[#allocation2 + $0x4c] sm:$0xf] %vm631, 0.0
        %652 = vst.msk [vmem:[#allocation2 + $0x50] sm:$0xf] %vm631, 0.0
        %653 = vst.msk [vmem:[#allocation2 + $0x54] sm:$0xf] %vm631, 0.0
        %654 = vst.msk [vmem:[#allocation2 + $0x58] sm:$0xf] %vm631, 0.0
        %655 = vst.msk [vmem:[#allocation2 + $0x5c] sm:$0xf] %vm631, 0.0
        %656 = vst.msk [vmem:[#allocation2 + $0x60] sm:$0xf] %vm631, 0.0
        %657 = vst.msk [vmem:[#allocation2 + $0x64] sm:$0xf] %vm631, 0.0
        %658 = vst.msk [vmem:[#allocation2 + $0x68] sm:$0xf] %vm631, 0.0
        %659 = vst.msk [vmem:[#allocation2 + $0x6c] sm:$0xf] %vm631, 0.0
        %660 = vst.msk [vmem:[#allocation2 + $0x70] sm:$0xf] %vm631, 0.0
        %661 = vst.msk [vmem:[#allocation2 + $0x74] sm:$0xf] %vm631, 0.0
        %662 = vst.msk [vmem:[#allocation2 + $0x78] sm:$0xf] %vm631, 0.0
        %663 = vst.msk [vmem:[#allocation2 + $0x7c] sm:$0xf] %vm631, 0.0
      $region72: #{mgtst_forward.8} parent=67 // pred_fallthru
        _
      %v664 = vld [vmem:[%s13] sm:$0xf]
      %v665 = vld [vmem:[%s13 + $0x4] sm:$0xf]
      %v666 = vld [vmem:[%s13 + $0x8] sm:$0xf]
      %v667 = vld [vmem:[%s13 + $0xc] sm:$0xf]
      %v668 = vld [vmem:[%s13 + $0x10] sm:$0xf]
      %v669 = vld [vmem:[%s13 + $0x14] sm:$0xf]
      %v670 = vld [vmem:[%s13 + $0x18] sm:$0xf]
      %v671 = vld [vmem:[%s13 + $0x1c] sm:$0xf]
      %680 = vst [vmem:[#allocation1] ss:$2 sm:$0xff] %v664
      %s681 = scalar_lea.vmem [#allocation1], 1
      %682 = vst [vmem:[%s681] ss:$2 sm:$0xff] %v665
      %s683 = scalar_lea.vmem [#allocation1], 16
      %684 = vst [vmem:[%s683] ss:$2 sm:$0xff] %v666
      %s685 = scalar_lea.vmem [#allocation1], 17
      %686 = vst [vmem:[%s685] ss:$2 sm:$0xff] %v667
      %s687 = scalar_lea.vmem [#allocation1], 32
      %688 = vst [vmem:[%s687] ss:$2 sm:$0xff] %v668
      %s689 = scalar_lea.vmem [#allocation1], 33
      %690 = vst [vmem:[%s689] ss:$2 sm:$0xff] %v669
      %s691 = scalar_lea.vmem [#allocation1], 48
      %692 = vst [vmem:[%s691] ss:$2 sm:$0xff] %v670
      %s693 = scalar_lea.vmem [#allocation1], 49
      %694 = vst [vmem:[%s693] ss:$2 sm:$0xff] %v671
      %v695 = vld.sshfl [vmem:[#allocation1] sm:$0xff pattern:$0x75316420]
      %v696 = vld.sshfl [vmem:[#allocation1 + $0x10] sm:$0xff pattern:$0x75316420]
      %v697 = vld.sshfl [vmem:[#allocation1 + $0x20] sm:$0xff pattern:$0x75316420]
      %v698 = vld.sshfl [vmem:[#allocation1 + $0x30] sm:$0xff pattern:$0x75316420]
      %v703 = vpack.c.bf16 %v696, %v695
      %v704 = vpack.c.bf16 %v698, %v697
      %v705 = vld [vmem:[%s557] sm:$0xf]
      %v706 = vld [vmem:[%s557 + $0x4] sm:$0xf]
      %v707 = vld [vmem:[%s557 + $0x8] sm:$0xf]
      %v708 = vld [vmem:[%s557 + $0xc] sm:$0xf]
      %v709 = vld [vmem:[%s560] sm:$0x1]
      %v711 = vperm.slane %v709, 0
      %v717 = vunpack.c.l.b16 %v705
      %v718 = vunpack.c.l.b16 %v706
      %v719 = vunpack.c.l.b16 %v707
      %v720 = vunpack.c.l.b16 %v708
      %v721 = vpack.c.b16 %v718, %v717
      %v722 = vpack.c.b16 %v720, %v719
      %vm725 = vcmask 261120
      %v727 = vsel %vm725, %v703, 0
      %v730 = vsel %vm725, %v704, 0
      %732 = vmatpush.bf16.msra.mxu0 0
      %733 = vmatpush.bf16.msra.mxu0 0
      %734 = vmatpush.bf16.msra.mxu0 0
      %735 = vmatpush.bf16.msra.mxu0 0
      %736 = vmatpush.bf16.msra.mxu0 0
      %737 = vmatpush.bf16.msra.mxu0 0
      %738 = vmatpush.bf16.msra.mxu0 %v722
      %739 = vmatpush.bf16.msra.mxu0 %v721
      %740 = vmatmul.bf16.gmra.mxu0 %v727
      %v741 = vpop.f32.mrf.mxu0
      %v742 = vadd.f32 %v711, %v741
      %v743 = vpop.f32.mrf.mxu0
      %v744 = vadd.f32 %v711, %v743
      %745 = vmatmul.bf16.gmra.mxu0 %v730
      %v746 = vpop.f32.mrf.mxu0
      %v747 = vadd.f32 %v711, %v746
      %v748 = vpop.f32.mrf.mxu0
      %v749 = vadd.f32 %v711, %v748
      %750 = vdwg.mxu0
      %v751 = vpack.c.bf16 %v742, %v742
      %v752 = vpack.c.bf16 %v744, %v744
      %v753 = vpack.c.bf16 %v747, %v747
      %v754 = vpack.c.bf16 %v749, %v749
      %v759 = vrot.slane %v751, 2
      %v760 = vrot.slane %v752, 2
      %v761 = vrot.slane %v753, 2
      %v762 = vrot.slane %v754, 2
      %vm763 = vcmask 1041408
      %v766 = vsel %vm763, %v751, %v759
      %vm767 = vcmask 1043458
      %v768 = vsel %vm767, %v751, %v759
      %v770 = vrot.slane %v768, 2
      %v773 = vsel %vm763, %v752, %v760
      %v774 = vsel %vm767, %v752, %v760
      %v776 = vrot.slane %v774, 2
      %v779 = vsel %vm763, %v753, %v761
      %v780 = vsel %vm767, %v753, %v761
      %v782 = vrot.slane %v780, 2
      %v785 = vsel %vm763, %v754, %v762
      %v786 = vsel %vm767, %v754, %v762
      %v788 = vrot.slane %v786, 2
      %v789 = vld [vmem:[%s565] sm:$0xf]
      %v790 = vld [vmem:[%s565 + $0x4] sm:$0xf]
      %v791 = vld [vmem:[%s565 + $0x8] sm:$0xf]
      %v792 = vld [vmem:[%s565 + $0xc] sm:$0xf]
      %v793 = vld [vmem:[#allocation2] sm:$0xf]
      %v794 = vld [vmem:[#allocation2 + $0x4] sm:$0xf]
      %v795 = vld [vmem:[#allocation2 + $0x8] sm:$0xf]
      %v796 = vld [vmem:[#allocation2 + $0xc] sm:$0xf]
      %v797 = vld [vmem:[#allocation2 + $0x10] sm:$0xf]
      %v798 = vld [vmem:[#allocation2 + $0x14] sm:$0xf]
      %v799 = vld [vmem:[#allocation2 + $0x18] sm:$0xf]
      %v800 = vld [vmem:[#allocation2 + $0x1c] sm:$0xf]
      %801 = vst [vmem:[#allocation1] ss:$4 sm:$0xff] %v766
      %v802 = vld.sshfl [vmem:[#allocation1] sm:$0xff pattern:$0x73625140]
      %804 = vrot.lane.b32.xlu0 %v802, 96
      %v805 = vpop.permute.xlu0 %804
      %vm806 = vcmask 64512
      %v807 = vsel %vm806, %v766, 0
      %v810 = vsel %vm806, %v805, 0
      %812 = vmatpush.bf16.xpose.msra.mxu0 0
      %813 = vmatpush.bf16.xpose.msra.mxu0 0
      %814 = vmatpush.bf16.xpose.msra.mxu0 0
      %815 = vmatpush.bf16.xpose.msra.mxu0 0
      %816 = vmatpush.bf16.xpose.msra.mxu0 0
      %817 = vmatpush.bf16.xpose.msra.mxu0 0
      %818 = vmatpush.bf16.xpose.msra.mxu0 0
      %819 = vmatpush.bf16.xpose.msra.mxu0 %v810
      %820 = vmatmul.bf16.gmra.mxu0 %v807
      %v821 = vpop.f32.mrf.mxu0
      %v822 = vadd.f32 %v793, %v821
      %v823 = vpop.f32.mrf.mxu0
      %824 = vdwg.mxu0
      %826 = vst [vmem:[#allocation1] ss:$4 sm:$0xff] %v770
      %v827 = vld.sshfl [vmem:[#allocation1] sm:$0xff pattern:$0x73625140]
      %829 = vrot.lane.b32.xlu0 %v827, 96
      %v830 = vpop.permute.xlu0 %829
      %v831 = vsel %vm806, %v770, 0
      %v834 = vsel %vm806, %v830, 0
      %836 = vmatpush.bf16.xpose.msra.mxu0 0
      %837 = vmatpush.bf16.xpose.msra.mxu0 0
      %838 = vmatpush.bf16.xpose.msra.mxu0 0
      %839 = vmatpush.bf16.xpose.msra.mxu0 0
      %840 = vmatpush.bf16.xpose.msra.mxu0 0
      %841 = vmatpush.bf16.xpose.msra.mxu0 0
      %842 = vmatpush.bf16.xpose.msra.mxu0 0
      %843 = vmatpush.bf16.xpose.msra.mxu0 %v834
      %844 = vmatmul.bf16.gmra.mxu0 %v831
      %v845 = vpop.f32.mrf.mxu0
      %v846 = vadd.f32 %v794, %v845
      %v847 = vpop.f32.mrf.mxu0
      %848 = vdwg.mxu0
      %849 = vst [vmem:[#allocation1] ss:$4 sm:$0xff] %v773
      %v850 = vld.sshfl [vmem:[#allocation1] sm:$0xff pattern:$0x73625140]
      %852 = vrot.lane.b32.xlu0 %v850, 96
      %v853 = vpop.permute.xlu0 %852
      %v854 = vsel %vm806, %v773, 0
      %v857 = vsel %vm806, %v853, 0
      %859 = vmatpush.bf16.xpose.msra.mxu0 0
      %860 = vmatpush.bf16.xpose.msra.mxu0 0
      %861 = vmatpush.bf16.xpose.msra.mxu0 0
      %862 = vmatpush.bf16.xpose.msra.mxu0 0
      %863 = vmatpush.bf16.xpose.msra.mxu0 0
      %864 = vmatpush.bf16.xpose.msra.mxu0 0
      %865 = vmatpush.bf16.xpose.msra.mxu0 0
      %866 = vmatpush.bf16.xpose.msra.mxu0 %v857
      %867 = vmatmul.bf16.gmra.mxu0 %v854
      %v868 = vpop.f32.mrf.mxu0
      %v869 = vadd.f32 %v795, %v868
      %v870 = vpop.f32.mrf.mxu0
      %871 = vdwg.mxu0
      %873 = vst [vmem:[#allocation1] ss:$4 sm:$0xff] %v776
      %v874 = vld.sshfl [vmem:[#allocation1] sm:$0xff pattern:$0x73625140]
      %876 = vrot.lane.b32.xlu0 %v874, 96
      %v877 = vpop.permute.xlu0 %876
      %v878 = vsel %vm806, %v776, 0
      %v881 = vsel %vm806, %v877, 0
      %883 = vmatpush.bf16.xpose.msra.mxu0 0
      %884 = vmatpush.bf16.xpose.msra.mxu0 0
      %885 = vmatpush.bf16.xpose.msra.mxu0 0
      %886 = vmatpush.bf16.xpose.msra.mxu0 0
      %887 = vmatpush.bf16.xpose.msra.mxu0 0
      %888 = vmatpush.bf16.xpose.msra.mxu0 0
      %889 = vmatpush.bf16.xpose.msra.mxu0 0
      %890 = vmatpush.bf16.xpose.msra.mxu0 %v881
      %891 = vmatmul.bf16.gmra.mxu0 %v878
      %v892 = vpop.f32.mrf.mxu0
      %v893 = vadd.f32 %v796, %v892
      %v894 = vpop.f32.mrf.mxu0
      %895 = vdwg.mxu0
      %896 = vst [vmem:[#allocation1] ss:$4 sm:$0xff] %v779
      %v897 = vld.sshfl [vmem:[#allocation1] sm:$0xff pattern:$0x73625140]
      %899 = vrot.lane.b32.xlu0 %v897, 96
      %v900 = vpop.permute.xlu0 %899
      %v901 = vsel %vm806, %v779, 0
      %v904 = vsel %vm806, %v900, 0
      %906 = vmatpush.bf16.xpose.msra.mxu0 0
      %907 = vmatpush.bf16.xpose.msra.mxu0 0
      %908 = vmatpush.bf16.xpose.msra.mxu0 0
      %909 = vmatpush.bf16.xpose.msra.mxu0 0
      %910 = vmatpush.bf16.xpose.msra.mxu0 0
      %911 = vmatpush.bf16.xpose.msra.mxu0 0
      %912 = vmatpush.bf16.xpose.msra.mxu0 0
      %913 = vmatpush.bf16.xpose.msra.mxu0 %v904
      %914 = vmatmul.bf16.gmra.mxu0 %v901
      %v915 = vpop.f32.mrf.mxu0
      %v916 = vadd.f32 %v797, %v915
      %v917 = vpop.f32.mrf.mxu0
      %918 = vdwg.mxu0
      %920 = vst [vmem:[#allocation1] ss:$4 sm:$0xff] %v782
      %v921 = vld.sshfl [vmem:[#allocation1] sm:$0xff pattern:$0x73625140]
      %923 = vrot.lane.b32.xlu0 %v921, 96
      %v924 = vpop.permute.xlu0 %923
      %v925 = vsel %vm806, %v782, 0
      %v928 = vsel %vm806, %v924, 0
      %930 = vmatpush.bf16.xpose.msra.mxu0 0
      %931 = vmatpush.bf16.xpose.msra.mxu0 0
      %932 = vmatpush.bf16.xpose.msra.mxu0 0
      %933 = vmatpush.bf16.xpose.msra.mxu0 0
      %934 = vmatpush.bf16.xpose.msra.mxu0 0
      %935 = vmatpush.bf16.xpose.msra.mxu0 0
      %936 = vmatpush.bf16.xpose.msra.mxu0 0
      %937 = vmatpush.bf16.xpose.msra.mxu0 %v928
      %938 = vmatmul.bf16.gmra.mxu0 %v925
      %v939 = vpop.f32.mrf.mxu0
      %v940 = vadd.f32 %v798, %v939
      %v941 = vpop.f32.mrf.mxu0
      %942 = vdwg.mxu0
      %943 = vst [vmem:[#allocation1] ss:$4 sm:$0xff] %v785
      %v944 = vld.sshfl [vmem:[#allocation1] sm:$0xff pattern:$0x73625140]
      %946 = vrot.lane.b32.xlu0 %v944, 96
      %v947 = vpop.permute.xlu0 %946
      %v948 = vsel %vm806, %v785, 0
      %v951 = vsel %vm806, %v947, 0
      %953 = vmatpush.bf16.xpose.msra.mxu0 0
      %954 = vmatpush.bf16.xpose.msra.mxu0 0
      %955 = vmatpush.bf16.xpose.msra.mxu0 0
      %956 = vmatpush.bf16.xpose.msra.mxu0 0
      %957 = vmatpush.bf16.xpose.msra.mxu0 0
      %958 = vmatpush.bf16.xpose.msra.mxu0 0
      %959 = vmatpush.bf16.xpose.msra.mxu0 0
      %960 = vmatpush.bf16.xpose.msra.mxu0 %v951
      %961 = vmatmul.bf16.gmra.mxu0 %v948
      %v962 = vpop.f32.mrf.mxu0
      %v963 = vadd.f32 %v799, %v962
      %v964 = vpop.f32.mrf.mxu0
      %965 = vdwg.mxu0
      %967 = vst [vmem:[#allocation1] ss:$4 sm:$0xff] %v788
      %v968 = vld.sshfl [vmem:[#allocation1] sm:$0xff pattern:$0x73625140]
      %970 = vrot.lane.b32.xlu0 %v968, 96
      %v971 = vpop.permute.xlu0 %970
      %v972 = vsel %vm806, %v788, 0
      %v975 = vsel %vm806, %v971, 0
      %977 = vmatpush.bf16.xpose.msra.mxu0 0
      %978 = vmatpush.bf16.xpose.msra.mxu0 0
      %979 = vmatpush.bf16.xpose.msra.mxu0 0
      %980 = vmatpush.bf16.xpose.msra.mxu0 0
      %981 = vmatpush.bf16.xpose.msra.mxu0 0
      %982 = vmatpush.bf16.xpose.msra.mxu0 0
      %983 = vmatpush.bf16.xpose.msra.mxu0 0
      %984 = vmatpush.bf16.xpose.msra.mxu0 %v975
      %985 = vmatmul.bf16.gmra.mxu0 %v972
      %v986 = vpop.f32.mrf.mxu0
      %v987 = vadd.f32 %v800, %v986
      %v988 = vpop.f32.mrf.mxu0
      %989 = vdwg.mxu0
      %vm990 = vcmask 27648
      %991 = vst.msk [vmem:[#allocation2] sm:$0xf] %vm990, %v822
      %992 = vst.msk [vmem:[#allocation2 + $0x4] sm:$0xf] %vm990, %v846
      %993 = vst.msk [vmem:[#allocation2 + $0x8] sm:$0xf] %vm990, %v869
      %994 = vst.msk [vmem:[#allocation2 + $0xc] sm:$0xf] %vm990, %v893
      %995 = vst.msk [vmem:[#allocation2 + $0x10] sm:$0xf] %vm990, %v916
      %996 = vst.msk [vmem:[#allocation2 + $0x14] sm:$0xf] %vm990, %v940
      %997 = vst.msk [vmem:[#allocation2 + $0x18] sm:$0xf] %vm990, %v963
      %998 = vst.msk [vmem:[#allocation2 + $0x1c] sm:$0xf] %vm990, %v987
      %v999 = vsel %vm990, %v822, -inf
      %1000 = vmax.xlane.f32.xlu0 %v999
      %v1001 = vpop.xlane.xlu0 %1000
      %v1002 = vsel %vm990, %v846, -inf
      %1003 = vmax.xlane.f32.xlu0 %v1002
      %v1004 = vpop.xlane.xlu0 %1003
      %v1005 = vsel %vm990, %v869, -inf
      %1006 = vmax.xlane.f32.xlu0 %v1005
      %v1007 = vpop.xlane.xlu0 %1006
      %v1008 = vsel %vm990, %v893, -inf
      %1009 = vmax.xlane.f32.xlu0 %v1008
      %v1010 = vpop.xlane.xlu0 %1009
      %v1011 = vsel %vm990, %v916, -inf
      %1012 = vmax.xlane.f32.xlu0 %v1011
      %v1013 = vpop.xlane.xlu0 %1012
      %v1014 = vsel %vm990, %v940, -inf
      %1015 = vmax.xlane.f32.xlu0 %v1014
      %v1016 = vpop.xlane.xlu0 %1015
      %v1017 = vsel %vm990, %v963, -inf
      %1018 = vmax.xlane.f32.xlu0 %v1017
      %v1019 = vpop.xlane.xlu0 %1018
      %v1020 = vsel %vm990, %v987, -inf
      %1021 = vmax.xlane.f32.xlu0 %v1020
      %v1022 = vpop.xlane.xlu0 %1021
      %v1023 = vsub.f32 %v822, %v1001
      %v1024 = vsub.f32 %v846, %v1004
      %v1025 = vsub.f32 %v869, %v1007
      %v1026 = vsub.f32 %v893, %v1010
      %v1027 = vsub.f32 %v916, %v1013
      %v1028 = vsub.f32 %v940, %v1016
      %v1029 = vsub.f32 %v963, %v1019
      %v1030 = vsub.f32 %v987, %v1022
      %v1031 = vmul.f32 %v1023, 1.442695
      %v1032 = vpow.pop %v1031
      %v1033 = vmul.f32 %v1024, 1.442695
      %v1034 = vpow.pop %v1033
      %v1035 = vmul.f32 %v1025, 1.442695
      %v1036 = vpow.pop %v1035
      %v1037 = vmul.f32 %v1026, 1.442695
      %v1038 = vpow.pop %v1037
      %v1039 = vmul.f32 %v1027, 1.442695
      %v1040 = vpow.pop %v1039
      %v1041 = vmul.f32 %v1028, 1.442695
      %v1042 = vpow.pop %v1041
      %v1043 = vmul.f32 %v1029, 1.442695
      %v1044 = vpow.pop %v1043
      %v1045 = vmul.f32 %v1030, 1.442695
      %v1046 = vpow.pop %v1045
      %v1047 = vsel %vm990, %v1032, 0.0
      %1048 = vadd.xlane.f32.xlu0 %v1047
      %v1049 = vpop.xlane.xlu0 %1048
      %v1050 = vsel %vm990, %v1034, 0.0
      %1051 = vadd.xlane.f32.xlu0 %v1050
      %v1052 = vpop.xlane.xlu0 %1051
      %v1053 = vsel %vm990, %v1036, 0.0
      %1054 = vadd.xlane.f32.xlu0 %v1053
      %v1055 = vpop.xlane.xlu0 %1054
      %v1056 = vsel %vm990, %v1038, 0.0
      %1057 = vadd.xlane.f32.xlu0 %v1056
      %v1058 = vpop.xlane.xlu0 %1057
      %v1059 = vsel %vm990, %v1040, 0.0
      %1060 = vadd.xlane.f32.xlu0 %v1059
      %v1061 = vpop.xlane.xlu0 %1060
      %v1062 = vsel %vm990, %v1042, 0.0
      %1063 = vadd.xlane.f32.xlu0 %v1062
      %v1064 = vpop.xlane.xlu0 %1063
      %v1065 = vsel %vm990, %v1044, 0.0
      %1066 = vadd.xlane.f32.xlu0 %v1065
      %v1067 = vpop.xlane.xlu0 %1066
      %v1068 = vsel %vm990, %v1046, 0.0
      %1069 = vadd.xlane.f32.xlu0 %v1068
      %v1070 = vpop.xlane.xlu0 %1069
      %v1071 = vrcp.pop %v1049
      %v1072 = vmul.f32 %v1049, %v1071
      %v1073 = vsub.f32 1.0, %v1072
      %v1074 = vmul.f32 %v1071, %v1073
      %v1075 = vadd.f32 %v1071, %v1074
      %vm1076 = vweird.f32 %v1049
      %vm1077 = vweird.f32 %v1071
      %vm1078 = vmor %vm1076, %vm1077
      %v1079 = vsel %vm1078, %v1071, %v1075
      %v1080 = vand.u32 2147483647, %v1049
      %vm1081 = vcmp.eq.f32.partialorder %v1080, 8.507059e+37
      %v1082 = vand.u32 %v1049, 2147483648
      %v1083 = vor.u32 1.1754944e-38, %v1082
      %v1084 = vsel %vm1081, %v1083, %v1079
      %v1085 = vmul.f32 %v1032, %v1084
      %v1086 = vrcp.pop %v1052
      %v1087 = vmul.f32 %v1052, %v1086
      %v1088 = vsub.f32 1.0, %v1087
      %v1089 = vmul.f32 %v1086, %v1088
      %v1090 = vadd.f32 %v1086, %v1089
      %vm1091 = vweird.f32 %v1052
      %vm1092 = vweird.f32 %v1086
      %vm1093 = vmor %vm1091, %vm1092
      %v1094 = vsel %vm1093, %v1086, %v1090
      %v1095 = vand.u32 2147483647, %v1052
      %vm1096 = vcmp.eq.f32.partialorder %v1095, 8.507059e+37
      %v1097 = vand.u32 %v1052, 2147483648
      %v1098 = vor.u32 1.1754944e-38, %v1097
      %v1099 = vsel %vm1096, %v1098, %v1094
      %v1100 = vmul.f32 %v1034, %v1099
      %v1101 = vrcp.pop %v1055
      %v1102 = vmul.f32 %v1055, %v1101
      %v1103 = vsub.f32 1.0, %v1102
      %v1104 = vmul.f32 %v1101, %v1103
      %v1105 = vadd.f32 %v1101, %v1104
      %vm1106 = vweird.f32 %v1055
      %vm1107 = vweird.f32 %v1101
      %vm1108 = vmor %vm1106, %vm1107
      %v1109 = vsel %vm1108, %v1101, %v1105
      %v1110 = vand.u32 2147483647, %v1055
      %vm1111 = vcmp.eq.f32.partialorder %v1110, 8.507059e+37
      %v1112 = vand.u32 %v1055, 2147483648
      %v1113 = vor.u32 1.1754944e-38, %v1112
      %v1114 = vsel %vm1111, %v1113, %v1109
      %v1115 = vmul.f32 %v1036, %v1114
      %v1116 = vrcp.pop %v1058
      %v1117 = vmul.f32 %v1058, %v1116
      %v1118 = vsub.f32 1.0, %v1117
      %v1119 = vmul.f32 %v1116, %v1118
      %v1120 = vadd.f32 %v1116, %v1119
      %vm1121 = vweird.f32 %v1058
      %vm1122 = vweird.f32 %v1116
      %vm1123 = vmor %vm1121, %vm1122
      %v1124 = vsel %vm1123, %v1116, %v1120
      %v1125 = vand.u32 2147483647, %v1058
      %vm1126 = vcmp.eq.f32.partialorder %v1125, 8.507059e+37
      %v1127 = vand.u32 %v1058, 2147483648
      %v1128 = vor.u32 1.1754944e-38, %v1127
      %v1129 = vsel %vm1126, %v1128, %v1124
      %v1130 = vmul.f32 %v1038, %v1129
      %v1131 = vrcp.pop %v1061
      %v1132 = vmul.f32 %v1061, %v1131
      %v1133 = vsub.f32 1.0, %v1132
      %v1134 = vmul.f32 %v1131, %v1133
      %v1135 = vadd.f32 %v1131, %v1134
      %vm1136 = vweird.f32 %v1061
      %vm1137 = vweird.f32 %v1131
      %vm1138 = vmor %vm1136, %vm1137
      %v1139 = vsel %vm1138, %v1131, %v1135
      %v1140 = vand.u32 2147483647, %v1061
      %vm1141 = vcmp.eq.f32.partialorder %v1140, 8.507059e+37
      %v1142 = vand.u32 %v1061, 2147483648
      %v1143 = vor.u32 1.1754944e-38, %v1142
      %v1144 = vsel %vm1141, %v1143, %v1139
      %v1145 = vmul.f32 %v1040, %v1144
      %v1146 = vrcp.pop %v1064
      %v1147 = vmul.f32 %v1064, %v1146
      %v1148 = vsub.f32 1.0, %v1147
      %v1149 = vmul.f32 %v1146, %v1148
      %v1150 = vadd.f32 %v1146, %v1149
      %vm1151 = vweird.f32 %v1064
      %vm1152 = vweird.f32 %v1146
      %vm1153 = vmor %vm1151, %vm1152
      %v1154 = vsel %vm1153, %v1146, %v1150
      %v1155 = vand.u32 2147483647, %v1064
      %vm1156 = vcmp.eq.f32.partialorder %v1155, 8.507059e+37
      %v1157 = vand.u32 %v1064, 2147483648
      %v1158 = vor.u32 1.1754944e-38, %v1157
      %v1159 = vsel %vm1156, %v1158, %v1154
      %v1160 = vmul.f32 %v1042, %v1159
      %v1161 = vrcp.pop %v1067
      %v1162 = vmul.f32 %v1067, %v1161
      %v1163 = vsub.f32 1.0, %v1162
      %v1164 = vmul.f32 %v1161, %v1163
      %v1165 = vadd.f32 %v1161, %v1164
      %vm1166 = vweird.f32 %v1067
      %vm1167 = vweird.f32 %v1161
      %vm1168 = vmor %vm1166, %vm1167
      %v1169 = vsel %vm1168, %v1161, %v1165
      %v1170 = vand.u32 2147483647, %v1067
      %vm1171 = vcmp.eq.f32.partialorder %v1170, 8.507059e+37
      %v1172 = vand.u32 %v1067, 2147483648
      %v1173 = vor.u32 1.1754944e-38, %v1172
      %v1174 = vsel %vm1171, %v1173, %v1169
      %v1175 = vmul.f32 %v1044, %v1174
      %v1176 = vrcp.pop %v1070
      %v1177 = vmul.f32 %v1070, %v1176
      %v1178 = vsub.f32 1.0, %v1177
      %v1179 = vmul.f32 %v1176, %v1178
      %v1180 = vadd.f32 %v1176, %v1179
      %vm1181 = vweird.f32 %v1070
      %vm1182 = vweird.f32 %v1176
      %vm1183 = vmor %vm1181, %vm1182
      %v1184 = vsel %vm1183, %v1176, %v1180
      %v1185 = vand.u32 2147483647, %v1070
      %vm1186 = vcmp.eq.f32.partialorder %v1185, 8.507059e+37
      %v1187 = vand.u32 %v1070, 2147483648
      %v1188 = vor.u32 1.1754944e-38, %v1187
      %v1189 = vsel %vm1186, %v1188, %v1184
      %v1190 = vmul.f32 %v1046, %v1189
      %v1191 = vpack.c.bf16 %v1085, %v1085
      %v1192 = vpack.c.bf16 %v1100, %v1100
      %v1193 = vpack.c.bf16 %v1115, %v1115
      %v1194 = vpack.c.bf16 %v1130, %v1130
      %v1195 = vpack.c.bf16 %v1145, %v1145
      %v1196 = vpack.c.bf16 %v1160, %v1160
      %v1197 = vpack.c.bf16 %v1175, %v1175
      %v1198 = vpack.c.bf16 %v1190, %v1190
      %1199 = vst [vmem:[#allocation1] ss:$4 sm:$0xff] %v766
      %v1200 = vld.sshfl [vmem:[#allocation1] sm:$0xff pattern:$0x73625140]
      %1202 = vrot.lane.b32.xlu0 %v1200, 64
      %v1203 = vpop.permute.xlu0 %1202
      %vm1204 = vcmask 31744
      %v1206 = vsel %vm1204, %v1191, 0
      %v1209 = vsel %vm763, %v1203, 0
      %1211 = vmatpush.bf16.msra.mxu0 0
      %1212 = vmatpush.bf16.msra.mxu0 0
      %1213 = vmatpush.bf16.msra.mxu0 0
      %1214 = vmatpush.bf16.msra.mxu0 0
      %1215 = vmatpush.bf16.msra.mxu0 0
      %1216 = vmatpush.bf16.msra.mxu0 0
      %1217 = vmatpush.bf16.msra.mxu0 0
      %1218 = vmatpush.bf16.msra.mxu0 %v1209
      %1219 = vmatmul.bf16.gmra.mxu0 %v1206
      %v1220 = vpop.f32.mrf.mxu0
      %v1221 = vadd.f32 0.0, %v1220
      %v1222 = vpop.f32.mrf.mxu0
      %1223 = vdwg.mxu0
      %1224 = vst [vmem:[#allocation1] ss:$4 sm:$0xff] %v770
      %v1225 = vld.sshfl [vmem:[#allocation1] sm:$0xff pattern:$0x73625140]
      %1227 = vrot.lane.b32.xlu0 %v1225, 64
      %v1228 = vpop.permute.xlu0 %1227
      %v1230 = vsel %vm1204, %v1192, 0
      %v1233 = vsel %vm763, %v1228, 0
      %1235 = vmatpush.bf16.msra.mxu0 0
      %1236 = vmatpush.bf16.msra.mxu0 0
      %1237 = vmatpush.bf16.msra.mxu0 0
      %1238 = vmatpush.bf16.msra.mxu0 0
      %1239 = vmatpush.bf16.msra.mxu0 0
      %1240 = vmatpush.bf16.msra.mxu0 0
      %1241 = vmatpush.bf16.msra.mxu0 0
      %1242 = vmatpush.bf16.msra.mxu0 %v1233
      %1243 = vmatmul.bf16.gmra.mxu0 %v1230
      %v1244 = vpop.f32.mrf.mxu0
      %v1245 = vadd.f32 0.0, %v1244
      %v1246 = vpop.f32.mrf.mxu0
      %1247 = vdwg.mxu0
      %1248 = vst [vmem:[#allocation1] ss:$4 sm:$0xff] %v773
      %v1249 = vld.sshfl [vmem:[#allocation1] sm:$0xff pattern:$0x73625140]
      %1251 = vrot.lane.b32.xlu0 %v1249, 64
      %v1252 = vpop.permute.xlu0 %1251
      %v1254 = vsel %vm1204, %v1193, 0
      %v1257 = vsel %vm763, %v1252, 0
      %1259 = vmatpush.bf16.msra.mxu0 0
      %1260 = vmatpush.bf16.msra.mxu0 0
      %1261 = vmatpush.bf16.msra.mxu0 0
      %1262 = vmatpush.bf16.msra.mxu0 0
      %1263 = vmatpush.bf16.msra.mxu0 0
      %1264 = vmatpush.bf16.msra.mxu0 0
      %1265 = vmatpush.bf16.msra.mxu0 0
      %1266 = vmatpush.bf16.msra.mxu0 %v1257
      %1267 = vmatmul.bf16.gmra.mxu0 %v1254
      %v1268 = vpop.f32.mrf.mxu0
      %v1269 = vadd.f32 0.0, %v1268
      %v1270 = vpop.f32.mrf.mxu0
      %1271 = vdwg.mxu0
      %1272 = vst [vmem:[#allocation1] ss:$4 sm:$0xff] %v776
      %v1273 = vld.sshfl [vmem:[#allocation1] sm:$0xff pattern:$0x73625140]
      %1275 = vrot.lane.b32.xlu0 %v1273, 64
      %v1276 = vpop.permute.xlu0 %1275
      %v1278 = vsel %vm1204, %v1194, 0
      %v1281 = vsel %vm763, %v1276, 0
      %1283 = vmatpush.bf16.msra.mxu0 0
      %1284 = vmatpush.bf16.msra.mxu0 0
      %1285 = vmatpush.bf16.msra.mxu0 0
      %1286 = vmatpush.bf16.msra.mxu0 0
      %1287 = vmatpush.bf16.msra.mxu0 0
      %1288 = vmatpush.bf16.msra.mxu0 0
      %1289 = vmatpush.bf16.msra.mxu0 0
      %1290 = vmatpush.bf16.msra.mxu0 %v1281
      %1291 = vmatmul.bf16.gmra.mxu0 %v1278
      %v1292 = vpop.f32.mrf.mxu0
      %v1293 = vadd.f32 0.0, %v1292
      %v1294 = vpop.f32.mrf.mxu0
      %1295 = vdwg.mxu0
      %1296 = vst [vmem:[#allocation1] ss:$4 sm:$0xff] %v779
      %v1297 = vld.sshfl [vmem:[#allocation1] sm:$0xff pattern:$0x73625140]
      %1299 = vrot.lane.b32.xlu0 %v1297, 64
      %v1300 = vpop.permute.xlu0 %1299
      %v1302 = vsel %vm1204, %v1195, 0
      %v1305 = vsel %vm763, %v1300, 0
      %1307 = vmatpush.bf16.msra.mxu0 0
      %1308 = vmatpush.bf16.msra.mxu0 0
      %1309 = vmatpush.bf16.msra.mxu0 0
      %1310 = vmatpush.bf16.msra.mxu0 0
      %1311 = vmatpush.bf16.msra.mxu0 0
      %1312 = vmatpush.bf16.msra.mxu0 0
      %1313 = vmatpush.bf16.msra.mxu0 0
      %1314 = vmatpush.bf16.msra.mxu0 %v1305
      %1315 = vmatmul.bf16.gmra.mxu0 %v1302
      %v1316 = vpop.f32.mrf.mxu0
      %v1317 = vadd.f32 0.0, %v1316
      %v1318 = vpop.f32.mrf.mxu0
      %1319 = vdwg.mxu0
      %1320 = vst [vmem:[#allocation1] ss:$4 sm:$0xff] %v782
      %v1321 = vld.sshfl [vmem:[#allocation1] sm:$0xff pattern:$0x73625140]
      %1323 = vrot.lane.b32.xlu0 %v1321, 64
      %v1324 = vpop.permute.xlu0 %1323
      %v1326 = vsel %vm1204, %v1196, 0
      %v1329 = vsel %vm763, %v1324, 0
      %1331 = vmatpush.bf16.msra.mxu0 0
      %1332 = vmatpush.bf16.msra.mxu0 0
      %1333 = vmatpush.bf16.msra.mxu0 0
      %1334 = vmatpush.bf16.msra.mxu0 0
      %1335 = vmatpush.bf16.msra.mxu0 0
      %1336 = vmatpush.bf16.msra.mxu0 0
      %1337 = vmatpush.bf16.msra.mxu0 0
      %1338 = vmatpush.bf16.msra.mxu0 %v1329
      %1339 = vmatmul.bf16.gmra.mxu0 %v1326
      %v1340 = vpop.f32.mrf.mxu0
      %v1341 = vadd.f32 0.0, %v1340
      %v1342 = vpop.f32.mrf.mxu0
      %1343 = vdwg.mxu0
      %1344 = vst [vmem:[#allocation1] ss:$4 sm:$0xff] %v785
      %v1345 = vld.sshfl [vmem:[#allocation1] sm:$0xff pattern:$0x73625140]
      %1347 = vrot.lane.b32.xlu0 %v1345, 64
      %v1348 = vpop.permute.xlu0 %1347
      %v1350 = vsel %vm1204, %v1197, 0
      %v1353 = vsel %vm763, %v1348, 0
      %1355 = vmatpush.bf16.msra.mxu0 0
      %1356 = vmatpush.bf16.msra.mxu0 0
      %1357 = vmatpush.bf16.msra.mxu0 0
      %1358 = vmatpush.bf16.msra.mxu0 0
      %1359 = vmatpush.bf16.msra.mxu0 0
      %1360 = vmatpush.bf16.msra.mxu0 0
      %1361 = vmatpush.bf16.msra.mxu0 0
      %1362 = vmatpush.bf16.msra.mxu0 %v1353
      %1363 = vmatmul.bf16.gmra.mxu0 %v1350
      %v1364 = vpop.f32.mrf.mxu0
      %v1365 = vadd.f32 0.0, %v1364
      %v1366 = vpop.f32.mrf.mxu0
      %1367 = vdwg.mxu0
      %1368 = vst [vmem:[#allocation1] ss:$4 sm:$0xff] %v788
      %v1369 = vld.sshfl [vmem:[#allocation1] sm:$0xff pattern:$0x73625140]
      %1371 = vrot.lane.b32.xlu0 %v1369, 64
      %v1372 = vpop.permute.xlu0 %1371
      %v1374 = vsel %vm1204, %v1198, 0
      %v1377 = vsel %vm763, %v1372, 0
      %1379 = vmatpush.bf16.msra.mxu0 0
      %1380 = vmatpush.bf16.msra.mxu0 0
      %1381 = vmatpush.bf16.msra.mxu0 0
      %1382 = vmatpush.bf16.msra.mxu0 0
      %1383 = vmatpush.bf16.msra.mxu0 0
      %1384 = vmatpush.bf16.msra.mxu0 0
      %1385 = vmatpush.bf16.msra.mxu0 0
      %1386 = vmatpush.bf16.msra.mxu0 %v1377
      %1387 = vmatmul.bf16.gmra.mxu0 %v1374
      %v1388 = vpop.f32.mrf.mxu0
      %v1389 = vadd.f32 0.0, %v1388
      %v1390 = vpop.f32.mrf.mxu0
      %1391 = vdwg.mxu0
      %1400 = vst [vmem:[#allocation1] ss:$2 sm:$0xff] %v1221
      %s1401 = scalar_lea.vmem [#allocation1], 1
      %1402 = vst [vmem:[%s1401] ss:$2 sm:$0xff] %v1245
      %s1403 = scalar_lea.vmem [#allocation1], 16
      %1404 = vst [vmem:[%s1403] ss:$2 sm:$0xff] %v1269
      %s1405 = scalar_lea.vmem [#allocation1], 17
      %1406 = vst [vmem:[%s1405] ss:$2 sm:$0xff] %v1293
      %s1407 = scalar_lea.vmem [#allocation1], 32
      %1408 = vst [vmem:[%s1407] ss:$2 sm:$0xff] %v1317
      %s1409 = scalar_lea.vmem [#allocation1], 33
      %1410 = vst [vmem:[%s1409] ss:$2 sm:$0xff] %v1341
      %s1411 = scalar_lea.vmem [#allocation1], 48
      %1412 = vst [vmem:[%s1411] ss:$2 sm:$0xff] %v1365
      %s1413 = scalar_lea.vmem [#allocation1], 49
      %1414 = vst [vmem:[%s1413] ss:$2 sm:$0xff] %v1389
      %v1415 = vld.sshfl [vmem:[#allocation1] sm:$0xff pattern:$0x75316420]
      %v1416 = vld.sshfl [vmem:[#allocation1 + $0x10] sm:$0xff pattern:$0x75316420]
      %v1417 = vld.sshfl [vmem:[#allocation1 + $0x20] sm:$0xff pattern:$0x75316420]
      %v1418 = vld.sshfl [vmem:[#allocation1 + $0x30] sm:$0xff pattern:$0x75316420]
      %v1423 = vpack.c.bf16 %v1416, %v1415
      %v1424 = vpack.c.bf16 %v1418, %v1417
      %s1425 = scalar_lea.vmem [#allocation2], 32
      %v1426 = vld [vmem:[%s1425] sm:$0xf]
      %v1427 = vld [vmem:[%s1425 + $0x4] sm:$0xf]
      %v1428 = vld [vmem:[%s1425 + $0x8] sm:$0xf]
      %v1429 = vld [vmem:[%s1425 + $0xc] sm:$0xf]
      %v1430 = vld [vmem:[%s1425 + $0x10] sm:$0xf]
      %v1431 = vld [vmem:[%s1425 + $0x14] sm:$0xf]
      %v1432 = vld [vmem:[%s1425 + $0x18] sm:$0xf]
      %v1433 = vld [vmem:[%s1425 + $0x1c] sm:$0xf]
      %1434 = vst [vmem:[#allocation1] ss:$4 sm:$0xff] %v766
      %v1435 = vld.sshfl [vmem:[#allocation1] sm:$0xff pattern:$0x73625140]
      %1437 = vrot.lane.b32.xlu0 %v1435, 120
      %v1438 = vpop.permute.xlu0 %1437
      %1439 = vst [vmem:[#allocation1] ss:$4 sm:$0xff] %v766
      %v1440 = vld.sshfl [vmem:[#allocation1] sm:$0xff pattern:$0x73625140]
      %1442 = vrot.lane.b32.xlu0 %v1440, 88
      %v1443 = vpop.permute.xlu0 %1442
      %v1445 = vsel %vm806, %v1438, 0
      %v1448 = vsel %vm806, %v1443, 0
      %1450 = vmatpush.bf16.xpose.msra.mxu0 0
      %1451 = vmatpush.bf16.xpose.msra.mxu0 0
      %1452 = vmatpush.bf16.xpose.msra.mxu0 0
      %1453 = vmatpush.bf16.xpose.msra.mxu0 0
      %1454 = vmatpush.bf16.xpose.msra.mxu0 0
      %1455 = vmatpush.bf16.xpose.msra.mxu0 0
      %1456 = vmatpush.bf16.xpose.msra.mxu0 0
      %1457 = vmatpush.bf16.xpose.msra.mxu0 %v1448
      %1458 = vmatmul.bf16.gmra.mxu0 %v1445
      %v1459 = vpop.f32.mrf.mxu0
      %v1460 = vadd.f32 %v1426, %v1459
      %v1461 = vpop.f32.mrf.mxu0
      %1462 = vdwg.mxu0
      %1463 = vst [vmem:[#allocation1] ss:$4 sm:$0xff] %v770
      %v1464 = vld.sshfl [vmem:[#allocation1] sm:$0xff pattern:$0x73625140]
      %1466 = vrot.lane.b32.xlu0 %v1464, 120
      %v1467 = vpop.permute.xlu0 %1466
      %1468 = vst [vmem:[#allocation1] ss:$4 sm:$0xff] %v770
      %v1469 = vld.sshfl [vmem:[#allocation1] sm:$0xff pattern:$0x73625140]
      %1471 = vrot.lane.b32.xlu0 %v1469, 88
      %v1472 = vpop.permute.xlu0 %1471
      %v1474 = vsel %vm806, %v1467, 0
      %v1477 = vsel %vm806, %v1472, 0
      %1479 = vmatpush.bf16.xpose.msra.mxu0 0
      %1480 = vmatpush.bf16.xpose.msra.mxu0 0
      %1481 = vmatpush.bf16.xpose.msra.mxu0 0
      %1482 = vmatpush.bf16.xpose.msra.mxu0 0
      %1483 = vmatpush.bf16.xpose.msra.mxu0 0
      %1484 = vmatpush.bf16.xpose.msra.mxu0 0
      %1485 = vmatpush.bf16.xpose.msra.mxu0 0
      %1486 = vmatpush.bf16.xpose.msra.mxu0 %v1477
      %1487 = vmatmul.bf16.gmra.mxu0 %v1474
      %v1488 = vpop.f32.mrf.mxu0
      %v1489 = vadd.f32 %v1427, %v1488
      %v1490 = vpop.f32.mrf.mxu0
      %1491 = vdwg.mxu0
      %1492 = vst [vmem:[#allocation1] ss:$4 sm:$0xff] %v773
      %v1493 = vld.sshfl [vmem:[#allocation1] sm:$0xff pattern:$0x73625140]
      %1495 = vrot.lane.b32.xlu0 %v1493, 120
      %v1496 = vpop.permute.xlu0 %1495
      %1497 = vst [vmem:[#allocation1] ss:$4 sm:$0xff] %v773
      %v1498 = vld.sshfl [vmem:[#allocation1] sm:$0xff pattern:$0x73625140]
      %1500 = vrot.lane.b32.xlu0 %v1498, 88
      %v1501 = vpop.permute.xlu0 %1500
      %v1503 = vsel %vm806, %v1496, 0
      %v1506 = vsel %vm806, %v1501, 0
      %1508 = vmatpush.bf16.xpose.msra.mxu0 0
      %1509 = vmatpush.bf16.xpose.msra.mxu0 0
      %1510 = vmatpush.bf16.xpose.msra.mxu0 0
      %1511 = vmatpush.bf16.xpose.msra.mxu0 0
      %1512 = vmatpush.bf16.xpose.msra.mxu0 0
      %1513 = vmatpush.bf16.xpose.msra.mxu0 0
      %1514 = vmatpush.bf16.xpose.msra.mxu0 0
      %1515 = vmatpush.bf16.xpose.msra.mxu0 %v1506
      %1516 = vmatmul.bf16.gmra.mxu0 %v1503
      %v1517 = vpop.f32.mrf.mxu0
      %v1518 = vadd.f32 %v1428, %v1517
      %v1519 = vpop.f32.mrf.mxu0
      %1520 = vdwg.mxu0
      %1521 = vst [vmem:[#allocation1] ss:$4 sm:$0xff] %v776
      %v1522 = vld.sshfl [vmem:[#allocation1] sm:$0xff pattern:$0x73625140]
      %1524 = vrot.lane.b32.xlu0 %v1522, 120
      %v1525 = vpop.permute.xlu0 %1524
      %1526 = vst [vmem:[#allocation1] ss:$4 sm:$0xff] %v776
      %v1527 = vld.sshfl [vmem:[#allocation1] sm:$0xff pattern:$0x73625140]
      %1529 = vrot.lane.b32.xlu0 %v1527, 88
      %v1530 = vpop.permute.xlu0 %1529
      %v1532 = vsel %vm806, %v1525, 0
      %v1535 = vsel %vm806, %v1530, 0
      %1537 = vmatpush.bf16.xpose.msra.mxu0 0
      %1538 = vmatpush.bf16.xpose.msra.mxu0 0
      %1539 = vmatpush.bf16.xpose.msra.mxu0 0
      %1540 = vmatpush.bf16.xpose.msra.mxu0 0
      %1541 = vmatpush.bf16.xpose.msra.mxu0 0
      %1542 = vmatpush.bf16.xpose.msra.mxu0 0
      %1543 = vmatpush.bf16.xpose.msra.mxu0 0
      %1544 = vmatpush.bf16.xpose.msra.mxu0 %v1535
      %1545 = vmatmul.bf16.gmra.mxu0 %v1532
      %v1546 = vpop.f32.mrf.mxu0
      %v1547 = vadd.f32 %v1429, %v1546
      %v1548 = vpop.f32.mrf.mxu0
      %1549 = vdwg.mxu0
      %1550 = vst [vmem:[#allocation1] ss:$4 sm:$0xff] %v779
      %v1551 = vld.sshfl [vmem:[#allocation1] sm:$0xff pattern:$0x73625140]
      %1553 = vrot.lane.b32.xlu0 %v1551, 120
      %v1554 = vpop.permute.xlu0 %1553
      %1555 = vst [vmem:[#allocation1] ss:$4 sm:$0xff] %v779
      %v1556 = vld.sshfl [vmem:[#allocation1] sm:$0xff pattern:$0x73625140]
      %1558 = vrot.lane.b32.xlu0 %v1556, 88
      %v1559 = vpop.permute.xlu0 %1558
      %v1561 = vsel %vm806, %v1554, 0
      %v1564 = vsel %vm806, %v1559, 0
      %1566 = vmatpush.bf16.xpose.msra.mxu0 0
      %1567 = vmatpush.bf16.xpose.msra.mxu0 0
      %1568 = vmatpush.bf16.xpose.msra.mxu0 0
      %1569 = vmatpush.bf16.xpose.msra.mxu0 0
      %1570 = vmatpush.bf16.xpose.msra.mxu0 0
      %1571 = vmatpush.bf16.xpose.msra.mxu0 0
      %1572 = vmatpush.bf16.xpose.msra.mxu0 0
      %1573 = vmatpush.bf16.xpose.msra.mxu0 %v1564
      %1574 = vmatmul.bf16.gmra.mxu0 %v1561
      %v1575 = vpop.f32.mrf.mxu0
      %v1576 = vadd.f32 %v1430, %v1575
      %v1577 = vpop.f32.mrf.mxu0
      %1578 = vdwg.mxu0
      %1579 = vst [vmem:[#allocation1] ss:$4 sm:$0xff] %v782
      %v1580 = vld.sshfl [vmem:[#allocation1] sm:$0xff pattern:$0x73625140]
      %1582 = vrot.lane.b32.xlu0 %v1580, 120
      %v1583 = vpop.permute.xlu0 %1582
      %1584 = vst [vmem:[#allocation1] ss:$4 sm:$0xff] %v782
      %v1585 = vld.sshfl [vmem:[#allocation1] sm:$0xff pattern:$0x73625140]
      %1587 = vrot.lane.b32.xlu0 %v1585, 88
      %v1588 = vpop.permute.xlu0 %1587
      %v1590 = vsel %vm806, %v1583, 0
      %v1593 = vsel %vm806, %v1588, 0
      %1595 = vmatpush.bf16.xpose.msra.mxu0 0
      %1596 = vmatpush.bf16.xpose.msra.mxu0 0
      %1597 = vmatpush.bf16.xpose.msra.mxu0 0
      %1598 = vmatpush.bf16.xpose.msra.mxu0 0
      %1599 = vmatpush.bf16.xpose.msra.mxu0 0
      %1600 = vmatpush.bf16.xpose.msra.mxu0 0
      %1601 = vmatpush.bf16.xpose.msra.mxu0 0
      %1602 = vmatpush.bf16.xpose.msra.mxu0 %v1593
      %1603 = vmatmul.bf16.gmra.mxu0 %v1590
      %v1604 = vpop.f32.mrf.mxu0
      %v1605 = vadd.f32 %v1431, %v1604
      %v1606 = vpop.f32.mrf.mxu0
      %1607 = vdwg.mxu0
      %1608 = vst [vmem:[#allocation1] ss:$4 sm:$0xff] %v785
      %v1609 = vld.sshfl [vmem:[#allocation1] sm:$0xff pattern:$0x73625140]
      %1611 = vrot.lane.b32.xlu0 %v1609, 120
      %v1612 = vpop.permute.xlu0 %1611
      %1613 = vst [vmem:[#allocation1] ss:$4 sm:$0xff] %v785
      %v1614 = vld.sshfl [vmem:[#allocation1] sm:$0xff pattern:$0x73625140]
      %1616 = vrot.lane.b32.xlu0 %v1614, 88
      %v1617 = vpop.permute.xlu0 %1616
      %v1619 = vsel %vm806, %v1612, 0
      %v1622 = vsel %vm806, %v1617, 0
      %1624 = vmatpush.bf16.xpose.msra.mxu0 0
      %1625 = vmatpush.bf16.xpose.msra.mxu0 0
      %1626 = vmatpush.bf16.xpose.msra.mxu0 0
      %1627 = vmatpush.bf16.xpose.msra.mxu0 0
      %1628 = vmatpush.bf16.xpose.msra.mxu0 0
      %1629 = vmatpush.bf16.xpose.msra.mxu0 0
      %1630 = vmatpush.bf16.xpose.msra.mxu0 0
      %1631 = vmatpush.bf16.xpose.msra.mxu0 %v1622
      %1632 = vmatmul.bf16.gmra.mxu0 %v1619
      %v1633 = vpop.f32.mrf.mxu0
      %v1634 = vadd.f32 %v1432, %v1633
      %v1635 = vpop.f32.mrf.mxu0
      %1636 = vdwg.mxu0
      %1637 = vst [vmem:[#allocation1] ss:$4 sm:$0xff] %v788
      %v1638 = vld.sshfl [vmem:[#allocation1] sm:$0xff pattern:$0x73625140]
      %1640 = vrot.lane.b32.xlu0 %v1638, 120
      %v1641 = vpop.permute.xlu0 %1640
      %1642 = vst [vmem:[#allocation1] ss:$4 sm:$0xff] %v788
      %v1643 = vld.sshfl [vmem:[#allocation1] sm:$0xff pattern:$0x73625140]
      %1645 = vrot.lane.b32.xlu0 %v1643, 88
      %v1646 = vpop.permute.xlu0 %1645
      %v1648 = vsel %vm806, %v1641, 0
      %v1651 = vsel %vm806, %v1646, 0
      %1653 = vmatpush.bf16.xpose.msra.mxu0 0
      %1654 = vmatpush.bf16.xpose.msra.mxu0 0
      %1655 = vmatpush.bf16.xpose.msra.mxu0 0
      %1656 = vmatpush.bf16.xpose.msra.mxu0 0
      %1657 = vmatpush.bf16.xpose.msra.mxu0 0
      %1658 = vmatpush.bf16.xpose.msra.mxu0 0
      %1659 = vmatpush.bf16.xpose.msra.mxu0 0
      %1660 = vmatpush.bf16.xpose.msra.mxu0 %v1651
      %1661 = vmatmul.bf16.gmra.mxu0 %v1648
      %v1662 = vpop.f32.mrf.mxu0
      %v1663 = vadd.f32 %v1433, %v1662
      %v1664 = vpop.f32.mrf.mxu0
      %1665 = vdwg.mxu0
      %1666 = vst.msk [vmem:[%s1425] sm:$0xf] %vm990, %v1460
      %1667 = vst.msk [vmem:[%s1425 + $0x4] sm:$0xf] %vm990, %v1489
      %1668 = vst.msk [vmem:[%s1425 + $0x8] sm:$0xf] %vm990, %v1518
      %1669 = vst.msk [vmem:[%s1425 + $0xc] sm:$0xf] %vm990, %v1547
      %1670 = vst.msk [vmem:[%s1425 + $0x10] sm:$0xf] %vm990, %v1576
      %1671 = vst.msk [vmem:[%s1425 + $0x14] sm:$0xf] %vm990, %v1605
      %1672 = vst.msk [vmem:[%s1425 + $0x18] sm:$0xf] %vm990, %v1634
      %1673 = vst.msk [vmem:[%s1425 + $0x1c] sm:$0xf] %vm990, %v1663
      %v1674 = vsel %vm990, %v1460, -inf
      %1675 = vmax.xlane.f32.xlu0 %v1674
      %v1676 = vpop.xlane.xlu0 %1675
      %v1677 = vsel %vm990, %v1489, -inf
      %1678 = vmax.xlane.f32.xlu0 %v1677
      %v1679 = vpop.xlane.xlu0 %1678
      %v1680 = vsel %vm990, %v1518, -inf
      %1681 = vmax.xlane.f32.xlu0 %v1680
      %v1682 = vpop.xlane.xlu0 %1681
      %v1683 = vsel %vm990, %v1547, -inf
      %1684 = vmax.xlane.f32.xlu0 %v1683
      %v1685 = vpop.xlane.xlu0 %1684
      %v1686 = vsel %vm990, %v1576, -inf
      %1687 = vmax.xlane.f32.xlu0 %v1686
      %v1688 = vpop.xlane.xlu0 %1687
      %v1689 = vsel %vm990, %v1605, -inf
      %1690 = vmax.xlane.f32.xlu0 %v1689
      %v1691 = vpop.xlane.xlu0 %1690
      %v1692 = vsel %vm990, %v1634, -inf
      %1693 = vmax.xlane.f32.xlu0 %v1692
      %v1694 = vpop.xlane.xlu0 %1693
      %v1695 = vsel %vm990, %v1663, -inf
      %1696 = vmax.xlane.f32.xlu0 %v1695
      %v1697 = vpop.xlane.xlu0 %1696
      %v1698 = vsub.f32 %v1460, %v1676
      %v1699 = vsub.f32 %v1489, %v1679
      %v1700 = vsub.f32 %v1518, %v1682
      %v1701 = vsub.f32 %v1547, %v1685
      %v1702 = vsub.f32 %v1576, %v1688
      %v1703 = vsub.f32 %v1605, %v1691
      %v1704 = vsub.f32 %v1634, %v1694
      %v1705 = vsub.f32 %v1663, %v1697
      %v1706 = vmul.f32 %v1698, 1.442695
      %v1707 = vpow.pop %v1706
      %v1708 = vmul.f32 %v1699, 1.442695
      %v1709 = vpow.pop %v1708
      %v1710 = vmul.f32 %v1700, 1.442695
      %v1711 = vpow.pop %v1710
      %v1712 = vmul.f32 %v1701, 1.442695
      %v1713 = vpow.pop %v1712
      %v1714 = vmul.f32 %v1702, 1.442695
      %v1715 = vpow.pop %v1714
      %v1716 = vmul.f32 %v1703, 1.442695
      %v1717 = vpow.pop %v1716
      %v1718 = vmul.f32 %v1704, 1.442695
      %v1719 = vpow.pop %v1718
      %v1720 = vmul.f32 %v1705, 1.442695
      %v1721 = vpow.pop %v1720
      %v1722 = vsel %vm990, %v1707, 0.0
      %1723 = vadd.xlane.f32.xlu0 %v1722
      %v1724 = vpop.xlane.xlu0 %1723
      %v1725 = vsel %vm990, %v1709, 0.0
      %1726 = vadd.xlane.f32.xlu0 %v1725
      %v1727 = vpop.xlane.xlu0 %1726
      %v1728 = vsel %vm990, %v1711, 0.0
      %1729 = vadd.xlane.f32.xlu0 %v1728
      %v1730 = vpop.xlane.xlu0 %1729
      %v1731 = vsel %vm990, %v1713, 0.0
      %1732 = vadd.xlane.f32.xlu0 %v1731
      %v1733 = vpop.xlane.xlu0 %1732
      %v1734 = vsel %vm990, %v1715, 0.0
      %1735 = vadd.xlane.f32.xlu0 %v1734
      %v1736 = vpop.xlane.xlu0 %1735
      %v1737 = vsel %vm990, %v1717, 0.0
      %1738 = vadd.xlane.f32.xlu0 %v1737
      %v1739 = vpop.xlane.xlu0 %1738
      %v1740 = vsel %vm990, %v1719, 0.0
      %1741 = vadd.xlane.f32.xlu0 %v1740
      %v1742 = vpop.xlane.xlu0 %1741
      %v1743 = vsel %vm990, %v1721, 0.0
      %1744 = vadd.xlane.f32.xlu0 %v1743
      %v1745 = vpop.xlane.xlu0 %1744
      %v1746 = vrcp.pop %v1724
      %v1747 = vmul.f32 %v1724, %v1746
      %v1748 = vsub.f32 1.0, %v1747
      %v1749 = vmul.f32 %v1746, %v1748
      %v1750 = vadd.f32 %v1746, %v1749
      %vm1751 = vweird.f32 %v1724
      %vm1752 = vweird.f32 %v1746
      %vm1753 = vmor %vm1751, %vm1752
      %v1754 = vsel %vm1753, %v1746, %v1750
      %v1755 = vand.u32 2147483647, %v1724
      %vm1756 = vcmp.eq.f32.partialorder %v1755, 8.507059e+37
      %v1757 = vand.u32 %v1724, 2147483648
      %v1758 = vor.u32 1.1754944e-38, %v1757
      %v1759 = vsel %vm1756, %v1758, %v1754
      %v1760 = vmul.f32 %v1707, %v1759
      %v1761 = vrcp.pop %v1727
      %v1762 = vmul.f32 %v1727, %v1761
      %v1763 = vsub.f32 1.0, %v1762
      %v1764 = vmul.f32 %v1761, %v1763
      %v1765 = vadd.f32 %v1761, %v1764
      %vm1766 = vweird.f32 %v1727
      %vm1767 = vweird.f32 %v1761
      %vm1768 = vmor %vm1766, %vm1767
      %v1769 = vsel %vm1768, %v1761, %v1765
      %v1770 = vand.u32 2147483647, %v1727
      %vm1771 = vcmp.eq.f32.partialorder %v1770, 8.507059e+37
      %v1772 = vand.u32 %v1727, 2147483648
      %v1773 = vor.u32 1.1754944e-38, %v1772
      %v1774 = vsel %vm1771, %v1773, %v1769
      %v1775 = vmul.f32 %v1709, %v1774
      %v1776 = vrcp.pop %v1730
      %v1777 = vmul.f32 %v1730, %v1776
      %v1778 = vsub.f32 1.0, %v1777
      %v1779 = vmul.f32 %v1776, %v1778
      %v1780 = vadd.f32 %v1776, %v1779
      %vm1781 = vweird.f32 %v1730
      %vm1782 = vweird.f32 %v1776
      %vm1783 = vmor %vm1781, %vm1782
      %v1784 = vsel %vm1783, %v1776, %v1780
      %v1785 = vand.u32 2147483647, %v1730
      %vm1786 = vcmp.eq.f32.partialorder %v1785, 8.507059e+37
      %v1787 = vand.u32 %v1730, 2147483648
      %v1788 = vor.u32 1.1754944e-38, %v1787
      %v1789 = vsel %vm1786, %v1788, %v1784
      %v1790 = vmul.f32 %v1711, %v1789
      %v1791 = vrcp.pop %v1733
      %v1792 = vmul.f32 %v1733, %v1791
      %v1793 = vsub.f32 1.0, %v1792
      %v1794 = vmul.f32 %v1791, %v1793
      %v1795 = vadd.f32 %v1791, %v1794
      %vm1796 = vweird.f32 %v1733
      %vm1797 = vweird.f32 %v1791
      %vm1798 = vmor %vm1796, %vm1797
      %v1799 = vsel %vm1798, %v1791, %v1795
      %v1800 = vand.u32 2147483647, %v1733
      %vm1801 = vcmp.eq.f32.partialorder %v1800, 8.507059e+37
      %v1802 = vand.u32 %v1733, 2147483648
      %v1803 = vor.u32 1.1754944e-38, %v1802
      %v1804 = vsel %vm1801, %v1803, %v1799
      %v1805 = vmul.f32 %v1713, %v1804
      %v1806 = vrcp.pop %v1736
      %v1807 = vmul.f32 %v1736, %v1806
      %v1808 = vsub.f32 1.0, %v1807
      %v1809 = vmul.f32 %v1806, %v1808
      %v1810 = vadd.f32 %v1806, %v1809
      %vm1811 = vweird.f32 %v1736
      %vm1812 = vweird.f32 %v1806
      %vm1813 = vmor %vm1811, %vm1812
      %v1814 = vsel %vm1813, %v1806, %v1810
      %v1815 = vand.u32 2147483647, %v1736
      %vm1816 = vcmp.eq.f32.partialorder %v1815, 8.507059e+37
      %v1817 = vand.u32 %v1736, 2147483648
      %v1818 = vor.u32 1.1754944e-38, %v1817
      %v1819 = vsel %vm1816, %v1818, %v1814
      %v1820 = vmul.f32 %v1715, %v1819
      %v1821 = vrcp.pop %v1739
      %v1822 = vmul.f32 %v1739, %v1821
      %v1823 = vsub.f32 1.0, %v1822
      %v1824 = vmul.f32 %v1821, %v1823
      %v1825 = vadd.f32 %v1821, %v1824
      %vm1826 = vweird.f32 %v1739
      %vm1827 = vweird.f32 %v1821
      %vm1828 = vmor %vm1826, %vm1827
      %v1829 = vsel %vm1828, %v1821, %v1825
      %v1830 = vand.u32 2147483647, %v1739
      %vm1831 = vcmp.eq.f32.partialorder %v1830, 8.507059e+37
      %v1832 = vand.u32 %v1739, 2147483648
      %v1833 = vor.u32 1.1754944e-38, %v1832
      %v1834 = vsel %vm1831, %v1833, %v1829
      %v1835 = vmul.f32 %v1717, %v1834
      %v1836 = vrcp.pop %v1742
      %v1837 = vmul.f32 %v1742, %v1836
      %v1838 = vsub.f32 1.0, %v1837
      %v1839 = vmul.f32 %v1836, %v1838
      %v1840 = vadd.f32 %v1836, %v1839
      %vm1841 = vweird.f32 %v1742
      %vm1842 = vweird.f32 %v1836
      %vm1843 = vmor %vm1841, %vm1842
      %v1844 = vsel %vm1843, %v1836, %v1840
      %v1845 = vand.u32 2147483647, %v1742
      %vm1846 = vcmp.eq.f32.partialorder %v1845, 8.507059e+37
      %v1847 = vand.u32 %v1742, 2147483648
      %v1848 = vor.u32 1.1754944e-38, %v1847
      %v1849 = vsel %vm1846, %v1848, %v1844
      %v1850 = vmul.f32 %v1719, %v1849
      %v1851 = vrcp.pop %v1745
      %v1852 = vmul.f32 %v1745, %v1851
      %v1853 = vsub.f32 1.0, %v1852
      %v1854 = vmul.f32 %v1851, %v1853
      %v1855 = vadd.f32 %v1851, %v1854
      %vm1856 = vweird.f32 %v1745
      %vm1857 = vweird.f32 %v1851
      %vm1858 = vmor %vm1856, %vm1857
      %v1859 = vsel %vm1858, %v1851, %v1855
      %v1860 = vand.u32 2147483647, %v1745
      %vm1861 = vcmp.eq.f32.partialorder %v1860, 8.507059e+37
      %v1862 = vand.u32 %v1745, 2147483648
      %v1863 = vor.u32 1.1754944e-38, %v1862
      %v1864 = vsel %vm1861, %v1863, %v1859
      %v1865 = vmul.f32 %v1721, %v1864
      %v1866 = vpack.c.bf16 %v1760, %v1760
      %v1867 = vpack.c.bf16 %v1775, %v1775
      %v1868 = vpack.c.bf16 %v1790, %v1790
      %v1869 = vpack.c.bf16 %v1805, %v1805
      %v1870 = vpack.c.bf16 %v1820, %v1820
      %v1871 = vpack.c.bf16 %v1835, %v1835
      %v1872 = vpack.c.bf16 %v1850, %v1850
      %v1873 = vpack.c.bf16 %v1865, %v1865
      %1874 = vst [vmem:[#allocation1] ss:$4 sm:$0xff] %v766
      %v1875 = vld.sshfl [vmem:[#allocation1] sm:$0xff pattern:$0x73625140]
      %1877 = vrot.lane.b32.xlu0 %v1875, 56
      %v1878 = vpop.permute.xlu0 %1877
      %v1880 = vsel %vm1204, %v1866, 0
      %v1883 = vsel %vm763, %v1878, 0
      %1885 = vmatpush.bf16.msra.mxu0 0
      %1886 = vmatpush.bf16.msra.mxu0 0
      %1887 = vmatpush.bf16.msra.mxu0 0
      %1888 = vmatpush.bf16.msra.mxu0 0
      %1889 = vmatpush.bf16.msra.mxu0 0
      %1890 = vmatpush.bf16.msra.mxu0 0
      %1891 = vmatpush.bf16.msra.mxu0 0
      %1892 = vmatpush.bf16.msra.mxu0 %v1883
      %1893 = vmatmul.bf16.gmra.mxu0 %v1880
      %v1894 = vpop.f32.mrf.mxu0
      %v1895 = vadd.f32 0.0, %v1894
      %v1896 = vpop.f32.mrf.mxu0
      %1897 = vdwg.mxu0
      %1898 = vst [vmem:[#allocation1] ss:$4 sm:$0xff] %v770
      %v1899 = vld.sshfl [vmem:[#allocation1] sm:$0xff pattern:$0x73625140]
      %1901 = vrot.lane.b32.xlu0 %v1899, 56
      %v1902 = vpop.permute.xlu0 %1901
      %v1904 = vsel %vm1204, %v1867, 0
      %v1907 = vsel %vm763, %v1902, 0
      %1909 = vmatpush.bf16.msra.mxu0 0
      %1910 = vmatpush.bf16.msra.mxu0 0
      %1911 = vmatpush.bf16.msra.mxu0 0
      %1912 = vmatpush.bf16.msra.mxu0 0
      %1913 = vmatpush.bf16.msra.mxu0 0
      %1914 = vmatpush.bf16.msra.mxu0 0
      %1915 = vmatpush.bf16.msra.mxu0 0
      %1916 = vmatpush.bf16.msra.mxu0 %v1907
      %1917 = vmatmul.bf16.gmra.mxu0 %v1904
      %v1918 = vpop.f32.mrf.mxu0
      %v1919 = vadd.f32 0.0, %v1918
      %v1920 = vpop.f32.mrf.mxu0
      %1921 = vdwg.mxu0
      %1922 = vst [vmem:[#allocation1] ss:$4 sm:$0xff] %v773
      %v1923 = vld.sshfl [vmem:[#allocation1] sm:$0xff pattern:$0x73625140]
      %1925 = vrot.lane.b32.xlu0 %v1923, 56
      %v1926 = vpop.permute.xlu0 %1925
      %v1928 = vsel %vm1204, %v1868, 0
      %v1931 = vsel %vm763, %v1926, 0
      %1933 = vmatpush.bf16.msra.mxu0 0
      %1934 = vmatpush.bf16.msra.mxu0 0
      %1935 = vmatpush.bf16.msra.mxu0 0
      %1936 = vmatpush.bf16.msra.mxu0 0
      %1937 = vmatpush.bf16.msra.mxu0 0
      %1938 = vmatpush.bf16.msra.mxu0 0
      %1939 = vmatpush.bf16.msra.mxu0 0
      %1940 = vmatpush.bf16.msra.mxu0 %v1931
      %1941 = vmatmul.bf16.gmra.mxu0 %v1928
      %v1942 = vpop.f32.mrf.mxu0
      %v1943 = vadd.f32 0.0, %v1942
      %v1944 = vpop.f32.mrf.mxu0
      %1945 = vdwg.mxu0
      %1946 = vst [vmem:[#allocation1] ss:$4 sm:$0xff] %v776
      %v1947 = vld.sshfl [vmem:[#allocation1] sm:$0xff pattern:$0x73625140]
      %1949 = vrot.lane.b32.xlu0 %v1947, 56
      %v1950 = vpop.permute.xlu0 %1949
      %v1952 = vsel %vm1204, %v1869, 0
      %v1955 = vsel %vm763, %v1950, 0
      %1957 = vmatpush.bf16.msra.mxu0 0
      %1958 = vmatpush.bf16.msra.mxu0 0
      %1959 = vmatpush.bf16.msra.mxu0 0
      %1960 = vmatpush.bf16.msra.mxu0 0
      %1961 = vmatpush.bf16.msra.mxu0 0
      %1962 = vmatpush.bf16.msra.mxu0 0
      %1963 = vmatpush.bf16.msra.mxu0 0
      %1964 = vmatpush.bf16.msra.mxu0 %v1955
      %1965 = vmatmul.bf16.gmra.mxu0 %v1952
      %v1966 = vpop.f32.mrf.mxu0
      %v1967 = vadd.f32 0.0, %v1966
      %v1968 = vpop.f32.mrf.mxu0
      %1969 = vdwg.mxu0
      %1970 = vst [vmem:[#allocation1] ss:$4 sm:$0xff] %v779
      %v1971 = vld.sshfl [vmem:[#allocation1] sm:$0xff pattern:$0x73625140]
      %1973 = vrot.lane.b32.xlu0 %v1971, 56
      %v1974 = vpop.permute.xlu0 %1973
      %v1976 = vsel %vm1204, %v1870, 0
      %v1979 = vsel %vm763, %v1974, 0
      %1981 = vmatpush.bf16.msra.mxu0 0
      %1982 = vmatpush.bf16.msra.mxu0 0
      %1983 = vmatpush.bf16.msra.mxu0 0
      %1984 = vmatpush.bf16.msra.mxu0 0
      %1985 = vmatpush.bf16.msra.mxu0 0
      %1986 = vmatpush.bf16.msra.mxu0 0
      %1987 = vmatpush.bf16.msra.mxu0 0
      %1988 = vmatpush.bf16.msra.mxu0 %v1979
      %1989 = vmatmul.bf16.gmra.mxu0 %v1976
      %v1990 = vpop.f32.mrf.mxu0
      %v1991 = vadd.f32 0.0, %v1990
      %v1992 = vpop.f32.mrf.mxu0
      %1993 = vdwg.mxu0
      %1994 = vst [vmem:[#allocation1] ss:$4 sm:$0xff] %v782
      %v1995 = vld.sshfl [vmem:[#allocation1] sm:$0xff pattern:$0x73625140]
      %1997 = vrot.lane.b32.xlu0 %v1995, 56
      %v1998 = vpop.permute.xlu0 %1997
      %v2000 = vsel %vm1204, %v1871, 0
      %v2003 = vsel %vm763, %v1998, 0
      %2005 = vmatpush.bf16.msra.mxu0 0
      %2006 = vmatpush.bf16.msra.mxu0 0
      %2007 = vmatpush.bf16.msra.mxu0 0
      %2008 = vmatpush.bf16.msra.mxu0 0
      %2009 = vmatpush.bf16.msra.mxu0 0
      %2010 = vmatpush.bf16.msra.mxu0 0
      %2011 = vmatpush.bf16.msra.mxu0 0
      %2012 = vmatpush.bf16.msra.mxu0 %v2003
      %2013 = vmatmul.bf16.gmra.mxu0 %v2000
      %v2014 = vpop.f32.mrf.mxu0
      %v2015 = vadd.f32 0.0, %v2014
      %v2016 = vpop.f32.mrf.mxu0
      %2017 = vdwg.mxu0
      %2018 = vst [vmem:[#allocation1] ss:$4 sm:$0xff] %v785
      %v2019 = vld.sshfl [vmem:[#allocation1] sm:$0xff pattern:$0x73625140]
      %2021 = vrot.lane.b32.xlu0 %v2019, 56
      %v2022 = vpop.permute.xlu0 %2021
      %v2024 = vsel %vm1204, %v1872, 0
      %v2027 = vsel %vm763, %v2022, 0
      %2029 = vmatpush.bf16.msra.mxu0 0
      %2030 = vmatpush.bf16.msra.mxu0 0
      %2031 = vmatpush.bf16.msra.mxu0 0
      %2032 = vmatpush.bf16.msra.mxu0 0
      %2033 = vmatpush.bf16.msra.mxu0 0
      %2034 = vmatpush.bf16.msra.mxu0 0
      %2035 = vmatpush.bf16.msra.mxu0 0
      %2036 = vmatpush.bf16.msra.mxu0 %v2027
      %2037 = vmatmul.bf16.gmra.mxu0 %v2024
      %v2038 = vpop.f32.mrf.mxu0
      %v2039 = vadd.f32 0.0, %v2038
      %v2040 = vpop.f32.mrf.mxu0
      %2041 = vdwg.mxu0
      %2042 = vst [vmem:[#allocation1] ss:$4 sm:$0xff] %v788
      %v2043 = vld.sshfl [vmem:[#allocation1] sm:$0xff pattern:$0x73625140]
      %2045 = vrot.lane.b32.xlu0 %v2043, 56
      %v2046 = vpop.permute.xlu0 %2045
      %v2048 = vsel %vm1204, %v1873, 0
      %v2051 = vsel %vm763, %v2046, 0
      %2053 = vmatpush.bf16.msra.mxu0 0
      %2054 = vmatpush.bf16.msra.mxu0 0
      %2055 = vmatpush.bf16.msra.mxu0 0
      %2056 = vmatpush.bf16.msra.mxu0 0
      %2057 = vmatpush.bf16.msra.mxu0 0
      %2058 = vmatpush.bf16.msra.mxu0 0
      %2059 = vmatpush.bf16.msra.mxu0 0
      %2060 = vmatpush.bf16.msra.mxu0 %v2051
      %2061 = vmatmul.bf16.gmra.mxu0 %v2048
      %v2062 = vpop.f32.mrf.mxu0
      %v2063 = vadd.f32 0.0, %v2062
      %v2064 = vpop.f32.mrf.mxu0
      %2065 = vdwg.mxu0
      %2074 = vst [vmem:[#allocation1] ss:$2 sm:$0xff] %v1895
      %s2075 = scalar_lea.vmem [#allocation1], 1
      %2076 = vst [vmem:[%s2075] ss:$2 sm:$0xff] %v1919
      %s2077 = scalar_lea.vmem [#allocation1], 16
      %2078 = vst [vmem:[%s2077] ss:$2 sm:$0xff] %v1943
      %s2079 = scalar_lea.vmem [#allocation1], 17
      %2080 = vst [vmem:[%s2079] ss:$2 sm:$0xff] %v1967
      %s2081 = scalar_lea.vmem [#allocation1], 32
      %2082 = vst [vmem:[%s2081] ss:$2 sm:$0xff] %v1991
      %s2083 = scalar_lea.vmem [#allocation1], 33
      %2084 = vst [vmem:[%s2083] ss:$2 sm:$0xff] %v2015
      %s2085 = scalar_lea.vmem [#allocation1], 48
      %2086 = vst [vmem:[%s2085] ss:$2 sm:$0xff] %v2039
      %s2087 = scalar_lea.vmem [#allocation1], 49
      %2088 = vst [vmem:[%s2087] ss:$2 sm:$0xff] %v2063
      %v2089 = vld.sshfl [vmem:[#allocation1] sm:$0xff pattern:$0x75316420]
      %v2090 = vld.sshfl [vmem:[#allocation1 + $0x10] sm:$0xff pattern:$0x75316420]
      %v2091 = vld.sshfl [vmem:[#allocation1 + $0x20] sm:$0xff pattern:$0x75316420]
      %v2092 = vld.sshfl [vmem:[#allocation1 + $0x30] sm:$0xff pattern:$0x75316420]
      %v2097 = vpack.c.bf16 %v2090, %v2089
      %v2098 = vpack.c.bf16 %v2092, %v2091
      %v2100 = vsel %vm806, %v2097, 0
      %v2103 = vsel %vm806, %v2098, 0
      %vm2105 = vcmask 1043456
      %v2107 = vsel %vm2105, %v790, 0
      %2109 = vmatpush.bf16.msra.mxu0 0
      %2110 = vmatpush.bf16.msra.mxu0 0
      %2111 = vmatpush.bf16.msra.mxu0 0
      %2112 = vmatpush.bf16.msra.mxu0 0
      %2113 = vmatpush.bf16.msra.mxu0 0
      %2114 = vmatpush.bf16.msra.mxu0 0
      %2115 = vmatpush.bf16.msra.mxu0 0
      %2116 = vmatpush.bf16.msra.mxu0 %v2107
      %2117 = vmatmul.bf16.gmra.mxu0 %v2100
      %v2118 = vpop.f32.mrf.mxu0
      %v2119 = vadd.f32 0.0, %v2118
      %v2120 = vpop.f32.mrf.mxu0
      %v2121 = vadd.f32 0.0, %v2120
      %2122 = vmatmul.bf16.gmra.mxu0 %v2103
      %v2123 = vpop.f32.mrf.mxu0
      %v2124 = vadd.f32 0.0, %v2123
      %v2125 = vpop.f32.mrf.mxu0
      %v2126 = vadd.f32 0.0, %v2125
      %2127 = vdwg.mxu0
      %v2129 = vsel %vm806, %v1423, 0
      %v2132 = vsel %vm806, %v1424, 0
      %v2135 = vsel %vm2105, %v789, 0
      %2137 = vmatpush.bf16.msra.mxu0 0
      %2138 = vmatpush.bf16.msra.mxu0 0
      %2139 = vmatpush.bf16.msra.mxu0 0
      %2140 = vmatpush.bf16.msra.mxu0 0
      %2141 = vmatpush.bf16.msra.mxu0 0
      %2142 = vmatpush.bf16.msra.mxu0 0
      %2143 = vmatpush.bf16.msra.mxu0 0
      %2144 = vmatpush.bf16.msra.mxu0 %v2135
      %2145 = vmatmul.bf16.gmra.mxu0 %v2129
      %v2146 = vpop.f32.mrf.mxu0
      %v2147 = vadd.f32 %v2119, %v2146
      %v2148 = vpop.f32.mrf.mxu0
      %v2149 = vadd.f32 %v2121, %v2148
      %2150 = vmatmul.bf16.gmra.mxu0 %v2132
      %v2151 = vpop.f32.mrf.mxu0
      %v2152 = vadd.f32 %v2124, %v2151
      %v2153 = vpop.f32.mrf.mxu0
      %v2154 = vadd.f32 %v2126, %v2153
      %2155 = vdwg.mxu0
      %s2156 = scalar_lea.vmem [#allocation2], 64
      %v2157 = vld [vmem:[%s2156] sm:$0xf]
      %v2158 = vld [vmem:[%s2156 + $0x4] sm:$0xf]
      %v2159 = vld [vmem:[%s2156 + $0x8] sm:$0xf]
      %v2160 = vld [vmem:[%s2156 + $0xc] sm:$0xf]
      %v2161 = vld [vmem:[%s2156 + $0x10] sm:$0xf]
      %v2162 = vld [vmem:[%s2156 + $0x14] sm:$0xf]
      %v2163 = vld [vmem:[%s2156 + $0x18] sm:$0xf]
      %v2164 = vld [vmem:[%s2156 + $0x1c] sm:$0xf]
      %2165 = vst [vmem:[#allocation1] ss:$4 sm:$0xff] %v766
      %v2166 = vld.sshfl [vmem:[#allocation1] sm:$0xff pattern:$0x73625140]
      %2168 = vrot.lane.b32.xlu0 %v2166, 112
      %v2169 = vpop.permute.xlu0 %2168
      %2170 = vst [vmem:[#allocation1] ss:$4 sm:$0xff] %v766
      %v2171 = vld.sshfl [vmem:[#allocation1] sm:$0xff pattern:$0x73625140]
      %2173 = vrot.lane.b32.xlu0 %v2171, 80
      %v2174 = vpop.permute.xlu0 %2173
      %v2176 = vsel %vm806, %v2169, 0
      %v2179 = vsel %vm806, %v2174, 0
      %2181 = vmatpush.bf16.xpose.msra.mxu0 0
      %2182 = vmatpush.bf16.xpose.msra.mxu0 0
      %2183 = vmatpush.bf16.xpose.msra.mxu0 0
      %2184 = vmatpush.bf16.xpose.msra.mxu0 0
      %2185 = vmatpush.bf16.xpose.msra.mxu0 0
      %2186 = vmatpush.bf16.xpose.msra.mxu0 0
      %2187 = vmatpush.bf16.xpose.msra.mxu0 0
      %2188 = vmatpush.bf16.xpose.msra.mxu0 %v2179
      %2189 = vmatmul.bf16.gmra.mxu0 %v2176
      %v2190 = vpop.f32.mrf.mxu0
      %v2191 = vadd.f32 %v2157, %v2190
      %v2192 = vpop.f32.mrf.mxu0
      %2193 = vdwg.mxu0
      %2194 = vst [vmem:[#allocation1] ss:$4 sm:$0xff] %v770
      %v2195 = vld.sshfl [vmem:[#allocation1] sm:$0xff pattern:$0x73625140]
      %2197 = vrot.lane.b32.xlu0 %v2195, 112
      %v2198 = vpop.permute.xlu0 %2197
      %2199 = vst [vmem:[#allocation1] ss:$4 sm:$0xff] %v770
      %v2200 = vld.sshfl [vmem:[#allocation1] sm:$0xff pattern:$0x73625140]
      %2202 = vrot.lane.b32.xlu0 %v2200, 80
      %v2203 = vpop.permute.xlu0 %2202
      %v2205 = vsel %vm806, %v2198, 0
      %v2208 = vsel %vm806, %v2203, 0
      %2210 = vmatpush.bf16.xpose.msra.mxu0 0
      %2211 = vmatpush.bf16.xpose.msra.mxu0 0
      %2212 = vmatpush.bf16.xpose.msra.mxu0 0
      %2213 = vmatpush.bf16.xpose.msra.mxu0 0
      %2214 = vmatpush.bf16.xpose.msra.mxu0 0
      %2215 = vmatpush.bf16.xpose.msra.mxu0 0
      %2216 = vmatpush.bf16.xpose.msra.mxu0 0
      %2217 = vmatpush.bf16.xpose.msra.mxu0 %v2208
      %2218 = vmatmul.bf16.gmra.mxu0 %v2205
      %v2219 = vpop.f32.mrf.mxu0
      %v2220 = vadd.f32 %v2158, %v2219
      %v2221 = vpop.f32.mrf.mxu0
      %2222 = vdwg.mxu0
      %2223 = vst [vmem:[#allocation1] ss:$4 sm:$0xff] %v773
      %v2224 = vld.sshfl [vmem:[#allocation1] sm:$0xff pattern:$0x73625140]
      %2226 = vrot.lane.b32.xlu0 %v2224, 112
      %v2227 = vpop.permute.xlu0 %2226
      %2228 = vst [vmem:[#allocation1] ss:$4 sm:$0xff] %v773
      %v2229 = vld.sshfl [vmem:[#allocation1] sm:$0xff pattern:$0x73625140]
      %2231 = vrot.lane.b32.xlu0 %v2229, 80
      %v2232 = vpop.permute.xlu0 %2231
      %v2234 = vsel %vm806, %v2227, 0
      %v2237 = vsel %vm806, %v2232, 0
      %2239 = vmatpush.bf16.xpose.msra.mxu0 0
      %2240 = vmatpush.bf16.xpose.msra.mxu0 0
      %2241 = vmatpush.bf16.xpose.msra.mxu0 0
      %2242 = vmatpush.bf16.xpose.msra.mxu0 0
      %2243 = vmatpush.bf16.xpose.msra.mxu0 0
      %2244 = vmatpush.bf16.xpose.msra.mxu0 0
      %2245 = vmatpush.bf16.xpose.msra.mxu0 0
      %2246 = vmatpush.bf16.xpose.msra.mxu0 %v2237
      %2247 = vmatmul.bf16.gmra.mxu0 %v2234
      %v2248 = vpop.f32.mrf.mxu0
      %v2249 = vadd.f32 %v2159, %v2248
      %v2250 = vpop.f32.mrf.mxu0
      %2251 = vdwg.mxu0
      %2252 = vst [vmem:[#allocation1] ss:$4 sm:$0xff] %v776
      %v2253 = vld.sshfl [vmem:[#allocation1] sm:$0xff pattern:$0x73625140]
      %2255 = vrot.lane.b32.xlu0 %v2253, 112
      %v2256 = vpop.permute.xlu0 %2255
      %2257 = vst [vmem:[#allocation1] ss:$4 sm:$0xff] %v776
      %v2258 = vld.sshfl [vmem:[#allocation1] sm:$0xff pattern:$0x73625140]
      %2260 = vrot.lane.b32.xlu0 %v2258, 80
      %v2261 = vpop.permute.xlu0 %2260
      %v2263 = vsel %vm806, %v2256, 0
      %v2266 = vsel %vm806, %v2261, 0
      %2268 = vmatpush.bf16.xpose.msra.mxu0 0
      %2269 = vmatpush.bf16.xpose.msra.mxu0 0
      %2270 = vmatpush.bf16.xpose.msra.mxu0 0
      %2271 = vmatpush.bf16.xpose.msra.mxu0 0
      %2272 = vmatpush.bf16.xpose.msra.mxu0 0
      %2273 = vmatpush.bf16.xpose.msra.mxu0 0
      %2274 = vmatpush.bf16.xpose.msra.mxu0 0
      %2275 = vmatpush.bf16.xpose.msra.mxu0 %v2266
      %2276 = vmatmul.bf16.gmra.mxu0 %v2263
      %v2277 = vpop.f32.mrf.mxu0
      %v2278 = vadd.f32 %v2160, %v2277
      %v2279 = vpop.f32.mrf.mxu0
      %2280 = vdwg.mxu0
      %2281 = vst [vmem:[#allocation1] ss:$4 sm:$0xff] %v779
      %v2282 = vld.sshfl [vmem:[#allocation1] sm:$0xff pattern:$0x73625140]
      %2284 = vrot.lane.b32.xlu0 %v2282, 112
      %v2285 = vpop.permute.xlu0 %2284
      %2286 = vst [vmem:[#allocation1] ss:$4 sm:$0xff] %v779
      %v2287 = vld.sshfl [vmem:[#allocation1] sm:$0xff pattern:$0x73625140]
      %2289 = vrot.lane.b32.xlu0 %v2287, 80
      %v2290 = vpop.permute.xlu0 %2289
      %v2292 = vsel %vm806, %v2285, 0
      %v2295 = vsel %vm806, %v2290, 0
      %2297 = vmatpush.bf16.xpose.msra.mxu0 0
      %2298 = vmatpush.bf16.xpose.msra.mxu0 0
      %2299 = vmatpush.bf16.xpose.msra.mxu0 0
      %2300 = vmatpush.bf16.xpose.msra.mxu0 0
      %2301 = vmatpush.bf16.xpose.msra.mxu0 0
      %2302 = vmatpush.bf16.xpose.msra.mxu0 0
      %2303 = vmatpush.bf16.xpose.msra.mxu0 0
      %2304 = vmatpush.bf16.xpose.msra.mxu0 %v2295
      %2305 = vmatmul.bf16.gmra.mxu0 %v2292
      %v2306 = vpop.f32.mrf.mxu0
      %v2307 = vadd.f32 %v2161, %v2306
      %v2308 = vpop.f32.mrf.mxu0
      %2309 = vdwg.mxu0
      %2310 = vst [vmem:[#allocation1] ss:$4 sm:$0xff] %v782
      %v2311 = vld.sshfl [vmem:[#allocation1] sm:$0xff pattern:$0x73625140]
      %2313 = vrot.lane.b32.xlu0 %v2311, 112
      %v2314 = vpop.permute.xlu0 %2313
      %2315 = vst [vmem:[#allocation1] ss:$4 sm:$0xff] %v782
      %v2316 = vld.sshfl [vmem:[#allocation1] sm:$0xff pattern:$0x73625140]
      %2318 = vrot.lane.b32.xlu0 %v2316, 80
      %v2319 = vpop.permute.xlu0 %2318
      %v2321 = vsel %vm806, %v2314, 0
      %v2324 = vsel %vm806, %v2319, 0
      %2326 = vmatpush.bf16.xpose.msra.mxu0 0
      %2327 = vmatpush.bf16.xpose.msra.mxu0 0
      %2328 = vmatpush.bf16.xpose.msra.mxu0 0
      %2329 = vmatpush.bf16.xpose.msra.mxu0 0
      %2330 = vmatpush.bf16.xpose.msra.mxu0 0
      %2331 = vmatpush.bf16.xpose.msra.mxu0 0
      %2332 = vmatpush.bf16.xpose.msra.mxu0 0
      %2333 = vmatpush.bf16.xpose.msra.mxu0 %v2324
      %2334 = vmatmul.bf16.gmra.mxu0 %v2321
      %v2335 = vpop.f32.mrf.mxu0
      %v2336 = vadd.f32 %v2162, %v2335
      %v2337 = vpop.f32.mrf.mxu0
      %2338 = vdwg.mxu0
      %2339 = vst [vmem:[#allocation1] ss:$4 sm:$0xff] %v785
      %v2340 = vld.sshfl [vmem:[#allocation1] sm:$0xff pattern:$0x73625140]
      %2342 = vrot.lane.b32.xlu0 %v2340, 112
      %v2343 = vpop.permute.xlu0 %2342
      %2344 = vst [vmem:[#allocation1] ss:$4 sm:$0xff] %v785
      %v2345 = vld.sshfl [vmem:[#allocation1] sm:$0xff pattern:$0x73625140]
      %2347 = vrot.lane.b32.xlu0 %v2345, 80
      %v2348 = vpop.permute.xlu0 %2347
      %v2350 = vsel %vm806, %v2343, 0
      %v2353 = vsel %vm806, %v2348, 0
      %2355 = vmatpush.bf16.xpose.msra.mxu0 0
      %2356 = vmatpush.bf16.xpose.msra.mxu0 0
      %2357 = vmatpush.bf16.xpose.msra.mxu0 0
      %2358 = vmatpush.bf16.xpose.msra.mxu0 0
      %2359 = vmatpush.bf16.xpose.msra.mxu0 0
      %2360 = vmatpush.bf16.xpose.msra.mxu0 0
      %2361 = vmatpush.bf16.xpose.msra.mxu0 0
      %2362 = vmatpush.bf16.xpose.msra.mxu0 %v2353
      %2363 = vmatmul.bf16.gmra.mxu0 %v2350
      %v2364 = vpop.f32.mrf.mxu0
      %v2365 = vadd.f32 %v2163, %v2364
      %v2366 = vpop.f32.mrf.mxu0
      %2367 = vdwg.mxu0
      %2368 = vst [vmem:[#allocation1] ss:$4 sm:$0xff] %v788
      %v2369 = vld.sshfl [vmem:[#allocation1] sm:$0xff pattern:$0x73625140]
      %2371 = vrot.lane.b32.xlu0 %v2369, 112
      %v2372 = vpop.permute.xlu0 %2371
      %2373 = vst [vmem:[#allocation1] ss:$4 sm:$0xff] %v788
      %v2374 = vld.sshfl [vmem:[#allocation1] sm:$0xff pattern:$0x73625140]
      %2376 = vrot.lane.b32.xlu0 %v2374, 80
      %v2377 = vpop.permute.xlu0 %2376
      %v2379 = vsel %vm806, %v2372, 0
      %v2382 = vsel %vm806, %v2377, 0
      %2384 = vmatpush.bf16.xpose.msra.mxu0 0
      %2385 = vmatpush.bf16.xpose.msra.mxu0 0
      %2386 = vmatpush.bf16.xpose.msra.mxu0 0
      %2387 = vmatpush.bf16.xpose.msra.mxu0 0
      %2388 = vmatpush.bf16.xpose.msra.mxu0 0
      %2389 = vmatpush.bf16.xpose.msra.mxu0 0
      %2390 = vmatpush.bf16.xpose.msra.mxu0 0
      %2391 = vmatpush.bf16.xpose.msra.mxu0 %v2382
      %2392 = vmatmul.bf16.gmra.mxu0 %v2379
      %v2393 = vpop.f32.mrf.mxu0
      %v2394 = vadd.f32 %v2164, %v2393
      %v2395 = vpop.f32.mrf.mxu0
      %2396 = vdwg.mxu0
      %2397 = vst.msk [vmem:[%s2156] sm:$0xf] %vm990, %v2191
      %2398 = vst.msk [vmem:[%s2156 + $0x4] sm:$0xf] %vm990, %v2220
      %2399 = vst.msk [vmem:[%s2156 + $0x8] sm:$0xf] %vm990, %v2249
      %2400 = vst.msk [vmem:[%s2156 + $0xc] sm:$0xf] %vm990, %v2278
      %2401 = vst.msk [vmem:[%s2156 + $0x10] sm:$0xf] %vm990, %v2307
      %2402 = vst.msk [vmem:[%s2156 + $0x14] sm:$0xf] %vm990, %v2336
      %2403 = vst.msk [vmem:[%s2156 + $0x18] sm:$0xf] %vm990, %v2365
      %2404 = vst.msk [vmem:[%s2156 + $0x1c] sm:$0xf] %vm990, %v2394
      %v2405 = vsel %vm990, %v2191, -inf
      %2406 = vmax.xlane.f32.xlu0 %v2405
      %v2407 = vpop.xlane.xlu0 %2406
      %v2408 = vsel %vm990, %v2220, -inf
      %2409 = vmax.xlane.f32.xlu0 %v2408
      %v2410 = vpop.xlane.xlu0 %2409
      %v2411 = vsel %vm990, %v2249, -inf
      %2412 = vmax.xlane.f32.xlu0 %v2411
      %v2413 = vpop.xlane.xlu0 %2412
      %v2414 = vsel %vm990, %v2278, -inf
      %2415 = vmax.xlane.f32.xlu0 %v2414
      %v2416 = vpop.xlane.xlu0 %2415
      %v2417 = vsel %vm990, %v2307, -inf
      %2418 = vmax.xlane.f32.xlu0 %v2417
      %v2419 = vpop.xlane.xlu0 %2418
      %v2420 = vsel %vm990, %v2336, -inf
      %2421 = vmax.xlane.f32.xlu0 %v2420
      %v2422 = vpop.xlane.xlu0 %2421
      %v2423 = vsel %vm990, %v2365, -inf
      %2424 = vmax.xlane.f32.xlu0 %v2423
      %v2425 = vpop.xlane.xlu0 %2424
      %v2426 = vsel %vm990, %v2394, -inf
      %2427 = vmax.xlane.f32.xlu0 %v2426
      %v2428 = vpop.xlane.xlu0 %2427
      %v2429 = vsub.f32 %v2191, %v2407
      %v2430 = vsub.f32 %v2220, %v2410
      %v2431 = vsub.f32 %v2249, %v2413
      %v2432 = vsub.f32 %v2278, %v2416
      %v2433 = vsub.f32 %v2307, %v2419
      %v2434 = vsub.f32 %v2336, %v2422
      %v2435 = vsub.f32 %v2365, %v2425
      %v2436 = vsub.f32 %v2394, %v2428
      %v2437 = vmul.f32 %v2429, 1.442695
      %v2438 = vpow.pop %v2437
      %v2439 = vmul.f32 %v2430, 1.442695
      %v2440 = vpow.pop %v2439
      %v2441 = vmul.f32 %v2431, 1.442695
      %v2442 = vpow.pop %v2441
      %v2443 = vmul.f32 %v2432, 1.442695
      %v2444 = vpow.pop %v2443
      %v2445 = vmul.f32 %v2433, 1.442695
      %v2446 = vpow.pop %v2445
      %v2447 = vmul.f32 %v2434, 1.442695
      %v2448 = vpow.pop %v2447
      %v2449 = vmul.f32 %v2435, 1.442695
      %v2450 = vpow.pop %v2449
      %v2451 = vmul.f32 %v2436, 1.442695
      %v2452 = vpow.pop %v2451
      %v2453 = vsel %vm990, %v2438, 0.0
      %2454 = vadd.xlane.f32.xlu0 %v2453
      %v2455 = vpop.xlane.xlu0 %2454
      %v2456 = vsel %vm990, %v2440, 0.0
      %2457 = vadd.xlane.f32.xlu0 %v2456
      %v2458 = vpop.xlane.xlu0 %2457
      %v2459 = vsel %vm990, %v2442, 0.0
      %2460 = vadd.xlane.f32.xlu0 %v2459
      %v2461 = vpop.xlane.xlu0 %2460
      %v2462 = vsel %vm990, %v2444, 0.0
      %2463 = vadd.xlane.f32.xlu0 %v2462
      %v2464 = vpop.xlane.xlu0 %2463
      %v2465 = vsel %vm990, %v2446, 0.0
      %2466 = vadd.xlane.f32.xlu0 %v2465
      %v2467 = vpop.xlane.xlu0 %2466
      %v2468 = vsel %vm990, %v2448, 0.0
      %2469 = vadd.xlane.f32.xlu0 %v2468
      %v2470 = vpop.xlane.xlu0 %2469
      %v2471 = vsel %vm990, %v2450, 0.0
      %2472 = vadd.xlane.f32.xlu0 %v2471
      %v2473 = vpop.xlane.xlu0 %2472
      %v2474 = vsel %vm990, %v2452, 0.0
      %2475 = vadd.xlane.f32.xlu0 %v2474
      %v2476 = vpop.xlane.xlu0 %2475
      %v2477 = vrcp.pop %v2455
      %v2478 = vmul.f32 %v2455, %v2477
      %v2479 = vsub.f32 1.0, %v2478
      %v2480 = vmul.f32 %v2477, %v2479
      %v2481 = vadd.f32 %v2477, %v2480
      %vm2482 = vweird.f32 %v2455
      %vm2483 = vweird.f32 %v2477
      %vm2484 = vmor %vm2482, %vm2483
      %v2485 = vsel %vm2484, %v2477, %v2481
      %v2486 = vand.u32 2147483647, %v2455
      %vm2487 = vcmp.eq.f32.partialorder %v2486, 8.507059e+37
      %v2488 = vand.u32 %v2455, 2147483648
      %v2489 = vor.u32 1.1754944e-38, %v2488
      %v2490 = vsel %vm2487, %v2489, %v2485
      %v2491 = vmul.f32 %v2438, %v2490
      %v2492 = vrcp.pop %v2458
      %v2493 = vmul.f32 %v2458, %v2492
      %v2494 = vsub.f32 1.0, %v2493
      %v2495 = vmul.f32 %v2492, %v2494
      %v2496 = vadd.f32 %v2492, %v2495
      %vm2497 = vweird.f32 %v2458
      %vm2498 = vweird.f32 %v2492
      %vm2499 = vmor %vm2497, %vm2498
      %v2500 = vsel %vm2499, %v2492, %v2496
      %v2501 = vand.u32 2147483647, %v2458
      %vm2502 = vcmp.eq.f32.partialorder %v2501, 8.507059e+37
      %v2503 = vand.u32 %v2458, 2147483648
      %v2504 = vor.u32 1.1754944e-38, %v2503
      %v2505 = vsel %vm2502, %v2504, %v2500
      %v2506 = vmul.f32 %v2440, %v2505
      %v2507 = vrcp.pop %v2461
      %v2508 = vmul.f32 %v2461, %v2507
      %v2509 = vsub.f32 1.0, %v2508
      %v2510 = vmul.f32 %v2507, %v2509
      %v2511 = vadd.f32 %v2507, %v2510
      %vm2512 = vweird.f32 %v2461
      %vm2513 = vweird.f32 %v2507
      %vm2514 = vmor %vm2512, %vm2513
      %v2515 = vsel %vm2514, %v2507, %v2511
      %v2516 = vand.u32 2147483647, %v2461
      %vm2517 = vcmp.eq.f32.partialorder %v2516, 8.507059e+37
      %v2518 = vand.u32 %v2461, 2147483648
      %v2519 = vor.u32 1.1754944e-38, %v2518
      %v2520 = vsel %vm2517, %v2519, %v2515
      %v2521 = vmul.f32 %v2442, %v2520
      %v2522 = vrcp.pop %v2464
      %v2523 = vmul.f32 %v2464, %v2522
      %v2524 = vsub.f32 1.0, %v2523
      %v2525 = vmul.f32 %v2522, %v2524
      %v2526 = vadd.f32 %v2522, %v2525
      %vm2527 = vweird.f32 %v2464
      %vm2528 = vweird.f32 %v2522
      %vm2529 = vmor %vm2527, %vm2528
      %v2530 = vsel %vm2529, %v2522, %v2526
      %v2531 = vand.u32 2147483647, %v2464
      %vm2532 = vcmp.eq.f32.partialorder %v2531, 8.507059e+37
      %v2533 = vand.u32 %v2464, 2147483648
      %v2534 = vor.u32 1.1754944e-38, %v2533
      %v2535 = vsel %vm2532, %v2534, %v2530
      %v2536 = vmul.f32 %v2444, %v2535
      %v2537 = vrcp.pop %v2467
      %v2538 = vmul.f32 %v2467, %v2537
      %v2539 = vsub.f32 1.0, %v2538
      %v2540 = vmul.f32 %v2537, %v2539
      %v2541 = vadd.f32 %v2537, %v2540
      %vm2542 = vweird.f32 %v2467
      %vm2543 = vweird.f32 %v2537
      %vm2544 = vmor %vm2542, %vm2543
      %v2545 = vsel %vm2544, %v2537, %v2541
      %v2546 = vand.u32 2147483647, %v2467
      %vm2547 = vcmp.eq.f32.partialorder %v2546, 8.507059e+37
      %v2548 = vand.u32 %v2467, 2147483648
      %v2549 = vor.u32 1.1754944e-38, %v2548
      %v2550 = vsel %vm2547, %v2549, %v2545
      %v2551 = vmul.f32 %v2446, %v2550
      %v2552 = vrcp.pop %v2470
      %v2553 = vmul.f32 %v2470, %v2552
      %v2554 = vsub.f32 1.0, %v2553
      %v2555 = vmul.f32 %v2552, %v2554
      %v2556 = vadd.f32 %v2552, %v2555
      %vm2557 = vweird.f32 %v2470
      %vm2558 = vweird.f32 %v2552
      %vm2559 = vmor %vm2557, %vm2558
      %v2560 = vsel %vm2559, %v2552, %v2556
      %v2561 = vand.u32 2147483647, %v2470
      %vm2562 = vcmp.eq.f32.partialorder %v2561, 8.507059e+37
      %v2563 = vand.u32 %v2470, 2147483648
      %v2564 = vor.u32 1.1754944e-38, %v2563
      %v2565 = vsel %vm2562, %v2564, %v2560
      %v2566 = vmul.f32 %v2448, %v2565
      %v2567 = vrcp.pop %v2473
      %v2568 = vmul.f32 %v2473, %v2567
      %v2569 = vsub.f32 1.0, %v2568
      %v2570 = vmul.f32 %v2567, %v2569
      %v2571 = vadd.f32 %v2567, %v2570
      %vm2572 = vweird.f32 %v2473
      %vm2573 = vweird.f32 %v2567
      %vm2574 = vmor %vm2572, %vm2573
      %v2575 = vsel %vm2574, %v2567, %v2571
      %v2576 = vand.u32 2147483647, %v2473
      %vm2577 = vcmp.eq.f32.partialorder %v2576, 8.507059e+37
      %v2578 = vand.u32 %v2473, 2147483648
      %v2579 = vor.u32 1.1754944e-38, %v2578
      %v2580 = vsel %vm2577, %v2579, %v2575
      %v2581 = vmul.f32 %v2450, %v2580
      %v2582 = vrcp.pop %v2476
      %v2583 = vmul.f32 %v2476, %v2582
      %v2584 = vsub.f32 1.0, %v2583
      %v2585 = vmul.f32 %v2582, %v2584
      %v2586 = vadd.f32 %v2582, %v2585
      %vm2587 = vweird.f32 %v2476
      %vm2588 = vweird.f32 %v2582
      %vm2589 = vmor %vm2587, %vm2588
      %v2590 = vsel %vm2589, %v2582, %v2586
      %v2591 = vand.u32 2147483647, %v2476
      %vm2592 = vcmp.eq.f32.partialorder %v2591, 8.507059e+37
      %v2593 = vand.u32 %v2476, 2147483648
      %v2594 = vor.u32 1.1754944e-38, %v2593
      %v2595 = vsel %vm2592, %v2594, %v2590
      %v2596 = vmul.f32 %v2452, %v2595
      %v2597 = vpack.c.bf16 %v2491, %v2491
      %v2598 = vpack.c.bf16 %v2506, %v2506
      %v2599 = vpack.c.bf16 %v2521, %v2521
      %v2600 = vpack.c.bf16 %v2536, %v2536
      %v2601 = vpack.c.bf16 %v2551, %v2551
      %v2602 = vpack.c.bf16 %v2566, %v2566
      %v2603 = vpack.c.bf16 %v2581, %v2581
      %v2604 = vpack.c.bf16 %v2596, %v2596
      %2605 = vst [vmem:[#allocation1] ss:$4 sm:$0xff] %v766
      %v2606 = vld.sshfl [vmem:[#allocation1] sm:$0xff pattern:$0x73625140]
      %2608 = vrot.lane.b32.xlu0 %v2606, 48
      %v2609 = vpop.permute.xlu0 %2608
      %v2611 = vsel %vm1204, %v2597, 0
      %v2614 = vsel %vm763, %v2609, 0
      %2616 = vmatpush.bf16.msra.mxu0 0
      %2617 = vmatpush.bf16.msra.mxu0 0
      %2618 = vmatpush.bf16.msra.mxu0 0
      %2619 = vmatpush.bf16.msra.mxu0 0
      %2620 = vmatpush.bf16.msra.mxu0 0
      %2621 = vmatpush.bf16.msra.mxu0 0
      %2622 = vmatpush.bf16.msra.mxu0 0
      %2623 = vmatpush.bf16.msra.mxu0 %v2614
      %2624 = vmatmul.bf16.gmra.mxu0 %v2611
      %v2625 = vpop.f32.mrf.mxu0
      %v2626 = vadd.f32 0.0, %v2625
      %v2627 = vpop.f32.mrf.mxu0
      %2628 = vdwg.mxu0
      %2629 = vst [vmem:[#allocation1] ss:$4 sm:$0xff] %v770
      %v2630 = vld.sshfl [vmem:[#allocation1] sm:$0xff pattern:$0x73625140]
      %2632 = vrot.lane.b32.xlu0 %v2630, 48
      %v2633 = vpop.permute.xlu0 %2632
      %v2635 = vsel %vm1204, %v2598, 0
      %v2638 = vsel %vm763, %v2633, 0
      %2640 = vmatpush.bf16.msra.mxu0 0
      %2641 = vmatpush.bf16.msra.mxu0 0
      %2642 = vmatpush.bf16.msra.mxu0 0
      %2643 = vmatpush.bf16.msra.mxu0 0
      %2644 = vmatpush.bf16.msra.mxu0 0
      %2645 = vmatpush.bf16.msra.mxu0 0
      %2646 = vmatpush.bf16.msra.mxu0 0
      %2647 = vmatpush.bf16.msra.mxu0 %v2638
      %2648 = vmatmul.bf16.gmra.mxu0 %v2635
      %v2649 = vpop.f32.mrf.mxu0
      %v2650 = vadd.f32 0.0, %v2649
      %v2651 = vpop.f32.mrf.mxu0
      %2652 = vdwg.mxu0
      %2653 = vst [vmem:[#allocation1] ss:$4 sm:$0xff] %v773
      %v2654 = vld.sshfl [vmem:[#allocation1] sm:$0xff pattern:$0x73625140]
      %2656 = vrot.lane.b32.xlu0 %v2654, 48
      %v2657 = vpop.permute.xlu0 %2656
      %v2659 = vsel %vm1204, %v2599, 0
      %v2662 = vsel %vm763, %v2657, 0
      %2664 = vmatpush.bf16.msra.mxu0 0
      %2665 = vmatpush.bf16.msra.mxu0 0
      %2666 = vmatpush.bf16.msra.mxu0 0
      %2667 = vmatpush.bf16.msra.mxu0 0
      %2668 = vmatpush.bf16.msra.mxu0 0
      %2669 = vmatpush.bf16.msra.mxu0 0
      %2670 = vmatpush.bf16.msra.mxu0 0
      %2671 = vmatpush.bf16.msra.mxu0 %v2662
      %2672 = vmatmul.bf16.gmra.mxu0 %v2659
      %v2673 = vpop.f32.mrf.mxu0
      %v2674 = vadd.f32 0.0, %v2673
      %v2675 = vpop.f32.mrf.mxu0
      %2676 = vdwg.mxu0
      %2677 = vst [vmem:[#allocation1] ss:$4 sm:$0xff] %v776
      %v2678 = vld.sshfl [vmem:[#allocation1] sm:$0xff pattern:$0x73625140]
      %2680 = vrot.lane.b32.xlu0 %v2678, 48
      %v2681 = vpop.permute.xlu0 %2680
      %v2683 = vsel %vm1204, %v2600, 0
      %v2686 = vsel %vm763, %v2681, 0
      %2688 = vmatpush.bf16.msra.mxu0 0
      %2689 = vmatpush.bf16.msra.mxu0 0
      %2690 = vmatpush.bf16.msra.mxu0 0
      %2691 = vmatpush.bf16.msra.mxu0 0
      %2692 = vmatpush.bf16.msra.mxu0 0
      %2693 = vmatpush.bf16.msra.mxu0 0
      %2694 = vmatpush.bf16.msra.mxu0 0
      %2695 = vmatpush.bf16.msra.mxu0 %v2686
      %2696 = vmatmul.bf16.gmra.mxu0 %v2683
      %v2697 = vpop.f32.mrf.mxu0
      %v2698 = vadd.f32 0.0, %v2697
      %v2699 = vpop.f32.mrf.mxu0
      %2700 = vdwg.mxu0
      %2701 = vst [vmem:[#allocation1] ss:$4 sm:$0xff] %v779
      %v2702 = vld.sshfl [vmem:[#allocation1] sm:$0xff pattern:$0x73625140]
      %2704 = vrot.lane.b32.xlu0 %v2702, 48
      %v2705 = vpop.permute.xlu0 %2704
      %v2707 = vsel %vm1204, %v2601, 0
      %v2710 = vsel %vm763, %v2705, 0
      %2712 = vmatpush.bf16.msra.mxu0 0
      %2713 = vmatpush.bf16.msra.mxu0 0
      %2714 = vmatpush.bf16.msra.mxu0 0
      %2715 = vmatpush.bf16.msra.mxu0 0
      %2716 = vmatpush.bf16.msra.mxu0 0
      %2717 = vmatpush.bf16.msra.mxu0 0
      %2718 = vmatpush.bf16.msra.mxu0 0
      %2719 = vmatpush.bf16.msra.mxu0 %v2710
      %2720 = vmatmul.bf16.gmra.mxu0 %v2707
      %v2721 = vpop.f32.mrf.mxu0
      %v2722 = vadd.f32 0.0, %v2721
      %v2723 = vpop.f32.mrf.mxu0
      %2724 = vdwg.mxu0
      %2725 = vst [vmem:[#allocation1] ss:$4 sm:$0xff] %v782
      %v2726 = vld.sshfl [vmem:[#allocation1] sm:$0xff pattern:$0x73625140]
      %2728 = vrot.lane.b32.xlu0 %v2726, 48
      %v2729 = vpop.permute.xlu0 %2728
      %v2731 = vsel %vm1204, %v2602, 0
      %v2734 = vsel %vm763, %v2729, 0
      %2736 = vmatpush.bf16.msra.mxu0 0
      %2737 = vmatpush.bf16.msra.mxu0 0
      %2738 = vmatpush.bf16.msra.mxu0 0
      %2739 = vmatpush.bf16.msra.mxu0 0
      %2740 = vmatpush.bf16.msra.mxu0 0
      %2741 = vmatpush.bf16.msra.mxu0 0
      %2742 = vmatpush.bf16.msra.mxu0 0
      %2743 = vmatpush.bf16.msra.mxu0 %v2734
      %2744 = vmatmul.bf16.gmra.mxu0 %v2731
      %v2745 = vpop.f32.mrf.mxu0
      %v2746 = vadd.f32 0.0, %v2745
      %v2747 = vpop.f32.mrf.mxu0
      %2748 = vdwg.mxu0
      %2749 = vst [vmem:[#allocation1] ss:$4 sm:$0xff] %v785
      %v2750 = vld.sshfl [vmem:[#allocation1] sm:$0xff pattern:$0x73625140]
      %2752 = vrot.lane.b32.xlu0 %v2750, 48
      %v2753 = vpop.permute.xlu0 %2752
      %v2755 = vsel %vm1204, %v2603, 0
      %v2758 = vsel %vm763, %v2753, 0
      %2760 = vmatpush.bf16.msra.mxu0 0
      %2761 = vmatpush.bf16.msra.mxu0 0
      %2762 = vmatpush.bf16.msra.mxu0 0
      %2763 = vmatpush.bf16.msra.mxu0 0
      %2764 = vmatpush.bf16.msra.mxu0 0
      %2765 = vmatpush.bf16.msra.mxu0 0
      %2766 = vmatpush.bf16.msra.mxu0 0
      %2767 = vmatpush.bf16.msra.mxu0 %v2758
      %2768 = vmatmul.bf16.gmra.mxu0 %v2755
      %v2769 = vpop.f32.mrf.mxu0
      %v2770 = vadd.f32 0.0, %v2769
      %v2771 = vpop.f32.mrf.mxu0
      %2772 = vdwg.mxu0
      %2773 = vst [vmem:[#allocation1] ss:$4 sm:$0xff] %v788
      %v2774 = vld.sshfl [vmem:[#allocation1] sm:$0xff pattern:$0x73625140]
      %2776 = vrot.lane.b32.xlu0 %v2774, 48
      %v2777 = vpop.permute.xlu0 %2776
      %v2779 = vsel %vm1204, %v2604, 0
      %v2782 = vsel %vm763, %v2777, 0
      %2784 = vmatpush.bf16.msra.mxu0 0
      %2785 = vmatpush.bf16.msra.mxu0 0
      %2786 = vmatpush.bf16.msra.mxu0 0
      %2787 = vmatpush.bf16.msra.mxu0 0
      %2788 = vmatpush.bf16.msra.mxu0 0
      %2789 = vmatpush.bf16.msra.mxu0 0
      %2790 = vmatpush.bf16.msra.mxu0 0
      %2791 = vmatpush.bf16.msra.mxu0 %v2782
      %2792 = vmatmul.bf16.gmra.mxu0 %v2779
      %v2793 = vpop.f32.mrf.mxu0
      %v2794 = vadd.f32 0.0, %v2793
      %v2795 = vpop.f32.mrf.mxu0
      %2796 = vdwg.mxu0
      %2805 = vst [vmem:[#allocation1] ss:$2 sm:$0xff] %v2626
      %s2806 = scalar_lea.vmem [#allocation1], 1
      %2807 = vst [vmem:[%s2806] ss:$2 sm:$0xff] %v2650
      %s2808 = scalar_lea.vmem [#allocation1], 16
      %2809 = vst [vmem:[%s2808] ss:$2 sm:$0xff] %v2674
      %s2810 = scalar_lea.vmem [#allocation1], 17
      %2811 = vst [vmem:[%s2810] ss:$2 sm:$0xff] %v2698
      %s2812 = scalar_lea.vmem [#allocation1], 32
      %2813 = vst [vmem:[%s2812] ss:$2 sm:$0xff] %v2722
      %s2814 = scalar_lea.vmem [#allocation1], 33
      %2815 = vst [vmem:[%s2814] ss:$2 sm:$0xff] %v2746
      %s2816 = scalar_lea.vmem [#allocation1], 48
      %2817 = vst [vmem:[%s2816] ss:$2 sm:$0xff] %v2770
      %s2818 = scalar_lea.vmem [#allocation1], 49
      %2819 = vst [vmem:[%s2818] ss:$2 sm:$0xff] %v2794
      %v2820 = vld.sshfl [vmem:[#allocation1] sm:$0xff pattern:$0x75316420]
      %v2821 = vld.sshfl [vmem:[#allocation1 + $0x10] sm:$0xff pattern:$0x75316420]
      %v2822 = vld.sshfl [vmem:[#allocation1 + $0x20] sm:$0xff pattern:$0x75316420]
      %v2823 = vld.sshfl [vmem:[#allocation1 + $0x30] sm:$0xff pattern:$0x75316420]
      %v2828 = vpack.c.bf16 %v2821, %v2820
      %v2829 = vpack.c.bf16 %v2823, %v2822
      %v2831 = vsel %vm806, %v2828, 0
      %v2834 = vsel %vm806, %v2829, 0
      %v2837 = vsel %vm2105, %v791, 0
      %2839 = vmatpush.bf16.msra.mxu0 0
      %2840 = vmatpush.bf16.msra.mxu0 0
      %2841 = vmatpush.bf16.msra.mxu0 0
      %2842 = vmatpush.bf16.msra.mxu0 0
      %2843 = vmatpush.bf16.msra.mxu0 0
      %2844 = vmatpush.bf16.msra.mxu0 0
      %2845 = vmatpush.bf16.msra.mxu0 0
      %2846 = vmatpush.bf16.msra.mxu0 %v2837
      %2847 = vmatmul.bf16.gmra.mxu0 %v2831
      %v2848 = vpop.f32.mrf.mxu0
      %v2849 = vadd.f32 0.0, %v2848
      %v2850 = vpop.f32.mrf.mxu0
      %v2851 = vadd.f32 0.0, %v2850
      %2852 = vmatmul.bf16.gmra.mxu0 %v2834
      %v2853 = vpop.f32.mrf.mxu0
      %v2854 = vadd.f32 0.0, %v2853
      %v2855 = vpop.f32.mrf.mxu0
      %v2856 = vadd.f32 0.0, %v2855
      %2857 = vdwg.mxu0
      %v2858 = vadd.f32 %v2147, %v2849
      %v2859 = vadd.f32 %v2149, %v2851
      %v2860 = vadd.f32 %v2152, %v2854
      %v2861 = vadd.f32 %v2154, %v2856
      %s2862 = scalar_lea.vmem [#allocation2], 96
      %v2863 = vld [vmem:[%s2862] sm:$0xf]
      %v2864 = vld [vmem:[%s2862 + $0x4] sm:$0xf]
      %v2865 = vld [vmem:[%s2862 + $0x8] sm:$0xf]
      %v2866 = vld [vmem:[%s2862 + $0xc] sm:$0xf]
      %v2867 = vld [vmem:[%s2862 + $0x10] sm:$0xf]
      %v2868 = vld [vmem:[%s2862 + $0x14] sm:$0xf]
      %v2869 = vld [vmem:[%s2862 + $0x18] sm:$0xf]
      %v2870 = vld [vmem:[%s2862 + $0x1c] sm:$0xf]
      %2871 = vst [vmem:[#allocation1] ss:$4 sm:$0xff] %v766
      %v2872 = vld.sshfl [vmem:[#allocation1] sm:$0xff pattern:$0x73625140]
      %2874 = vrot.lane.b32.xlu0 %v2872, 104
      %v2875 = vpop.permute.xlu0 %2874
      %2876 = vst [vmem:[#allocation1] ss:$4 sm:$0xff] %v766
      %v2877 = vld.sshfl [vmem:[#allocation1] sm:$0xff pattern:$0x73625140]
      %2879 = vrot.lane.b32.xlu0 %v2877, 72
      %v2880 = vpop.permute.xlu0 %2879
      %v2882 = vsel %vm806, %v2875, 0
      %v2885 = vsel %vm806, %v2880, 0
      %2887 = vmatpush.bf16.xpose.msra.mxu0 0
      %2888 = vmatpush.bf16.xpose.msra.mxu0 0
      %2889 = vmatpush.bf16.xpose.msra.mxu0 0
      %2890 = vmatpush.bf16.xpose.msra.mxu0 0
      %2891 = vmatpush.bf16.xpose.msra.mxu0 0
      %2892 = vmatpush.bf16.xpose.msra.mxu0 0
      %2893 = vmatpush.bf16.xpose.msra.mxu0 0
      %2894 = vmatpush.bf16.xpose.msra.mxu0 %v2885
      %2895 = vmatmul.bf16.gmra.mxu0 %v2882
      %v2896 = vpop.f32.mrf.mxu0
      %v2897 = vadd.f32 %v2863, %v2896
      %v2898 = vpop.f32.mrf.mxu0
      %2899 = vdwg.mxu0
      %2900 = vst [vmem:[#allocation1] ss:$4 sm:$0xff] %v770
      %v2901 = vld.sshfl [vmem:[#allocation1] sm:$0xff pattern:$0x73625140]
      %2903 = vrot.lane.b32.xlu0 %v2901, 104
      %v2904 = vpop.permute.xlu0 %2903
      %2905 = vst [vmem:[#allocation1] ss:$4 sm:$0xff] %v770
      %v2906 = vld.sshfl [vmem:[#allocation1] sm:$0xff pattern:$0x73625140]
      %2908 = vrot.lane.b32.xlu0 %v2906, 72
      %v2909 = vpop.permute.xlu0 %2908
      %v2911 = vsel %vm806, %v2904, 0
      %v2914 = vsel %vm806, %v2909, 0
      %2916 = vmatpush.bf16.xpose.msra.mxu0 0
      %2917 = vmatpush.bf16.xpose.msra.mxu0 0
      %2918 = vmatpush.bf16.xpose.msra.mxu0 0
      %2919 = vmatpush.bf16.xpose.msra.mxu0 0
      %2920 = vmatpush.bf16.xpose.msra.mxu0 0
      %2921 = vmatpush.bf16.xpose.msra.mxu0 0
      %2922 = vmatpush.bf16.xpose.msra.mxu0 0
      %2923 = vmatpush.bf16.xpose.msra.mxu0 %v2914
      %2924 = vmatmul.bf16.gmra.mxu0 %v2911
      %v2925 = vpop.f32.mrf.mxu0
      %v2926 = vadd.f32 %v2864, %v2925
      %v2927 = vpop.f32.mrf.mxu0
      %2928 = vdwg.mxu0
      %2929 = vst [vmem:[#allocation1] ss:$4 sm:$0xff] %v773
      %v2930 = vld.sshfl [vmem:[#allocation1] sm:$0xff pattern:$0x73625140]
      %2932 = vrot.lane.b32.xlu0 %v2930, 104
      %v2933 = vpop.permute.xlu0 %2932
      %2934 = vst [vmem:[#allocation1] ss:$4 sm:$0xff] %v773
      %v2935 = vld.sshfl [vmem:[#allocation1] sm:$0xff pattern:$0x73625140]
      %2937 = vrot.lane.b32.xlu0 %v2935, 72
      %v2938 = vpop.permute.xlu0 %2937
      %v2940 = vsel %vm806, %v2933, 0
      %v2943 = vsel %vm806, %v2938, 0
      %2945 = vmatpush.bf16.xpose.msra.mxu0 0
      %2946 = vmatpush.bf16.xpose.msra.mxu0 0
      %2947 = vmatpush.bf16.xpose.msra.mxu0 0
      %2948 = vmatpush.bf16.xpose.msra.mxu0 0
      %2949 = vmatpush.bf16.xpose.msra.mxu0 0
      %2950 = vmatpush.bf16.xpose.msra.mxu0 0
      %2951 = vmatpush.bf16.xpose.msra.mxu0 0
      %2952 = vmatpush.bf16.xpose.msra.mxu0 %v2943
      %2953 = vmatmul.bf16.gmra.mxu0 %v2940
      %v2954 = vpop.f32.mrf.mxu0
      %v2955 = vadd.f32 %v2865, %v2954
      %v2956 = vpop.f32.mrf.mxu0
      %2957 = vdwg.mxu0
      %2958 = vst [vmem:[#allocation1] ss:$4 sm:$0xff] %v776
      %v2959 = vld.sshfl [vmem:[#allocation1] sm:$0xff pattern:$0x73625140]
      %2961 = vrot.lane.b32.xlu0 %v2959, 104
      %v2962 = vpop.permute.xlu0 %2961
      %2963 = vst [vmem:[#allocation1] ss:$4 sm:$0xff] %v776
      %v2964 = vld.sshfl [vmem:[#allocation1] sm:$0xff pattern:$0x73625140]
      %2966 = vrot.lane.b32.xlu0 %v2964, 72
      %v2967 = vpop.permute.xlu0 %2966
      %v2969 = vsel %vm806, %v2962, 0
      %v2972 = vsel %vm806, %v2967, 0
      %2974 = vmatpush.bf16.xpose.msra.mxu0 0
      %2975 = vmatpush.bf16.xpose.msra.mxu0 0
      %2976 = vmatpush.bf16.xpose.msra.mxu0 0
      %2977 = vmatpush.bf16.xpose.msra.mxu0 0
      %2978 = vmatpush.bf16.xpose.msra.mxu0 0
      %2979 = vmatpush.bf16.xpose.msra.mxu0 0
      %2980 = vmatpush.bf16.xpose.msra.mxu0 0
      %2981 = vmatpush.bf16.xpose.msra.mxu0 %v2972
      %2982 = vmatmul.bf16.gmra.mxu0 %v2969
      %v2983 = vpop.f32.mrf.mxu0
      %v2984 = vadd.f32 %v2866, %v2983
      %v2985 = vpop.f32.mrf.mxu0
      %2986 = vdwg.mxu0
      %2987 = vst [vmem:[#allocation1] ss:$4 sm:$0xff] %v779
      %v2988 = vld.sshfl [vmem:[#allocation1] sm:$0xff pattern:$0x73625140]
      %2990 = vrot.lane.b32.xlu0 %v2988, 104
      %v2991 = vpop.permute.xlu0 %2990
      %2992 = vst [vmem:[#allocation1] ss:$4 sm:$0xff] %v779
      %v2993 = vld.sshfl [vmem:[#allocation1] sm:$0xff pattern:$0x73625140]
      %2995 = vrot.lane.b32.xlu0 %v2993, 72
      %v2996 = vpop.permute.xlu0 %2995
      %v2998 = vsel %vm806, %v2991, 0
      %v3001 = vsel %vm806, %v2996, 0
      %3003 = vmatpush.bf16.xpose.msra.mxu0 0
      %3004 = vmatpush.bf16.xpose.msra.mxu0 0
      %3005 = vmatpush.bf16.xpose.msra.mxu0 0
      %3006 = vmatpush.bf16.xpose.msra.mxu0 0
      %3007 = vmatpush.bf16.xpose.msra.mxu0 0
      %3008 = vmatpush.bf16.xpose.msra.mxu0 0
      %3009 = vmatpush.bf16.xpose.msra.mxu0 0
      %3010 = vmatpush.bf16.xpose.msra.mxu0 %v3001
      %3011 = vmatmul.bf16.gmra.mxu0 %v2998
      %v3012 = vpop.f32.mrf.mxu0
      %v3013 = vadd.f32 %v2867, %v3012
      %v3014 = vpop.f32.mrf.mxu0
      %3015 = vdwg.mxu0
      %3016 = vst [vmem:[#allocation1] ss:$4 sm:$0xff] %v782
      %v3017 = vld.sshfl [vmem:[#allocation1] sm:$0xff pattern:$0x73625140]
      %3019 = vrot.lane.b32.xlu0 %v3017, 104
      %v3020 = vpop.permute.xlu0 %3019
      %3021 = vst [vmem:[#allocation1] ss:$4 sm:$0xff] %v782
      %v3022 = vld.sshfl [vmem:[#allocation1] sm:$0xff pattern:$0x73625140]
      %3024 = vrot.lane.b32.xlu0 %v3022, 72
      %v3025 = vpop.permute.xlu0 %3024
      %v3027 = vsel %vm806, %v3020, 0
      %v3030 = vsel %vm806, %v3025, 0
      %3032 = vmatpush.bf16.xpose.msra.mxu0 0
      %3033 = vmatpush.bf16.xpose.msra.mxu0 0
      %3034 = vmatpush.bf16.xpose.msra.mxu0 0
      %3035 = vmatpush.bf16.xpose.msra.mxu0 0
      %3036 = vmatpush.bf16.xpose.msra.mxu0 0
      %3037 = vmatpush.bf16.xpose.msra.mxu0 0
      %3038 = vmatpush.bf16.xpose.msra.mxu0 0
      %3039 = vmatpush.bf16.xpose.msra.mxu0 %v3030
      %3040 = vmatmul.bf16.gmra.mxu0 %v3027
      %v3041 = vpop.f32.mrf.mxu0
      %v3042 = vadd.f32 %v2868, %v3041
      %v3043 = vpop.f32.mrf.mxu0
      %3044 = vdwg.mxu0
      %3045 = vst [vmem:[#allocation1] ss:$4 sm:$0xff] %v785
      %v3046 = vld.sshfl [vmem:[#allocation1] sm:$0xff pattern:$0x73625140]
      %3048 = vrot.lane.b32.xlu0 %v3046, 104
      %v3049 = vpop.permute.xlu0 %3048
      %3050 = vst [vmem:[#allocation1] ss:$4 sm:$0xff] %v785
      %v3051 = vld.sshfl [vmem:[#allocation1] sm:$0xff pattern:$0x73625140]
      %3053 = vrot.lane.b32.xlu0 %v3051, 72
      %v3054 = vpop.permute.xlu0 %3053
      %v3056 = vsel %vm806, %v3049, 0
      %v3059 = vsel %vm806, %v3054, 0
      %3061 = vmatpush.bf16.xpose.msra.mxu0 0
      %3062 = vmatpush.bf16.xpose.msra.mxu0 0
      %3063 = vmatpush.bf16.xpose.msra.mxu0 0
      %3064 = vmatpush.bf16.xpose.msra.mxu0 0
      %3065 = vmatpush.bf16.xpose.msra.mxu0 0
      %3066 = vmatpush.bf16.xpose.msra.mxu0 0
      %3067 = vmatpush.bf16.xpose.msra.mxu0 0
      %3068 = vmatpush.bf16.xpose.msra.mxu0 %v3059
      %3069 = vmatmul.bf16.gmra.mxu0 %v3056
      %v3070 = vpop.f32.mrf.mxu0
      %v3071 = vadd.f32 %v2869, %v3070
      %v3072 = vpop.f32.mrf.mxu0
      %3073 = vdwg.mxu0
      %3074 = vst [vmem:[#allocation1] ss:$4 sm:$0xff] %v788
      %v3075 = vld.sshfl [vmem:[#allocation1] sm:$0xff pattern:$0x73625140]
      %3077 = vrot.lane.b32.xlu0 %v3075, 104
      %v3078 = vpop.permute.xlu0 %3077
      %3079 = vst [vmem:[#allocation1] ss:$4 sm:$0xff] %v788
      %v3080 = vld.sshfl [vmem:[#allocation1] sm:$0xff pattern:$0x73625140]
      %3082 = vrot.lane.b32.xlu0 %v3080, 72
      %v3083 = vpop.permute.xlu0 %3082
      %v3085 = vsel %vm806, %v3078, 0
      %v3088 = vsel %vm806, %v3083, 0
      %3090 = vmatpush.bf16.xpose.msra.mxu0 0
      %3091 = vmatpush.bf16.xpose.msra.mxu0 0
      %3092 = vmatpush.bf16.xpose.msra.mxu0 0
      %3093 = vmatpush.bf16.xpose.msra.mxu0 0
      %3094 = vmatpush.bf16.xpose.msra.mxu0 0
      %3095 = vmatpush.bf16.xpose.msra.mxu0 0
      %3096 = vmatpush.bf16.xpose.msra.mxu0 0
      %3097 = vmatpush.bf16.xpose.msra.mxu0 %v3088
      %3098 = vmatmul.bf16.gmra.mxu0 %v3085
      %v3099 = vpop.f32.mrf.mxu0
      %v3100 = vadd.f32 %v2870, %v3099
      %v3101 = vpop.f32.mrf.mxu0
      %3102 = vdwg.mxu0
      %3103 = vst.msk [vmem:[%s2862] sm:$0xf] %vm990, %v2897
      %3104 = vst.msk [vmem:[%s2862 + $0x4] sm:$0xf] %vm990, %v2926
      %3105 = vst.msk [vmem:[%s2862 + $0x8] sm:$0xf] %vm990, %v2955
      %3106 = vst.msk [vmem:[%s2862 + $0xc] sm:$0xf] %vm990, %v2984
      %3107 = vst.msk [vmem:[%s2862 + $0x10] sm:$0xf] %vm990, %v3013
      %3108 = vst.msk [vmem:[%s2862 + $0x14] sm:$0xf] %vm990, %v3042
      %3109 = vst.msk [vmem:[%s2862 + $0x18] sm:$0xf] %vm990, %v3071
      %3110 = vst.msk [vmem:[%s2862 + $0x1c] sm:$0xf] %vm990, %v3100
      %v3111 = vsel %vm990, %v2897, -inf
      %3112 = vmax.xlane.f32.xlu0 %v3111
      %v3113 = vpop.xlane.xlu0 %3112
      %v3114 = vsel %vm990, %v2926, -inf
      %3115 = vmax.xlane.f32.xlu0 %v3114
      %v3116 = vpop.xlane.xlu0 %3115
      %v3117 = vsel %vm990, %v2955, -inf
      %3118 = vmax.xlane.f32.xlu0 %v3117
      %v3119 = vpop.xlane.xlu0 %3118
      %v3120 = vsel %vm990, %v2984, -inf
      %3121 = vmax.xlane.f32.xlu0 %v3120
      %v3122 = vpop.xlane.xlu0 %3121
      %v3123 = vsel %vm990, %v3013, -inf
      %3124 = vmax.xlane.f32.xlu0 %v3123
      %v3125 = vpop.xlane.xlu0 %3124
      %v3126 = vsel %vm990, %v3042, -inf
      %3127 = vmax.xlane.f32.xlu0 %v3126
      %v3128 = vpop.xlane.xlu0 %3127
      %v3129 = vsel %vm990, %v3071, -inf
      %3130 = vmax.xlane.f32.xlu0 %v3129
      %v3131 = vpop.xlane.xlu0 %3130
      %v3132 = vsel %vm990, %v3100, -inf
      %3133 = vmax.xlane.f32.xlu0 %v3132
      %v3134 = vpop.xlane.xlu0 %3133
      %v3135 = vsub.f32 %v2897, %v3113
      %v3136 = vsub.f32 %v2926, %v3116
      %v3137 = vsub.f32 %v2955, %v3119
      %v3138 = vsub.f32 %v2984, %v3122
      %v3139 = vsub.f32 %v3013, %v3125
      %v3140 = vsub.f32 %v3042, %v3128
      %v3141 = vsub.f32 %v3071, %v3131
      %v3142 = vsub.f32 %v3100, %v3134
      %v3143 = vmul.f32 %v3135, 1.442695
      %v3144 = vpow.pop %v3143
      %v3145 = vmul.f32 %v3136, 1.442695
      %v3146 = vpow.pop %v3145
      %v3147 = vmul.f32 %v3137, 1.442695
      %v3148 = vpow.pop %v3147
      %v3149 = vmul.f32 %v3138, 1.442695
      %v3150 = vpow.pop %v3149
      %v3151 = vmul.f32 %v3139, 1.442695
      %v3152 = vpow.pop %v3151
      %v3153 = vmul.f32 %v3140, 1.442695
      %v3154 = vpow.pop %v3153
      %v3155 = vmul.f32 %v3141, 1.442695
      %v3156 = vpow.pop %v3155
      %v3157 = vmul.f32 %v3142, 1.442695
      %v3158 = vpow.pop %v3157
      %v3159 = vsel %vm990, %v3144, 0.0
      %3160 = vadd.xlane.f32.xlu0 %v3159
      %v3161 = vpop.xlane.xlu0 %3160
      %v3162 = vsel %vm990, %v3146, 0.0
      %3163 = vadd.xlane.f32.xlu0 %v3162
      %v3164 = vpop.xlane.xlu0 %3163
      %v3165 = vsel %vm990, %v3148, 0.0
      %3166 = vadd.xlane.f32.xlu0 %v3165
      %v3167 = vpop.xlane.xlu0 %3166
      %v3168 = vsel %vm990, %v3150, 0.0
      %3169 = vadd.xlane.f32.xlu0 %v3168
      %v3170 = vpop.xlane.xlu0 %3169
      %v3171 = vsel %vm990, %v3152, 0.0
      %3172 = vadd.xlane.f32.xlu0 %v3171
      %v3173 = vpop.xlane.xlu0 %3172
      %v3174 = vsel %vm990, %v3154, 0.0
      %3175 = vadd.xlane.f32.xlu0 %v3174
      %v3176 = vpop.xlane.xlu0 %3175
      %v3177 = vsel %vm990, %v3156, 0.0
      %3178 = vadd.xlane.f32.xlu0 %v3177
      %v3179 = vpop.xlane.xlu0 %3178
      %v3180 = vsel %vm990, %v3158, 0.0
      %3181 = vadd.xlane.f32.xlu0 %v3180
      %v3182 = vpop.xlane.xlu0 %3181
      %v3183 = vrcp.pop %v3161
      %v3184 = vmul.f32 %v3161, %v3183
      %v3185 = vsub.f32 1.0, %v3184
      %v3186 = vmul.f32 %v3183, %v3185
      %v3187 = vadd.f32 %v3183, %v3186
      %vm3188 = vweird.f32 %v3161
      %vm3189 = vweird.f32 %v3183
      %vm3190 = vmor %vm3188, %vm3189
      %v3191 = vsel %vm3190, %v3183, %v3187
      %v3192 = vand.u32 2147483647, %v3161
      %vm3193 = vcmp.eq.f32.partialorder %v3192, 8.507059e+37
      %v3194 = vand.u32 %v3161, 2147483648
      %v3195 = vor.u32 1.1754944e-38, %v3194
      %v3196 = vsel %vm3193, %v3195, %v3191
      %v3197 = vmul.f32 %v3144, %v3196
      %v3198 = vrcp.pop %v3164
      %v3199 = vmul.f32 %v3164, %v3198
      %v3200 = vsub.f32 1.0, %v3199
      %v3201 = vmul.f32 %v3198, %v3200
      %v3202 = vadd.f32 %v3198, %v3201
      %vm3203 = vweird.f32 %v3164
      %vm3204 = vweird.f32 %v3198
      %vm3205 = vmor %vm3203, %vm3204
      %v3206 = vsel %vm3205, %v3198, %v3202
      %v3207 = vand.u32 2147483647, %v3164
      %vm3208 = vcmp.eq.f32.partialorder %v3207, 8.507059e+37
      %v3209 = vand.u32 %v3164, 2147483648
      %v3210 = vor.u32 1.1754944e-38, %v3209
      %v3211 = vsel %vm3208, %v3210, %v3206
      %v3212 = vmul.f32 %v3146, %v3211
      %v3213 = vrcp.pop %v3167
      %v3214 = vmul.f32 %v3167, %v3213
      %v3215 = vsub.f32 1.0, %v3214
      %v3216 = vmul.f32 %v3213, %v3215
      %v3217 = vadd.f32 %v3213, %v3216
      %vm3218 = vweird.f32 %v3167
      %vm3219 = vweird.f32 %v3213
      %vm3220 = vmor %vm3218, %vm3219
      %v3221 = vsel %vm3220, %v3213, %v3217
      %v3222 = vand.u32 2147483647, %v3167
      %vm3223 = vcmp.eq.f32.partialorder %v3222, 8.507059e+37
      %v3224 = vand.u32 %v3167, 2147483648
      %v3225 = vor.u32 1.1754944e-38, %v3224
      %v3226 = vsel %vm3223, %v3225, %v3221
      %v3227 = vmul.f32 %v3148, %v3226
      %v3228 = vrcp.pop %v3170
      %v3229 = vmul.f32 %v3170, %v3228
      %v3230 = vsub.f32 1.0, %v3229
      %v3231 = vmul.f32 %v3228, %v3230
      %v3232 = vadd.f32 %v3228, %v3231
      %vm3233 = vweird.f32 %v3170
      %vm3234 = vweird.f32 %v3228
      %vm3235 = vmor %vm3233, %vm3234
      %v3236 = vsel %vm3235, %v3228, %v3232
      %v3237 = vand.u32 2147483647, %v3170
      %vm3238 = vcmp.eq.f32.partialorder %v3237, 8.507059e+37
      %v3239 = vand.u32 %v3170, 2147483648
      %v3240 = vor.u32 1.1754944e-38, %v3239
      %v3241 = vsel %vm3238, %v3240, %v3236
      %v3242 = vmul.f32 %v3150, %v3241
      %v3243 = vrcp.pop %v3173
      %v3244 = vmul.f32 %v3173, %v3243
      %v3245 = vsub.f32 1.0, %v3244
      %v3246 = vmul.f32 %v3243, %v3245
      %v3247 = vadd.f32 %v3243, %v3246
      %vm3248 = vweird.f32 %v3173
      %vm3249 = vweird.f32 %v3243
      %vm3250 = vmor %vm3248, %vm3249
      %v3251 = vsel %vm3250, %v3243, %v3247
      %v3252 = vand.u32 2147483647, %v3173
      %vm3253 = vcmp.eq.f32.partialorder %v3252, 8.507059e+37
      %v3254 = vand.u32 %v3173, 2147483648
      %v3255 = vor.u32 1.1754944e-38, %v3254
      %v3256 = vsel %vm3253, %v3255, %v3251
      %v3257 = vmul.f32 %v3152, %v3256
      %v3258 = vrcp.pop %v3176
      %v3259 = vmul.f32 %v3176, %v3258
      %v3260 = vsub.f32 1.0, %v3259
      %v3261 = vmul.f32 %v3258, %v3260
      %v3262 = vadd.f32 %v3258, %v3261
      %vm3263 = vweird.f32 %v3176
      %vm3264 = vweird.f32 %v3258
      %vm3265 = vmor %vm3263, %vm3264
      %v3266 = vsel %vm3265, %v3258, %v3262
      %v3267 = vand.u32 2147483647, %v3176
      %vm3268 = vcmp.eq.f32.partialorder %v3267, 8.507059e+37
      %v3269 = vand.u32 %v3176, 2147483648
      %v3270 = vor.u32 1.1754944e-38, %v3269
      %v3271 = vsel %vm3268, %v3270, %v3266
      %v3272 = vmul.f32 %v3154, %v3271
      %v3273 = vrcp.pop %v3179
      %v3274 = vmul.f32 %v3179, %v3273
      %v3275 = vsub.f32 1.0, %v3274
      %v3276 = vmul.f32 %v3273, %v3275
      %v3277 = vadd.f32 %v3273, %v3276
      %vm3278 = vweird.f32 %v3179
      %vm3279 = vweird.f32 %v3273
      %vm3280 = vmor %vm3278, %vm3279
      %v3281 = vsel %vm3280, %v3273, %v3277
      %v3282 = vand.u32 2147483647, %v3179
      %vm3283 = vcmp.eq.f32.partialorder %v3282, 8.507059e+37
      %v3284 = vand.u32 %v3179, 2147483648
      %v3285 = vor.u32 1.1754944e-38, %v3284
      %v3286 = vsel %vm3283, %v3285, %v3281
      %v3287 = vmul.f32 %v3156, %v3286
      %v3288 = vrcp.pop %v3182
      %v3289 = vmul.f32 %v3182, %v3288
      %v3290 = vsub.f32 1.0, %v3289
      %v3291 = vmul.f32 %v3288, %v3290
      %v3292 = vadd.f32 %v3288, %v3291
      %vm3293 = vweird.f32 %v3182
      %vm3294 = vweird.f32 %v3288
      %vm3295 = vmor %vm3293, %vm3294
      %v3296 = vsel %vm3295, %v3288, %v3292
      %v3297 = vand.u32 2147483647, %v3182
      %vm3298 = vcmp.eq.f32.partialorder %v3297, 8.507059e+37
      %v3299 = vand.u32 %v3182, 2147483648
      %v3300 = vor.u32 1.1754944e-38, %v3299
      %v3301 = vsel %vm3298, %v3300, %v3296
      %v3302 = vmul.f32 %v3158, %v3301
      %v3303 = vpack.c.bf16 %v3197, %v3197
      %v3304 = vpack.c.bf16 %v3212, %v3212
      %v3305 = vpack.c.bf16 %v3227, %v3227
      %v3306 = vpack.c.bf16 %v3242, %v3242
      %v3307 = vpack.c.bf16 %v3257, %v3257
      %v3308 = vpack.c.bf16 %v3272, %v3272
      %v3309 = vpack.c.bf16 %v3287, %v3287
      %v3310 = vpack.c.bf16 %v3302, %v3302
      %3311 = vst [vmem:[#allocation1] ss:$4 sm:$0xff] %v766
      %v3312 = vld.sshfl [vmem:[#allocation1] sm:$0xff pattern:$0x73625140]
      %3314 = vrot.lane.b32.xlu0 %v3312, 40
      %v3315 = vpop.permute.xlu0 %3314
      %v3317 = vsel %vm1204, %v3303, 0
      %v3320 = vsel %vm763, %v3315, 0
      %3322 = vmatpush.bf16.msra.mxu0 0
      %3323 = vmatpush.bf16.msra.mxu0 0
      %3324 = vmatpush.bf16.msra.mxu0 0
      %3325 = vmatpush.bf16.msra.mxu0 0
      %3326 = vmatpush.bf16.msra.mxu0 0
      %3327 = vmatpush.bf16.msra.mxu0 0
      %3328 = vmatpush.bf16.msra.mxu0 0
      %3329 = vmatpush.bf16.msra.mxu0 %v3320
      %3330 = vmatmul.bf16.gmra.mxu0 %v3317
      %v3331 = vpop.f32.mrf.mxu0
      %v3332 = vadd.f32 0.0, %v3331
      %v3333 = vpop.f32.mrf.mxu0
      %3334 = vdwg.mxu0
      %3335 = vst [vmem:[#allocation1] ss:$4 sm:$0xff] %v770
      %v3336 = vld.sshfl [vmem:[#allocation1] sm:$0xff pattern:$0x73625140]
      %3338 = vrot.lane.b32.xlu0 %v3336, 40
      %v3339 = vpop.permute.xlu0 %3338
      %v3341 = vsel %vm1204, %v3304, 0
      %v3344 = vsel %vm763, %v3339, 0
      %3346 = vmatpush.bf16.msra.mxu0 0
      %3347 = vmatpush.bf16.msra.mxu0 0
      %3348 = vmatpush.bf16.msra.mxu0 0
      %3349 = vmatpush.bf16.msra.mxu0 0
      %3350 = vmatpush.bf16.msra.mxu0 0
      %3351 = vmatpush.bf16.msra.mxu0 0
      %3352 = vmatpush.bf16.msra.mxu0 0
      %3353 = vmatpush.bf16.msra.mxu0 %v3344
      %3354 = vmatmul.bf16.gmra.mxu0 %v3341
      %v3355 = vpop.f32.mrf.mxu0
      %v3356 = vadd.f32 0.0, %v3355
      %v3357 = vpop.f32.mrf.mxu0
      %3358 = vdwg.mxu0
      %3359 = vst [vmem:[#allocation1] ss:$4 sm:$0xff] %v773
      %v3360 = vld.sshfl [vmem:[#allocation1] sm:$0xff pattern:$0x73625140]
      %3362 = vrot.lane.b32.xlu0 %v3360, 40
      %v3363 = vpop.permute.xlu0 %3362
      %v3365 = vsel %vm1204, %v3305, 0
      %v3368 = vsel %vm763, %v3363, 0
      %3370 = vmatpush.bf16.msra.mxu0 0
      %3371 = vmatpush.bf16.msra.mxu0 0
      %3372 = vmatpush.bf16.msra.mxu0 0
      %3373 = vmatpush.bf16.msra.mxu0 0
      %3374 = vmatpush.bf16.msra.mxu0 0
      %3375 = vmatpush.bf16.msra.mxu0 0
      %3376 = vmatpush.bf16.msra.mxu0 0
      %3377 = vmatpush.bf16.msra.mxu0 %v3368
      %3378 = vmatmul.bf16.gmra.mxu0 %v3365
      %v3379 = vpop.f32.mrf.mxu0
      %v3380 = vadd.f32 0.0, %v3379
      %v3381 = vpop.f32.mrf.mxu0
      %3382 = vdwg.mxu0
      %3383 = vst [vmem:[#allocation1] ss:$4 sm:$0xff] %v776
      %v3384 = vld.sshfl [vmem:[#allocation1] sm:$0xff pattern:$0x73625140]
      %3386 = vrot.lane.b32.xlu0 %v3384, 40
      %v3387 = vpop.permute.xlu0 %3386
      %v3389 = vsel %vm1204, %v3306, 0
      %v3392 = vsel %vm763, %v3387, 0
      %3394 = vmatpush.bf16.msra.mxu0 0
      %3395 = vmatpush.bf16.msra.mxu0 0
      %3396 = vmatpush.bf16.msra.mxu0 0
      %3397 = vmatpush.bf16.msra.mxu0 0
      %3398 = vmatpush.bf16.msra.mxu0 0
      %3399 = vmatpush.bf16.msra.mxu0 0
      %3400 = vmatpush.bf16.msra.mxu0 0
      %3401 = vmatpush.bf16.msra.mxu0 %v3392
      %3402 = vmatmul.bf16.gmra.mxu0 %v3389
      %v3403 = vpop.f32.mrf.mxu0
      %v3404 = vadd.f32 0.0, %v3403
      %v3405 = vpop.f32.mrf.mxu0
      %3406 = vdwg.mxu0
      %3407 = vst [vmem:[#allocation1] ss:$4 sm:$0xff] %v779
      %v3408 = vld.sshfl [vmem:[#allocation1] sm:$0xff pattern:$0x73625140]
      %3410 = vrot.lane.b32.xlu0 %v3408, 40
      %v3411 = vpop.permute.xlu0 %3410
      %v3413 = vsel %vm1204, %v3307, 0
      %v3416 = vsel %vm763, %v3411, 0
      %3418 = vmatpush.bf16.msra.mxu0 0
      %3419 = vmatpush.bf16.msra.mxu0 0
      %3420 = vmatpush.bf16.msra.mxu0 0
      %3421 = vmatpush.bf16.msra.mxu0 0
      %3422 = vmatpush.bf16.msra.mxu0 0
      %3423 = vmatpush.bf16.msra.mxu0 0
      %3424 = vmatpush.bf16.msra.mxu0 0
      %3425 = vmatpush.bf16.msra.mxu0 %v3416
      %3426 = vmatmul.bf16.gmra.mxu0 %v3413
      %v3427 = vpop.f32.mrf.mxu0
      %v3428 = vadd.f32 0.0, %v3427
      %v3429 = vpop.f32.mrf.mxu0
      %3430 = vdwg.mxu0
      %3431 = vst [vmem:[#allocation1] ss:$4 sm:$0xff] %v782
      %v3432 = vld.sshfl [vmem:[#allocation1] sm:$0xff pattern:$0x73625140]
      %3434 = vrot.lane.b32.xlu0 %v3432, 40
      %v3435 = vpop.permute.xlu0 %3434
      %v3437 = vsel %vm1204, %v3308, 0
      %v3440 = vsel %vm763, %v3435, 0
      %3442 = vmatpush.bf16.msra.mxu0 0
      %3443 = vmatpush.bf16.msra.mxu0 0
      %3444 = vmatpush.bf16.msra.mxu0 0
      %3445 = vmatpush.bf16.msra.mxu0 0
      %3446 = vmatpush.bf16.msra.mxu0 0
      %3447 = vmatpush.bf16.msra.mxu0 0
      %3448 = vmatpush.bf16.msra.mxu0 0
      %3449 = vmatpush.bf16.msra.mxu0 %v3440
      %3450 = vmatmul.bf16.gmra.mxu0 %v3437
      %v3451 = vpop.f32.mrf.mxu0
      %v3452 = vadd.f32 0.0, %v3451
      %v3453 = vpop.f32.mrf.mxu0
      %3454 = vdwg.mxu0
      %3455 = vst [vmem:[#allocation1] ss:$4 sm:$0xff] %v785
      %v3456 = vld.sshfl [vmem:[#allocation1] sm:$0xff pattern:$0x73625140]
      %3458 = vrot.lane.b32.xlu0 %v3456, 40
      %v3459 = vpop.permute.xlu0 %3458
      %v3461 = vsel %vm1204, %v3309, 0
      %v3464 = vsel %vm763, %v3459, 0
      %3466 = vmatpush.bf16.msra.mxu0 0
      %3467 = vmatpush.bf16.msra.mxu0 0
      %3468 = vmatpush.bf16.msra.mxu0 0
      %3469 = vmatpush.bf16.msra.mxu0 0
      %3470 = vmatpush.bf16.msra.mxu0 0
      %3471 = vmatpush.bf16.msra.mxu0 0
      %3472 = vmatpush.bf16.msra.mxu0 0
      %3473 = vmatpush.bf16.msra.mxu0 %v3464
      %3474 = vmatmul.bf16.gmra.mxu0 %v3461
      %v3475 = vpop.f32.mrf.mxu0
      %v3476 = vadd.f32 0.0, %v3475
      %v3477 = vpop.f32.mrf.mxu0
      %3478 = vdwg.mxu0
      %3479 = vst [vmem:[#allocation1] ss:$4 sm:$0xff] %v788
      %v3480 = vld.sshfl [vmem:[#allocation1] sm:$0xff pattern:$0x73625140]
      %3482 = vrot.lane.b32.xlu0 %v3480, 40
      %v3483 = vpop.permute.xlu0 %3482
      %v3485 = vsel %vm1204, %v3310, 0
      %v3488 = vsel %vm763, %v3483, 0
      %3490 = vmatpush.bf16.msra.mxu0 0
      %3491 = vmatpush.bf16.msra.mxu0 0
      %3492 = vmatpush.bf16.msra.mxu0 0
      %3493 = vmatpush.bf16.msra.mxu0 0
      %3494 = vmatpush.bf16.msra.mxu0 0
      %3495 = vmatpush.bf16.msra.mxu0 0
      %3496 = vmatpush.bf16.msra.mxu0 0
      %3497 = vmatpush.bf16.msra.mxu0 %v3488
      %3498 = vmatmul.bf16.gmra.mxu0 %v3485
      %v3499 = vpop.f32.mrf.mxu0
      %v3500 = vadd.f32 0.0, %v3499
      %v3501 = vpop.f32.mrf.mxu0
      %3502 = vdwg.mxu0
      %3511 = vst [vmem:[#allocation1] ss:$2 sm:$0xff] %v3332
      %s3512 = scalar_lea.vmem [#allocation1], 1
      %3513 = vst [vmem:[%s3512] ss:$2 sm:$0xff] %v3356
      %s3514 = scalar_lea.vmem [#allocation1], 16
      %3515 = vst [vmem:[%s3514] ss:$2 sm:$0xff] %v3380
      %s3516 = scalar_lea.vmem [#allocation1], 17
      %3517 = vst [vmem:[%s3516] ss:$2 sm:$0xff] %v3404
      %s3518 = scalar_lea.vmem [#allocation1], 32
      %3519 = vst [vmem:[%s3518] ss:$2 sm:$0xff] %v3428
      %s3520 = scalar_lea.vmem [#allocation1], 33
      %3521 = vst [vmem:[%s3520] ss:$2 sm:$0xff] %v3452
      %s3522 = scalar_lea.vmem [#allocation1], 48
      %3523 = vst [vmem:[%s3522] ss:$2 sm:$0xff] %v3476
      %s3524 = scalar_lea.vmem [#allocation1], 49
      %3525 = vst [vmem:[%s3524] ss:$2 sm:$0xff] %v3500
      %v3526 = vld.sshfl [vmem:[#allocation1] sm:$0xff pattern:$0x75316420]
      %v3527 = vld.sshfl [vmem:[#allocation1 + $0x10] sm:$0xff pattern:$0x75316420]
      %v3528 = vld.sshfl [vmem:[#allocation1 + $0x20] sm:$0xff pattern:$0x75316420]
      %v3529 = vld.sshfl [vmem:[#allocation1 + $0x30] sm:$0xff pattern:$0x75316420]
      %v3534 = vpack.c.bf16 %v3527, %v3526
      %v3535 = vpack.c.bf16 %v3529, %v3528
      %v3537 = vsel %vm806, %v3534, 0
      %v3540 = vsel %vm806, %v3535, 0
      %v3543 = vsel %vm2105, %v792, 0
      %3545 = vmatpush.bf16.msra.mxu0 0
      %3546 = vmatpush.bf16.msra.mxu0 0
      %3547 = vmatpush.bf16.msra.mxu0 0
      %3548 = vmatpush.bf16.msra.mxu0 0
      %3549 = vmatpush.bf16.msra.mxu0 0
      %3550 = vmatpush.bf16.msra.mxu0 0
      %3551 = vmatpush.bf16.msra.mxu0 0
      %3552 = vmatpush.bf16.msra.mxu0 %v3543
      %3553 = vmatmul.bf16.gmra.mxu0 %v3537
      %v3554 = vpop.f32.mrf.mxu0
      %v3555 = vadd.f32 0.0, %v3554
      %v3556 = vpop.f32.mrf.mxu0
      %v3557 = vadd.f32 0.0, %v3556
      %3558 = vmatmul.bf16.gmra.mxu0 %v3540
      %v3559 = vpop.f32.mrf.mxu0
      %v3560 = vadd.f32 0.0, %v3559
      %v3561 = vpop.f32.mrf.mxu0
      %v3562 = vadd.f32 0.0, %v3561
      %3563 = vdwg.mxu0
      %v3564 = vadd.f32 %v2858, %v3555
      %v3565 = vadd.f32 %v2859, %v3557
      %v3566 = vadd.f32 %v2860, %v3560
      %v3567 = vadd.f32 %v2861, %v3562
      // Predicated region
      $region92: #{mgtst_forward.8} parent=67 // pred_check
        %p3568 = pneg %p598
      $region93: #{mgtst_forward.8} parent=67 // pred_check_branch
        %3570 = sbr.rel (%p3568) target = $region95
      $region94: #{mgtst_forward.8} parent=67 // pred_region
        %3571 = vst.msk [vmem:[%s14] sm:$0xf] %vm990, %v1085
        %3572 = vst.msk [vmem:[%s14 + $0x4] sm:$0xf] %vm990, %v1760
        %3573 = vst.msk [vmem:[%s14 + $0x8] sm:$0xf] %vm990, %v2491
        %3574 = vst.msk [vmem:[%s14 + $0xc] sm:$0xf] %vm990, %v3197
        %3575 = vst.msk [vmem:[%s14 + $0x10] sm:$0xf] %vm990, %v1100
        %3576 = vst.msk [vmem:[%s14 + $0x14] sm:$0xf] %vm990, %v1775
        %3577 = vst.msk [vmem:[%s14 + $0x18] sm:$0xf] %vm990, %v2506
        %3578 = vst.msk [vmem:[%s14 + $0x1c] sm:$0xf] %vm990, %v3212
        %3579 = vst.msk [vmem:[%s14 + $0x20] sm:$0xf] %vm990, %v1115
        %3580 = vst.msk [vmem:[%s14 + $0x24] sm:$0xf] %vm990, %v1790
        %3581 = vst.msk [vmem:[%s14 + $0x28] sm:$0xf] %vm990, %v2521
        %3582 = vst.msk [vmem:[%s14 + $0x2c] sm:$0xf] %vm990, %v3227
        %3583 = vst.msk [vmem:[%s14 + $0x30] sm:$0xf] %vm990, %v1130
        %3584 = vst.msk [vmem:[%s14 + $0x34] sm:$0xf] %vm990, %v1805
        %3585 = vst.msk [vmem:[%s14 + $0x38] sm:$0xf] %vm990, %v2536
        %3586 = vst.msk [vmem:[%s14 + $0x3c] sm:$0xf] %vm990, %v3242
        %3587 = vst.msk [vmem:[%s14 + $0x40] sm:$0xf] %vm990, %v1145
        %3588 = vst.msk [vmem:[%s14 + $0x44] sm:$0xf] %vm990, %v1820
        %3589 = vst.msk [vmem:[%s14 + $0x48] sm:$0xf] %vm990, %v2551
        %3590 = vst.msk [vmem:[%s14 + $0x4c] sm:$0xf] %vm990, %v3257
        %3591 = vst.msk [vmem:[%s14 + $0x50] sm:$0xf] %vm990, %v1160
        %3592 = vst.msk [vmem:[%s14 + $0x54] sm:$0xf] %vm990, %v1835
        %3593 = vst.msk [vmem:[%s14 + $0x58] sm:$0xf] %vm990, %v2566
        %3594 = vst.msk [vmem:[%s14 + $0x5c] sm:$0xf] %vm990, %v3272
        %3595 = vst.msk [vmem:[%s14 + $0x60] sm:$0xf] %vm990, %v1175
        %3596 = vst.msk [vmem:[%s14 + $0x64] sm:$0xf] %vm990, %v1850
        %3597 = vst.msk [vmem:[%s14 + $0x68] sm:$0xf] %vm990, %v2581
        %3598 = vst.msk [vmem:[%s14 + $0x6c] sm:$0xf] %vm990, %v3287
        %3599 = vst.msk [vmem:[%s14 + $0x70] sm:$0xf] %vm990, %v1190
        %3600 = vst.msk [vmem:[%s14 + $0x74] sm:$0xf] %vm990, %v1865
        %3601 = vst.msk [vmem:[%s14 + $0x78] sm:$0xf] %vm990, %v2596
        %3602 = vst.msk [vmem:[%s14 + $0x7c] sm:$0xf] %vm990, %v3302
      $region95: #{mgtst_forward.8} parent=67 // pred_fallthru
        _
      %v3603 = vld [vmem:[%s568] sm:$0x1]
      %v3605 = vperm.slane %v3603, 0
      %v3607 = vadd.f32 %v3564, %v3605
      %v3608 = vadd.f32 %v3565, %v3605
      %v3609 = vadd.f32 %v3566, %v3605
      %v3610 = vadd.f32 %v3567, %v3605
      %v3615 = vrot.slane %v3607, 4
      %v3616 = vrot.slane %v3608, 4
      %v3617 = vrot.slane %v3609, 4
      %v3618 = vrot.slane %v3610, 4
      %v3623 = vadd.f32 %v664, %v3607
      %v3624 = vadd.f32 %v665, %v3615
      %v3625 = vadd.f32 %v666, %v3608
      %v3626 = vadd.f32 %v667, %v3616
      %v3627 = vadd.f32 %v668, %v3609
      %v3628 = vadd.f32 %v669, %v3617
      %v3629 = vadd.f32 %v670, %v3610
      %v3630 = vadd.f32 %v671, %v3618
      %vm3631 = vcmask 257024
      %v3632 = vsel %vm3631, %v3623, 0.0
      %v3633 = vsel %vm3631, %v3624, 0.0
      %v3634 = vadd.f32 %v3632, %v3633
      %v3635 = vsel %vm3631, %v3625, 0.0
      %v3636 = vadd.f32 %v3634, %v3635
      %v3637 = vsel %vm3631, %v3626, 0.0
      %v3638 = vadd.f32 %v3636, %v3637
      %v3639 = vsel %vm3631, %v3627, 0.0
      %v3640 = vadd.f32 %v3638, %v3639
      %v3641 = vsel %vm3631, %v3628, 0.0
      %v3642 = vadd.f32 %v3640, %v3641
      %v3643 = vsel %vm3631, %v3629, 0.0
      %v3644 = vadd.f32 %v3642, %v3643
      %v3645 = vsel %vm3631, %v3630, 0.0
      %v3646 = vadd.f32 %v3644, %v3645
      %v3647 = vrot.slane %v3646, 4
      %v3648 = vadd.f32 %v3646, %v3647
      %v3649 = vrot.slane %v3648, 2
      %v3650 = vadd.f32 %v3648, %v3649
      %v3651 = vrot.slane %v3650, 1
      %v3652 = vadd.f32 %v3650, %v3651
      %v3653 = vrcp.pop 32.0
      %v3654 = vmul.f32 32.0, %v3653
      %v3655 = vsub.f32 1.0, %v3654
      %v3656 = vmul.f32 %v3653, %v3655
      %v3657 = vadd.f32 %v3653, %v3656
      %vm3658 = vweird.f32 %v3653
      %v3659 = vsel %vm3658, %v3653, %v3657
      %v3660 = vmul.f32 %v3652, %v3659
      %v3661 = vsub.f32 %v3623, %v3660
      %v3662 = vsub.f32 %v3624, %v3660
      %v3663 = vsub.f32 %v3625, %v3660
      %v3664 = vsub.f32 %v3626, %v3660
      %v3665 = vsub.f32 %v3627, %v3660
      %v3666 = vsub.f32 %v3628, %v3660
      %v3667 = vsub.f32 %v3629, %v3660
      %v3668 = vsub.f32 %v3630, %v3660
      %v3669 = vmul.f32 %v3661, %v3661
      %v3670 = vmul.f32 %v3662, %v3662
      %v3671 = vmul.f32 %v3663, %v3663
      %v3672 = vmul.f32 %v3664, %v3664
      %v3673 = vmul.f32 %v3665, %v3665
      %v3674 = vmul.f32 %v3666, %v3666
      %v3675 = vmul.f32 %v3667, %v3667
      %v3676 = vmul.f32 %v3668, %v3668
      %v3677 = vsel %vm3631, %v3669, 0.0
      %v3678 = vsel %vm3631, %v3670, 0.0
      %v3679 = vadd.f32 %v3677, %v3678
      %v3680 = vsel %vm3631, %v3671, 0.0
      %v3681 = vadd.f32 %v3679, %v3680
      %v3682 = vsel %vm3631, %v3672, 0.0
      %v3683 = vadd.f32 %v3681, %v3682
      %v3684 = vsel %vm3631, %v3673, 0.0
      %v3685 = vadd.f32 %v3683, %v3684
      %v3686 = vsel %vm3631, %v3674, 0.0
      %v3687 = vadd.f32 %v3685, %v3686
      %v3688 = vsel %vm3631, %v3675, 0.0
      %v3689 = vadd.f32 %v3687, %v3688
      %v3690 = vsel %vm3631, %v3676, 0.0
      %v3691 = vadd.f32 %v3689, %v3690
      %v3692 = vrot.slane %v3691, 4
      %v3693 = vadd.f32 %v3691, %v3692
      %v3694 = vrot.slane %v3693, 2
      %v3695 = vadd.f32 %v3693, %v3694
      %v3696 = vrot.slane %v3695, 1
      %v3697 = vadd.f32 %v3695, %v3696
      %v3698 = vmul.f32 %v3697, %v3659
      %v3699 = vadd.f32 %v3698, 1e-05
      %v3700 = vrsqrt.pop %v3699
      %v3701 = vmul.f32 %v3700, %v3699
      %v3702 = vmul.f32 %v3701, %v3700
      %v3703 = vmul.f32 0.5, %v3702
      %v3704 = vsub.f32 1.5, %v3703
      %v3705 = vmul.f32 %v3700, %v3704
      %vm3706 = vweird.f32 %v3699
      %vm3707 = vweird.f32 %v3700
      %vm3708 = vmor %vm3706, %vm3707
      %v3709 = vsel %vm3708, %v3700, %v3705
      %v3710 = vmul.f32 %v3661, %v3709
      %v3711 = vmul.f32 %v3662, %v3709
      %v3712 = vmul.f32 %v3663, %v3709
      %v3713 = vmul.f32 %v3664, %v3709
      %v3714 = vmul.f32 %v3665, %v3709
      %v3715 = vmul.f32 %v3666, %v3709
      %v3716 = vmul.f32 %v3667, %v3709
      %v3717 = vmul.f32 %v3668, %v3709
      %v3718 = vld [vmem:[%s571] sm:$0x1]
      %v3720 = vperm.slane %v3718, 0
      %v3722 = vmul.f32 %v3710, %v3720
      %v3723 = vmul.f32 %v3711, %v3720
      %v3724 = vmul.f32 %v3712, %v3720
      %v3725 = vmul.f32 %v3713, %v3720
      %v3726 = vmul.f32 %v3714, %v3720
      %v3727 = vmul.f32 %v3715, %v3720
      %v3728 = vmul.f32 %v3716, %v3720
      %v3729 = vmul.f32 %v3717, %v3720
      %v3730 = vld [vmem:[%s574] sm:$0x1]
      %v3732 = vperm.slane %v3730, 0
      %v3734 = vadd.f32 %v3722, %v3732
      %v3735 = vadd.f32 %v3723, %v3732
      %v3736 = vadd.f32 %v3724, %v3732
      %v3737 = vadd.f32 %v3725, %v3732
      %v3738 = vadd.f32 %v3726, %v3732
      %v3739 = vadd.f32 %v3727, %v3732
      %v3740 = vadd.f32 %v3728, %v3732
      %v3741 = vadd.f32 %v3729, %v3732
      %3750 = vst [vmem:[#allocation1] ss:$2 sm:$0xff] %v3734
      %s3751 = scalar_lea.vmem [#allocation1], 1
      %3752 = vst [vmem:[%s3751] ss:$2 sm:$0xff] %v3735
      %s3753 = scalar_lea.vmem [#allocation1], 16
      %3754 = vst [vmem:[%s3753] ss:$2 sm:$0xff] %v3736
      %s3755 = scalar_lea.vmem [#allocation1], 17
      %3756 = vst [vmem:[%s3755] ss:$2 sm:$0xff] %v3737
      %s3757 = scalar_lea.vmem [#allocation1], 32
      %3758 = vst [vmem:[%s3757] ss:$2 sm:$0xff] %v3738
      %s3759 = scalar_lea.vmem [#allocation1], 33
      %3760 = vst [vmem:[%s3759] ss:$2 sm:$0xff] %v3739
      %s3761 = scalar_lea.vmem [#allocation1], 48
      %3762 = vst [vmem:[%s3761] ss:$2 sm:$0xff] %v3740
      %s3763 = scalar_lea.vmem [#allocation1], 49
      %3764 = vst [vmem:[%s3763] ss:$2 sm:$0xff] %v3741
      %v3765 = vld.sshfl [vmem:[#allocation1] sm:$0xff pattern:$0x75316420]
      %v3766 = vld.sshfl [vmem:[#allocation1 + $0x10] sm:$0xff pattern:$0x75316420]
      %v3767 = vld.sshfl [vmem:[#allocation1 + $0x20] sm:$0xff pattern:$0x75316420]
      %v3768 = vld.sshfl [vmem:[#allocation1 + $0x30] sm:$0xff pattern:$0x75316420]
      %v3773 = vpack.c.bf16 %v3766, %v3765
      %v3774 = vpack.c.bf16 %v3768, %v3767
      %v3775 = vld [vmem:[%s579] sm:$0xf]
      %v3776 = vld [vmem:[%s579 + $0x4] sm:$0xf]
      %v3777 = vld [vmem:[%s579 + $0x8] sm:$0xf]
      %v3778 = vld [vmem:[%s579 + $0xc] sm:$0xf]
      %v3779 = vld [vmem:[%s582] sm:$0x1]
      %v3781 = vperm.slane %v3779, 0
      %v3787 = vunpack.c.l.b16 %v3775
      %v3788 = vunpack.c.l.b16 %v3776
      %v3789 = vunpack.c.l.b16 %v3777
      %v3790 = vunpack.c.l.b16 %v3778
      %v3791 = vpack.c.b16 %v3788, %v3787
      %v3792 = vpack.c.b16 %v3790, %v3789
      %v3796 = vsel %vm725, %v3773, 0
      %v3799 = vsel %vm725, %v3774, 0
      %3801 = vmatpush.bf16.msra.mxu0 0
      %3802 = vmatpush.bf16.msra.mxu0 0
      %3803 = vmatpush.bf16.msra.mxu0 0
      %3804 = vmatpush.bf16.msra.mxu0 0
      %3805 = vmatpush.bf16.msra.mxu0 0
      %3806 = vmatpush.bf16.msra.mxu0 0
      %3807 = vmatpush.bf16.msra.mxu0 %v3792
      %3808 = vmatpush.bf16.msra.mxu0 %v3791
      %3809 = vmatmul.bf16.gmra.mxu0 %v3796
      %v3810 = vpop.f32.mrf.mxu0
      %v3811 = vadd.f32 %v3781, %v3810
      %v3812 = vpop.f32.mrf.mxu0
      %v3813 = vadd.f32 %v3781, %v3812
      %3814 = vmatmul.bf16.gmra.mxu0 %v3799
      %v3815 = vpop.f32.mrf.mxu0
      %v3816 = vadd.f32 %v3781, %v3815
      %v3817 = vpop.f32.mrf.mxu0
      %v3818 = vadd.f32 %v3781, %v3817
      %3819 = vdwg.mxu0
      %v3820 = vmul.f32 %v3811, %v3811
      %v3821 = vmul.f32 %v3813, %v3813
      %v3822 = vmul.f32 %v3816, %v3816
      %v3823 = vmul.f32 %v3818, %v3818
      %v3824 = vmul.f32 %v3811, %v3820
      %v3825 = vmul.f32 %v3813, %v3821
      %v3826 = vmul.f32 %v3816, %v3822
      %v3827 = vmul.f32 %v3818, %v3823
      %v3828 = vmul.f32 %v3824, 0.044715
      %v3829 = vmul.f32 %v3825, 0.044715
      %v3830 = vmul.f32 %v3826, 0.044715
      %v3831 = vmul.f32 %v3827, 0.044715
      %v3832 = vadd.f32 %v3811, %v3828
      %v3833 = vadd.f32 %v3813, %v3829
      %v3834 = vadd.f32 %v3816, %v3830
      %v3835 = vadd.f32 %v3818, %v3831
      %v3836 = vmul.f32 %v3832, 0.7978846
      %v3837 = vmul.f32 %v3833, 0.7978846
      %v3838 = vmul.f32 %v3834, 0.7978846
      %v3839 = vmul.f32 %v3835, 0.7978846
      %v3840 = vtanh.pop %v3836
      %v3841 = vtanh.pop %v3837
      %v3842 = vtanh.pop %v3838
      %v3843 = vtanh.pop %v3839
      %v3844 = vadd.f32 %v3840, 1.0
      %v3845 = vadd.f32 %v3841, 1.0
      %v3846 = vadd.f32 %v3842, 1.0
      %v3847 = vadd.f32 %v3843, 1.0
      %v3848 = vmul.f32 %v3844, 0.5
      %v3849 = vmul.f32 %v3845, 0.5
      %v3850 = vmul.f32 %v3846, 0.5
      %v3851 = vmul.f32 %v3847, 0.5
      %v3852 = vmul.f32 %v3811, %v3848
      %v3853 = vmul.f32 %v3813, %v3849
      %v3854 = vmul.f32 %v3816, %v3850
      %v3855 = vmul.f32 %v3818, %v3851
      %v3856 = vpack.c.bf16 %v3853, %v3852
      %v3857 = vpack.c.bf16 %v3855, %v3854
      %v3858 = vld [vmem:[%s587] sm:$0xf]
      %v3859 = vld [vmem:[%s587 + $0x4] sm:$0xf]
      %v3860 = vld [vmem:[%s587 + $0x8] sm:$0xf]
      %v3861 = vld [vmem:[%s587 + $0xc] sm:$0xf]
      %v3862 = vld [vmem:[%s587 + $0x10] sm:$0xf]
      %v3863 = vld [vmem:[%s587 + $0x14] sm:$0xf]
      %v3864 = vld [vmem:[%s587 + $0x18] sm:$0xf]
      %v3865 = vld [vmem:[%s587 + $0x1c] sm:$0xf]
      %v3866 = vld [vmem:[%s590] sm:$0x1]
      %v3868 = vperm.slane %v3866, 0
      %v3878 = vunpack.c.l.b16 %v3858
      %v3879 = vunpack.c.l.b16 %v3859
      %v3880 = vunpack.c.l.b16 %v3860
      %v3881 = vunpack.c.l.b16 %v3861
      %v3882 = vunpack.c.l.b16 %v3862
      %v3883 = vunpack.c.l.b16 %v3863
      %v3884 = vunpack.c.l.b16 %v3864
      %v3885 = vunpack.c.l.b16 %v3865
      %v3886 = vpack.c.b16 %v3879, %v3878
      %v3887 = vpack.c.b16 %v3881, %v3880
      %v3888 = vpack.c.b16 %v3883, %v3882
      %v3889 = vpack.c.b16 %v3885, %v3884
      %vm3894 = vcmask 523264
      %v3896 = vsel %vm3894, %v3856, 0
      %v3899 = vsel %vm3894, %v3857, 0
      %3901 = vmatpush.bf16.msra.mxu0 0
      %3902 = vmatpush.bf16.msra.mxu0 0
      %3903 = vmatpush.bf16.msra.mxu0 0
      %3904 = vmatpush.bf16.msra.mxu0 0
      %3905 = vmatpush.bf16.msra.mxu0 %v3889
      %3906 = vmatpush.bf16.msra.mxu0 %v3888
      %3907 = vmatpush.bf16.msra.mxu0 %v3887
      %3908 = vmatpush.bf16.msra.mxu0 %v3886
      %3909 = vmatmul.bf16.gmra.mxu0 %v3896
      %v3910 = vpop.f32.mrf.mxu0
      %v3911 = vadd.f32 %v3868, %v3910
      %v3912 = vpop.f32.mrf.mxu0
      %v3913 = vadd.f32 %v3868, %v3912
      %3914 = vmatmul.bf16.gmra.mxu0 %v3899
      %v3915 = vpop.f32.mrf.mxu0
      %v3916 = vadd.f32 %v3868, %v3915
      %v3917 = vpop.f32.mrf.mxu0
      %v3918 = vadd.f32 %v3868, %v3917
      %3919 = vdwg.mxu0
      %v3924 = vrot.slane %v3911, 4
      %v3925 = vrot.slane %v3913, 4
      %v3926 = vrot.slane %v3916, 4
      %v3927 = vrot.slane %v3918, 4
      %v3932 = vadd.f32 %v3734, %v3911
      %v3933 = vadd.f32 %v3735, %v3924
      %v3934 = vadd.f32 %v3736, %v3913
      %v3935 = vadd.f32 %v3737, %v3925
      %v3936 = vadd.f32 %v3738, %v3916
      %v3937 = vadd.f32 %v3739, %v3926
      %v3938 = vadd.f32 %v3740, %v3918
      %v3939 = vadd.f32 %v3741, %v3927
      %v3940 = vsel %vm3631, %v3932, 0.0
      %v3941 = vsel %vm3631, %v3933, 0.0
      %v3942 = vadd.f32 %v3940, %v3941
      %v3943 = vsel %vm3631, %v3934, 0.0
      %v3944 = vadd.f32 %v3942, %v3943
      %v3945 = vsel %vm3631, %v3935, 0.0
      %v3946 = vadd.f32 %v3944, %v3945
      %v3947 = vsel %vm3631, %v3936, 0.0
      %v3948 = vadd.f32 %v3946, %v3947
      %v3949 = vsel %vm3631, %v3937, 0.0
      %v3950 = vadd.f32 %v3948, %v3949
      %v3951 = vsel %vm3631, %v3938, 0.0
      %v3952 = vadd.f32 %v3950, %v3951
      %v3953 = vsel %vm3631, %v3939, 0.0
      %v3954 = vadd.f32 %v3952, %v3953
      %v3955 = vrot.slane %v3954, 4
      %v3956 = vadd.f32 %v3954, %v3955
      %v3957 = vrot.slane %v3956, 2
      %v3958 = vadd.f32 %v3956, %v3957
      %v3959 = vrot.slane %v3958, 1
      %v3960 = vadd.f32 %v3958, %v3959
      %v3961 = vmul.f32 %v3960, %v3659
      %v3962 = vsub.f32 %v3932, %v3961
      %v3963 = vsub.f32 %v3933, %v3961
      %v3964 = vsub.f32 %v3934, %v3961
      %v3965 = vsub.f32 %v3935, %v3961
      %v3966 = vsub.f32 %v3936, %v3961
      %v3967 = vsub.f32 %v3937, %v3961
      %v3968 = vsub.f32 %v3938, %v3961
      %v3969 = vsub.f32 %v3939, %v3961
      %v3970 = vmul.f32 %v3962, %v3962
      %v3971 = vmul.f32 %v3963, %v3963
      %v3972 = vmul.f32 %v3964, %v3964
      %v3973 = vmul.f32 %v3965, %v3965
      %v3974 = vmul.f32 %v3966, %v3966
      %v3975 = vmul.f32 %v3967, %v3967
      %v3976 = vmul.f32 %v3968, %v3968
      %v3977 = vmul.f32 %v3969, %v3969
      %v3978 = vsel %vm3631, %v3970, 0.0
      %v3979 = vsel %vm3631, %v3971, 0.0
      %v3980 = vadd.f32 %v3978, %v3979
      %v3981 = vsel %vm3631, %v3972, 0.0
      %v3982 = vadd.f32 %v3980, %v3981
      %v3983 = vsel %vm3631, %v3973, 0.0
      %v3984 = vadd.f32 %v3982, %v3983
      %v3985 = vsel %vm3631, %v3974, 0.0
      %v3986 = vadd.f32 %v3984, %v3985
      %v3987 = vsel %vm3631, %v3975, 0.0
      %v3988 = vadd.f32 %v3986, %v3987
      %v3989 = vsel %vm3631, %v3976, 0.0
      %v3990 = vadd.f32 %v3988, %v3989
      %v3991 = vsel %vm3631, %v3977, 0.0
      %v3992 = vadd.f32 %v3990, %v3991
      %v3993 = vrot.slane %v3992, 4
      %v3994 = vadd.f32 %v3992, %v3993
      %v3995 = vrot.slane %v3994, 2
      %v3996 = vadd.f32 %v3994, %v3995
      %v3997 = vrot.slane %v3996, 1
      %v3998 = vadd.f32 %v3996, %v3997
      %v3999 = vmul.f32 %v3998, %v3659
      %v4000 = vadd.f32 %v3999, 1e-05
      %v4001 = vrsqrt.pop %v4000
      %v4002 = vmul.f32 %v4001, %v4000
      %v4003 = vmul.f32 %v4002, %v4001
      %v4004 = vmul.f32 0.5, %v4003
      %v4005 = vsub.f32 1.5, %v4004
      %v4006 = vmul.f32 %v4001, %v4005
      %vm4007 = vweird.f32 %v4000
      %vm4008 = vweird.f32 %v4001
      %vm4009 = vmor %vm4007, %vm4008
      %v4010 = vsel %vm4009, %v4001, %v4006
      %v4011 = vmul.f32 %v3962, %v4010
      %v4012 = vmul.f32 %v3963, %v4010
      %v4013 = vmul.f32 %v3964, %v4010
      %v4014 = vmul.f32 %v3965, %v4010
      %v4015 = vmul.f32 %v3966, %v4010
      %v4016 = vmul.f32 %v3967, %v4010
      %v4017 = vmul.f32 %v3968, %v4010
      %v4018 = vmul.f32 %v3969, %v4010
      %v4019 = vld [vmem:[%s593] sm:$0x1]
      %v4021 = vperm.slane %v4019, 0
      %v4023 = vmul.f32 %v4011, %v4021
      %v4024 = vmul.f32 %v4012, %v4021
      %v4025 = vmul.f32 %v4013, %v4021
      %v4026 = vmul.f32 %v4014, %v4021
      %v4027 = vmul.f32 %v4015, %v4021
      %v4028 = vmul.f32 %v4016, %v4021
      %v4029 = vmul.f32 %v4017, %v4021
      %v4030 = vmul.f32 %v4018, %v4021
      %v4031 = vld [vmem:[%s596] sm:$0x1]
      %v4033 = vperm.slane %v4031, 0
      %v4035 = vadd.f32 %v4023, %v4033
      %v4036 = vadd.f32 %v4024, %v4033
      %v4037 = vadd.f32 %v4025, %v4033
      %v4038 = vadd.f32 %v4026, %v4033
      %v4039 = vadd.f32 %v4027, %v4033
      %v4040 = vadd.f32 %v4028, %v4033
      %v4041 = vadd.f32 %v4029, %v4033
      %v4042 = vadd.f32 %v4030, %v4033
      %4043 = vst.msk [vmem:[%s13] sm:$0xf] %vm3631, %v4035
      %4044 = vst.msk [vmem:[%s13 + $0x4] sm:$0xf] %vm3631, %v4036
      %4045 = vst.msk [vmem:[%s13 + $0x8] sm:$0xf] %vm3631, %v4037
      %4046 = vst.msk [vmem:[%s13 + $0xc] sm:$0xf] %vm3631, %v4038
      %4047 = vst.msk [vmem:[%s13 + $0x10] sm:$0xf] %vm3631, %v4039
      %4048 = vst.msk [vmem:[%s13 + $0x14] sm:$0xf] %vm3631, %v4040
      %4049 = vst.msk [vmem:[%s13 + $0x18] sm:$0xf] %vm3631, %v4041
      %4050 = vst.msk [vmem:[%s13 + $0x1c] sm:$0xf] %vm3631, %v4042
      // Predicated region
      $region96: #{mgtst_forward.8} parent=67 // pred_check
        %p4051 = pneg %p351
      $region97: #{mgtst_forward.8} parent=67 // pred_check_branch
        %4053 = sbr.rel (%p4051) target = $region99
      $region98: #{mgtst_forward.8} parent=67 // pred_region
        _
      $region99: #{mgtst_forward.8} parent=67 // pred_fallthru
        _
      // Predicated region
      $region100: #{mgtst_forward.8} parent=67 // pred_check
        %p4054 = pneg %p372
      $region101: #{mgtst_forward.8} parent=67 // pred_check_branch
        %4056 = sbr.rel (%p4054) target = $region103
      $region102: #{mgtst_forward.8} parent=67 // pred_region
        _
      $region103: #{mgtst_forward.8} parent=67 // pred_fallthru
        _
      // Predicated region
      $region104: #{mgtst_forward.8} parent=67 // pred_check
        %p4057 = pneg %p351
      $region105: #{mgtst_forward.8} parent=67 // pred_check_branch
        %4059 = sbr.rel (%p4057) target = $region107
      $region106: #{mgtst_forward.8} parent=67 // pred_region
        _
      $region107: #{mgtst_forward.8} parent=67 // pred_fallthru
        _
      // Predicated region
      $region108: #{mgtst_forward.8} parent=67 // pred_check
        %p4060 = pneg %p372
      $region109: #{mgtst_forward.8} parent=67 // pred_check_branch
        %4062 = sbr.rel (%p4060) target = $region111
      $region110: #{mgtst_forward.8} parent=67 // pred_region
        _
      $region111: #{mgtst_forward.8} parent=67 // pred_fallthru
        _
    $region68: #{mgtst_forward.8} parent=5 // pred_fallthru
      _
    %p4063 = scmp.le.s32.totalorder 2, %s21
    // Predicated region
    $region112: #{mgtst_forward.8} parent=5 // pred_check
      %p4064 = pneg %p4063
    $region113: #{mgtst_forward.8} parent=5 // pred_check_branch
      %4066 = sbr.rel (%p4064) target = $region115
    $region114: #{mgtst_forward.8} parent=5 // pred_region
      %s4067 = ssub.s32 %s21, 2
    $region115: #{mgtst_forward.8} parent=5 // pred_fallthru
      _
  $region6: #{mgtst_forward.8} parent=0 // loop_footer
    %s25 = sadd.s32 1, %s21
  $region7: #{mgtst_forward.8} parent=0 // loop_footer_branch
    %20 = sbr.rel target = $region3
  $region8: #{mgtst_forward.8} parent=0 // loop_exit
    _
  %4068 = vsyncmov [#allocation3]
  %s4069 = vpop.sfrf %4068
  %p4070 = scmp.eq.s32.totalorder %s4069, 0
  %p4071 = pneg %p4070
  %4073 = shalt.err (%p4071)

</llo_original>
